<compile_context>
chip_gen: v7x
topology: tpu7x:2x2x1
jax: 0.10.0
libtpu: 0.0.40
codegen_flags: <defaults>
</compile_context>

<pallas_src>
import math

import numpy as np
import jax
import jax.numpy as jnp
from jax.experimental import pallas as pl
from jax.experimental.pallas import tpu as pltpu

D = 512                      # self.size[1]
NUM_HEADS = 8                # TODO(synk): opt-dependent (not in spec)
HEAD_DIM = D // NUM_HEADS
MLP_DIM = 1024               # TODO(synk): opt-dependent (not in spec)
NUM_LAYERS = 2               # TODO(synk): opt['Network']['1p19q_layers']
LN_EPS = 1e-6
ATTN_SCALE = 1.0 / math.sqrt(HEAD_DIM)


def _layernorm(x, g, b):
    """LayerNorm over the last (feature) axis, eps=1e-6."""
    mu = jnp.mean(x, axis=-1, keepdims=True)
    xc = x - mu
    var = jnp.mean(xc * xc, axis=-1, keepdims=True)
    return xc * jax.lax.rsqrt(var + LN_EPS) * g + b


# ---------------------------------------------------------------------------
# Fused kernel: grid axis = transformer layer.  Hidden state lives in the
# `hidden` output block (constant index map -> VMEM resident across layers);
# per-layer weights (bf16) + one packed f32 vector slab stream in per step.
# ---------------------------------------------------------------------------
def mine_1p19q_kernel(x_ref,
                      qkvw_ref, pw_ref, f1w_ref, f2w_ref,
                      vec_ref, encn_ref,
                      hid_ref, enc_ref):
    layer = pl.program_id(0)
    B, N, _ = x_ref.shape
    BN = B * N

    @pl.when(layer == 0)
    def _():
        hid_ref[...] = x_ref[...]

    h = hid_ref[...]                                          # (B, N, D) f32

    # ---- unpack the per-layer vector slab (one DMA per layer) -------------
    qkv_b = vec_ref[0:1, :]                                   # (1, 3D), Q pre-scaled
    attn_g = vec_ref[1:2, 0:D]
    attn_b = vec_ref[1:2, D:2 * D]
    proj_b = vec_ref[1:2, 2 * D:3 * D]
    ffn_g = vec_ref[2:3, 0:D]
    ffn_b = vec_ref[2:3, D:2 * D]
    fc2_b = vec_ref[2:3, 2 * D:3 * D]
    fc1_b = vec_ref[3:4, 0:MLP_DIM]

    # ---- attention sub-block: LN -> fused QKV -> SDPA -> proj -> residual -
    xn = _layernorm(h, attn_g, attn_b).reshape(BN, D)
    # Fused Q/K/V projection: one (BN, D) @ (D, 3D) bf16 matmul, f32 accum.
    qkv = jnp.dot(xn.astype(jnp.bfloat16), qkvw_ref[...],
                  preferred_element_type=jnp.float32) + qkv_b

    head_outs = []
    for hh in range(NUM_HEADS):                               # static unroll
        lo = hh * HEAD_DIM
        qh = qkv[:, lo:lo + HEAD_DIM].reshape(B, N, HEAD_DIM)
        kh = qkv[:, D + lo:D + lo + HEAD_DIM].reshape(B, N, HEAD_DIM)
        vh = qkv[:, 2 * D + lo:2 * D + lo + HEAD_DIM].reshape(B, N, HEAD_DIM)
        # ATTN_SCALE already folded into the Q weights/bias.
        s = jnp.einsum('bqd,bkd->bqk', qh, kh,
                       preferred_element_type=jnp.float32)
        s = s - jnp.max(s, axis=-1, keepdims=True)
        e = jnp.exp(s)
        p = e * pl.reciprocal(jnp.sum(e, axis=-1, keepdims=True), approx=True)
        head_outs.append(jnp.einsum('bqk,bkd->bqd', p, vh,
                                    preferred_element_type=jnp.float32))
    ctx = jnp.concatenate(head_outs, axis=-1).reshape(BN, D)
    attn = jnp.dot(ctx.astype(jnp.bfloat16), pw_ref[...],
                   preferred_element_type=jnp.float32) + proj_b
    h = h + attn.reshape(B, N, D)

    # ---- MLP sub-block: LN -> fc1 -> GELU -> fc2 -> residual --------------
    yn = _layernorm(h, ffn_g, ffn_b).reshape(BN, D)
    y = jnp.dot(yn.astype(jnp.bfloat16), f1w_ref[...],
                preferred_element_type=jnp.float32) + fc1_b
    y = jax.nn.gelu(y, approximate=True)
    y = jnp.dot(y.astype(jnp.bfloat16), f2w_ref[...],
                preferred_element_type=jnp.float32) + fc2_b
    h = h + y.reshape(B, N, D)

    hid_ref[...] = h

    @pl.when(layer == pl.num_programs(0) - 1)
    def _():
        enc_ref[...] = _layernorm(h, encn_ref[0:1, :], encn_ref[1:2, :])


# ---------------------------------------------------------------------------
# Parameter preparation for the kernel: bf16 weight matrices, folded attention
# scale, and one packed f32 slab per layer for all small vectors.
# ---------------------------------------------------------------------------
def prepare_params(params):
    L = params["qkv_w"].shape[0]

    # Fold 1/sqrt(head_dim) into the Q third of the fused QKV projection.
    scale_vec = jnp.concatenate([
        jnp.full((D,), ATTN_SCALE, jnp.float32),
        jnp.ones((2 * D,), jnp.float32)])
    qkv_w = params["qkv_w"] * scale_vec
    qkv_b = params["qkv_b"] * scale_vec

    slab = jnp.zeros((L, 8, 3 * D), jnp.float32)
    slab = slab.at[:, 0, :].set(qkv_b[:, 0, :])
    slab = slab.at[:, 1, 0:D].set(params["attn_norm_g"][:, 0, :])
    slab = slab.at[:, 1, D:2 * D].set(params["attn_norm_b"][:, 0, :])
    slab = slab.at[:, 1, 2 * D:3 * D].set(params["proj_b"][:, 0, :])
    slab = slab.at[:, 2, 0:D].set(params["ffn_norm_g"][:, 0, :])
    slab = slab.at[:, 2, D:2 * D].set(params["ffn_norm_b"][:, 0, :])
    slab = slab.at[:, 2, 2 * D:3 * D].set(params["fc2_b"][:, 0, :])
    slab = slab.at[:, 3, 0:MLP_DIM].set(params["fc1_b"][:, 0, :])

    encn = jnp.zeros((8, D), jnp.float32)
    encn = encn.at[0].set(params["enc_norm_g"][0])
    encn = encn.at[1].set(params["enc_norm_b"][0])

    return {
        "qkv_w": qkv_w.astype(jnp.bfloat16),
        "proj_w": params["proj_w"].astype(jnp.bfloat16),
        "fc1_w": params["fc1_w"].astype(jnp.bfloat16),
        "fc2_w": params["fc2_w"].astype(jnp.bfloat16),
        "vec_slab": slab,
        "enc_norm": encn,
    }


# ---------------------------------------------------------------------------
# Wrapper
# ---------------------------------------------------------------------------
def mine_1p19q_forward(hidden_states, kp):
    B, N, _ = hidden_states.shape
    L = kp["qkv_w"].shape[0]

    def per_layer(shape):
        # (L, *shape) array, one layer-slice streamed (double-buffered) per step.
        return pl.BlockSpec((None,) + shape, lambda l: (l,) + (0,) * len(shape))

    act_spec = pl.BlockSpec((B, N, D), lambda l: (0, 0, 0))

    in_specs = [
        act_spec,                                  # input hidden states
        per_layer((D, 3 * D)),                     # fused q/k/v weights (bf16)
        per_layer((D, D)),                         # attention out proj (bf16)
        per_layer((D, MLP_DIM)),                   # fc1 (bf16)
        per_layer((MLP_DIM, D)),                   # fc2 (bf16)
        per_layer((8, 3 * D)),                     # packed biases / norm params
        pl.BlockSpec((8, D), lambda l: (0, 0)),    # encoder_norm_1p19q g/b
    ]
    out_specs = [act_spec, act_spec]
    out_shape = [jax.ShapeDtypeStruct((B, N, D), jnp.float32)] * 2

    grid_spec = pltpu.PrefetchScalarGridSpec(
        num_scalar_prefetch=0,
        grid=(L,),
        in_specs=in_specs,
        out_specs=out_specs,
    )

    hidden, encoded = pl.pallas_call(
        mine_1p19q_kernel,
        grid_spec=grid_spec,
        out_shape=out_shape,
        compiler_params=pltpu.CompilerParams(
            dimension_semantics=("arbitrary",),     # layers are sequential
            vmem_limit_bytes=24 * 1024 * 1024),
    )(hidden_states,
      kp["qkv_w"], kp["proj_w"], kp["fc1_w"], kp["fc2_w"],
      kp["vec_slab"], kp["enc_norm"])
    return hidden, encoded


# ---------------------------------------------------------------------------
# Deterministic parameter init (synthetic, not a checkpoint), module-style f32
# ---------------------------------------------------------------------------
def init_params(key, num_layers=NUM_LAYERS):
    ks = iter(jax.random.split(key, 32))

    def rnd(shape, scale=0.05):
        return scale * jax.random.normal(next(ks), shape, dtype=jnp.float32)

    L = num_layers
    return {
        "attn_norm_g": jnp.ones((L, 1, D), jnp.float32),
        "attn_norm_b": jnp.zeros((L, 1, D), jnp.float32),
        "qkv_w": rnd((L, D, 3 * D)),
        "qkv_b": rnd((L, 1, 3 * D)),
        "proj_w": rnd((L, D, D)),
        "proj_b": rnd((L, 1, D)),
        "ffn_norm_g": jnp.ones((L, 1, D), jnp.float32),
        "ffn_norm_b": jnp.zeros((L, 1, D), jnp.float32),
        "fc1_w": rnd((L, D, MLP_DIM)),
        "fc1_b": rnd((L, 1, MLP_DIM)),
        "fc2_w": rnd((L, MLP_DIM, D)),
        "fc2_b": rnd((L, 1, D)),
        "enc_norm_g": jnp.ones((1, D), jnp.float32),
        "enc_norm_b": jnp.zeros((1, D), jnp.float32),
    }


# ---------------------------------------------------------------------------
# Pure-JAX reference (mirrors the module semantics, f32 HIGHEST precision)
# ---------------------------------------------------------------------------
def reference_forward(x, params):
    HI = jax.lax.Precision.HIGHEST
    B, N, _ = x.shape
    L = params["qkv_w"].shape[0]
    h = x
    for l in range(L):
        xn = _layernorm(h, params["attn_norm_g"][l], params["attn_norm_b"][l])
        qkv = (jnp.dot(xn.reshape(B * N, D), params["qkv_w"][l], precision=HI)
               + params["qkv_b"][l])
        q, k, v = jnp.split(qkv, 3, axis=-1)

        def split_heads(t):
            return t.reshape(B, N, NUM_HEADS, HEAD_DIM).transpose(0, 2, 1, 3)

        q, k, v = split_heads(q), split_heads(k), split_heads(v)
        s = jnp.einsum('bhqd,bhkd->bhqk', q, k, precision=HI) * ATTN_SCALE
        p = jax.nn.softmax(s, axis=-1)
        ctx = jnp.einsum('bhqk,bhkd->bhqd', p, v, precision=HI)
        ctx = ctx.transpose(0, 2, 1, 3).reshape(B * N, D)
        attn = jnp.dot(ctx, params["proj_w"][l], precision=HI) + params["proj_b"][l]
        h = h + attn.reshape(B, N, D)

        yn = _layernorm(h, params["ffn_norm_g"][l], params["ffn_norm_b"][l])
        y = (jnp.dot(yn.reshape(B * N, D), params["fc1_w"][l], precision=HI)
             + params["fc1_b"][l])
        y = jax.nn.gelu(y, approximate=True)
        y = jnp.dot(y, params["fc2_w"][l], precision=HI) + params["fc2_b"][l]
        h = h + y.reshape(B, N, D)

    enc = _layernorm(h, params["enc_norm_g"], params["enc_norm_b"])
    return h, enc


if __name__ == "__main__":
    B, N = 2, 8
    key = jax.random.PRNGKey(0)
    k_in, k_par = jax.random.split(key)
    hidden_in = jax.random.normal(k_in, (B, N, D), dtype=jnp.float32)
    params = init_params(k_par)
    kernel_params = prepare_params(params)

    hidden_out, encoded = mine_1p19q_forward(hidden_in, kernel_params)
    hidden_out, encoded = jax.block_until_ready((hidden_out, encoded))

    ref_hidden, ref_encoded = reference_forward(hidden_in, params)
    # Tolerance covers bf16 weight streaming / bf16 MXU operands compounded
    # across the 2-layer stack, compared against an f32 HIGHEST reference.
    np.testing.assert_allclose(hidden_out, ref_hidden, rtol=5e-2, atol=5e-2)
    np.testing.assert_allclose(encoded, ref_encoded, rtol=5e-2, atol=5e-2)
    assert hidden_out.shape == (B, N, D) and encoded.shape == (B, N, D)

    print("KERNEL_OK")
</pallas_src>

<mosaic_0001>
module attributes {stable_mosaic.version = 11 : i64} {
  func.func @mine_1p19q_kernel(%arg0: i32, %arg1: memref<2x8x512xf32, #tpu.memory_space<vmem>>, %arg2: memref<1x512x1536xbf16, #tpu.memory_space<vmem>>, %arg3: memref<1x512x512xbf16, #tpu.memory_space<vmem>>, %arg4: memref<1x512x1024xbf16, #tpu.memory_space<vmem>>, %arg5: memref<1x1024x512xbf16, #tpu.memory_space<vmem>>, %arg6: memref<1x8x1536xf32, #tpu.memory_space<vmem>>, %arg7: memref<8x512xf32, #tpu.memory_space<vmem>>, %arg8: memref<2x8x512xf32, #tpu.memory_space<vmem>>, %arg9: memref<2x8x512xf32, #tpu.memory_space<vmem>>) attributes {dimension_semantics = [#tpu.dimension_semantics<arbitrary>], iteration_bounds = array<i64: 2>, scalar_prefetch = 0 : i64, scratch_operands = 0 : i64, tpu.core_type = #tpu.core_type<tc>, window_params = [{pipeline_mode = #tpu.pipeline_mode<synchronous>, transform_indices = @transform_0, window_bounds = array<i64: 2, 8, 512>}, {transform_indices = @transform_1, window_bounds = array<i64: 1, 512, 1536>}, {transform_indices = @transform_2, window_bounds = array<i64: 1, 512, 512>}, {transform_indices = @transform_3, window_bounds = array<i64: 1, 512, 1024>}, {transform_indices = @transform_4, window_bounds = array<i64: 1, 1024, 512>}, {transform_indices = @transform_5, window_bounds = array<i64: 1, 8, 1536>}, {pipeline_mode = #tpu.pipeline_mode<synchronous>, transform_indices = @transform_6, window_bounds = array<i64: 8, 512>}, {pipeline_mode = #tpu.pipeline_mode<synchronous>, transform_indices = @transform_7, window_bounds = array<i64: 2, 8, 512>}, {pipeline_mode = #tpu.pipeline_mode<synchronous>, transform_indices = @transform_8, window_bounds = array<i64: 2, 8, 512>}]} {
    %c0_i32 = arith.constant 0 : i32
    %0 = arith.cmpi eq, %arg0, %c0_i32 : i32
    %1 = arith.extui %0 : i1 to i32
    %c0_i32_0 = arith.constant 0 : i32
    %2 = arith.cmpi ne, %1, %c0_i32_0 : i32
    scf.if %2 {
      %c0_87 = arith.constant 0 : index
      %c0_88 = arith.constant 0 : index
      %c0_89 = arith.constant 0 : index
      %257 = vector.load %arg1[%c0_87, %c0_88, %c0_89] : memref<2x8x512xf32, #tpu.memory_space<vmem>>, vector<2x8x512xf32>
      %c0_90 = arith.constant 0 : index
      %c0_91 = arith.constant 0 : index
      %c0_92 = arith.constant 0 : index
      %258 = vector.load %arg8[%c0_90, %c0_91, %c0_92] : memref<2x8x512xf32, #tpu.memory_space<vmem>>, vector<2x8x512xf32>
      tpu.vector_store %arg8[%c0_90, %c0_91, %c0_92], %257 {strides = array<i32>} : memref<2x8x512xf32, #tpu.memory_space<vmem>>, vector<2x8x512xf32>,
    } else {
    }
    %c0 = arith.constant 0 : index
    %c0_1 = arith.constant 0 : index
    %c0_2 = arith.constant 0 : index
    %3 = vector.load %arg8[%c0, %c0_1, %c0_2] : memref<2x8x512xf32, #tpu.memory_space<vmem>>, vector<2x8x512xf32>
    %c0_3 = arith.constant 0 : index
    %c0_4 = arith.constant 0 : index
    %c0_5 = arith.constant 0 : index
    %4 = vector.load %arg6[%c0_3, %c0_4, %c0_5] : memref<1x8x1536xf32, #tpu.memory_space<vmem>>, vector<1x1x1536xf32>
    %5 = vector.shape_cast %4 : vector<1x1x1536xf32> to vector<1x1536xf32>
    %c0_6 = arith.constant 0 : index
    %c1 = arith.constant 1 : index
    %c0_7 = arith.constant 0 : index
    %6 = vector.load %arg6[%c0_6, %c1, %c0_7] : memref<1x8x1536xf32, #tpu.memory_space<vmem>>, vector<1x1x512xf32>
    %7 = vector.shape_cast %6 : vector<1x1x512xf32> to vector<1x512xf32>
    %c0_8 = arith.constant 0 : index
    %c1_9 = arith.constant 1 : index
    %c512 = arith.constant 512 : index
    %8 = vector.load %arg6[%c0_8, %c1_9, %c512] : memref<1x8x1536xf32, #tpu.memory_space<vmem>>, vector<1x1x512xf32>
    %9 = vector.shape_cast %8 : vector<1x1x512xf32> to vector<1x512xf32>
    %c0_10 = arith.constant 0 : index
    %c1_11 = arith.constant 1 : index
    %c1024 = arith.constant 1024 : index
    %10 = vector.load %arg6[%c0_10, %c1_11, %c1024] : memref<1x8x1536xf32, #tpu.memory_space<vmem>>, vector<1x1x512xf32>
    %11 = vector.shape_cast %10 : vector<1x1x512xf32> to vector<1x512xf32>
    %c0_12 = arith.constant 0 : index
    %c2 = arith.constant 2 : index
    %c0_13 = arith.constant 0 : index
    %12 = vector.load %arg6[%c0_12, %c2, %c0_13] : memref<1x8x1536xf32, #tpu.memory_space<vmem>>, vector<1x1x512xf32>
    %13 = vector.shape_cast %12 : vector<1x1x512xf32> to vector<1x512xf32>
    %c0_14 = arith.constant 0 : index
    %c2_15 = arith.constant 2 : index
    %c512_16 = arith.constant 512 : index
    %14 = vector.load %arg6[%c0_14, %c2_15, %c512_16] : memref<1x8x1536xf32, #tpu.memory_space<vmem>>, vector<1x1x512xf32>
    %15 = vector.shape_cast %14 : vector<1x1x512xf32> to vector<1x512xf32>
    %c0_17 = arith.constant 0 : index
    %c2_18 = arith.constant 2 : index
    %c1024_19 = arith.constant 1024 : index
    %16 = vector.load %arg6[%c0_17, %c2_18, %c1024_19] : memref<1x8x1536xf32, #tpu.memory_space<vmem>>, vector<1x1x512xf32>
    %17 = vector.shape_cast %16 : vector<1x1x512xf32> to vector<1x512xf32>
    %c0_20 = arith.constant 0 : index
    %c3 = arith.constant 3 : index
    %c0_21 = arith.constant 0 : index
    %18 = vector.load %arg6[%c0_20, %c3, %c0_21] : memref<1x8x1536xf32, #tpu.memory_space<vmem>>, vector<1x1x1024xf32>
    %19 = vector.shape_cast %18 : vector<1x1x1024xf32> to vector<1x1024xf32>
    %cst = arith.constant dense<0.000000e+00> : vector<2x8xf32>
    %20 = vector.multi_reduction <add>, %3, %cst [2] : vector<2x8x512xf32> to vector<2x8xf32>
    %21 = vector.shape_cast %20 : vector<2x8xf32> to vector<2x8x1xf32>
    %cst_22 = arith.constant 5.120000e+02 : f32
    %22 = vector.broadcast %cst_22 : f32 to vector<2x8x1xf32>
    %23 = arith.divf %21, %22 : vector<2x8x1xf32>
    %24 = vector.broadcast %23 : vector<2x8x1xf32> to vector<2x8x512xf32>
    %25 = arith.subf %3, %24 : vector<2x8x512xf32>
    %26 = arith.mulf %25, %25 : vector<2x8x512xf32>
    %cst_23 = arith.constant dense<0.000000e+00> : vector<2x8xf32>
    %27 = vector.multi_reduction <add>, %26, %cst_23 [2] : vector<2x8x512xf32> to vector<2x8xf32>
    %28 = vector.shape_cast %27 : vector<2x8xf32> to vector<2x8x1xf32>
    %cst_24 = arith.constant 5.120000e+02 : f32
    %29 = vector.broadcast %cst_24 : f32 to vector<2x8x1xf32>
    %30 = arith.divf %28, %29 : vector<2x8x1xf32>
    %cst_25 = arith.constant 9.99999997E-7 : f32
    %31 = vector.broadcast %cst_25 : f32 to vector<2x8x1xf32>
    %32 = arith.addf %30, %31 : vector<2x8x1xf32>
    %33 = math.rsqrt %32 : vector<2x8x1xf32>
    %34 = vector.broadcast %33 : vector<2x8x1xf32> to vector<2x8x512xf32>
    %35 = arith.mulf %25, %34 : vector<2x8x512xf32>
    %36 = vector.shape_cast %7 : vector<1x512xf32> to vector<1x1x512xf32>
    %37 = vector.broadcast %36 : vector<1x1x512xf32> to vector<2x8x512xf32>
    %38 = arith.mulf %35, %37 : vector<2x8x512xf32>
    %39 = vector.shape_cast %9 : vector<1x512xf32> to vector<1x1x512xf32>
    %40 = vector.broadcast %39 : vector<1x1x512xf32> to vector<2x8x512xf32>
    %41 = arith.addf %38, %40 : vector<2x8x512xf32>
    %42 = vector.shape_cast %41 : vector<2x8x512xf32> to vector<16x512xf32>
    %43 = arith.truncf %42 : vector<16x512xf32> to vector<16x512xbf16>
    %c0_26 = arith.constant 0 : index
    %c0_27 = arith.constant 0 : index
    %c0_28 = arith.constant 0 : index
    %44 = vector.load %arg2[%c0_26, %c0_27, %c0_28] : memref<1x512x1536xbf16, #tpu.memory_space<vmem>>, vector<1x512x1536xbf16>
    %45 = vector.shape_cast %44 : vector<1x512x1536xbf16> to vector<512x1536xbf16>
    %cst_29 = arith.constant dense<0.000000e+00> : vector<16x1536xf32>
    %46 = tpu.matmul %43, %45, %cst_29 {dimension_numbers = #tpu.dot_dimension_numbers<[1], [0], [0], [1], [0, 0, 1, 1], [], []>} : vector<16x512xbf16>, vector<512x1536xbf16>, vector<16x1536xf32> -> vector<16x1536xf32>
    %47 = vector.broadcast %5 : vector<1x1536xf32> to vector<16x1536xf32>
    %48 = arith.addf %46, %47 : vector<16x1536xf32>
    %49 = vector.extract_strided_slice %48 {offsets = [0, 0], sizes = [16, 64], strides = [1, 1]} : vector<16x1536xf32> to vector<16x64xf32>
    %50 = vector.shape_cast %49 : vector<16x64xf32> to vector<2x8x64xf32>
    %51 = vector.extract_strided_slice %48 {offsets = [0, 512], sizes = [16, 64], strides = [1, 1]} : vector<16x1536xf32> to vector<16x64xf32>
    %52 = vector.shape_cast %51 : vector<16x64xf32> to vector<2x8x64xf32>
    %53 = vector.extract_strided_slice %48 {offsets = [0, 1024], sizes = [16, 64], strides = [1, 1]} : vector<16x1536xf32> to vector<16x64xf32>
    %54 = vector.shape_cast %53 : vector<16x64xf32> to vector<2x8x64xf32>
    "tpu.trace_start"() <{level = 10 : i32, message = "bqd,bkd->bqk"}> : () -> ()
    %cst_30 = arith.constant dense<0.000000e+00> : vector<2x8x8xf32>
    %55 = tpu.matmul %50, %52, %cst_30 {dimension_numbers = #tpu.dot_dimension_numbers<[2], [2], [1], [1], [0, 0, 0, 1, 1, 1], [0], [0]>} : vector<2x8x64xf32>, vector<2x8x64xf32>, vector<2x8x8xf32> -> vector<2x8x8xf32>
    "tpu.trace_stop"() : () -> ()
    %cst_31 = arith.constant dense<0xFF800000> : vector<2x8xf32>
    %56 = vector.multi_reduction <maximumf>, %55, %cst_31 [2] : vector<2x8x8xf32> to vector<2x8xf32>
    %57 = vector.shape_cast %56 : vector<2x8xf32> to vector<2x8x1xf32>
    %58 = vector.broadcast %57 : vector<2x8x1xf32> to vector<2x8x8xf32>
    %59 = arith.subf %55, %58 : vector<2x8x8xf32>
    %60 = math.exp %59 : vector<2x8x8xf32>
    %cst_32 = arith.constant dense<0.000000e+00> : vector<2x8xf32>
    %61 = vector.multi_reduction <add>, %60, %cst_32 [2] : vector<2x8x8xf32> to vector<2x8xf32>
    %62 = vector.shape_cast %61 : vector<2x8xf32> to vector<2x8x1xf32>
    %63 = tpu.reciprocal %62 {approx = true} : vector<2x8x1xf32> -> vector<2x8x1xf32>
    %64 = vector.broadcast %63 : vector<2x8x1xf32> to vector<2x8x8xf32>
    %65 = arith.mulf %60, %64 : vector<2x8x8xf32>
    "tpu.trace_start"() <{level = 10 : i32, message = "bqk,bkd->bqd"}> : () -> ()
    %cst_33 = arith.constant dense<0.000000e+00> : vector<2x8x64xf32>
    %66 = tpu.matmul %65, %54, %cst_33 {dimension_numbers = #tpu.dot_dimension_numbers<[2], [1], [1], [2], [0, 0, 0, 1, 1, 2], [0], [0]>} : vector<2x8x8xf32>, vector<2x8x64xf32>, vector<2x8x64xf32> -> vector<2x8x64xf32>
    "tpu.trace_stop"() : () -> ()
    %67 = vector.extract_strided_slice %48 {offsets = [0, 64], sizes = [16, 64], strides = [1, 1]} : vector<16x1536xf32> to vector<16x64xf32>
    %68 = vector.shape_cast %67 : vector<16x64xf32> to vector<2x8x64xf32>
    %69 = vector.extract_strided_slice %48 {offsets = [0, 576], sizes = [16, 64], strides = [1, 1]} : vector<16x1536xf32> to vector<16x64xf32>
    %70 = vector.shape_cast %69 : vector<16x64xf32> to vector<2x8x64xf32>
    %71 = vector.extract_strided_slice %48 {offsets = [0, 1088], sizes = [16, 64], strides = [1, 1]} : vector<16x1536xf32> to vector<16x64xf32>
    %72 = vector.shape_cast %71 : vector<16x64xf32> to vector<2x8x64xf32>
    "tpu.trace_start"() <{level = 10 : i32, message = "bqd,bkd->bqk"}> : () -> ()
    %cst_34 = arith.constant dense<0.000000e+00> : vector<2x8x8xf32>
    %73 = tpu.matmul %68, %70, %cst_34 {dimension_numbers = #tpu.dot_dimension_numbers<[2], [2], [1], [1], [0, 0, 0, 1, 1, 1], [0], [0]>} : vector<2x8x64xf32>, vector<2x8x64xf32>, vector<2x8x8xf32> -> vector<2x8x8xf32>
    "tpu.trace_stop"() : () -> ()
    %cst_35 = arith.constant dense<0xFF800000> : vector<2x8xf32>
    %74 = vector.multi_reduction <maximumf>, %73, %cst_35 [2] : vector<2x8x8xf32> to vector<2x8xf32>
    %75 = vector.shape_cast %74 : vector<2x8xf32> to vector<2x8x1xf32>
    %76 = vector.broadcast %75 : vector<2x8x1xf32> to vector<2x8x8xf32>
    %77 = arith.subf %73, %76 : vector<2x8x8xf32>
    %78 = math.exp %77 : vector<2x8x8xf32>
    %cst_36 = arith.constant dense<0.000000e+00> : vector<2x8xf32>
    %79 = vector.multi_reduction <add>, %78, %cst_36 [2] : vector<2x8x8xf32> to vector<2x8xf32>
    %80 = vector.shape_cast %79 : vector<2x8xf32> to vector<2x8x1xf32>
    %81 = tpu.reciprocal %80 {approx = true} : vector<2x8x1xf32> -> vector<2x8x1xf32>
    %82 = vector.broadcast %81 : vector<2x8x1xf32> to vector<2x8x8xf32>
    %83 = arith.mulf %78, %82 : vector<2x8x8xf32>
    "tpu.trace_start"() <{level = 10 : i32, message = "bqk,bkd->bqd"}> : () -> ()
    %cst_37 = arith.constant dense<0.000000e+00> : vector<2x8x64xf32>
    %84 = tpu.matmul %83, %72, %cst_37 {dimension_numbers = #tpu.dot_dimension_numbers<[2], [1], [1], [2], [0, 0, 0, 1, 1, 2], [0], [0]>} : vector<2x8x8xf32>, vector<2x8x64xf32>, vector<2x8x64xf32> -> vector<2x8x64xf32>
    "tpu.trace_stop"() : () -> ()
    %85 = vector.extract_strided_slice %48 {offsets = [0, 128], sizes = [16, 64], strides = [1, 1]} : vector<16x1536xf32> to vector<16x64xf32>
    %86 = vector.shape_cast %85 : vector<16x64xf32> to vector<2x8x64xf32>
    %87 = vector.extract_strided_slice %48 {offsets = [0, 640], sizes = [16, 64], strides = [1, 1]} : vector<16x1536xf32> to vector<16x64xf32>
    %88 = vector.shape_cast %87 : vector<16x64xf32> to vector<2x8x64xf32>
    %89 = vector.extract_strided_slice %48 {offsets = [0, 1152], sizes = [16, 64], strides = [1, 1]} : vector<16x1536xf32> to vector<16x64xf32>
    %90 = vector.shape_cast %89 : vector<16x64xf32> to vector<2x8x64xf32>
    "tpu.trace_start"() <{level = 10 : i32, message = "bqd,bkd->bqk"}> : () -> ()
    %cst_38 = arith.constant dense<0.000000e+00> : vector<2x8x8xf32>
    %91 = tpu.matmul %86, %88, %cst_38 {dimension_numbers = #tpu.dot_dimension_numbers<[2], [2], [1], [1], [0, 0, 0, 1, 1, 1], [0], [0]>} : vector<2x8x64xf32>, vector<2x8x64xf32>, vector<2x8x8xf32> -> vector<2x8x8xf32>
    "tpu.trace_stop"() : () -> ()
    %cst_39 = arith.constant dense<0xFF800000> : vector<2x8xf32>
    %92 = vector.multi_reduction <maximumf>, %91, %cst_39 [2] : vector<2x8x8xf32> to vector<2x8xf32>
    %93 = vector.shape_cast %92 : vector<2x8xf32> to vector<2x8x1xf32>
    %94 = vector.broadcast %93 : vector<2x8x1xf32> to vector<2x8x8xf32>
    %95 = arith.subf %91, %94 : vector<2x8x8xf32>
    %96 = math.exp %95 : vector<2x8x8xf32>
    %cst_40 = arith.constant dense<0.000000e+00> : vector<2x8xf32>
    %97 = vector.multi_reduction <add>, %96, %cst_40 [2] : vector<2x8x8xf32> to vector<2x8xf32>
    %98 = vector.shape_cast %97 : vector<2x8xf32> to vector<2x8x1xf32>
    %99 = tpu.reciprocal %98 {approx = true} : vector<2x8x1xf32> -> vector<2x8x1xf32>
    %100 = vector.broadcast %99 : vector<2x8x1xf32> to vector<2x8x8xf32>
    %101 = arith.mulf %96, %100 : vector<2x8x8xf32>
    "tpu.trace_start"() <{level = 10 : i32, message = "bqk,bkd->bqd"}> : () -> ()
    %cst_41 = arith.constant dense<0.000000e+00> : vector<2x8x64xf32>
    %102 = tpu.matmul %101, %90, %cst_41 {dimension_numbers = #tpu.dot_dimension_numbers<[2], [1], [1], [2], [0, 0, 0, 1, 1, 2], [0], [0]>} : vector<2x8x8xf32>, vector<2x8x64xf32>, vector<2x8x64xf32> -> vector<2x8x64xf32>
    "tpu.trace_stop"() : () -> ()
    %103 = vector.extract_strided_slice %48 {offsets = [0, 192], sizes = [16, 64], strides = [1, 1]} : vector<16x1536xf32> to vector<16x64xf32>
    %104 = vector.shape_cast %103 : vector<16x64xf32> to vector<2x8x64xf32>
    %105 = vector.extract_strided_slice %48 {offsets = [0, 704], sizes = [16, 64], strides = [1, 1]} : vector<16x1536xf32> to vector<16x64xf32>
    %106 = vector.shape_cast %105 : vector<16x64xf32> to vector<2x8x64xf32>
    %107 = vector.extract_strided_slice %48 {offsets = [0, 1216], sizes = [16, 64], strides = [1, 1]} : vector<16x1536xf32> to vector<16x64xf32>
    %108 = vector.shape_cast %107 : vector<16x64xf32> to vector<2x8x64xf32>
    "tpu.trace_start"() <{level = 10 : i32, message = "bqd,bkd->bqk"}> : () -> ()
    %cst_42 = arith.constant dense<0.000000e+00> : vector<2x8x8xf32>
    %109 = tpu.matmul %104, %106, %cst_42 {dimension_numbers = #tpu.dot_dimension_numbers<[2], [2], [1], [1], [0, 0, 0, 1, 1, 1], [0], [0]>} : vector<2x8x64xf32>, vector<2x8x64xf32>, vector<2x8x8xf32> -> vector<2x8x8xf32>
    "tpu.trace_stop"() : () -> ()
    %cst_43 = arith.constant dense<0xFF800000> : vector<2x8xf32>
    %110 = vector.multi_reduction <maximumf>, %109, %cst_43 [2] : vector<2x8x8xf32> to vector<2x8xf32>
    %111 = vector.shape_cast %110 : vector<2x8xf32> to vector<2x8x1xf32>
    %112 = vector.broadcast %111 : vector<2x8x1xf32> to vector<2x8x8xf32>
    %113 = arith.subf %109, %112 : vector<2x8x8xf32>
    %114 = math.exp %113 : vector<2x8x8xf32>
    %cst_44 = arith.constant dense<0.000000e+00> : vector<2x8xf32>
    %115 = vector.multi_reduction <add>, %114, %cst_44 [2] : vector<2x8x8xf32> to vector<2x8xf32>
    %116 = vector.shape_cast %115 : vector<2x8xf32> to vector<2x8x1xf32>
    %117 = tpu.reciprocal %116 {approx = true} : vector<2x8x1xf32> -> vector<2x8x1xf32>
    %118 = vector.broadcast %117 : vector<2x8x1xf32> to vector<2x8x8xf32>
    %119 = arith.mulf %114, %118 : vector<2x8x8xf32>
    "tpu.trace_start"() <{level = 10 : i32, message = "bqk,bkd->bqd"}> : () -> ()
    %cst_45 = arith.constant dense<0.000000e+00> : vector<2x8x64xf32>
    %120 = tpu.matmul %119, %108, %cst_45 {dimension_numbers = #tpu.dot_dimension_numbers<[2], [1], [1], [2], [0, 0, 0, 1, 1, 2], [0], [0]>} : vector<2x8x8xf32>, vector<2x8x64xf32>, vector<2x8x64xf32> -> vector<2x8x64xf32>
    "tpu.trace_stop"() : () -> ()
    %121 = vector.extract_strided_slice %48 {offsets = [0, 256], sizes = [16, 64], strides = [1, 1]} : vector<16x1536xf32> to vector<16x64xf32>
    %122 = vector.shape_cast %121 : vector<16x64xf32> to vector<2x8x64xf32>
    %123 = vector.extract_strided_slice %48 {offsets = [0, 768], sizes = [16, 64], strides = [1, 1]} : vector<16x1536xf32> to vector<16x64xf32>
    %124 = vector.shape_cast %123 : vector<16x64xf32> to vector<2x8x64xf32>
    %125 = vector.extract_strided_slice %48 {offsets = [0, 1280], sizes = [16, 64], strides = [1, 1]} : vector<16x1536xf32> to vector<16x64xf32>
    %126 = vector.shape_cast %125 : vector<16x64xf32> to vector<2x8x64xf32>
    "tpu.trace_start"() <{level = 10 : i32, message = "bqd,bkd->bqk"}> : () -> ()
    %cst_46 = arith.constant dense<0.000000e+00> : vector<2x8x8xf32>
    %127 = tpu.matmul %122, %124, %cst_46 {dimension_numbers = #tpu.dot_dimension_numbers<[2], [2], [1], [1], [0, 0, 0, 1, 1, 1], [0], [0]>} : vector<2x8x64xf32>, vector<2x8x64xf32>, vector<2x8x8xf32> -> vector<2x8x8xf32>
    "tpu.trace_stop"() : () -> ()
    %cst_47 = arith.constant dense<0xFF800000> : vector<2x8xf32>
    %128 = vector.multi_reduction <maximumf>, %127, %cst_47 [2] : vector<2x8x8xf32> to vector<2x8xf32>
    %129 = vector.shape_cast %128 : vector<2x8xf32> to vector<2x8x1xf32>
    %130 = vector.broadcast %129 : vector<2x8x1xf32> to vector<2x8x8xf32>
    %131 = arith.subf %127, %130 : vector<2x8x8xf32>
    %132 = math.exp %131 : vector<2x8x8xf32>
    %cst_48 = arith.constant dense<0.000000e+00> : vector<2x8xf32>
    %133 = vector.multi_reduction <add>, %132, %cst_48 [2] : vector<2x8x8xf32> to vector<2x8xf32>
    %134 = vector.shape_cast %133 : vector<2x8xf32> to vector<2x8x1xf32>
    %135 = tpu.reciprocal %134 {approx = true} : vector<2x8x1xf32> -> vector<2x8x1xf32>
    %136 = vector.broadcast %135 : vector<2x8x1xf32> to vector<2x8x8xf32>
    %137 = arith.mulf %132, %136 : vector<2x8x8xf32>
    "tpu.trace_start"() <{level = 10 : i32, message = "bqk,bkd->bqd"}> : () -> ()
    %cst_49 = arith.constant dense<0.000000e+00> : vector<2x8x64xf32>
    %138 = tpu.matmul %137, %126, %cst_49 {dimension_numbers = #tpu.dot_dimension_numbers<[2], [1], [1], [2], [0, 0, 0, 1, 1, 2], [0], [0]>} : vector<2x8x8xf32>, vector<2x8x64xf32>, vector<2x8x64xf32> -> vector<2x8x64xf32>
    "tpu.trace_stop"() : () -> ()
    %139 = vector.extract_strided_slice %48 {offsets = [0, 320], sizes = [16, 64], strides = [1, 1]} : vector<16x1536xf32> to vector<16x64xf32>
    %140 = vector.shape_cast %139 : vector<16x64xf32> to vector<2x8x64xf32>
    %141 = vector.extract_strided_slice %48 {offsets = [0, 832], sizes = [16, 64], strides = [1, 1]} : vector<16x1536xf32> to vector<16x64xf32>
    %142 = vector.shape_cast %141 : vector<16x64xf32> to vector<2x8x64xf32>
    %143 = vector.extract_strided_slice %48 {offsets = [0, 1344], sizes = [16, 64], strides = [1, 1]} : vector<16x1536xf32> to vector<16x64xf32>
    %144 = vector.shape_cast %143 : vector<16x64xf32> to vector<2x8x64xf32>
    "tpu.trace_start"() <{level = 10 : i32, message = "bqd,bkd->bqk"}> : () -> ()
    %cst_50 = arith.constant dense<0.000000e+00> : vector<2x8x8xf32>
    %145 = tpu.matmul %140, %142, %cst_50 {dimension_numbers = #tpu.dot_dimension_numbers<[2], [2], [1], [1], [0, 0, 0, 1, 1, 1], [0], [0]>} : vector<2x8x64xf32>, vector<2x8x64xf32>, vector<2x8x8xf32> -> vector<2x8x8xf32>
    "tpu.trace_stop"() : () -> ()
    %cst_51 = arith.constant dense<0xFF800000> : vector<2x8xf32>
    %146 = vector.multi_reduction <maximumf>, %145, %cst_51 [2] : vector<2x8x8xf32> to vector<2x8xf32>
    %147 = vector.shape_cast %146 : vector<2x8xf32> to vector<2x8x1xf32>
    %148 = vector.broadcast %147 : vector<2x8x1xf32> to vector<2x8x8xf32>
    %149 = arith.subf %145, %148 : vector<2x8x8xf32>
    %150 = math.exp %149 : vector<2x8x8xf32>
    %cst_52 = arith.constant dense<0.000000e+00> : vector<2x8xf32>
    %151 = vector.multi_reduction <add>, %150, %cst_52 [2] : vector<2x8x8xf32> to vector<2x8xf32>
    %152 = vector.shape_cast %151 : vector<2x8xf32> to vector<2x8x1xf32>
    %153 = tpu.reciprocal %152 {approx = true} : vector<2x8x1xf32> -> vector<2x8x1xf32>
    %154 = vector.broadcast %153 : vector<2x8x1xf32> to vector<2x8x8xf32>
    %155 = arith.mulf %150, %154 : vector<2x8x8xf32>
    "tpu.trace_start"() <{level = 10 : i32, message = "bqk,bkd->bqd"}> : () -> ()
    %cst_53 = arith.constant dense<0.000000e+00> : vector<2x8x64xf32>
    %156 = tpu.matmul %155, %144, %cst_53 {dimension_numbers = #tpu.dot_dimension_numbers<[2], [1], [1], [2], [0, 0, 0, 1, 1, 2], [0], [0]>} : vector<2x8x8xf32>, vector<2x8x64xf32>, vector<2x8x64xf32> -> vector<2x8x64xf32>
    "tpu.trace_stop"() : () -> ()
    %157 = vector.extract_strided_slice %48 {offsets = [0, 384], sizes = [16, 64], strides = [1, 1]} : vector<16x1536xf32> to vector<16x64xf32>
    %158 = vector.shape_cast %157 : vector<16x64xf32> to vector<2x8x64xf32>
    %159 = vector.extract_strided_slice %48 {offsets = [0, 896], sizes = [16, 64], strides = [1, 1]} : vector<16x1536xf32> to vector<16x64xf32>
    %160 = vector.shape_cast %159 : vector<16x64xf32> to vector<2x8x64xf32>
    %161 = vector.extract_strided_slice %48 {offsets = [0, 1408], sizes = [16, 64], strides = [1, 1]} : vector<16x1536xf32> to vector<16x64xf32>
    %162 = vector.shape_cast %161 : vector<16x64xf32> to vector<2x8x64xf32>
    "tpu.trace_start"() <{level = 10 : i32, message = "bqd,bkd->bqk"}> : () -> ()
    %cst_54 = arith.constant dense<0.000000e+00> : vector<2x8x8xf32>
    %163 = tpu.matmul %158, %160, %cst_54 {dimension_numbers = #tpu.dot_dimension_numbers<[2], [2], [1], [1], [0, 0, 0, 1, 1, 1], [0], [0]>} : vector<2x8x64xf32>, vector<2x8x64xf32>, vector<2x8x8xf32> -> vector<2x8x8xf32>
    "tpu.trace_stop"() : () -> ()
    %cst_55 = arith.constant dense<0xFF800000> : vector<2x8xf32>
    %164 = vector.multi_reduction <maximumf>, %163, %cst_55 [2] : vector<2x8x8xf32> to vector<2x8xf32>
    %165 = vector.shape_cast %164 : vector<2x8xf32> to vector<2x8x1xf32>
    %166 = vector.broadcast %165 : vector<2x8x1xf32> to vector<2x8x8xf32>
    %167 = arith.subf %163, %166 : vector<2x8x8xf32>
    %168 = math.exp %167 : vector<2x8x8xf32>
    %cst_56 = arith.constant dense<0.000000e+00> : vector<2x8xf32>
    %169 = vector.multi_reduction <add>, %168, %cst_56 [2] : vector<2x8x8xf32> to vector<2x8xf32>
    %170 = vector.shape_cast %169 : vector<2x8xf32> to vector<2x8x1xf32>
    %171 = tpu.reciprocal %170 {approx = true} : vector<2x8x1xf32> -> vector<2x8x1xf32>
    %172 = vector.broadcast %171 : vector<2x8x1xf32> to vector<2x8x8xf32>
    %173 = arith.mulf %168, %172 : vector<2x8x8xf32>
    "tpu.trace_start"() <{level = 10 : i32, message = "bqk,bkd->bqd"}> : () -> ()
    %cst_57 = arith.constant dense<0.000000e+00> : vector<2x8x64xf32>
    %174 = tpu.matmul %173, %162, %cst_57 {dimension_numbers = #tpu.dot_dimension_numbers<[2], [1], [1], [2], [0, 0, 0, 1, 1, 2], [0], [0]>} : vector<2x8x8xf32>, vector<2x8x64xf32>, vector<2x8x64xf32> -> vector<2x8x64xf32>
    "tpu.trace_stop"() : () -> ()
    %175 = vector.extract_strided_slice %48 {offsets = [0, 448], sizes = [16, 64], strides = [1, 1]} : vector<16x1536xf32> to vector<16x64xf32>
    %176 = vector.shape_cast %175 : vector<16x64xf32> to vector<2x8x64xf32>
    %177 = vector.extract_strided_slice %48 {offsets = [0, 960], sizes = [16, 64], strides = [1, 1]} : vector<16x1536xf32> to vector<16x64xf32>
    %178 = vector.shape_cast %177 : vector<16x64xf32> to vector<2x8x64xf32>
    %179 = vector.extract_strided_slice %48 {offsets = [0, 1472], sizes = [16, 64], strides = [1, 1]} : vector<16x1536xf32> to vector<16x64xf32>
    %180 = vector.shape_cast %179 : vector<16x64xf32> to vector<2x8x64xf32>
    "tpu.trace_start"() <{level = 10 : i32, message = "bqd,bkd->bqk"}> : () -> ()
    %cst_58 = arith.constant dense<0.000000e+00> : vector<2x8x8xf32>
    %181 = tpu.matmul %176, %178, %cst_58 {dimension_numbers = #tpu.dot_dimension_numbers<[2], [2], [1], [1], [0, 0, 0, 1, 1, 1], [0], [0]>} : vector<2x8x64xf32>, vector<2x8x64xf32>, vector<2x8x8xf32> -> vector<2x8x8xf32>
    "tpu.trace_stop"() : () -> ()
    %cst_59 = arith.constant dense<0xFF800000> : vector<2x8xf32>
    %182 = vector.multi_reduction <maximumf>, %181, %cst_59 [2] : vector<2x8x8xf32> to vector<2x8xf32>
    %183 = vector.shape_cast %182 : vector<2x8xf32> to vector<2x8x1xf32>
    %184 = vector.broadcast %183 : vector<2x8x1xf32> to vector<2x8x8xf32>
    %185 = arith.subf %181, %184 : vector<2x8x8xf32>
    %186 = math.exp %185 : vector<2x8x8xf32>
    %cst_60 = arith.constant dense<0.000000e+00> : vector<2x8xf32>
    %187 = vector.multi_reduction <add>, %186, %cst_60 [2] : vector<2x8x8xf32> to vector<2x8xf32>
    %188 = vector.shape_cast %187 : vector<2x8xf32> to vector<2x8x1xf32>
    %189 = tpu.reciprocal %188 {approx = true} : vector<2x8x1xf32> -> vector<2x8x1xf32>
    %190 = vector.broadcast %189 : vector<2x8x1xf32> to vector<2x8x8xf32>
    %191 = arith.mulf %186, %190 : vector<2x8x8xf32>
    "tpu.trace_start"() <{level = 10 : i32, message = "bqk,bkd->bqd"}> : () -> ()
    %cst_61 = arith.constant dense<0.000000e+00> : vector<2x8x64xf32>
    %192 = tpu.matmul %191, %180, %cst_61 {dimension_numbers = #tpu.dot_dimension_numbers<[2], [1], [1], [2], [0, 0, 0, 1, 1, 2], [0], [0]>} : vector<2x8x8xf32>, vector<2x8x64xf32>, vector<2x8x64xf32> -> vector<2x8x64xf32>
    "tpu.trace_stop"() : () -> ()
    %193 = tpu.concatenate %66, %84, %102, %120, %138, %156, %174, %192 in 2 : vector<2x8x64xf32>, vector<2x8x64xf32>, vector<2x8x64xf32>, vector<2x8x64xf32>, vector<2x8x64xf32>, vector<2x8x64xf32>, vector<2x8x64xf32>, vector<2x8x64xf32> -> vector<2x8x512xf32>
    %194 = vector.shape_cast %193 : vector<2x8x512xf32> to vector<16x512xf32>
    %195 = arith.truncf %194 : vector<16x512xf32> to vector<16x512xbf16>
    %c0_62 = arith.constant 0 : index
    %c0_63 = arith.constant 0 : index
    %c0_64 = arith.constant 0 : index
    %196 = vector.load %arg3[%c0_62, %c0_63, %c0_64] : memref<1x512x512xbf16, #tpu.memory_space<vmem>>, vector<1x512x512xbf16>
    %197 = vector.shape_cast %196 : vector<1x512x512xbf16> to vector<512x512xbf16>
    %cst_65 = arith.constant dense<0.000000e+00> : vector<16x512xf32>
    %198 = tpu.matmul %195, %197, %cst_65 {dimension_numbers = #tpu.dot_dimension_numbers<[1], [0], [0], [1], [0, 0, 1, 1], [], []>} : vector<16x512xbf16>, vector<512x512xbf16>, vector<16x512xf32> -> vector<16x512xf32>
    %199 = vector.broadcast %11 : vector<1x512xf32> to vector<16x512xf32>
    %200 = arith.addf %198, %199 : vector<16x512xf32>
    %201 = vector.shape_cast %200 : vector<16x512xf32> to vector<2x8x512xf32>
    %202 = arith.addf %3, %201 : vector<2x8x512xf32>
    %cst_66 = arith.constant dense<0.000000e+00> : vector<2x8xf32>
    %203 = vector.multi_reduction <add>, %202, %cst_66 [2] : vector<2x8x512xf32> to vector<2x8xf32>
    %204 = vector.shape_cast %203 : vector<2x8xf32> to vector<2x8x1xf32>
    %cst_67 = arith.constant 5.120000e+02 : f32
    %205 = vector.broadcast %cst_67 : f32 to vector<2x8x1xf32>
    %206 = arith.divf %204, %205 : vector<2x8x1xf32>
    %207 = vector.broadcast %206 : vector<2x8x1xf32> to vector<2x8x512xf32>
    %208 = arith.subf %202, %207 : vector<2x8x512xf32>
    %209 = arith.mulf %208, %208 : vector<2x8x512xf32>
    %cst_68 = arith.constant dense<0.000000e+00> : vector<2x8xf32>
    %210 = vector.multi_reduction <add>, %209, %cst_68 [2] : vector<2x8x512xf32> to vector<2x8xf32>
    %211 = vector.shape_cast %210 : vector<2x8xf32> to vector<2x8x1xf32>
    %cst_69 = arith.constant 5.120000e+02 : f32
    %212 = vector.broadcast %cst_69 : f32 to vector<2x8x1xf32>
    %213 = arith.divf %211, %212 : vector<2x8x1xf32>
    %cst_70 = arith.constant 9.99999997E-7 : f32
    %214 = vector.broadcast %cst_70 : f32 to vector<2x8x1xf32>
    %215 = arith.addf %213, %214 : vector<2x8x1xf32>
    %216 = math.rsqrt %215 : vector<2x8x1xf32>
    %217 = vector.broadcast %216 : vector<2x8x1xf32> to vector<2x8x512xf32>
    %218 = arith.mulf %208, %217 : vector<2x8x512xf32>
    %219 = vector.shape_cast %13 : vector<1x512xf32> to vector<1x1x512xf32>
    %220 = vector.broadcast %219 : vector<1x1x512xf32> to vector<2x8x512xf32>
    %221 = arith.mulf %218, %220 : vector<2x8x512xf32>
    %222 = vector.shape_cast %15 : vector<1x512xf32> to vector<1x1x512xf32>
    %223 = vector.broadcast %222 : vector<1x1x512xf32> to vector<2x8x512xf32>
    %224 = arith.addf %221, %223 : vector<2x8x512xf32>
    %225 = vector.shape_cast %224 : vector<2x8x512xf32> to vector<16x512xf32>
    %226 = arith.truncf %225 : vector<16x512xf32> to vector<16x512xbf16>
    %c0_71 = arith.constant 0 : index
    %c0_72 = arith.constant 0 : index
    %c0_73 = arith.constant 0 : index
    %227 = vector.load %arg4[%c0_71, %c0_72, %c0_73] : memref<1x512x1024xbf16, #tpu.memory_space<vmem>>, vector<1x512x1024xbf16>
    %228 = vector.shape_cast %227 : vector<1x512x1024xbf16> to vector<512x1024xbf16>
    %cst_74 = arith.constant dense<0.000000e+00> : vector<16x1024xf32>
    %229 = tpu.matmul %226, %228, %cst_74 {dimension_numbers = #tpu.dot_dimension_numbers<[1], [0], [0], [1], [0, 0, 1, 1], [], []>} : vector<16x512xbf16>, vector<512x1024xbf16>, vector<16x1024xf32> -> vector<16x1024xf32>
    %230 = vector.broadcast %19 : vector<1x1024xf32> to vector<16x1024xf32>
    %231 = arith.addf %229, %230 : vector<16x1024xf32>
    %232 = arith.mulf %231, %231 : vector<16x1024xf32>
    %233 = arith.mulf %231, %232 : vector<16x1024xf32>
    %cst_75 = arith.constant 4.471500e-02 : f32
    %234 = vector.broadcast %cst_75 : f32 to vector<16x1024xf32>
    %235 = arith.mulf %234, %233 : vector<16x1024xf32>
    %236 = arith.addf %231, %235 : vector<16x1024xf32>
    %cst_76 = arith.constant 0.797884583 : f32
    %237 = vector.broadcast %cst_76 : f32 to vector<16x1024xf32>
    %238 = arith.mulf %237, %236 : vector<16x1024xf32>
    %239 = math.tanh %238 : vector<16x1024xf32>
    %cst_77 = arith.constant 1.000000e+00 : f32
    %240 = vector.broadcast %cst_77 : f32 to vector<16x1024xf32>
    %241 = arith.addf %240, %239 : vector<16x1024xf32>
    %cst_78 = arith.constant 5.000000e-01 : f32
    %242 = vector.broadcast %cst_78 : f32 to vector<16x1024xf32>
    %243 = arith.mulf %242, %241 : vector<16x1024xf32>
    %244 = arith.mulf %231, %243 : vector<16x1024xf32>
    %245 = arith.truncf %244 : vector<16x1024xf32> to vector<16x1024xbf16>
    %c0_79 = arith.constant 0 : index
    %c0_80 = arith.constant 0 : index
    %c0_81 = arith.constant 0 : index
    %246 = vector.load %arg5[%c0_79, %c0_80, %c0_81] : memref<1x1024x512xbf16, #tpu.memory_space<vmem>>, vector<1x1024x512xbf16>
    %247 = vector.shape_cast %246 : vector<1x1024x512xbf16> to vector<1024x512xbf16>
    %cst_82 = arith.constant dense<0.000000e+00> : vector<16x512xf32>
    %248 = tpu.matmul %245, %247, %cst_82 {dimension_numbers = #tpu.dot_dimension_numbers<[1], [0], [0], [1], [0, 0, 1, 1], [], []>} : vector<16x1024xbf16>, vector<1024x512xbf16>, vector<16x512xf32> -> vector<16x512xf32>
    %249 = vector.broadcast %17 : vector<1x512xf32> to vector<16x512xf32>
    %250 = arith.addf %248, %249 : vector<16x512xf32>
    %251 = vector.shape_cast %250 : vector<16x512xf32> to vector<2x8x512xf32>
    %252 = arith.addf %202, %251 : vector<2x8x512xf32>
    %c0_83 = arith.constant 0 : index
    %c0_84 = arith.constant 0 : index
    %c0_85 = arith.constant 0 : index
    %253 = vector.load %arg8[%c0_83, %c0_84, %c0_85] : memref<2x8x512xf32, #tpu.memory_space<vmem>>, vector<2x8x512xf32>
    tpu.vector_store %arg8[%c0_83, %c0_84, %c0_85], %252 {strides = array<i32>} : memref<2x8x512xf32, #tpu.memory_space<vmem>>, vector<2x8x512xf32>,
    %c1_i32 = arith.constant 1 : i32
    %254 = arith.cmpi eq, %arg0, %c1_i32 : i32
    %255 = arith.extui %254 : i1 to i32
    %c0_i32_86 = arith.constant 0 : i32
    %256 = arith.cmpi ne, %255, %c0_i32_86 : i32
    scf.if %256 {
      %c0_87 = arith.constant 0 : index
      %c0_88 = arith.constant 0 : index
      %257 = vector.load %arg7[%c0_87, %c0_88] : memref<8x512xf32, #tpu.memory_space<vmem>>, vector<1x512xf32>
      %c1_89 = arith.constant 1 : index
      %c0_90 = arith.constant 0 : index
      %258 = vector.load %arg7[%c1_89, %c0_90] : memref<8x512xf32, #tpu.memory_space<vmem>>, vector<1x512xf32>
      %cst_91 = arith.constant dense<0.000000e+00> : vector<2x8xf32>
      %259 = vector.multi_reduction <add>, %252, %cst_91 [2] : vector<2x8x512xf32> to vector<2x8xf32>
      %260 = vector.shape_cast %259 : vector<2x8xf32> to vector<2x8x1xf32>
      %cst_92 = arith.constant 5.120000e+02 : f32
      %261 = vector.broadcast %cst_92 : f32 to vector<2x8x1xf32>
      %262 = arith.divf %260, %261 : vector<2x8x1xf32>
      %263 = vector.broadcast %262 : vector<2x8x1xf32> to vector<2x8x512xf32>
      %264 = arith.subf %252, %263 : vector<2x8x512xf32>
      %265 = arith.mulf %264, %264 : vector<2x8x512xf32>
      %cst_93 = arith.constant dense<0.000000e+00> : vector<2x8xf32>
      %266 = vector.multi_reduction <add>, %265, %cst_93 [2] : vector<2x8x512xf32> to vector<2x8xf32>
      %267 = vector.shape_cast %266 : vector<2x8xf32> to vector<2x8x1xf32>
      %cst_94 = arith.constant 5.120000e+02 : f32
      %268 = vector.broadcast %cst_94 : f32 to vector<2x8x1xf32>
      %269 = arith.divf %267, %268 : vector<2x8x1xf32>
      %cst_95 = arith.constant 9.99999997E-7 : f32
      %270 = vector.broadcast %cst_95 : f32 to vector<2x8x1xf32>
      %271 = arith.addf %269, %270 : vector<2x8x1xf32>
      %272 = math.rsqrt %271 : vector<2x8x1xf32>
      %273 = vector.broadcast %272 : vector<2x8x1xf32> to vector<2x8x512xf32>
      %274 = arith.mulf %264, %273 : vector<2x8x512xf32>
      %275 = vector.shape_cast %257 : vector<1x512xf32> to vector<1x1x512xf32>
      %276 = vector.broadcast %275 : vector<1x1x512xf32> to vector<2x8x512xf32>
      %277 = arith.mulf %274, %276 : vector<2x8x512xf32>
      %278 = vector.shape_cast %258 : vector<1x512xf32> to vector<1x1x512xf32>
      %279 = vector.broadcast %278 : vector<1x1x512xf32> to vector<2x8x512xf32>
      %280 = arith.addf %277, %279 : vector<2x8x512xf32>
      %c0_96 = arith.constant 0 : index
      %c0_97 = arith.constant 0 : index
      %c0_98 = arith.constant 0 : index
      %281 = vector.load %arg9[%c0_96, %c0_97, %c0_98] : memref<2x8x512xf32, #tpu.memory_space<vmem>>, vector<2x8x512xf32>
      tpu.vector_store %arg9[%c0_96, %c0_97, %c0_98], %280 {strides = array<i32>} : memref<2x8x512xf32, #tpu.memory_space<vmem>>, vector<2x8x512xf32>,
    } else {
    }
    return
  }
  func.func @transform_0(%arg0: i32) -> (i32, i32, i32) {
    %c0_i32 = arith.constant 0 : i32
    %c0_i32_0 = arith.constant 0 : i32
    %c0_i32_1 = arith.constant 0 : i32
    %c0_i32_2 = arith.constant 0 : i32
    return %c0_i32, %c0_i32_0, %c0_i32_1 : i32, i32, i32
  }
  func.func @transform_1(%arg0: i32) -> (i32, i32, i32) {
    %c0_i32 = arith.constant 0 : i32
    %c0_i32_0 = arith.constant 0 : i32
    %c0_i32_1 = arith.constant 0 : i32
    return %arg0, %c0_i32, %c0_i32_0 : i32, i32, i32
  }
  func.func @transform_2(%arg0: i32) -> (i32, i32, i32) {
    %c0_i32 = arith.constant 0 : i32
    %c0_i32_0 = arith.constant 0 : i32
    %c0_i32_1 = arith.constant 0 : i32
    return %arg0, %c0_i32, %c0_i32_0 : i32, i32, i32
  }
  func.func @transform_3(%arg0: i32) -> (i32, i32, i32) {
    %c0_i32 = arith.constant 0 : i32
    %c0_i32_0 = arith.constant 0 : i32
    %c0_i32_1 = arith.constant 0 : i32
    return %arg0, %c0_i32, %c0_i32_0 : i32, i32, i32
  }
  func.func @transform_4(%arg0: i32) -> (i32, i32, i32) {
    %c0_i32 = arith.constant 0 : i32
    %c0_i32_0 = arith.constant 0 : i32
    %c0_i32_1 = arith.constant 0 : i32
    return %arg0, %c0_i32, %c0_i32_0 : i32, i32, i32
  }
  func.func @transform_5(%arg0: i32) -> (i32, i32, i32) {
    %c0_i32 = arith.constant 0 : i32
    %c0_i32_0 = arith.constant 0 : i32
    %c0_i32_1 = arith.constant 0 : i32
    return %arg0, %c0_i32, %c0_i32_0 : i32, i32, i32
  }
  func.func @transform_6(%arg0: i32) -> (i32, i32) {
    %c0_i32 = arith.constant 0 : i32
    %c0_i32_0 = arith.constant 0 : i32
    %c0_i32_1 = arith.constant 0 : i32
    return %c0_i32, %c0_i32_0 : i32, i32
  }
  func.func @transform_7(%arg0: i32) -> (i32, i32, i32) {
    %c0_i32 = arith.constant 0 : i32
    %c0_i32_0 = arith.constant 0 : i32
    %c0_i32_1 = arith.constant 0 : i32
    %c0_i32_2 = arith.constant 0 : i32
    return %c0_i32, %c0_i32_0, %c0_i32_1 : i32, i32, i32
  }
  func.func @transform_8(%arg0: i32) -> (i32, i32, i32) {
    %c0_i32 = arith.constant 0 : i32
    %c0_i32_0 = arith.constant 0 : i32
    %c0_i32_1 = arith.constant 0 : i32
    %c0_i32_2 = arith.constant 0 : i32
    return %c0_i32, %c0_i32_0, %c0_i32_1 : i32, i32, i32
  }
}

</mosaic_0001>

<llo_original>
// kernel: tpu_custom_call.1
$region0: #{tpu_custom_call.1}
  #allocation0 [shape = 'u32[]', space=smem, size = 0x4, offset = 0x4, fixed_abs, tag = 'smem constant byte address 0x4 - core index']
  #allocation1 [shape = 'u32[144,128]{1,0:T(1,128)}', space=vmem, size = 0x12000, scoped, tag = 'internal scratch']
  %s0 = inlined_call_operand.hbm [shape: f32[2,8,512], index: 0, kind: input, shape index: {}]
  %s1 = inlined_call_operand.hbm [shape: bf16[2,512,1536], index: 1, kind: input, shape index: {}]
  %s2 = inlined_call_operand.hbm [shape: bf16[2,512,512], index: 2, kind: input, shape index: {}]
  %s3 = inlined_call_operand.hbm [shape: bf16[2,512,1024], index: 3, kind: input, shape index: {}]
  %s4 = inlined_call_operand.hbm [shape: bf16[2,1024,512], index: 4, kind: input, shape index: {}]
  %s5 = inlined_call_operand.hbm [shape: f32[2,8,1536], index: 5, kind: input, shape index: {}]
  %s6 = inlined_call_operand.hbm [shape: f32[8,512], index: 6, kind: input, shape index: {}]
  %s7 = inlined_call_operand.hbm [shape: f32[2,8,512], index: 7, kind: output, shape index: {0}]
  %s8 = inlined_call_operand.hbm [shape: f32[2,8,512], index: 8, kind: output, shape index: {1}]
  %9 = xla_tuple %s7, %s8
  %s10 = sld [smem:[#allocation0]]
  $region105: #{tpu_custom_call.1} parent=0
    _
  %s12 = ssub.s32 1, %s10
  %s13 = scalar_select 0, %s12, %s10
  $region1: #{tpu_custom_call.1} parent=0
    #allocation2 [shape = 'u8[32768]{0}', space=vmem, size = 0x8000, scoped, tag = 'input window, operand 0, single buffered']
    #allocation3 [shape = 's32[2]{0}', space=sflag, size = 0x8, scoped, tag = 'scoped memory for tpu_custom_call.1']
    #allocation4 [shape = 's32[2]{0}', space=sflag, size = 0x8, scoped, tag = 'scoped memory for tpu_custom_call.1']
    #allocation5 [shape = 'u8[3145728]{0}', space=vmem, size = 0x300000, scoped, tag = 'input window, operand 1']
    #allocation6 [shape = 's32[2]{0}', space=sflag, size = 0x8, scoped, tag = 'scoped memory for tpu_custom_call.1']
    #allocation7 [shape = 'u8[1048576]{0}', space=vmem, size = 0x100000, scoped, tag = 'input window, operand 2']
    #allocation8 [shape = 'u8[2097152]{0}', space=vmem, size = 0x200000, scoped, tag = 'input window, operand 3']
    #allocation9 [shape = 's32[2]{0}', space=sflag, size = 0x8, scoped, tag = 'scoped memory for tpu_custom_call.1']
    #allocation10 [shape = 'u8[2097152]{0}', space=vmem, size = 0x200000, scoped, tag = 'input window, operand 4']
    #allocation11 [shape = 'u8[98304]{0}', space=vmem, size = 0x18000, scoped, tag = 'input window, operand 5']
    #allocation12 [shape = 's32[2]{0}', space=sflag, size = 0x8, scoped, tag = 'scoped memory for tpu_custom_call.1']
    #allocation13 [shape = 'u8[16384]{0}', space=vmem, size = 0x4000, scoped, tag = 'input window, operand 6, single buffered']
    #allocation14 [shape = 'u8[32768]{0}', space=vmem, size = 0x8000, scoped, tag = 'output window, operand 0, single buffered']
    #allocation15 [shape = 'u8[32768]{0}', space=vmem, size = 0x8000, scoped, tag = 'output window, operand 1, single buffered']
    #allocation16 [shape = 's32[1]{0}', space=sflag, size = 0x4, scoped, tag = 'scoped memory for tpu_custom_call.1']
    %14 = vsyncpa [#allocation3], 0
    %15 = vsyncpa [#allocation6], 0
    %s16 = scalar_lea.sflag [#allocation6], 1
    %17 = vsyncpa %s16, 0
    %18 = vsyncpa [#allocation9], 0
    %s19 = scalar_lea.sflag [#allocation9], 1
    %20 = vsyncpa %s19, 0
    %21 = vsyncpa [#allocation12], 0
    %s22 = scalar_lea.sflag [#allocation12], 1
    %23 = vsyncpa %s22, 0
    %24 = vsyncpa [#allocation4], 0
    %25 = vsyncpa [#allocation16], 0
    loop: start=0, step=1, limit=4
    $region2: #{tpu_custom_call.1} parent=1 // loop_pre_header
      _
    $region3: #{tpu_custom_call.1} parent=1 // loop_header
      %s27 = sphi 0, %s31
      %p28 = scmp.ge.s32.totalorder %s27, 4
      %s35 = sphi 0, %s35
      %s37 = sphi 0, %s35
      %s38 = sphi 0, %s37
      %s52 = sphi 0, %s38
      %s58 = sphi 0, %s60
      %s61 = sphi 0, %s58
      %s62 = sphi 0, %s61
      %s78 = sphi 0, %s62
      %s84 = sphi 0, %s86
      %s87 = sphi 0, %s84
      %s88 = sphi 0, %s87
      %s104 = sphi 0, %s88
      %s110 = sphi 0, %s112
      %s113 = sphi 0, %s110
      %s114 = sphi 0, %s113
      %s130 = sphi 0, %s114
      %s136 = sphi 0, %s138
      %s139 = sphi 0, %s136
      %s140 = sphi 0, %s139
      %s156 = sphi 0, %s140
      %s162 = sphi 0, %s164
      %s165 = sphi 0, %s162
      %s166 = sphi 0, %s165
      %s182 = sphi 0, %s166
      %s186 = sphi 0, %s186
      %s188 = sphi 0, %s186
      %s189 = sphi 0, %s188
      %s203 = sphi 0, %s189
      %s207 = sphi 0, %s207
      %s209 = sphi 0, %s207
      %s210 = sphi 0, %s209
      %s224 = sphi 0, %s210
      %s228 = sphi 0, %s228
      %s230 = sphi 0, %s228
      %s231 = sphi 0, %s230
      %s245 = sphi 0, %s231
    $region4: #{tpu_custom_call.1} parent=1 // loop_header_branch
      %30 = sbr.rel (%p28) target = $region8
    $region5: #{tpu_custom_call.1} parent=1 // loop_body
      %s32 = ssub.s32 %s27, 1
      %s33 = ssub.s32 %s27, 2
      %s34 = sadd.s32 %s27, 1
      %s36 = sadd.s32 %s35, 1
      %p39 = scmp.eq.s32.totalorder %s27, 1
      %p40 = scmp.ne.s32.totalorder %s35, %s37
      %p41 = scmp.eq.s32.totalorder %s27, 0
      %p42 = por %p40, %p41
      %p43 = scmp.ne.s32.totalorder %s35, %s37
      %p44 = scmp.eq.s32.totalorder %s32, 1
      %p45 = por %p43, %p44
      %p46 = scmp.ne.s32.totalorder %s37, %s38
      %p47 = scmp.eq.s32.totalorder %s32, 0
      %p48 = por %p46, %p47
      %p49 = scmp.ne.s32.totalorder %s37, %s38
      %p50 = scmp.eq.s32.totalorder %s33, 1
      %p51 = por %p49, %p50
      %p53 = scmp.ne.s32.totalorder %s38, %s52
      %p54 = scmp.eq.s32.totalorder %s33, 0
      %p55 = por %p53, %p54
      %s56 = ssub.s32 %s27, %s34
      %p57 = scmp.eq.s32.totalorder %s56, 0
      %s59 = sadd.s32 %s58, 1
      %s60 = scalar_select %p57, %s58, %s59
      %p63 = pneg %p57
      %p64 = scmp.eq.s32.totalorder %s27, 1
      %p65 = por %p63, %p64
      %p66 = scmp.ne.s32.totalorder %s58, %s61
      %p67 = scmp.eq.s32.totalorder %s27, 0
      %p68 = por %p66, %p67
      %p69 = scmp.ne.s32.totalorder %s58, %s61
      %p70 = scmp.eq.s32.totalorder %s32, 1
      %p71 = por %p69, %p70
      %p72 = scmp.ne.s32.totalorder %s61, %s62
      %p73 = scmp.eq.s32.totalorder %s32, 0
      %p74 = por %p72, %p73
      %p75 = scmp.ne.s32.totalorder %s61, %s62
      %p76 = scmp.eq.s32.totalorder %s33, 1
      %p77 = por %p75, %p76
      %p79 = scmp.ne.s32.totalorder %s62, %s78
      %p80 = scmp.eq.s32.totalorder %s33, 0
      %p81 = por %p79, %p80
      %s82 = ssub.s32 %s27, %s34
      %p83 = scmp.eq.s32.totalorder %s82, 0
      %s85 = sadd.s32 %s84, 1
      %s86 = scalar_select %p83, %s84, %s85
      %p89 = pneg %p83
      %p90 = scmp.eq.s32.totalorder %s27, 1
      %p91 = por %p89, %p90
      %p92 = scmp.ne.s32.totalorder %s84, %s87
      %p93 = scmp.eq.s32.totalorder %s27, 0
      %p94 = por %p92, %p93
      %p95 = scmp.ne.s32.totalorder %s84, %s87
      %p96 = scmp.eq.s32.totalorder %s32, 1
      %p97 = por %p95, %p96
      %p98 = scmp.ne.s32.totalorder %s87, %s88
      %p99 = scmp.eq.s32.totalorder %s32, 0
      %p100 = por %p98, %p99
      %p101 = scmp.ne.s32.totalorder %s87, %s88
      %p102 = scmp.eq.s32.totalorder %s33, 1
      %p103 = por %p101, %p102
      %p105 = scmp.ne.s32.totalorder %s88, %s104
      %p106 = scmp.eq.s32.totalorder %s33, 0
      %p107 = por %p105, %p106
      %s108 = ssub.s32 %s27, %s34
      %p109 = scmp.eq.s32.totalorder %s108, 0
      %s111 = sadd.s32 %s110, 1
      %s112 = scalar_select %p109, %s110, %s111
      %p115 = pneg %p109
      %p116 = scmp.eq.s32.totalorder %s27, 1
      %p117 = por %p115, %p116
      %p118 = scmp.ne.s32.totalorder %s110, %s113
      %p119 = scmp.eq.s32.totalorder %s27, 0
      %p120 = por %p118, %p119
      %p121 = scmp.ne.s32.totalorder %s110, %s113
      %p122 = scmp.eq.s32.totalorder %s32, 1
      %p123 = por %p121, %p122
      %p124 = scmp.ne.s32.totalorder %s113, %s114
      %p125 = scmp.eq.s32.totalorder %s32, 0
      %p126 = por %p124, %p125
      %p127 = scmp.ne.s32.totalorder %s113, %s114
      %p128 = scmp.eq.s32.totalorder %s33, 1
      %p129 = por %p127, %p128
      %p131 = scmp.ne.s32.totalorder %s114, %s130
      %p132 = scmp.eq.s32.totalorder %s33, 0
      %p133 = por %p131, %p132
      %s134 = ssub.s32 %s27, %s34
      %p135 = scmp.eq.s32.totalorder %s134, 0
      %s137 = sadd.s32 %s136, 1
      %s138 = scalar_select %p135, %s136, %s137
      %p141 = pneg %p135
      %p142 = scmp.eq.s32.totalorder %s27, 1
      %p143 = por %p141, %p142
      %p144 = scmp.ne.s32.totalorder %s136, %s139
      %p145 = scmp.eq.s32.totalorder %s27, 0
      %p146 = por %p144, %p145
      %p147 = scmp.ne.s32.totalorder %s136, %s139
      %p148 = scmp.eq.s32.totalorder %s32, 1
      %p149 = por %p147, %p148
      %p150 = scmp.ne.s32.totalorder %s139, %s140
      %p151 = scmp.eq.s32.totalorder %s32, 0
      %p152 = por %p150, %p151
      %p153 = scmp.ne.s32.totalorder %s139, %s140
      %p154 = scmp.eq.s32.totalorder %s33, 1
      %p155 = por %p153, %p154
      %p157 = scmp.ne.s32.totalorder %s140, %s156
      %p158 = scmp.eq.s32.totalorder %s33, 0
      %p159 = por %p157, %p158
      %s160 = ssub.s32 %s27, %s34
      %p161 = scmp.eq.s32.totalorder %s160, 0
      %s163 = sadd.s32 %s162, 1
      %s164 = scalar_select %p161, %s162, %s163
      %p167 = pneg %p161
      %p168 = scmp.eq.s32.totalorder %s27, 1
      %p169 = por %p167, %p168
      %p170 = scmp.ne.s32.totalorder %s162, %s165
      %p171 = scmp.eq.s32.totalorder %s27, 0
      %p172 = por %p170, %p171
      %p173 = scmp.ne.s32.totalorder %s162, %s165
      %p174 = scmp.eq.s32.totalorder %s32, 1
      %p175 = por %p173, %p174
      %p176 = scmp.ne.s32.totalorder %s165, %s166
      %p177 = scmp.eq.s32.totalorder %s32, 0
      %p178 = por %p176, %p177
      %p179 = scmp.ne.s32.totalorder %s165, %s166
      %p180 = scmp.eq.s32.totalorder %s33, 1
      %p181 = por %p179, %p180
      %p183 = scmp.ne.s32.totalorder %s166, %s182
      %p184 = scmp.eq.s32.totalorder %s33, 0
      %p185 = por %p183, %p184
      %s187 = sadd.s32 %s186, 1
      %p190 = scmp.eq.s32.totalorder %s27, 1
      %p191 = scmp.ne.s32.totalorder %s186, %s188
      %p192 = scmp.eq.s32.totalorder %s27, 0
      %p193 = por %p191, %p192
      %p194 = scmp.ne.s32.totalorder %s186, %s188
      %p195 = scmp.eq.s32.totalorder %s32, 1
      %p196 = por %p194, %p195
      %p197 = scmp.ne.s32.totalorder %s188, %s189
      %p198 = scmp.eq.s32.totalorder %s32, 0
      %p199 = por %p197, %p198
      %p200 = scmp.ne.s32.totalorder %s188, %s189
      %p201 = scmp.eq.s32.totalorder %s33, 1
      %p202 = por %p200, %p201
      %p204 = scmp.ne.s32.totalorder %s189, %s203
      %p205 = scmp.eq.s32.totalorder %s33, 0
      %p206 = por %p204, %p205
      %s208 = sadd.s32 %s207, 1
      %p211 = scmp.eq.s32.totalorder %s27, 1
      %p212 = scmp.ne.s32.totalorder %s207, %s209
      %p213 = scmp.eq.s32.totalorder %s27, 0
      %p214 = por %p212, %p213
      %p215 = scmp.ne.s32.totalorder %s207, %s209
      %p216 = scmp.eq.s32.totalorder %s32, 1
      %p217 = por %p215, %p216
      %p218 = scmp.ne.s32.totalorder %s209, %s210
      %p219 = scmp.eq.s32.totalorder %s32, 0
      %p220 = por %p218, %p219
      %p221 = scmp.ne.s32.totalorder %s209, %s210
      %p222 = scmp.eq.s32.totalorder %s33, 1
      %p223 = por %p221, %p222
      %p225 = scmp.ne.s32.totalorder %s210, %s224
      %p226 = scmp.eq.s32.totalorder %s33, 0
      %p227 = por %p225, %p226
      %s229 = sadd.s32 %s228, 1
      %p232 = scmp.eq.s32.totalorder %s27, 1
      %p233 = scmp.ne.s32.totalorder %s228, %s230
      %p234 = scmp.eq.s32.totalorder %s27, 0
      %p235 = por %p233, %p234
      %p236 = scmp.ne.s32.totalorder %s228, %s230
      %p237 = scmp.eq.s32.totalorder %s32, 1
      %p238 = por %p236, %p237
      %p239 = scmp.ne.s32.totalorder %s230, %s231
      %p240 = scmp.eq.s32.totalorder %s32, 0
      %p241 = por %p239, %p240
      %p242 = scmp.ne.s32.totalorder %s230, %s231
      %p243 = scmp.eq.s32.totalorder %s33, 1
      %p244 = por %p242, %p243
      %p246 = scmp.ne.s32.totalorder %s231, %s245
      %p247 = scmp.eq.s32.totalorder %s33, 0
      %p248 = por %p246, %p247
      %p249 = scmp.le.s32.totalorder 1, %s27
      %p250 = scmp.lt.s32.totalorder %s27, 3
      %p251 = pnand %p249, %p250
      %p252 = pneg %p251
      // Predicated region
      $region9: #{tpu_custom_call.1} parent=5 // pred_check
        _
      $region10: #{tpu_custom_call.1} parent=5 // pred_check_branch
        %254 = sbr.rel (%p251) target = $region12
      $region11: #{tpu_custom_call.1} parent=5 // pred_region
        %s255 = ssub.s32 %s27, 1
        // Predicated region
        $region13: #{tpu_custom_call.1} parent=11 // pred_check
          %p256 = pneg %p48
        $region14: #{tpu_custom_call.1} parent=11 // pred_check_branch
          %258 = sbr.rel (%p256) target = $region16
        $region15: #{tpu_custom_call.1} parent=11 // pred_region
          %s260 = ssub.s32 1024, 1024
          %261 = vsyncadd [#allocation3], %s260
          %s262 = sshll.u32 [#allocation2], 4
          %s263 = int_to_ptr.vmem [resolvable:$true] %s262
          %268 = dma.hbm_to_vmem [thread:$0]  %s0, 1024, %s263, [#allocation3], 512, 512, 32
        $region16: #{tpu_custom_call.1} parent=11 // pred_fallthru
          _
        // Predicated region
        $region17: #{tpu_custom_call.1} parent=11 // pred_check
          %p269 = pneg %p199
        $region18: #{tpu_custom_call.1} parent=11 // pred_check_branch
          %271 = sbr.rel (%p269) target = $region20
        $region19: #{tpu_custom_call.1} parent=11 // pred_region
          %s273 = ssub.s32 512, 512
          %274 = vsyncadd [#allocation12], %s273
          %s276 = sshll.u32 [#allocation13], 4
          %s277 = int_to_ptr.vmem [resolvable:$true] %s276
          %279 = dma.hbm_to_vmem [thread:$0]  %s6, 512, %s277, [#allocation12]
        $region20: #{tpu_custom_call.1} parent=11 // pred_fallthru
          _
      $region12: #{tpu_custom_call.1} parent=5 // pred_fallthru
        _
      %p280 = scmp.lt.s32.totalorder %s27, 2
      // Predicated region
      $region21: #{tpu_custom_call.1} parent=5 // pred_check
        %p281 = pneg %p280
      $region22: #{tpu_custom_call.1} parent=5 // pred_check_branch
        %283 = sbr.rel (%p281) target = $region24
      $region23: #{tpu_custom_call.1} parent=5 // pred_region
        // Predicated region
        $region25: #{tpu_custom_call.1} parent=23 // pred_check
          %p284 = pneg %p68
        $region26: #{tpu_custom_call.1} parent=23 // pred_check_branch
          %286 = sbr.rel (%p284) target = $region28
        $region27: #{tpu_custom_call.1} parent=23 // pred_region
          %s287 = sand.u32 %s27, 1
          %s288 = scalar_lea.sflag [#allocation6], %s287
          %s289 = sand.u32 %s58, 1
          %s290 = smul.addr %s289, 3072
          %s291 = scalar_lea.vmem [#allocation5], %s290
          %s293 = ssub.s32 49152, 49152
          %294 = vsyncadd %s288, %s293
          %s295 = smul.addr %s27, 768
          %s296 = smul.addr %s295, 64
          %s297 = scalar_lea.hbm %s1, %s296
          %s298 = sshll.u32 %s291, 4
          %s299 = int_to_ptr.vmem [resolvable:$true] %s298
          %304 = dma.hbm_to_vmem [thread:$0]  %s297, 49152, %s299, %s288, 768, 768, 48
        $region28: #{tpu_custom_call.1} parent=23 // pred_fallthru
          _
        // Predicated region
        $region29: #{tpu_custom_call.1} parent=23 // pred_check
          %p305 = pneg %p94
        $region30: #{tpu_custom_call.1} parent=23 // pred_check_branch
          %307 = sbr.rel (%p305) target = $region32
        $region31: #{tpu_custom_call.1} parent=23 // pred_region
          %s308 = sand.u32 %s27, 1
          %s309 = scalar_lea.sflag [#allocation6], %s308
          %s310 = sand.u32 %s84, 1
          %s311 = smul.addr %s310, 1024
          %s312 = scalar_lea.vmem [#allocation7], %s311
          %s314 = ssub.s32 16384, 16384
          %315 = vsyncadd %s309, %s314
          %s316 = smul.addr %s27, 256
          %s317 = smul.addr %s316, 64
          %s318 = scalar_lea.hbm %s2, %s317
          %s319 = sshll.u32 %s312, 4
          %s320 = int_to_ptr.vmem [resolvable:$true] %s319
          %325 = dma.hbm_to_vmem [thread:$0]  %s318, 16384, %s320, %s309, 256, 256, 16
        $region32: #{tpu_custom_call.1} parent=23 // pred_fallthru
          _
        // Predicated region
        $region33: #{tpu_custom_call.1} parent=23 // pred_check
          %p326 = pneg %p120
        $region34: #{tpu_custom_call.1} parent=23 // pred_check_branch
          %328 = sbr.rel (%p326) target = $region36
        $region35: #{tpu_custom_call.1} parent=23 // pred_region
          %s329 = sand.u32 %s27, 1
          %s330 = scalar_lea.sflag [#allocation9], %s329
          %s331 = sand.u32 %s110, 1
          %s332 = smul.addr %s331, 2048
          %s333 = scalar_lea.vmem [#allocation8], %s332
          %s335 = ssub.s32 32768, 32768
          %336 = vsyncadd %s330, %s335
          %s337 = smul.addr %s27, 512
          %s338 = smul.addr %s337, 64
          %s339 = scalar_lea.hbm %s3, %s338
          %s340 = sshll.u32 %s333, 4
          %s341 = int_to_ptr.vmem [resolvable:$true] %s340
          %346 = dma.hbm_to_vmem [thread:$0]  %s339, 32768, %s341, %s330, 512, 512, 32
        $region36: #{tpu_custom_call.1} parent=23 // pred_fallthru
          _
        // Predicated region
        $region37: #{tpu_custom_call.1} parent=23 // pred_check
          %p347 = pneg %p146
        $region38: #{tpu_custom_call.1} parent=23 // pred_check_branch
          %349 = sbr.rel (%p347) target = $region40
        $region39: #{tpu_custom_call.1} parent=23 // pred_region
          %s350 = sand.u32 %s27, 1
          %s351 = scalar_lea.sflag [#allocation9], %s350
          %s352 = sand.u32 %s136, 1
          %s353 = smul.addr %s352, 2048
          %s354 = scalar_lea.vmem [#allocation10], %s353
          %s356 = ssub.s32 32768, 32768
          %357 = vsyncadd %s351, %s356
          %s358 = smul.addr %s27, 512
          %s359 = smul.addr %s358, 64
          %s360 = scalar_lea.hbm %s4, %s359
          %s361 = sshll.u32 %s354, 4
          %s362 = int_to_ptr.vmem [resolvable:$true] %s361
          %367 = dma.hbm_to_vmem [thread:$0]  %s360, 32768, %s362, %s351, 256, 256, 16
        $region40: #{tpu_custom_call.1} parent=23 // pred_fallthru
          _
        // Predicated region
        $region41: #{tpu_custom_call.1} parent=23 // pred_check
          %p368 = pneg %p172
        $region42: #{tpu_custom_call.1} parent=23 // pred_check_branch
          %370 = sbr.rel (%p368) target = $region44
        $region43: #{tpu_custom_call.1} parent=23 // pred_region
          %s371 = sand.u32 %s27, 1
          %s372 = scalar_lea.sflag [#allocation12], %s371
          %s373 = sand.u32 %s162, 1
          %s374 = smul.addr %s373, 96
          %s375 = scalar_lea.vmem [#allocation11], %s374
          %s377 = ssub.s32 1536, 1536
          %378 = vsyncadd %s372, %s377
          %s379 = smul.addr %s27, 12
          %s380 = smul.addr %s379, 128
          %s381 = scalar_lea.hbm %s5, %s380
          %s383 = sshll.u32 %s375, 4
          %s384 = int_to_ptr.vmem [resolvable:$true] %s383
          %386 = dma.hbm_to_vmem [thread:$0]  %s381, 1536, %s384, %s372
        $region44: #{tpu_custom_call.1} parent=23 // pred_fallthru
          _
      $region24: #{tpu_custom_call.1} parent=5 // pred_fallthru
        _
      %p387 = scmp.le.s32.totalorder 1, %s27
      %p388 = scmp.lt.s32.totalorder %s27, 3
      %p389 = pnand %p387, %p388
      %p390 = pneg %p389
      // Predicated region
      $region45: #{tpu_custom_call.1} parent=5 // pred_check
        _
      $region46: #{tpu_custom_call.1} parent=5 // pred_check_branch
        %392 = sbr.rel (%p389) target = $region48
      $region47: #{tpu_custom_call.1} parent=5 // pred_region
        %s393 = ssub.s32 %s27, 1
        // Predicated region
        $region49: #{tpu_custom_call.1} parent=47 // pred_check
          %p394 = pneg %p48
        $region50: #{tpu_custom_call.1} parent=47 // pred_check_branch
          %396 = sbr.rel (%p394) target = $region52
        $region51: #{tpu_custom_call.1} parent=47 // pred_region
          %397 = dma.done [#allocation3], 1024
        $region52: #{tpu_custom_call.1} parent=47 // pred_fallthru
          _
        %s398 = sand.u32 %s32, 1
        %s399 = scalar_lea.sflag [#allocation6], %s398
        %s400 = sand.u32 %s61, 1
        %s401 = smul.addr %s400, 3072
        %s402 = scalar_lea.vmem [#allocation5], %s401
        // Predicated region
        $region53: #{tpu_custom_call.1} parent=47 // pred_check
          %p403 = pneg %p74
        $region54: #{tpu_custom_call.1} parent=47 // pred_check_branch
          %405 = sbr.rel (%p403) target = $region56
        $region55: #{tpu_custom_call.1} parent=47 // pred_region
          %406 = dma.done %s399, 49152
        $region56: #{tpu_custom_call.1} parent=47 // pred_fallthru
          _
        %s407 = sand.u32 %s32, 1
        %s408 = scalar_lea.sflag [#allocation6], %s407
        %s409 = sand.u32 %s87, 1
        %s410 = smul.addr %s409, 1024
        %s411 = scalar_lea.vmem [#allocation7], %s410
        // Predicated region
        $region57: #{tpu_custom_call.1} parent=47 // pred_check
          %p412 = pneg %p100
        $region58: #{tpu_custom_call.1} parent=47 // pred_check_branch
          %414 = sbr.rel (%p412) target = $region60
        $region59: #{tpu_custom_call.1} parent=47 // pred_region
          %415 = dma.done %s408, 16384
        $region60: #{tpu_custom_call.1} parent=47 // pred_fallthru
          _
        %s416 = sand.u32 %s32, 1
        %s417 = scalar_lea.sflag [#allocation9], %s416
        %s418 = sand.u32 %s113, 1
        %s419 = smul.addr %s418, 2048
        %s420 = scalar_lea.vmem [#allocation8], %s419
        // Predicated region
        $region61: #{tpu_custom_call.1} parent=47 // pred_check
          %p421 = pneg %p126
        $region62: #{tpu_custom_call.1} parent=47 // pred_check_branch
          %423 = sbr.rel (%p421) target = $region64
        $region63: #{tpu_custom_call.1} parent=47 // pred_region
          %424 = dma.done %s417, 32768
        $region64: #{tpu_custom_call.1} parent=47 // pred_fallthru
          _
        %s425 = sand.u32 %s32, 1
        %s426 = scalar_lea.sflag [#allocation9], %s425
        %s427 = sand.u32 %s139, 1
        %s428 = smul.addr %s427, 2048
        %s429 = scalar_lea.vmem [#allocation10], %s428
        // Predicated region
        $region65: #{tpu_custom_call.1} parent=47 // pred_check
          %p430 = pneg %p152
        $region66: #{tpu_custom_call.1} parent=47 // pred_check_branch
          %432 = sbr.rel (%p430) target = $region68
        $region67: #{tpu_custom_call.1} parent=47 // pred_region
          %433 = dma.done %s426, 32768
        $region68: #{tpu_custom_call.1} parent=47 // pred_fallthru
          _
        %s434 = sand.u32 %s32, 1
        %s435 = scalar_lea.sflag [#allocation12], %s434
        %s436 = sand.u32 %s165, 1
        %s437 = smul.addr %s436, 96
        %s438 = scalar_lea.vmem [#allocation11], %s437
        // Predicated region
        $region69: #{tpu_custom_call.1} parent=47 // pred_check
          %p439 = pneg %p178
        $region70: #{tpu_custom_call.1} parent=47 // pred_check_branch
          %441 = sbr.rel (%p439) target = $region72
        $region71: #{tpu_custom_call.1} parent=47 // pred_region
          %442 = dma.done %s435, 1536
        $region72: #{tpu_custom_call.1} parent=47 // pred_fallthru
          _
        // Predicated region
        $region73: #{tpu_custom_call.1} parent=47 // pred_check
          %p443 = pneg %p199
        $region74: #{tpu_custom_call.1} parent=47 // pred_check_branch
          %445 = sbr.rel (%p443) target = $region76
        $region75: #{tpu_custom_call.1} parent=47 // pred_region
          %446 = dma.done [#allocation12], 512
        $region76: #{tpu_custom_call.1} parent=47 // pred_fallthru
          _
        %p447 = pneg %p48
        %p448 = pneg %p45
        %s449 = sand.u32 %s32, 1
        %s450 = scalar_lea.sflag [#allocation6], %s449
        %s451 = sand.u32 %s61, 1
        %s452 = smul.addr %s451, 3072
        %s453 = scalar_lea.vmem [#allocation5], %s452
        %p454 = pneg %p74
        %p455 = pneg %p71
        %s456 = sand.u32 %s32, 1
        %s457 = scalar_lea.sflag [#allocation6], %s456
        %s458 = sand.u32 %s87, 1
        %s459 = smul.addr %s458, 1024
        %s460 = scalar_lea.vmem [#allocation7], %s459
        %p461 = pneg %p100
        %p462 = pneg %p97
        %s463 = sand.u32 %s32, 1
        %s464 = scalar_lea.sflag [#allocation9], %s463
        %s465 = sand.u32 %s113, 1
        %s466 = smul.addr %s465, 2048
        %s467 = scalar_lea.vmem [#allocation8], %s466
        %p468 = pneg %p126
        %p469 = pneg %p123
        %s470 = sand.u32 %s32, 1
        %s471 = scalar_lea.sflag [#allocation9], %s470
        %s472 = sand.u32 %s139, 1
        %s473 = smul.addr %s472, 2048
        %s474 = scalar_lea.vmem [#allocation10], %s473
        %p475 = pneg %p152
        %p476 = pneg %p149
        %s477 = sand.u32 %s32, 1
        %s478 = scalar_lea.sflag [#allocation12], %s477
        %s479 = sand.u32 %s165, 1
        %s480 = smul.addr %s479, 96
        %s481 = scalar_lea.vmem [#allocation11], %s480
        %p482 = pneg %p178
        %p483 = pneg %p175
        %p484 = pneg %p199
        %p485 = pneg %p196
        %p486 = pneg %p220
        %p487 = pneg %p217
        %p488 = pneg %p241
        %p489 = pneg %p238
        %p490 = scmp.eq.s32.totalorder %s32, 0
        // Predicated region
        $region77: #{tpu_custom_call.1} parent=47 // pred_check
          %p491 = pneg %p490
        $region78: #{tpu_custom_call.1} parent=47 // pred_check_branch
          %493 = sbr.rel (%p491) target = $region80
        $region79: #{tpu_custom_call.1} parent=47 // pred_region
          %v494 = vld [vmem:[#allocation2] sm:$0xff]
          %v495 = vld [vmem:[#allocation2 + $0x8] sm:$0xff]
          %v496 = vld [vmem:[#allocation2 + $0x10] sm:$0xff]
          %v497 = vld [vmem:[#allocation2 + $0x18] sm:$0xff]
          %v498 = vld [vmem:[#allocation2 + $0x20] sm:$0xff]
          %v499 = vld [vmem:[#allocation2 + $0x28] sm:$0xff]
          %v500 = vld [vmem:[#allocation2 + $0x30] sm:$0xff]
          %v501 = vld [vmem:[#allocation2 + $0x38] sm:$0xff]
          %502 = vst [vmem:[#allocation14] sm:$0xff] %v494
          %503 = vst [vmem:[#allocation14 + $0x8] sm:$0xff] %v495
          %504 = vst [vmem:[#allocation14 + $0x10] sm:$0xff] %v496
          %505 = vst [vmem:[#allocation14 + $0x18] sm:$0xff] %v497
          %506 = vst [vmem:[#allocation14 + $0x20] sm:$0xff] %v498
          %507 = vst [vmem:[#allocation14 + $0x28] sm:$0xff] %v499
          %508 = vst [vmem:[#allocation14 + $0x30] sm:$0xff] %v500
          %509 = vst [vmem:[#allocation14 + $0x38] sm:$0xff] %v501
        $region80: #{tpu_custom_call.1} parent=47 // pred_fallthru
          _
        %v510 = vld [vmem:[#allocation14] sm:$0xff]
        %v511 = vld [vmem:[#allocation14 + $0x8] sm:$0xff]
        %v512 = vld [vmem:[#allocation14 + $0x10] sm:$0xff]
        %v513 = vld [vmem:[#allocation14 + $0x18] sm:$0xff]
        %v514 = vld [vmem:[#allocation14 + $0x20] sm:$0xff]
        %v515 = vld [vmem:[#allocation14 + $0x28] sm:$0xff]
        %v516 = vld [vmem:[#allocation14 + $0x30] sm:$0xff]
        %v517 = vld [vmem:[#allocation14 + $0x38] sm:$0xff]
        %v518 = vld [vmem:[%s438] ss:$8 sm:$0xf]
        %v519 = vld [vmem:[%s438] ss:$8 sm:$0xf0]
        %v520 = vor.u32 %v518, %v519
        %s521 = scalar_lea.vmem %s438, 64 [#allocation11]
        %v522 = vld [vmem:[%s521] ss:$8 sm:$0xf]
        %s523 = scalar_lea.vmem %s438, 1 [#allocation11]
        %v524 = vld [vmem:[%s523] ss:$8 sm:$0xf]
        %s525 = scalar_lea.vmem %s438, 33 [#allocation11]
        %v526 = vld [vmem:[%s525] ss:$8 sm:$0xf]
        %s527 = scalar_lea.vmem %s438, 65 [#allocation11]
        %v528 = vld [vmem:[%s527] ss:$8 sm:$0xf]
        %s529 = scalar_lea.vmem %s438, 2 [#allocation11]
        %v530 = vld [vmem:[%s529] ss:$8 sm:$0xf]
        %s531 = scalar_lea.vmem %s438, 34 [#allocation11]
        %v532 = vld [vmem:[%s531] ss:$8 sm:$0xf]
        %s533 = scalar_lea.vmem %s438, 66 [#allocation11]
        %v534 = vld [vmem:[%s533] ss:$8 sm:$0xf]
        %s535 = scalar_lea.vmem %s438, 3 [#allocation11]
        %v536 = vld [vmem:[%s535] ss:$8 sm:$0xf]
        %v537 = vld [vmem:[%s535] ss:$8 sm:$0xf0]
        %v538 = vor.u32 %v536, %v537
        %v539 = vadd.f32 %v510, %v511
        %v540 = vadd.f32 %v539, %v512
        %v541 = vadd.f32 %v540, %v513
        %542 = vadd.xlane.f32.xlu0 %v541
        %v543 = vpop.xlane.xlu0 %542
        %v544 = vadd.f32 %v514, %v515
        %v545 = vadd.f32 %v544, %v516
        %v546 = vadd.f32 %v545, %v517
        %547 = vadd.xlane.f32.xlu0 %v546
        %v548 = vpop.xlane.xlu0 %547
        %v549 = vrcp.pop 512.0
        %v550 = vmul.f32 %v543, %v549
        %v551 = vmul.f32 %v548, %v549
        %v552 = vsub.f32 %v510, %v550
        %v553 = vsub.f32 %v511, %v550
        %v554 = vsub.f32 %v512, %v550
        %v555 = vsub.f32 %v513, %v550
        %v556 = vsub.f32 %v514, %v551
        %v557 = vsub.f32 %v515, %v551
        %v558 = vsub.f32 %v516, %v551
        %v559 = vsub.f32 %v517, %v551
        %v560 = vmul.f32 %v552, %v552
        %v561 = vmul.f32 %v553, %v553
        %v562 = vmul.f32 %v554, %v554
        %v563 = vmul.f32 %v555, %v555
        %v564 = vmul.f32 %v556, %v556
        %v565 = vmul.f32 %v557, %v557
        %v566 = vmul.f32 %v558, %v558
        %v567 = vmul.f32 %v559, %v559
        %v568 = vadd.f32 %v560, %v561
        %v569 = vadd.f32 %v568, %v562
        %v570 = vadd.f32 %v569, %v563
        %571 = vadd.xlane.f32.xlu0 %v570
        %v572 = vpop.xlane.xlu0 %571
        %v573 = vadd.f32 %v564, %v565
        %v574 = vadd.f32 %v573, %v566
        %v575 = vadd.f32 %v574, %v567
        %576 = vadd.xlane.f32.xlu0 %v575
        %v577 = vpop.xlane.xlu0 %576
        %v578 = vmul.f32 %v572, %v549
        %v579 = vmul.f32 %v577, %v549
        %v580 = vadd.f32 %v578, 1e-06
        %v581 = vadd.f32 %v579, 1e-06
        %v582 = vrsqrt.pop %v580
        %v583 = vrsqrt.pop %v581
        %v584 = vmul.f32 %v552, %v582
        %v585 = vmul.f32 %v553, %v582
        %v586 = vmul.f32 %v554, %v582
        %v587 = vmul.f32 %v555, %v582
        %v588 = vmul.f32 %v556, %v583
        %v589 = vmul.f32 %v557, %v583
        %v590 = vmul.f32 %v558, %v583
        %v591 = vmul.f32 %v559, %v583
        %v593 = vlaneseq
        %v594 = vshrl.u32 %v593, 7
        %v595 = vsub.s32 0, %v594
        %v596 = vrot.slane %v524, %v595
        %v597 = vlaneseq
        %v598 = vshrl.u32 %v597, 7
        %v599 = vsub.s32 1, %v598
        %v600 = vrot.slane %v524, %v599
        %v601 = vlaneseq
        %v602 = vshrl.u32 %v601, 7
        %v603 = vsub.s32 2, %v602
        %v604 = vrot.slane %v524, %v603
        %v605 = vlaneseq
        %v606 = vshrl.u32 %v605, 7
        %v607 = vsub.s32 3, %v606
        %v608 = vrot.slane %v524, %v607
        %v613 = vmul.f32 %v584, %v596
        %v614 = vmul.f32 %v585, %v600
        %v615 = vmul.f32 %v586, %v604
        %v616 = vmul.f32 %v587, %v608
        %v617 = vmul.f32 %v588, %v596
        %v618 = vmul.f32 %v589, %v600
        %v619 = vmul.f32 %v590, %v604
        %v620 = vmul.f32 %v591, %v608
        %v622 = vlaneseq
        %v623 = vshrl.u32 %v622, 7
        %v624 = vsub.s32 0, %v623
        %v625 = vrot.slane %v526, %v624
        %v626 = vlaneseq
        %v627 = vshrl.u32 %v626, 7
        %v628 = vsub.s32 1, %v627
        %v629 = vrot.slane %v526, %v628
        %v630 = vlaneseq
        %v631 = vshrl.u32 %v630, 7
        %v632 = vsub.s32 2, %v631
        %v633 = vrot.slane %v526, %v632
        %v634 = vlaneseq
        %v635 = vshrl.u32 %v634, 7
        %v636 = vsub.s32 3, %v635
        %v637 = vrot.slane %v526, %v636
        %v642 = vadd.f32 %v613, %v625
        %v643 = vadd.f32 %v614, %v629
        %v644 = vadd.f32 %v615, %v633
        %v645 = vadd.f32 %v616, %v637
        %v646 = vadd.f32 %v617, %v625
        %v647 = vadd.f32 %v618, %v629
        %v648 = vadd.f32 %v619, %v633
        %v649 = vadd.f32 %v620, %v637
        %v650 = vpack.c.bf16 %v646, %v642
        %v651 = vpack.c.bf16 %v647, %v643
        %v652 = vpack.c.bf16 %v648, %v644
        %v653 = vpack.c.bf16 %v649, %v645
        %v654 = vld [vmem:[%s402] sm:$0xff]
        %v655 = vld [vmem:[%s402 + $0x8] sm:$0xff]
        %v656 = vld [vmem:[%s402 + $0x10] sm:$0xff]
        %v657 = vld [vmem:[%s402 + $0x18] sm:$0xff]
        %v658 = vld [vmem:[%s402 + $0x20] sm:$0xff]
        %v659 = vld [vmem:[%s402 + $0x28] sm:$0xff]
        %v660 = vld [vmem:[%s402 + $0x30] sm:$0xff]
        %v661 = vld [vmem:[%s402 + $0x38] sm:$0xff]
        %v662 = vld [vmem:[%s402 + $0x40] sm:$0xff]
        %v663 = vld [vmem:[%s402 + $0x48] sm:$0xff]
        %v664 = vld [vmem:[%s402 + $0x50] sm:$0xff]
        %v665 = vld [vmem:[%s402 + $0x58] sm:$0xff]
        %v666 = vld [vmem:[%s402 + $0x60] sm:$0xff]
        %v667 = vld [vmem:[%s402 + $0x68] sm:$0xff]
        %v668 = vld [vmem:[%s402 + $0x70] sm:$0xff]
        %v669 = vld [vmem:[%s402 + $0x78] sm:$0xff]
        %v670 = vld [vmem:[%s402 + $0x80] sm:$0xff]
        %v671 = vld [vmem:[%s402 + $0x88] sm:$0xff]
        %v672 = vld [vmem:[%s402 + $0x90] sm:$0xff]
        %v673 = vld [vmem:[%s402 + $0x98] sm:$0xff]
        %v674 = vld [vmem:[%s402 + $0xa0] sm:$0xff]
        %v675 = vld [vmem:[%s402 + $0xa8] sm:$0xff]
        %v676 = vld [vmem:[%s402 + $0xb0] sm:$0xff]
        %v677 = vld [vmem:[%s402 + $0xb8] sm:$0xff]
        %v678 = vld [vmem:[%s402 + $0xc0] sm:$0xff]
        %v679 = vld [vmem:[%s402 + $0xc8] sm:$0xff]
        %v680 = vld [vmem:[%s402 + $0xd0] sm:$0xff]
        %v681 = vld [vmem:[%s402 + $0xd8] sm:$0xff]
        %v682 = vld [vmem:[%s402 + $0xe0] sm:$0xff]
        %v683 = vld [vmem:[%s402 + $0xe8] sm:$0xff]
        %v684 = vld [vmem:[%s402 + $0xf0] sm:$0xff]
        %v685 = vld [vmem:[%s402 + $0xf8] sm:$0xff]
        %v686 = vld [vmem:[%s402 + $0x100] sm:$0xff]
        %v687 = vld [vmem:[%s402 + $0x108] sm:$0xff]
        %v688 = vld [vmem:[%s402 + $0x110] sm:$0xff]
        %v689 = vld [vmem:[%s402 + $0x118] sm:$0xff]
        %v690 = vld [vmem:[%s402 + $0x120] sm:$0xff]
        %v691 = vld [vmem:[%s402 + $0x128] sm:$0xff]
        %v692 = vld [vmem:[%s402 + $0x130] sm:$0xff]
        %v693 = vld [vmem:[%s402 + $0x138] sm:$0xff]
        %v694 = vld [vmem:[%s402 + $0x140] sm:$0xff]
        %v695 = vld [vmem:[%s402 + $0x148] sm:$0xff]
        %v696 = vld [vmem:[%s402 + $0x150] sm:$0xff]
        %v697 = vld [vmem:[%s402 + $0x158] sm:$0xff]
        %v698 = vld [vmem:[%s402 + $0x160] sm:$0xff]
        %v699 = vld [vmem:[%s402 + $0x168] sm:$0xff]
        %v700 = vld [vmem:[%s402 + $0x170] sm:$0xff]
        %v701 = vld [vmem:[%s402 + $0x178] sm:$0xff]
        %v702 = vld [vmem:[%s402 + $0x180] sm:$0xff]
        %v703 = vld [vmem:[%s402 + $0x188] sm:$0xff]
        %v704 = vld [vmem:[%s402 + $0x190] sm:$0xff]
        %v705 = vld [vmem:[%s402 + $0x198] sm:$0xff]
        %v706 = vld [vmem:[%s402 + $0x1a0] sm:$0xff]
        %v707 = vld [vmem:[%s402 + $0x1a8] sm:$0xff]
        %v708 = vld [vmem:[%s402 + $0x1b0] sm:$0xff]
        %v709 = vld [vmem:[%s402 + $0x1b8] sm:$0xff]
        %v710 = vld [vmem:[%s402 + $0x1c0] sm:$0xff]
        %v711 = vld [vmem:[%s402 + $0x1c8] sm:$0xff]
        %v712 = vld [vmem:[%s402 + $0x1d0] sm:$0xff]
        %v713 = vld [vmem:[%s402 + $0x1d8] sm:$0xff]
        %v714 = vld [vmem:[%s402 + $0x1e0] sm:$0xff]
        %v715 = vld [vmem:[%s402 + $0x1e8] sm:$0xff]
        %v716 = vld [vmem:[%s402 + $0x1f0] sm:$0xff]
        %v717 = vld [vmem:[%s402 + $0x1f8] sm:$0xff]
        %v718 = vld [vmem:[%s402 + $0x200] sm:$0xff]
        %v719 = vld [vmem:[%s402 + $0x208] sm:$0xff]
        %v720 = vld [vmem:[%s402 + $0x210] sm:$0xff]
        %v721 = vld [vmem:[%s402 + $0x218] sm:$0xff]
        %v722 = vld [vmem:[%s402 + $0x220] sm:$0xff]
        %v723 = vld [vmem:[%s402 + $0x228] sm:$0xff]
        %v724 = vld [vmem:[%s402 + $0x230] sm:$0xff]
        %v725 = vld [vmem:[%s402 + $0x238] sm:$0xff]
        %v726 = vld [vmem:[%s402 + $0x240] sm:$0xff]
        %v727 = vld [vmem:[%s402 + $0x248] sm:$0xff]
        %v728 = vld [vmem:[%s402 + $0x250] sm:$0xff]
        %v729 = vld [vmem:[%s402 + $0x258] sm:$0xff]
        %v730 = vld [vmem:[%s402 + $0x260] sm:$0xff]
        %v731 = vld [vmem:[%s402 + $0x268] sm:$0xff]
        %v732 = vld [vmem:[%s402 + $0x270] sm:$0xff]
        %v733 = vld [vmem:[%s402 + $0x278] sm:$0xff]
        %v734 = vld [vmem:[%s402 + $0x280] sm:$0xff]
        %v735 = vld [vmem:[%s402 + $0x288] sm:$0xff]
        %v736 = vld [vmem:[%s402 + $0x290] sm:$0xff]
        %v737 = vld [vmem:[%s402 + $0x298] sm:$0xff]
        %v738 = vld [vmem:[%s402 + $0x2a0] sm:$0xff]
        %v739 = vld [vmem:[%s402 + $0x2a8] sm:$0xff]
        %v740 = vld [vmem:[%s402 + $0x2b0] sm:$0xff]
        %v741 = vld [vmem:[%s402 + $0x2b8] sm:$0xff]
        %v742 = vld [vmem:[%s402 + $0x2c0] sm:$0xff]
        %v743 = vld [vmem:[%s402 + $0x2c8] sm:$0xff]
        %v744 = vld [vmem:[%s402 + $0x2d0] sm:$0xff]
        %v745 = vld [vmem:[%s402 + $0x2d8] sm:$0xff]
        %v746 = vld [vmem:[%s402 + $0x2e0] sm:$0xff]
        %v747 = vld [vmem:[%s402 + $0x2e8] sm:$0xff]
        %v748 = vld [vmem:[%s402 + $0x2f0] sm:$0xff]
        %v749 = vld [vmem:[%s402 + $0x2f8] sm:$0xff]
        %v750 = vld [vmem:[%s402 + $0x300] sm:$0xff]
        %v751 = vld [vmem:[%s402 + $0x308] sm:$0xff]
        %v752 = vld [vmem:[%s402 + $0x310] sm:$0xff]
        %v753 = vld [vmem:[%s402 + $0x318] sm:$0xff]
        %v754 = vld [vmem:[%s402 + $0x320] sm:$0xff]
        %v755 = vld [vmem:[%s402 + $0x328] sm:$0xff]
        %v756 = vld [vmem:[%s402 + $0x330] sm:$0xff]
        %v757 = vld [vmem:[%s402 + $0x338] sm:$0xff]
        %v758 = vld [vmem:[%s402 + $0x340] sm:$0xff]
        %v759 = vld [vmem:[%s402 + $0x348] sm:$0xff]
        %v760 = vld [vmem:[%s402 + $0x350] sm:$0xff]
        %v761 = vld [vmem:[%s402 + $0x358] sm:$0xff]
        %v762 = vld [vmem:[%s402 + $0x360] sm:$0xff]
        %v763 = vld [vmem:[%s402 + $0x368] sm:$0xff]
        %v764 = vld [vmem:[%s402 + $0x370] sm:$0xff]
        %v765 = vld [vmem:[%s402 + $0x378] sm:$0xff]
        %v766 = vld [vmem:[%s402 + $0x380] sm:$0xff]
        %v767 = vld [vmem:[%s402 + $0x388] sm:$0xff]
        %v768 = vld [vmem:[%s402 + $0x390] sm:$0xff]
        %v769 = vld [vmem:[%s402 + $0x398] sm:$0xff]
        %v770 = vld [vmem:[%s402 + $0x3a0] sm:$0xff]
        %v771 = vld [vmem:[%s402 + $0x3a8] sm:$0xff]
        %v772 = vld [vmem:[%s402 + $0x3b0] sm:$0xff]
        %v773 = vld [vmem:[%s402 + $0x3b8] sm:$0xff]
        %v774 = vld [vmem:[%s402 + $0x3c0] sm:$0xff]
        %v775 = vld [vmem:[%s402 + $0x3c8] sm:$0xff]
        %v776 = vld [vmem:[%s402 + $0x3d0] sm:$0xff]
        %v777 = vld [vmem:[%s402 + $0x3d8] sm:$0xff]
        %v778 = vld [vmem:[%s402 + $0x3e0] sm:$0xff]
        %v779 = vld [vmem:[%s402 + $0x3e8] sm:$0xff]
        %v780 = vld [vmem:[%s402 + $0x3f0] sm:$0xff]
        %v781 = vld [vmem:[%s402 + $0x3f8] sm:$0xff]
        %v782 = vld [vmem:[%s402 + $0x400] sm:$0xff]
        %v783 = vld [vmem:[%s402 + $0x408] sm:$0xff]
        %v784 = vld [vmem:[%s402 + $0x410] sm:$0xff]
        %v785 = vld [vmem:[%s402 + $0x418] sm:$0xff]
        %v786 = vld [vmem:[%s402 + $0x420] sm:$0xff]
        %v787 = vld [vmem:[%s402 + $0x428] sm:$0xff]
        %v788 = vld [vmem:[%s402 + $0x430] sm:$0xff]
        %v789 = vld [vmem:[%s402 + $0x438] sm:$0xff]
        %v790 = vld [vmem:[%s402 + $0x440] sm:$0xff]
        %v791 = vld [vmem:[%s402 + $0x448] sm:$0xff]
        %v792 = vld [vmem:[%s402 + $0x450] sm:$0xff]
        %v793 = vld [vmem:[%s402 + $0x458] sm:$0xff]
        %v794 = vld [vmem:[%s402 + $0x460] sm:$0xff]
        %v795 = vld [vmem:[%s402 + $0x468] sm:$0xff]
        %v796 = vld [vmem:[%s402 + $0x470] sm:$0xff]
        %v797 = vld [vmem:[%s402 + $0x478] sm:$0xff]
        %v798 = vld [vmem:[%s402 + $0x480] sm:$0xff]
        %v799 = vld [vmem:[%s402 + $0x488] sm:$0xff]
        %v800 = vld [vmem:[%s402 + $0x490] sm:$0xff]
        %v801 = vld [vmem:[%s402 + $0x498] sm:$0xff]
        %v802 = vld [vmem:[%s402 + $0x4a0] sm:$0xff]
        %v803 = vld [vmem:[%s402 + $0x4a8] sm:$0xff]
        %v804 = vld [vmem:[%s402 + $0x4b0] sm:$0xff]
        %v805 = vld [vmem:[%s402 + $0x4b8] sm:$0xff]
        %v806 = vld [vmem:[%s402 + $0x4c0] sm:$0xff]
        %v807 = vld [vmem:[%s402 + $0x4c8] sm:$0xff]
        %v808 = vld [vmem:[%s402 + $0x4d0] sm:$0xff]
        %v809 = vld [vmem:[%s402 + $0x4d8] sm:$0xff]
        %v810 = vld [vmem:[%s402 + $0x4e0] sm:$0xff]
        %v811 = vld [vmem:[%s402 + $0x4e8] sm:$0xff]
        %v812 = vld [vmem:[%s402 + $0x4f0] sm:$0xff]
        %v813 = vld [vmem:[%s402 + $0x4f8] sm:$0xff]
        %v814 = vld [vmem:[%s402 + $0x500] sm:$0xff]
        %v815 = vld [vmem:[%s402 + $0x508] sm:$0xff]
        %v816 = vld [vmem:[%s402 + $0x510] sm:$0xff]
        %v817 = vld [vmem:[%s402 + $0x518] sm:$0xff]
        %v818 = vld [vmem:[%s402 + $0x520] sm:$0xff]
        %v819 = vld [vmem:[%s402 + $0x528] sm:$0xff]
        %v820 = vld [vmem:[%s402 + $0x530] sm:$0xff]
        %v821 = vld [vmem:[%s402 + $0x538] sm:$0xff]
        %v822 = vld [vmem:[%s402 + $0x540] sm:$0xff]
        %v823 = vld [vmem:[%s402 + $0x548] sm:$0xff]
        %v824 = vld [vmem:[%s402 + $0x550] sm:$0xff]
        %v825 = vld [vmem:[%s402 + $0x558] sm:$0xff]
        %v826 = vld [vmem:[%s402 + $0x560] sm:$0xff]
        %v827 = vld [vmem:[%s402 + $0x568] sm:$0xff]
        %v828 = vld [vmem:[%s402 + $0x570] sm:$0xff]
        %v829 = vld [vmem:[%s402 + $0x578] sm:$0xff]
        %v830 = vld [vmem:[%s402 + $0x580] sm:$0xff]
        %v831 = vld [vmem:[%s402 + $0x588] sm:$0xff]
        %v832 = vld [vmem:[%s402 + $0x590] sm:$0xff]
        %v833 = vld [vmem:[%s402 + $0x598] sm:$0xff]
        %v834 = vld [vmem:[%s402 + $0x5a0] sm:$0xff]
        %v835 = vld [vmem:[%s402 + $0x5a8] sm:$0xff]
        %v836 = vld [vmem:[%s402 + $0x5b0] sm:$0xff]
        %v837 = vld [vmem:[%s402 + $0x5b8] sm:$0xff]
        %v838 = vld [vmem:[%s402 + $0x5c0] sm:$0xff]
        %v839 = vld [vmem:[%s402 + $0x5c8] sm:$0xff]
        %v840 = vld [vmem:[%s402 + $0x5d0] sm:$0xff]
        %v841 = vld [vmem:[%s402 + $0x5d8] sm:$0xff]
        %v842 = vld [vmem:[%s402 + $0x5e0] sm:$0xff]
        %v843 = vld [vmem:[%s402 + $0x5e8] sm:$0xff]
        %v844 = vld [vmem:[%s402 + $0x5f0] sm:$0xff]
        %v845 = vld [vmem:[%s402 + $0x5f8] sm:$0xff]
        %v846 = vld [vmem:[%s402 + $0x600] sm:$0xff]
        %v847 = vld [vmem:[%s402 + $0x608] sm:$0xff]
        %v848 = vld [vmem:[%s402 + $0x610] sm:$0xff]
        %v849 = vld [vmem:[%s402 + $0x618] sm:$0xff]
        %v850 = vld [vmem:[%s402 + $0x620] sm:$0xff]
        %v851 = vld [vmem:[%s402 + $0x628] sm:$0xff]
        %v852 = vld [vmem:[%s402 + $0x630] sm:$0xff]
        %v853 = vld [vmem:[%s402 + $0x638] sm:$0xff]
        %v854 = vld [vmem:[%s402 + $0x640] sm:$0xff]
        %v855 = vld [vmem:[%s402 + $0x648] sm:$0xff]
        %v856 = vld [vmem:[%s402 + $0x650] sm:$0xff]
        %v857 = vld [vmem:[%s402 + $0x658] sm:$0xff]
        %v858 = vld [vmem:[%s402 + $0x660] sm:$0xff]
        %v859 = vld [vmem:[%s402 + $0x668] sm:$0xff]
        %v860 = vld [vmem:[%s402 + $0x670] sm:$0xff]
        %v861 = vld [vmem:[%s402 + $0x678] sm:$0xff]
        %v862 = vld [vmem:[%s402 + $0x680] sm:$0xff]
        %v863 = vld [vmem:[%s402 + $0x688] sm:$0xff]
        %v864 = vld [vmem:[%s402 + $0x690] sm:$0xff]
        %v865 = vld [vmem:[%s402 + $0x698] sm:$0xff]
        %v866 = vld [vmem:[%s402 + $0x6a0] sm:$0xff]
        %v867 = vld [vmem:[%s402 + $0x6a8] sm:$0xff]
        %v868 = vld [vmem:[%s402 + $0x6b0] sm:$0xff]
        %v869 = vld [vmem:[%s402 + $0x6b8] sm:$0xff]
        %v870 = vld [vmem:[%s402 + $0x6c0] sm:$0xff]
        %v871 = vld [vmem:[%s402 + $0x6c8] sm:$0xff]
        %v872 = vld [vmem:[%s402 + $0x6d0] sm:$0xff]
        %v873 = vld [vmem:[%s402 + $0x6d8] sm:$0xff]
        %v874 = vld [vmem:[%s402 + $0x6e0] sm:$0xff]
        %v875 = vld [vmem:[%s402 + $0x6e8] sm:$0xff]
        %v876 = vld [vmem:[%s402 + $0x6f0] sm:$0xff]
        %v877 = vld [vmem:[%s402 + $0x6f8] sm:$0xff]
        %v878 = vld [vmem:[%s402 + $0x700] sm:$0xff]
        %v879 = vld [vmem:[%s402 + $0x708] sm:$0xff]
        %v880 = vld [vmem:[%s402 + $0x710] sm:$0xff]
        %v881 = vld [vmem:[%s402 + $0x718] sm:$0xff]
        %v882 = vld [vmem:[%s402 + $0x720] sm:$0xff]
        %v883 = vld [vmem:[%s402 + $0x728] sm:$0xff]
        %v884 = vld [vmem:[%s402 + $0x730] sm:$0xff]
        %v885 = vld [vmem:[%s402 + $0x738] sm:$0xff]
        %v886 = vld [vmem:[%s402 + $0x740] sm:$0xff]
        %v887 = vld [vmem:[%s402 + $0x748] sm:$0xff]
        %v888 = vld [vmem:[%s402 + $0x750] sm:$0xff]
        %v889 = vld [vmem:[%s402 + $0x758] sm:$0xff]
        %v890 = vld [vmem:[%s402 + $0x760] sm:$0xff]
        %v891 = vld [vmem:[%s402 + $0x768] sm:$0xff]
        %v892 = vld [vmem:[%s402 + $0x770] sm:$0xff]
        %v893 = vld [vmem:[%s402 + $0x778] sm:$0xff]
        %v894 = vld [vmem:[%s402 + $0x780] sm:$0xff]
        %v895 = vld [vmem:[%s402 + $0x788] sm:$0xff]
        %v896 = vld [vmem:[%s402 + $0x790] sm:$0xff]
        %v897 = vld [vmem:[%s402 + $0x798] sm:$0xff]
        %v898 = vld [vmem:[%s402 + $0x7a0] sm:$0xff]
        %v899 = vld [vmem:[%s402 + $0x7a8] sm:$0xff]
        %v900 = vld [vmem:[%s402 + $0x7b0] sm:$0xff]
        %v901 = vld [vmem:[%s402 + $0x7b8] sm:$0xff]
        %v902 = vld [vmem:[%s402 + $0x7c0] sm:$0xff]
        %v903 = vld [vmem:[%s402 + $0x7c8] sm:$0xff]
        %v904 = vld [vmem:[%s402 + $0x7d0] sm:$0xff]
        %v905 = vld [vmem:[%s402 + $0x7d8] sm:$0xff]
        %v906 = vld [vmem:[%s402 + $0x7e0] sm:$0xff]
        %v907 = vld [vmem:[%s402 + $0x7e8] sm:$0xff]
        %v908 = vld [vmem:[%s402 + $0x7f0] sm:$0xff]
        %v909 = vld [vmem:[%s402 + $0x7f8] sm:$0xff]
        %v910 = vld [vmem:[%s402 + $0x800] sm:$0xff]
        %v911 = vld [vmem:[%s402 + $0x808] sm:$0xff]
        %v912 = vld [vmem:[%s402 + $0x810] sm:$0xff]
        %v913 = vld [vmem:[%s402 + $0x818] sm:$0xff]
        %v914 = vld [vmem:[%s402 + $0x820] sm:$0xff]
        %v915 = vld [vmem:[%s402 + $0x828] sm:$0xff]
        %v916 = vld [vmem:[%s402 + $0x830] sm:$0xff]
        %v917 = vld [vmem:[%s402 + $0x838] sm:$0xff]
        %v918 = vld [vmem:[%s402 + $0x840] sm:$0xff]
        %v919 = vld [vmem:[%s402 + $0x848] sm:$0xff]
        %v920 = vld [vmem:[%s402 + $0x850] sm:$0xff]
        %v921 = vld [vmem:[%s402 + $0x858] sm:$0xff]
        %v922 = vld [vmem:[%s402 + $0x860] sm:$0xff]
        %v923 = vld [vmem:[%s402 + $0x868] sm:$0xff]
        %v924 = vld [vmem:[%s402 + $0x870] sm:$0xff]
        %v925 = vld [vmem:[%s402 + $0x878] sm:$0xff]
        %v926 = vld [vmem:[%s402 + $0x880] sm:$0xff]
        %v927 = vld [vmem:[%s402 + $0x888] sm:$0xff]
        %v928 = vld [vmem:[%s402 + $0x890] sm:$0xff]
        %v929 = vld [vmem:[%s402 + $0x898] sm:$0xff]
        %v930 = vld [vmem:[%s402 + $0x8a0] sm:$0xff]
        %v931 = vld [vmem:[%s402 + $0x8a8] sm:$0xff]
        %v932 = vld [vmem:[%s402 + $0x8b0] sm:$0xff]
        %v933 = vld [vmem:[%s402 + $0x8b8] sm:$0xff]
        %v934 = vld [vmem:[%s402 + $0x8c0] sm:$0xff]
        %v935 = vld [vmem:[%s402 + $0x8c8] sm:$0xff]
        %v936 = vld [vmem:[%s402 + $0x8d0] sm:$0xff]
        %v937 = vld [vmem:[%s402 + $0x8d8] sm:$0xff]
        %v938 = vld [vmem:[%s402 + $0x8e0] sm:$0xff]
        %v939 = vld [vmem:[%s402 + $0x8e8] sm:$0xff]
        %v940 = vld [vmem:[%s402 + $0x8f0] sm:$0xff]
        %v941 = vld [vmem:[%s402 + $0x8f8] sm:$0xff]
        %v942 = vld [vmem:[%s402 + $0x900] sm:$0xff]
        %v943 = vld [vmem:[%s402 + $0x908] sm:$0xff]
        %v944 = vld [vmem:[%s402 + $0x910] sm:$0xff]
        %v945 = vld [vmem:[%s402 + $0x918] sm:$0xff]
        %v946 = vld [vmem:[%s402 + $0x920] sm:$0xff]
        %v947 = vld [vmem:[%s402 + $0x928] sm:$0xff]
        %v948 = vld [vmem:[%s402 + $0x930] sm:$0xff]
        %v949 = vld [vmem:[%s402 + $0x938] sm:$0xff]
        %v950 = vld [vmem:[%s402 + $0x940] sm:$0xff]
        %v951 = vld [vmem:[%s402 + $0x948] sm:$0xff]
        %v952 = vld [vmem:[%s402 + $0x950] sm:$0xff]
        %v953 = vld [vmem:[%s402 + $0x958] sm:$0xff]
        %v954 = vld [vmem:[%s402 + $0x960] sm:$0xff]
        %v955 = vld [vmem:[%s402 + $0x968] sm:$0xff]
        %v956 = vld [vmem:[%s402 + $0x970] sm:$0xff]
        %v957 = vld [vmem:[%s402 + $0x978] sm:$0xff]
        %v958 = vld [vmem:[%s402 + $0x980] sm:$0xff]
        %v959 = vld [vmem:[%s402 + $0x988] sm:$0xff]
        %v960 = vld [vmem:[%s402 + $0x990] sm:$0xff]
        %v961 = vld [vmem:[%s402 + $0x998] sm:$0xff]
        %v962 = vld [vmem:[%s402 + $0x9a0] sm:$0xff]
        %v963 = vld [vmem:[%s402 + $0x9a8] sm:$0xff]
        %v964 = vld [vmem:[%s402 + $0x9b0] sm:$0xff]
        %v965 = vld [vmem:[%s402 + $0x9b8] sm:$0xff]
        %v966 = vld [vmem:[%s402 + $0x9c0] sm:$0xff]
        %v967 = vld [vmem:[%s402 + $0x9c8] sm:$0xff]
        %v968 = vld [vmem:[%s402 + $0x9d0] sm:$0xff]
        %v969 = vld [vmem:[%s402 + $0x9d8] sm:$0xff]
        %v970 = vld [vmem:[%s402 + $0x9e0] sm:$0xff]
        %v971 = vld [vmem:[%s402 + $0x9e8] sm:$0xff]
        %v972 = vld [vmem:[%s402 + $0x9f0] sm:$0xff]
        %v973 = vld [vmem:[%s402 + $0x9f8] sm:$0xff]
        %v974 = vld [vmem:[%s402 + $0xa00] sm:$0xff]
        %v975 = vld [vmem:[%s402 + $0xa08] sm:$0xff]
        %v976 = vld [vmem:[%s402 + $0xa10] sm:$0xff]
        %v977 = vld [vmem:[%s402 + $0xa18] sm:$0xff]
        %v978 = vld [vmem:[%s402 + $0xa20] sm:$0xff]
        %v979 = vld [vmem:[%s402 + $0xa28] sm:$0xff]
        %v980 = vld [vmem:[%s402 + $0xa30] sm:$0xff]
        %v981 = vld [vmem:[%s402 + $0xa38] sm:$0xff]
        %v982 = vld [vmem:[%s402 + $0xa40] sm:$0xff]
        %v983 = vld [vmem:[%s402 + $0xa48] sm:$0xff]
        %v984 = vld [vmem:[%s402 + $0xa50] sm:$0xff]
        %v985 = vld [vmem:[%s402 + $0xa58] sm:$0xff]
        %v986 = vld [vmem:[%s402 + $0xa60] sm:$0xff]
        %v987 = vld [vmem:[%s402 + $0xa68] sm:$0xff]
        %v988 = vld [vmem:[%s402 + $0xa70] sm:$0xff]
        %v989 = vld [vmem:[%s402 + $0xa78] sm:$0xff]
        %v990 = vld [vmem:[%s402 + $0xa80] sm:$0xff]
        %v991 = vld [vmem:[%s402 + $0xa88] sm:$0xff]
        %v992 = vld [vmem:[%s402 + $0xa90] sm:$0xff]
        %v993 = vld [vmem:[%s402 + $0xa98] sm:$0xff]
        %v994 = vld [vmem:[%s402 + $0xaa0] sm:$0xff]
        %v995 = vld [vmem:[%s402 + $0xaa8] sm:$0xff]
        %v996 = vld [vmem:[%s402 + $0xab0] sm:$0xff]
        %v997 = vld [vmem:[%s402 + $0xab8] sm:$0xff]
        %v998 = vld [vmem:[%s402 + $0xac0] sm:$0xff]
        %v999 = vld [vmem:[%s402 + $0xac8] sm:$0xff]
        %v1000 = vld [vmem:[%s402 + $0xad0] sm:$0xff]
        %v1001 = vld [vmem:[%s402 + $0xad8] sm:$0xff]
        %v1002 = vld [vmem:[%s402 + $0xae0] sm:$0xff]
        %v1003 = vld [vmem:[%s402 + $0xae8] sm:$0xff]
        %v1004 = vld [vmem:[%s402 + $0xaf0] sm:$0xff]
        %v1005 = vld [vmem:[%s402 + $0xaf8] sm:$0xff]
        %v1006 = vld [vmem:[%s402 + $0xb00] sm:$0xff]
        %v1007 = vld [vmem:[%s402 + $0xb08] sm:$0xff]
        %v1008 = vld [vmem:[%s402 + $0xb10] sm:$0xff]
        %v1009 = vld [vmem:[%s402 + $0xb18] sm:$0xff]
        %v1010 = vld [vmem:[%s402 + $0xb20] sm:$0xff]
        %v1011 = vld [vmem:[%s402 + $0xb28] sm:$0xff]
        %v1012 = vld [vmem:[%s402 + $0xb30] sm:$0xff]
        %v1013 = vld [vmem:[%s402 + $0xb38] sm:$0xff]
        %v1014 = vld [vmem:[%s402 + $0xb40] sm:$0xff]
        %v1015 = vld [vmem:[%s402 + $0xb48] sm:$0xff]
        %v1016 = vld [vmem:[%s402 + $0xb50] sm:$0xff]
        %v1017 = vld [vmem:[%s402 + $0xb58] sm:$0xff]
        %v1018 = vld [vmem:[%s402 + $0xb60] sm:$0xff]
        %v1019 = vld [vmem:[%s402 + $0xb68] sm:$0xff]
        %v1020 = vld [vmem:[%s402 + $0xb70] sm:$0xff]
        %v1021 = vld [vmem:[%s402 + $0xb78] sm:$0xff]
        %v1022 = vld [vmem:[%s402 + $0xb80] sm:$0xff]
        %v1023 = vld [vmem:[%s402 + $0xb88] sm:$0xff]
        %v1024 = vld [vmem:[%s402 + $0xb90] sm:$0xff]
        %v1025 = vld [vmem:[%s402 + $0xb98] sm:$0xff]
        %v1026 = vld [vmem:[%s402 + $0xba0] sm:$0xff]
        %v1027 = vld [vmem:[%s402 + $0xba8] sm:$0xff]
        %v1028 = vld [vmem:[%s402 + $0xbb0] sm:$0xff]
        %v1029 = vld [vmem:[%s402 + $0xbb8] sm:$0xff]
        %v1030 = vld [vmem:[%s402 + $0xbc0] sm:$0xff]
        %v1031 = vld [vmem:[%s402 + $0xbc8] sm:$0xff]
        %v1032 = vld [vmem:[%s402 + $0xbd0] sm:$0xff]
        %v1033 = vld [vmem:[%s402 + $0xbd8] sm:$0xff]
        %v1034 = vld [vmem:[%s402 + $0xbe0] sm:$0xff]
        %v1035 = vld [vmem:[%s402 + $0xbe8] sm:$0xff]
        %v1036 = vld [vmem:[%s402 + $0xbf0] sm:$0xff]
        %v1037 = vld [vmem:[%s402 + $0xbf8] sm:$0xff]
        %v1040 = vlaneseq
        %v1041 = vshrl.u32 %v1040, 7
        %v1042 = vsub.s32 0, %v1041
        %v1043 = vrot.slane %v520, %v1042
        %v1044 = vlaneseq
        %v1045 = vshrl.u32 %v1044, 7
        %v1046 = vsub.s32 1, %v1045
        %v1047 = vrot.slane %v520, %v1046
        %v1048 = vlaneseq
        %v1049 = vshrl.u32 %v1048, 7
        %v1050 = vsub.s32 2, %v1049
        %v1051 = vrot.slane %v520, %v1050
        %v1052 = vlaneseq
        %v1053 = vshrl.u32 %v1052, 7
        %v1054 = vsub.s32 3, %v1053
        %v1055 = vrot.slane %v520, %v1054
        %v1056 = vlaneseq
        %v1057 = vshrl.u32 %v1056, 7
        %v1058 = vsub.s32 4, %v1057
        %v1059 = vrot.slane %v520, %v1058
        %v1060 = vlaneseq
        %v1061 = vshrl.u32 %v1060, 7
        %v1062 = vsub.s32 5, %v1061
        %v1063 = vrot.slane %v520, %v1062
        %v1064 = vlaneseq
        %v1065 = vshrl.u32 %v1064, 7
        %v1066 = vsub.s32 6, %v1065
        %v1067 = vrot.slane %v520, %v1066
        %v1068 = vlaneseq
        %v1069 = vshrl.u32 %v1068, 7
        %v1070 = vsub.s32 7, %v1069
        %v1071 = vrot.slane %v520, %v1070
        %v1072 = vlaneseq
        %v1073 = vshrl.u32 %v1072, 7
        %v1074 = vsub.s32 0, %v1073
        %v1075 = vrot.slane %v522, %v1074
        %v1076 = vlaneseq
        %v1077 = vshrl.u32 %v1076, 7
        %v1078 = vsub.s32 1, %v1077
        %v1079 = vrot.slane %v522, %v1078
        %v1080 = vlaneseq
        %v1081 = vshrl.u32 %v1080, 7
        %v1082 = vsub.s32 2, %v1081
        %v1083 = vrot.slane %v522, %v1082
        %v1084 = vlaneseq
        %v1085 = vshrl.u32 %v1084, 7
        %v1086 = vsub.s32 3, %v1085
        %v1087 = vrot.slane %v522, %v1086
        %v1484 = vunpack.c.l.b16 %v654
        %v1485 = vunpack.c.h.b16 %v654
        %v1486 = vunpack.c.l.b16 %v655
        %v1487 = vunpack.c.h.b16 %v655
        %v1488 = vunpack.c.l.b16 %v656
        %v1489 = vunpack.c.h.b16 %v656
        %v1490 = vunpack.c.l.b16 %v657
        %v1491 = vunpack.c.h.b16 %v657
        %v1492 = vunpack.c.l.b16 %v658
        %v1493 = vunpack.c.h.b16 %v658
        %v1494 = vunpack.c.l.b16 %v659
        %v1495 = vunpack.c.h.b16 %v659
        %v1496 = vunpack.c.l.b16 %v660
        %v1497 = vunpack.c.h.b16 %v660
        %v1498 = vunpack.c.l.b16 %v661
        %v1499 = vunpack.c.h.b16 %v661
        %v1500 = vunpack.c.l.b16 %v662
        %v1501 = vunpack.c.h.b16 %v662
        %v1502 = vunpack.c.l.b16 %v663
        %v1503 = vunpack.c.h.b16 %v663
        %v1504 = vunpack.c.l.b16 %v664
        %v1505 = vunpack.c.h.b16 %v664
        %v1506 = vunpack.c.l.b16 %v665
        %v1507 = vunpack.c.h.b16 %v665
        %v1508 = vunpack.c.l.b16 %v666
        %v1509 = vunpack.c.h.b16 %v666
        %v1510 = vunpack.c.l.b16 %v667
        %v1511 = vunpack.c.h.b16 %v667
        %v1512 = vunpack.c.l.b16 %v668
        %v1513 = vunpack.c.h.b16 %v668
        %v1514 = vunpack.c.l.b16 %v669
        %v1515 = vunpack.c.h.b16 %v669
        %v1516 = vunpack.c.l.b16 %v670
        %v1517 = vunpack.c.h.b16 %v670
        %v1518 = vunpack.c.l.b16 %v671
        %v1519 = vunpack.c.h.b16 %v671
        %v1520 = vunpack.c.l.b16 %v672
        %v1521 = vunpack.c.h.b16 %v672
        %v1522 = vunpack.c.l.b16 %v673
        %v1523 = vunpack.c.h.b16 %v673
        %v1524 = vunpack.c.l.b16 %v674
        %v1525 = vunpack.c.h.b16 %v674
        %v1526 = vunpack.c.l.b16 %v675
        %v1527 = vunpack.c.h.b16 %v675
        %v1528 = vunpack.c.l.b16 %v676
        %v1529 = vunpack.c.h.b16 %v676
        %v1530 = vunpack.c.l.b16 %v677
        %v1531 = vunpack.c.h.b16 %v677
        %v1532 = vunpack.c.l.b16 %v678
        %v1533 = vunpack.c.h.b16 %v678
        %v1534 = vunpack.c.l.b16 %v679
        %v1535 = vunpack.c.h.b16 %v679
        %v1536 = vunpack.c.l.b16 %v680
        %v1537 = vunpack.c.h.b16 %v680
        %v1538 = vunpack.c.l.b16 %v681
        %v1539 = vunpack.c.h.b16 %v681
        %v1540 = vunpack.c.l.b16 %v682
        %v1541 = vunpack.c.h.b16 %v682
        %v1542 = vunpack.c.l.b16 %v683
        %v1543 = vunpack.c.h.b16 %v683
        %v1544 = vunpack.c.l.b16 %v684
        %v1545 = vunpack.c.h.b16 %v684
        %v1546 = vunpack.c.l.b16 %v685
        %v1547 = vunpack.c.h.b16 %v685
        %v1548 = vunpack.c.l.b16 %v686
        %v1549 = vunpack.c.h.b16 %v686
        %v1550 = vunpack.c.l.b16 %v687
        %v1551 = vunpack.c.h.b16 %v687
        %v1552 = vunpack.c.l.b16 %v688
        %v1553 = vunpack.c.h.b16 %v688
        %v1554 = vunpack.c.l.b16 %v689
        %v1555 = vunpack.c.h.b16 %v689
        %v1556 = vunpack.c.l.b16 %v690
        %v1557 = vunpack.c.h.b16 %v690
        %v1558 = vunpack.c.l.b16 %v691
        %v1559 = vunpack.c.h.b16 %v691
        %v1560 = vunpack.c.l.b16 %v692
        %v1561 = vunpack.c.h.b16 %v692
        %v1562 = vunpack.c.l.b16 %v693
        %v1563 = vunpack.c.h.b16 %v693
        %v1564 = vunpack.c.l.b16 %v694
        %v1565 = vunpack.c.h.b16 %v694
        %v1566 = vunpack.c.l.b16 %v695
        %v1567 = vunpack.c.h.b16 %v695
        %v1568 = vunpack.c.l.b16 %v696
        %v1569 = vunpack.c.h.b16 %v696
        %v1570 = vunpack.c.l.b16 %v697
        %v1571 = vunpack.c.h.b16 %v697
        %v1572 = vunpack.c.l.b16 %v698
        %v1573 = vunpack.c.h.b16 %v698
        %v1574 = vunpack.c.l.b16 %v699
        %v1575 = vunpack.c.h.b16 %v699
        %v1576 = vunpack.c.l.b16 %v700
        %v1577 = vunpack.c.h.b16 %v700
        %v1578 = vunpack.c.l.b16 %v701
        %v1579 = vunpack.c.h.b16 %v701
        %v1580 = vunpack.c.l.b16 %v702
        %v1581 = vunpack.c.h.b16 %v702
        %v1582 = vunpack.c.l.b16 %v703
        %v1583 = vunpack.c.h.b16 %v703
        %v1584 = vunpack.c.l.b16 %v704
        %v1585 = vunpack.c.h.b16 %v704
        %v1586 = vunpack.c.l.b16 %v705
        %v1587 = vunpack.c.h.b16 %v705
        %v1588 = vunpack.c.l.b16 %v706
        %v1589 = vunpack.c.h.b16 %v706
        %v1590 = vunpack.c.l.b16 %v707
        %v1591 = vunpack.c.h.b16 %v707
        %v1592 = vunpack.c.l.b16 %v708
        %v1593 = vunpack.c.h.b16 %v708
        %v1594 = vunpack.c.l.b16 %v709
        %v1595 = vunpack.c.h.b16 %v709
        %v1596 = vunpack.c.l.b16 %v710
        %v1597 = vunpack.c.h.b16 %v710
        %v1598 = vunpack.c.l.b16 %v711
        %v1599 = vunpack.c.h.b16 %v711
        %v1600 = vunpack.c.l.b16 %v712
        %v1601 = vunpack.c.h.b16 %v712
        %v1602 = vunpack.c.l.b16 %v713
        %v1603 = vunpack.c.h.b16 %v713
        %v1604 = vunpack.c.l.b16 %v714
        %v1605 = vunpack.c.h.b16 %v714
        %v1606 = vunpack.c.l.b16 %v715
        %v1607 = vunpack.c.h.b16 %v715
        %v1608 = vunpack.c.l.b16 %v716
        %v1609 = vunpack.c.h.b16 %v716
        %v1610 = vunpack.c.l.b16 %v717
        %v1611 = vunpack.c.h.b16 %v717
        %v1612 = vunpack.c.l.b16 %v718
        %v1613 = vunpack.c.h.b16 %v718
        %v1614 = vunpack.c.l.b16 %v719
        %v1615 = vunpack.c.h.b16 %v719
        %v1616 = vunpack.c.l.b16 %v720
        %v1617 = vunpack.c.h.b16 %v720
        %v1618 = vunpack.c.l.b16 %v721
        %v1619 = vunpack.c.h.b16 %v721
        %v1620 = vunpack.c.l.b16 %v722
        %v1621 = vunpack.c.h.b16 %v722
        %v1622 = vunpack.c.l.b16 %v723
        %v1623 = vunpack.c.h.b16 %v723
        %v1624 = vunpack.c.l.b16 %v724
        %v1625 = vunpack.c.h.b16 %v724
        %v1626 = vunpack.c.l.b16 %v725
        %v1627 = vunpack.c.h.b16 %v725
        %v1628 = vunpack.c.l.b16 %v726
        %v1629 = vunpack.c.h.b16 %v726
        %v1630 = vunpack.c.l.b16 %v727
        %v1631 = vunpack.c.h.b16 %v727
        %v1632 = vunpack.c.l.b16 %v728
        %v1633 = vunpack.c.h.b16 %v728
        %v1634 = vunpack.c.l.b16 %v729
        %v1635 = vunpack.c.h.b16 %v729
        %v1636 = vunpack.c.l.b16 %v730
        %v1637 = vunpack.c.h.b16 %v730
        %v1638 = vunpack.c.l.b16 %v731
        %v1639 = vunpack.c.h.b16 %v731
        %v1640 = vunpack.c.l.b16 %v732
        %v1641 = vunpack.c.h.b16 %v732
        %v1642 = vunpack.c.l.b16 %v733
        %v1643 = vunpack.c.h.b16 %v733
        %v1644 = vunpack.c.l.b16 %v734
        %v1645 = vunpack.c.h.b16 %v734
        %v1646 = vunpack.c.l.b16 %v735
        %v1647 = vunpack.c.h.b16 %v735
        %v1648 = vunpack.c.l.b16 %v736
        %v1649 = vunpack.c.h.b16 %v736
        %v1650 = vunpack.c.l.b16 %v737
        %v1651 = vunpack.c.h.b16 %v737
        %v1652 = vunpack.c.l.b16 %v738
        %v1653 = vunpack.c.h.b16 %v738
        %v1654 = vunpack.c.l.b16 %v739
        %v1655 = vunpack.c.h.b16 %v739
        %v1656 = vunpack.c.l.b16 %v740
        %v1657 = vunpack.c.h.b16 %v740
        %v1658 = vunpack.c.l.b16 %v741
        %v1659 = vunpack.c.h.b16 %v741
        %v1660 = vunpack.c.l.b16 %v742
        %v1661 = vunpack.c.h.b16 %v742
        %v1662 = vunpack.c.l.b16 %v743
        %v1663 = vunpack.c.h.b16 %v743
        %v1664 = vunpack.c.l.b16 %v744
        %v1665 = vunpack.c.h.b16 %v744
        %v1666 = vunpack.c.l.b16 %v745
        %v1667 = vunpack.c.h.b16 %v745
        %v1668 = vunpack.c.l.b16 %v746
        %v1669 = vunpack.c.h.b16 %v746
        %v1670 = vunpack.c.l.b16 %v747
        %v1671 = vunpack.c.h.b16 %v747
        %v1672 = vunpack.c.l.b16 %v748
        %v1673 = vunpack.c.h.b16 %v748
        %v1674 = vunpack.c.l.b16 %v749
        %v1675 = vunpack.c.h.b16 %v749
        %v1676 = vunpack.c.l.b16 %v750
        %v1677 = vunpack.c.h.b16 %v750
        %v1678 = vunpack.c.l.b16 %v751
        %v1679 = vunpack.c.h.b16 %v751
        %v1680 = vunpack.c.l.b16 %v752
        %v1681 = vunpack.c.h.b16 %v752
        %v1682 = vunpack.c.l.b16 %v753
        %v1683 = vunpack.c.h.b16 %v753
        %v1684 = vunpack.c.l.b16 %v754
        %v1685 = vunpack.c.h.b16 %v754
        %v1686 = vunpack.c.l.b16 %v755
        %v1687 = vunpack.c.h.b16 %v755
        %v1688 = vunpack.c.l.b16 %v756
        %v1689 = vunpack.c.h.b16 %v756
        %v1690 = vunpack.c.l.b16 %v757
        %v1691 = vunpack.c.h.b16 %v757
        %v1692 = vunpack.c.l.b16 %v758
        %v1693 = vunpack.c.h.b16 %v758
        %v1694 = vunpack.c.l.b16 %v759
        %v1695 = vunpack.c.h.b16 %v759
        %v1696 = vunpack.c.l.b16 %v760
        %v1697 = vunpack.c.h.b16 %v760
        %v1698 = vunpack.c.l.b16 %v761
        %v1699 = vunpack.c.h.b16 %v761
        %v1700 = vunpack.c.l.b16 %v762
        %v1701 = vunpack.c.h.b16 %v762
        %v1702 = vunpack.c.l.b16 %v763
        %v1703 = vunpack.c.h.b16 %v763
        %v1704 = vunpack.c.l.b16 %v764
        %v1705 = vunpack.c.h.b16 %v764
        %v1706 = vunpack.c.l.b16 %v765
        %v1707 = vunpack.c.h.b16 %v765
        %v1708 = vunpack.c.l.b16 %v766
        %v1709 = vunpack.c.h.b16 %v766
        %v1710 = vunpack.c.l.b16 %v767
        %v1711 = vunpack.c.h.b16 %v767
        %v1712 = vunpack.c.l.b16 %v768
        %v1713 = vunpack.c.h.b16 %v768
        %v1714 = vunpack.c.l.b16 %v769
        %v1715 = vunpack.c.h.b16 %v769
        %v1716 = vunpack.c.l.b16 %v770
        %v1717 = vunpack.c.h.b16 %v770
        %v1718 = vunpack.c.l.b16 %v771
        %v1719 = vunpack.c.h.b16 %v771
        %v1720 = vunpack.c.l.b16 %v772
        %v1721 = vunpack.c.h.b16 %v772
        %v1722 = vunpack.c.l.b16 %v773
        %v1723 = vunpack.c.h.b16 %v773
        %v1724 = vunpack.c.l.b16 %v774
        %v1725 = vunpack.c.h.b16 %v774
        %v1726 = vunpack.c.l.b16 %v775
        %v1727 = vunpack.c.h.b16 %v775
        %v1728 = vunpack.c.l.b16 %v776
        %v1729 = vunpack.c.h.b16 %v776
        %v1730 = vunpack.c.l.b16 %v777
        %v1731 = vunpack.c.h.b16 %v777
        %v1732 = vunpack.c.l.b16 %v778
        %v1733 = vunpack.c.h.b16 %v778
        %v1734 = vunpack.c.l.b16 %v779
        %v1735 = vunpack.c.h.b16 %v779
        %v1736 = vunpack.c.l.b16 %v780
        %v1737 = vunpack.c.h.b16 %v780
        %v1738 = vunpack.c.l.b16 %v781
        %v1739 = vunpack.c.h.b16 %v781
        %v1740 = vunpack.c.l.b16 %v782
        %v1741 = vunpack.c.h.b16 %v782
        %v1742 = vunpack.c.l.b16 %v783
        %v1743 = vunpack.c.h.b16 %v783
        %v1744 = vunpack.c.l.b16 %v784
        %v1745 = vunpack.c.h.b16 %v784
        %v1746 = vunpack.c.l.b16 %v785
        %v1747 = vunpack.c.h.b16 %v785
        %v1748 = vunpack.c.l.b16 %v786
        %v1749 = vunpack.c.h.b16 %v786
        %v1750 = vunpack.c.l.b16 %v787
        %v1751 = vunpack.c.h.b16 %v787
        %v1752 = vunpack.c.l.b16 %v788
        %v1753 = vunpack.c.h.b16 %v788
        %v1754 = vunpack.c.l.b16 %v789
        %v1755 = vunpack.c.h.b16 %v789
        %v1756 = vunpack.c.l.b16 %v790
        %v1757 = vunpack.c.h.b16 %v790
        %v1758 = vunpack.c.l.b16 %v791
        %v1759 = vunpack.c.h.b16 %v791
        %v1760 = vunpack.c.l.b16 %v792
        %v1761 = vunpack.c.h.b16 %v792
        %v1762 = vunpack.c.l.b16 %v793
        %v1763 = vunpack.c.h.b16 %v793
        %v1764 = vunpack.c.l.b16 %v794
        %v1765 = vunpack.c.h.b16 %v794
        %v1766 = vunpack.c.l.b16 %v795
        %v1767 = vunpack.c.h.b16 %v795
        %v1768 = vunpack.c.l.b16 %v796
        %v1769 = vunpack.c.h.b16 %v796
        %v1770 = vunpack.c.l.b16 %v797
        %v1771 = vunpack.c.h.b16 %v797
        %v1772 = vunpack.c.l.b16 %v798
        %v1773 = vunpack.c.h.b16 %v798
        %v1774 = vunpack.c.l.b16 %v799
        %v1775 = vunpack.c.h.b16 %v799
        %v1776 = vunpack.c.l.b16 %v800
        %v1777 = vunpack.c.h.b16 %v800
        %v1778 = vunpack.c.l.b16 %v801
        %v1779 = vunpack.c.h.b16 %v801
        %v1780 = vunpack.c.l.b16 %v802
        %v1781 = vunpack.c.h.b16 %v802
        %v1782 = vunpack.c.l.b16 %v803
        %v1783 = vunpack.c.h.b16 %v803
        %v1784 = vunpack.c.l.b16 %v804
        %v1785 = vunpack.c.h.b16 %v804
        %v1786 = vunpack.c.l.b16 %v805
        %v1787 = vunpack.c.h.b16 %v805
        %v1788 = vunpack.c.l.b16 %v806
        %v1789 = vunpack.c.h.b16 %v806
        %v1790 = vunpack.c.l.b16 %v807
        %v1791 = vunpack.c.h.b16 %v807
        %v1792 = vunpack.c.l.b16 %v808
        %v1793 = vunpack.c.h.b16 %v808
        %v1794 = vunpack.c.l.b16 %v809
        %v1795 = vunpack.c.h.b16 %v809
        %v1796 = vunpack.c.l.b16 %v810
        %v1797 = vunpack.c.h.b16 %v810
        %v1798 = vunpack.c.l.b16 %v811
        %v1799 = vunpack.c.h.b16 %v811
        %v1800 = vunpack.c.l.b16 %v812
        %v1801 = vunpack.c.h.b16 %v812
        %v1802 = vunpack.c.l.b16 %v813
        %v1803 = vunpack.c.h.b16 %v813
        %v1804 = vunpack.c.l.b16 %v814
        %v1805 = vunpack.c.h.b16 %v814
        %v1806 = vunpack.c.l.b16 %v815
        %v1807 = vunpack.c.h.b16 %v815
        %v1808 = vunpack.c.l.b16 %v816
        %v1809 = vunpack.c.h.b16 %v816
        %v1810 = vunpack.c.l.b16 %v817
        %v1811 = vunpack.c.h.b16 %v817
        %v1812 = vunpack.c.l.b16 %v818
        %v1813 = vunpack.c.h.b16 %v818
        %v1814 = vunpack.c.l.b16 %v819
        %v1815 = vunpack.c.h.b16 %v819
        %v1816 = vunpack.c.l.b16 %v820
        %v1817 = vunpack.c.h.b16 %v820
        %v1818 = vunpack.c.l.b16 %v821
        %v1819 = vunpack.c.h.b16 %v821
        %v1820 = vunpack.c.l.b16 %v822
        %v1821 = vunpack.c.h.b16 %v822
        %v1822 = vunpack.c.l.b16 %v823
        %v1823 = vunpack.c.h.b16 %v823
        %v1824 = vunpack.c.l.b16 %v824
        %v1825 = vunpack.c.h.b16 %v824
        %v1826 = vunpack.c.l.b16 %v825
        %v1827 = vunpack.c.h.b16 %v825
        %v1828 = vunpack.c.l.b16 %v826
        %v1829 = vunpack.c.h.b16 %v826
        %v1830 = vunpack.c.l.b16 %v827
        %v1831 = vunpack.c.h.b16 %v827
        %v1832 = vunpack.c.l.b16 %v828
        %v1833 = vunpack.c.h.b16 %v828
        %v1834 = vunpack.c.l.b16 %v829
        %v1835 = vunpack.c.h.b16 %v829
        %v1836 = vunpack.c.l.b16 %v830
        %v1837 = vunpack.c.h.b16 %v830
        %v1838 = vunpack.c.l.b16 %v831
        %v1839 = vunpack.c.h.b16 %v831
        %v1840 = vunpack.c.l.b16 %v832
        %v1841 = vunpack.c.h.b16 %v832
        %v1842 = vunpack.c.l.b16 %v833
        %v1843 = vunpack.c.h.b16 %v833
        %v1844 = vunpack.c.l.b16 %v834
        %v1845 = vunpack.c.h.b16 %v834
        %v1846 = vunpack.c.l.b16 %v835
        %v1847 = vunpack.c.h.b16 %v835
        %v1848 = vunpack.c.l.b16 %v836
        %v1849 = vunpack.c.h.b16 %v836
        %v1850 = vunpack.c.l.b16 %v837
        %v1851 = vunpack.c.h.b16 %v837
        %v1852 = vunpack.c.l.b16 %v838
        %v1853 = vunpack.c.h.b16 %v838
        %v1854 = vunpack.c.l.b16 %v839
        %v1855 = vunpack.c.h.b16 %v839
        %v1856 = vunpack.c.l.b16 %v840
        %v1857 = vunpack.c.h.b16 %v840
        %v1858 = vunpack.c.l.b16 %v841
        %v1859 = vunpack.c.h.b16 %v841
        %v1860 = vunpack.c.l.b16 %v842
        %v1861 = vunpack.c.h.b16 %v842
        %v1862 = vunpack.c.l.b16 %v843
        %v1863 = vunpack.c.h.b16 %v843
        %v1864 = vunpack.c.l.b16 %v844
        %v1865 = vunpack.c.h.b16 %v844
        %v1866 = vunpack.c.l.b16 %v845
        %v1867 = vunpack.c.h.b16 %v845
        %v1868 = vunpack.c.l.b16 %v846
        %v1869 = vunpack.c.h.b16 %v846
        %v1870 = vunpack.c.l.b16 %v847
        %v1871 = vunpack.c.h.b16 %v847
        %v1872 = vunpack.c.l.b16 %v848
        %v1873 = vunpack.c.h.b16 %v848
        %v1874 = vunpack.c.l.b16 %v849
        %v1875 = vunpack.c.h.b16 %v849
        %v1876 = vunpack.c.l.b16 %v850
        %v1877 = vunpack.c.h.b16 %v850
        %v1878 = vunpack.c.l.b16 %v851
        %v1879 = vunpack.c.h.b16 %v851
        %v1880 = vunpack.c.l.b16 %v852
        %v1881 = vunpack.c.h.b16 %v852
        %v1882 = vunpack.c.l.b16 %v853
        %v1883 = vunpack.c.h.b16 %v853
        %v1884 = vunpack.c.l.b16 %v854
        %v1885 = vunpack.c.h.b16 %v854
        %v1886 = vunpack.c.l.b16 %v855
        %v1887 = vunpack.c.h.b16 %v855
        %v1888 = vunpack.c.l.b16 %v856
        %v1889 = vunpack.c.h.b16 %v856
        %v1890 = vunpack.c.l.b16 %v857
        %v1891 = vunpack.c.h.b16 %v857
        %v1892 = vunpack.c.l.b16 %v858
        %v1893 = vunpack.c.h.b16 %v858
        %v1894 = vunpack.c.l.b16 %v859
        %v1895 = vunpack.c.h.b16 %v859
        %v1896 = vunpack.c.l.b16 %v860
        %v1897 = vunpack.c.h.b16 %v860
        %v1898 = vunpack.c.l.b16 %v861
        %v1899 = vunpack.c.h.b16 %v861
        %v1900 = vunpack.c.l.b16 %v862
        %v1901 = vunpack.c.h.b16 %v862
        %v1902 = vunpack.c.l.b16 %v863
        %v1903 = vunpack.c.h.b16 %v863
        %v1904 = vunpack.c.l.b16 %v864
        %v1905 = vunpack.c.h.b16 %v864
        %v1906 = vunpack.c.l.b16 %v865
        %v1907 = vunpack.c.h.b16 %v865
        %v1908 = vunpack.c.l.b16 %v866
        %v1909 = vunpack.c.h.b16 %v866
        %v1910 = vunpack.c.l.b16 %v867
        %v1911 = vunpack.c.h.b16 %v867
        %v1912 = vunpack.c.l.b16 %v868
        %v1913 = vunpack.c.h.b16 %v868
        %v1914 = vunpack.c.l.b16 %v869
        %v1915 = vunpack.c.h.b16 %v869
        %v1916 = vunpack.c.l.b16 %v870
        %v1917 = vunpack.c.h.b16 %v870
        %v1918 = vunpack.c.l.b16 %v871
        %v1919 = vunpack.c.h.b16 %v871
        %v1920 = vunpack.c.l.b16 %v872
        %v1921 = vunpack.c.h.b16 %v872
        %v1922 = vunpack.c.l.b16 %v873
        %v1923 = vunpack.c.h.b16 %v873
        %v1924 = vunpack.c.l.b16 %v874
        %v1925 = vunpack.c.h.b16 %v874
        %v1926 = vunpack.c.l.b16 %v875
        %v1927 = vunpack.c.h.b16 %v875
        %v1928 = vunpack.c.l.b16 %v876
        %v1929 = vunpack.c.h.b16 %v876
        %v1930 = vunpack.c.l.b16 %v877
        %v1931 = vunpack.c.h.b16 %v877
        %v1932 = vunpack.c.l.b16 %v878
        %v1933 = vunpack.c.h.b16 %v878
        %v1934 = vunpack.c.l.b16 %v879
        %v1935 = vunpack.c.h.b16 %v879
        %v1936 = vunpack.c.l.b16 %v880
        %v1937 = vunpack.c.h.b16 %v880
        %v1938 = vunpack.c.l.b16 %v881
        %v1939 = vunpack.c.h.b16 %v881
        %v1940 = vunpack.c.l.b16 %v882
        %v1941 = vunpack.c.h.b16 %v882
        %v1942 = vunpack.c.l.b16 %v883
        %v1943 = vunpack.c.h.b16 %v883
        %v1944 = vunpack.c.l.b16 %v884
        %v1945 = vunpack.c.h.b16 %v884
        %v1946 = vunpack.c.l.b16 %v885
        %v1947 = vunpack.c.h.b16 %v885
        %v1948 = vunpack.c.l.b16 %v886
        %v1949 = vunpack.c.h.b16 %v886
        %v1950 = vunpack.c.l.b16 %v887
        %v1951 = vunpack.c.h.b16 %v887
        %v1952 = vunpack.c.l.b16 %v888
        %v1953 = vunpack.c.h.b16 %v888
        %v1954 = vunpack.c.l.b16 %v889
        %v1955 = vunpack.c.h.b16 %v889
        %v1956 = vunpack.c.l.b16 %v890
        %v1957 = vunpack.c.h.b16 %v890
        %v1958 = vunpack.c.l.b16 %v891
        %v1959 = vunpack.c.h.b16 %v891
        %v1960 = vunpack.c.l.b16 %v892
        %v1961 = vunpack.c.h.b16 %v892
        %v1962 = vunpack.c.l.b16 %v893
        %v1963 = vunpack.c.h.b16 %v893
        %v1964 = vunpack.c.l.b16 %v894
        %v1965 = vunpack.c.h.b16 %v894
        %v1966 = vunpack.c.l.b16 %v895
        %v1967 = vunpack.c.h.b16 %v895
        %v1968 = vunpack.c.l.b16 %v896
        %v1969 = vunpack.c.h.b16 %v896
        %v1970 = vunpack.c.l.b16 %v897
        %v1971 = vunpack.c.h.b16 %v897
        %v1972 = vunpack.c.l.b16 %v898
        %v1973 = vunpack.c.h.b16 %v898
        %v1974 = vunpack.c.l.b16 %v899
        %v1975 = vunpack.c.h.b16 %v899
        %v1976 = vunpack.c.l.b16 %v900
        %v1977 = vunpack.c.h.b16 %v900
        %v1978 = vunpack.c.l.b16 %v901
        %v1979 = vunpack.c.h.b16 %v901
        %v1980 = vunpack.c.l.b16 %v902
        %v1981 = vunpack.c.h.b16 %v902
        %v1982 = vunpack.c.l.b16 %v903
        %v1983 = vunpack.c.h.b16 %v903
        %v1984 = vunpack.c.l.b16 %v904
        %v1985 = vunpack.c.h.b16 %v904
        %v1986 = vunpack.c.l.b16 %v905
        %v1987 = vunpack.c.h.b16 %v905
        %v1988 = vunpack.c.l.b16 %v906
        %v1989 = vunpack.c.h.b16 %v906
        %v1990 = vunpack.c.l.b16 %v907
        %v1991 = vunpack.c.h.b16 %v907
        %v1992 = vunpack.c.l.b16 %v908
        %v1993 = vunpack.c.h.b16 %v908
        %v1994 = vunpack.c.l.b16 %v909
        %v1995 = vunpack.c.h.b16 %v909
        %v1996 = vunpack.c.l.b16 %v910
        %v1997 = vunpack.c.h.b16 %v910
        %v1998 = vunpack.c.l.b16 %v911
        %v1999 = vunpack.c.h.b16 %v911
        %v2000 = vunpack.c.l.b16 %v912
        %v2001 = vunpack.c.h.b16 %v912
        %v2002 = vunpack.c.l.b16 %v913
        %v2003 = vunpack.c.h.b16 %v913
        %v2004 = vunpack.c.l.b16 %v914
        %v2005 = vunpack.c.h.b16 %v914
        %v2006 = vunpack.c.l.b16 %v915
        %v2007 = vunpack.c.h.b16 %v915
        %v2008 = vunpack.c.l.b16 %v916
        %v2009 = vunpack.c.h.b16 %v916
        %v2010 = vunpack.c.l.b16 %v917
        %v2011 = vunpack.c.h.b16 %v917
        %v2012 = vunpack.c.l.b16 %v918
        %v2013 = vunpack.c.h.b16 %v918
        %v2014 = vunpack.c.l.b16 %v919
        %v2015 = vunpack.c.h.b16 %v919
        %v2016 = vunpack.c.l.b16 %v920
        %v2017 = vunpack.c.h.b16 %v920
        %v2018 = vunpack.c.l.b16 %v921
        %v2019 = vunpack.c.h.b16 %v921
        %v2020 = vunpack.c.l.b16 %v922
        %v2021 = vunpack.c.h.b16 %v922
        %v2022 = vunpack.c.l.b16 %v923
        %v2023 = vunpack.c.h.b16 %v923
        %v2024 = vunpack.c.l.b16 %v924
        %v2025 = vunpack.c.h.b16 %v924
        %v2026 = vunpack.c.l.b16 %v925
        %v2027 = vunpack.c.h.b16 %v925
        %v2028 = vunpack.c.l.b16 %v926
        %v2029 = vunpack.c.h.b16 %v926
        %v2030 = vunpack.c.l.b16 %v927
        %v2031 = vunpack.c.h.b16 %v927
        %v2032 = vunpack.c.l.b16 %v928
        %v2033 = vunpack.c.h.b16 %v928
        %v2034 = vunpack.c.l.b16 %v929
        %v2035 = vunpack.c.h.b16 %v929
        %v2036 = vunpack.c.l.b16 %v930
        %v2037 = vunpack.c.h.b16 %v930
        %v2038 = vunpack.c.l.b16 %v931
        %v2039 = vunpack.c.h.b16 %v931
        %v2040 = vunpack.c.l.b16 %v932
        %v2041 = vunpack.c.h.b16 %v932
        %v2042 = vunpack.c.l.b16 %v933
        %v2043 = vunpack.c.h.b16 %v933
        %v2044 = vunpack.c.l.b16 %v934
        %v2045 = vunpack.c.h.b16 %v934
        %v2046 = vunpack.c.l.b16 %v935
        %v2047 = vunpack.c.h.b16 %v935
        %v2048 = vunpack.c.l.b16 %v936
        %v2049 = vunpack.c.h.b16 %v936
        %v2050 = vunpack.c.l.b16 %v937
        %v2051 = vunpack.c.h.b16 %v937
        %v2052 = vunpack.c.l.b16 %v938
        %v2053 = vunpack.c.h.b16 %v938
        %v2054 = vunpack.c.l.b16 %v939
        %v2055 = vunpack.c.h.b16 %v939
        %v2056 = vunpack.c.l.b16 %v940
        %v2057 = vunpack.c.h.b16 %v940
        %v2058 = vunpack.c.l.b16 %v941
        %v2059 = vunpack.c.h.b16 %v941
        %v2060 = vunpack.c.l.b16 %v942
        %v2061 = vunpack.c.h.b16 %v942
        %v2062 = vunpack.c.l.b16 %v943
        %v2063 = vunpack.c.h.b16 %v943
        %v2064 = vunpack.c.l.b16 %v944
        %v2065 = vunpack.c.h.b16 %v944
        %v2066 = vunpack.c.l.b16 %v945
        %v2067 = vunpack.c.h.b16 %v945
        %v2068 = vunpack.c.l.b16 %v946
        %v2069 = vunpack.c.h.b16 %v946
        %v2070 = vunpack.c.l.b16 %v947
        %v2071 = vunpack.c.h.b16 %v947
        %v2072 = vunpack.c.l.b16 %v948
        %v2073 = vunpack.c.h.b16 %v948
        %v2074 = vunpack.c.l.b16 %v949
        %v2075 = vunpack.c.h.b16 %v949
        %v2076 = vunpack.c.l.b16 %v950
        %v2077 = vunpack.c.h.b16 %v950
        %v2078 = vunpack.c.l.b16 %v951
        %v2079 = vunpack.c.h.b16 %v951
        %v2080 = vunpack.c.l.b16 %v952
        %v2081 = vunpack.c.h.b16 %v952
        %v2082 = vunpack.c.l.b16 %v953
        %v2083 = vunpack.c.h.b16 %v953
        %v2084 = vunpack.c.l.b16 %v954
        %v2085 = vunpack.c.h.b16 %v954
        %v2086 = vunpack.c.l.b16 %v955
        %v2087 = vunpack.c.h.b16 %v955
        %v2088 = vunpack.c.l.b16 %v956
        %v2089 = vunpack.c.h.b16 %v956
        %v2090 = vunpack.c.l.b16 %v957
        %v2091 = vunpack.c.h.b16 %v957
        %v2092 = vunpack.c.l.b16 %v958
        %v2093 = vunpack.c.h.b16 %v958
        %v2094 = vunpack.c.l.b16 %v959
        %v2095 = vunpack.c.h.b16 %v959
        %v2096 = vunpack.c.l.b16 %v960
        %v2097 = vunpack.c.h.b16 %v960
        %v2098 = vunpack.c.l.b16 %v961
        %v2099 = vunpack.c.h.b16 %v961
        %v2100 = vunpack.c.l.b16 %v962
        %v2101 = vunpack.c.h.b16 %v962
        %v2102 = vunpack.c.l.b16 %v963
        %v2103 = vunpack.c.h.b16 %v963
        %v2104 = vunpack.c.l.b16 %v964
        %v2105 = vunpack.c.h.b16 %v964
        %v2106 = vunpack.c.l.b16 %v965
        %v2107 = vunpack.c.h.b16 %v965
        %v2108 = vunpack.c.l.b16 %v966
        %v2109 = vunpack.c.h.b16 %v966
        %v2110 = vunpack.c.l.b16 %v967
        %v2111 = vunpack.c.h.b16 %v967
        %v2112 = vunpack.c.l.b16 %v968
        %v2113 = vunpack.c.h.b16 %v968
        %v2114 = vunpack.c.l.b16 %v969
        %v2115 = vunpack.c.h.b16 %v969
        %v2116 = vunpack.c.l.b16 %v970
        %v2117 = vunpack.c.h.b16 %v970
        %v2118 = vunpack.c.l.b16 %v971
        %v2119 = vunpack.c.h.b16 %v971
        %v2120 = vunpack.c.l.b16 %v972
        %v2121 = vunpack.c.h.b16 %v972
        %v2122 = vunpack.c.l.b16 %v973
        %v2123 = vunpack.c.h.b16 %v973
        %v2124 = vunpack.c.l.b16 %v974
        %v2125 = vunpack.c.h.b16 %v974
        %v2126 = vunpack.c.l.b16 %v975
        %v2127 = vunpack.c.h.b16 %v975
        %v2128 = vunpack.c.l.b16 %v976
        %v2129 = vunpack.c.h.b16 %v976
        %v2130 = vunpack.c.l.b16 %v977
        %v2131 = vunpack.c.h.b16 %v977
        %v2132 = vunpack.c.l.b16 %v978
        %v2133 = vunpack.c.h.b16 %v978
        %v2134 = vunpack.c.l.b16 %v979
        %v2135 = vunpack.c.h.b16 %v979
        %v2136 = vunpack.c.l.b16 %v980
        %v2137 = vunpack.c.h.b16 %v980
        %v2138 = vunpack.c.l.b16 %v981
        %v2139 = vunpack.c.h.b16 %v981
        %v2140 = vunpack.c.l.b16 %v982
        %v2141 = vunpack.c.h.b16 %v982
        %v2142 = vunpack.c.l.b16 %v983
        %v2143 = vunpack.c.h.b16 %v983
        %v2144 = vunpack.c.l.b16 %v984
        %v2145 = vunpack.c.h.b16 %v984
        %v2146 = vunpack.c.l.b16 %v985
        %v2147 = vunpack.c.h.b16 %v985
        %v2148 = vunpack.c.l.b16 %v986
        %v2149 = vunpack.c.h.b16 %v986
        %v2150 = vunpack.c.l.b16 %v987
        %v2151 = vunpack.c.h.b16 %v987
        %v2152 = vunpack.c.l.b16 %v988
        %v2153 = vunpack.c.h.b16 %v988
        %v2154 = vunpack.c.l.b16 %v989
        %v2155 = vunpack.c.h.b16 %v989
        %v2156 = vunpack.c.l.b16 %v990
        %v2157 = vunpack.c.h.b16 %v990
        %v2158 = vunpack.c.l.b16 %v991
        %v2159 = vunpack.c.h.b16 %v991
        %v2160 = vunpack.c.l.b16 %v992
        %v2161 = vunpack.c.h.b16 %v992
        %v2162 = vunpack.c.l.b16 %v993
        %v2163 = vunpack.c.h.b16 %v993
        %v2164 = vunpack.c.l.b16 %v994
        %v2165 = vunpack.c.h.b16 %v994
        %v2166 = vunpack.c.l.b16 %v995
        %v2167 = vunpack.c.h.b16 %v995
        %v2168 = vunpack.c.l.b16 %v996
        %v2169 = vunpack.c.h.b16 %v996
        %v2170 = vunpack.c.l.b16 %v997
        %v2171 = vunpack.c.h.b16 %v997
        %v2172 = vunpack.c.l.b16 %v998
        %v2173 = vunpack.c.h.b16 %v998
        %v2174 = vunpack.c.l.b16 %v999
        %v2175 = vunpack.c.h.b16 %v999
        %v2176 = vunpack.c.l.b16 %v1000
        %v2177 = vunpack.c.h.b16 %v1000
        %v2178 = vunpack.c.l.b16 %v1001
        %v2179 = vunpack.c.h.b16 %v1001
        %v2180 = vunpack.c.l.b16 %v1002
        %v2181 = vunpack.c.h.b16 %v1002
        %v2182 = vunpack.c.l.b16 %v1003
        %v2183 = vunpack.c.h.b16 %v1003
        %v2184 = vunpack.c.l.b16 %v1004
        %v2185 = vunpack.c.h.b16 %v1004
        %v2186 = vunpack.c.l.b16 %v1005
        %v2187 = vunpack.c.h.b16 %v1005
        %v2188 = vunpack.c.l.b16 %v1006
        %v2189 = vunpack.c.h.b16 %v1006
        %v2190 = vunpack.c.l.b16 %v1007
        %v2191 = vunpack.c.h.b16 %v1007
        %v2192 = vunpack.c.l.b16 %v1008
        %v2193 = vunpack.c.h.b16 %v1008
        %v2194 = vunpack.c.l.b16 %v1009
        %v2195 = vunpack.c.h.b16 %v1009
        %v2196 = vunpack.c.l.b16 %v1010
        %v2197 = vunpack.c.h.b16 %v1010
        %v2198 = vunpack.c.l.b16 %v1011
        %v2199 = vunpack.c.h.b16 %v1011
        %v2200 = vunpack.c.l.b16 %v1012
        %v2201 = vunpack.c.h.b16 %v1012
        %v2202 = vunpack.c.l.b16 %v1013
        %v2203 = vunpack.c.h.b16 %v1013
        %v2204 = vunpack.c.l.b16 %v1014
        %v2205 = vunpack.c.h.b16 %v1014
        %v2206 = vunpack.c.l.b16 %v1015
        %v2207 = vunpack.c.h.b16 %v1015
        %v2208 = vunpack.c.l.b16 %v1016
        %v2209 = vunpack.c.h.b16 %v1016
        %v2210 = vunpack.c.l.b16 %v1017
        %v2211 = vunpack.c.h.b16 %v1017
        %v2212 = vunpack.c.l.b16 %v1018
        %v2213 = vunpack.c.h.b16 %v1018
        %v2214 = vunpack.c.l.b16 %v1019
        %v2215 = vunpack.c.h.b16 %v1019
        %v2216 = vunpack.c.l.b16 %v1020
        %v2217 = vunpack.c.h.b16 %v1020
        %v2218 = vunpack.c.l.b16 %v1021
        %v2219 = vunpack.c.h.b16 %v1021
        %v2220 = vunpack.c.l.b16 %v1022
        %v2221 = vunpack.c.h.b16 %v1022
        %v2222 = vunpack.c.l.b16 %v1023
        %v2223 = vunpack.c.h.b16 %v1023
        %v2224 = vunpack.c.l.b16 %v1024
        %v2225 = vunpack.c.h.b16 %v1024
        %v2226 = vunpack.c.l.b16 %v1025
        %v2227 = vunpack.c.h.b16 %v1025
        %v2228 = vunpack.c.l.b16 %v1026
        %v2229 = vunpack.c.h.b16 %v1026
        %v2230 = vunpack.c.l.b16 %v1027
        %v2231 = vunpack.c.h.b16 %v1027
        %v2232 = vunpack.c.l.b16 %v1028
        %v2233 = vunpack.c.h.b16 %v1028
        %v2234 = vunpack.c.l.b16 %v1029
        %v2235 = vunpack.c.h.b16 %v1029
        %v2236 = vunpack.c.l.b16 %v1030
        %v2237 = vunpack.c.h.b16 %v1030
        %v2238 = vunpack.c.l.b16 %v1031
        %v2239 = vunpack.c.h.b16 %v1031
        %v2240 = vunpack.c.l.b16 %v1032
        %v2241 = vunpack.c.h.b16 %v1032
        %v2242 = vunpack.c.l.b16 %v1033
        %v2243 = vunpack.c.h.b16 %v1033
        %v2244 = vunpack.c.l.b16 %v1034
        %v2245 = vunpack.c.h.b16 %v1034
        %v2246 = vunpack.c.l.b16 %v1035
        %v2247 = vunpack.c.h.b16 %v1035
        %v2248 = vunpack.c.l.b16 %v1036
        %v2249 = vunpack.c.h.b16 %v1036
        %v2250 = vunpack.c.l.b16 %v1037
        %v2251 = vunpack.c.h.b16 %v1037
        %v2252 = vpack.c.b16 %v1496, %v1484
        %v2253 = vpack.c.b16 %v1497, %v1485
        %v2254 = vpack.c.b16 %v1498, %v1486
        %v2255 = vpack.c.b16 %v1499, %v1487
        %v2256 = vpack.c.b16 %v1500, %v1488
        %v2257 = vpack.c.b16 %v1501, %v1489
        %v2258 = vpack.c.b16 %v1502, %v1490
        %v2259 = vpack.c.b16 %v1503, %v1491
        %v2260 = vpack.c.b16 %v1504, %v1492
        %v2261 = vpack.c.b16 %v1505, %v1493
        %v2262 = vpack.c.b16 %v1506, %v1494
        %v2263 = vpack.c.b16 %v1507, %v1495
        %v2264 = vpack.c.b16 %v1520, %v1508
        %v2265 = vpack.c.b16 %v1521, %v1509
        %v2266 = vpack.c.b16 %v1522, %v1510
        %v2267 = vpack.c.b16 %v1523, %v1511
        %v2268 = vpack.c.b16 %v1524, %v1512
        %v2269 = vpack.c.b16 %v1525, %v1513
        %v2270 = vpack.c.b16 %v1526, %v1514
        %v2271 = vpack.c.b16 %v1527, %v1515
        %v2272 = vpack.c.b16 %v1528, %v1516
        %v2273 = vpack.c.b16 %v1529, %v1517
        %v2274 = vpack.c.b16 %v1530, %v1518
        %v2275 = vpack.c.b16 %v1531, %v1519
        %v2276 = vpack.c.b16 %v1544, %v1532
        %v2277 = vpack.c.b16 %v1545, %v1533
        %v2278 = vpack.c.b16 %v1546, %v1534
        %v2279 = vpack.c.b16 %v1547, %v1535
        %v2280 = vpack.c.b16 %v1548, %v1536
        %v2281 = vpack.c.b16 %v1549, %v1537
        %v2282 = vpack.c.b16 %v1550, %v1538
        %v2283 = vpack.c.b16 %v1551, %v1539
        %v2284 = vpack.c.b16 %v1552, %v1540
        %v2285 = vpack.c.b16 %v1553, %v1541
        %v2286 = vpack.c.b16 %v1554, %v1542
        %v2287 = vpack.c.b16 %v1555, %v1543
        %v2288 = vpack.c.b16 %v1568, %v1556
        %v2289 = vpack.c.b16 %v1569, %v1557
        %v2290 = vpack.c.b16 %v1570, %v1558
        %v2291 = vpack.c.b16 %v1571, %v1559
        %v2292 = vpack.c.b16 %v1572, %v1560
        %v2293 = vpack.c.b16 %v1573, %v1561
        %v2294 = vpack.c.b16 %v1574, %v1562
        %v2295 = vpack.c.b16 %v1575, %v1563
        %v2296 = vpack.c.b16 %v1576, %v1564
        %v2297 = vpack.c.b16 %v1577, %v1565
        %v2298 = vpack.c.b16 %v1578, %v1566
        %v2299 = vpack.c.b16 %v1579, %v1567
        %v2300 = vpack.c.b16 %v1592, %v1580
        %v2301 = vpack.c.b16 %v1593, %v1581
        %v2302 = vpack.c.b16 %v1594, %v1582
        %v2303 = vpack.c.b16 %v1595, %v1583
        %v2304 = vpack.c.b16 %v1596, %v1584
        %v2305 = vpack.c.b16 %v1597, %v1585
        %v2306 = vpack.c.b16 %v1598, %v1586
        %v2307 = vpack.c.b16 %v1599, %v1587
        %v2308 = vpack.c.b16 %v1600, %v1588
        %v2309 = vpack.c.b16 %v1601, %v1589
        %v2310 = vpack.c.b16 %v1602, %v1590
        %v2311 = vpack.c.b16 %v1603, %v1591
        %v2312 = vpack.c.b16 %v1616, %v1604
        %v2313 = vpack.c.b16 %v1617, %v1605
        %v2314 = vpack.c.b16 %v1618, %v1606
        %v2315 = vpack.c.b16 %v1619, %v1607
        %v2316 = vpack.c.b16 %v1620, %v1608
        %v2317 = vpack.c.b16 %v1621, %v1609
        %v2318 = vpack.c.b16 %v1622, %v1610
        %v2319 = vpack.c.b16 %v1623, %v1611
        %v2320 = vpack.c.b16 %v1624, %v1612
        %v2321 = vpack.c.b16 %v1625, %v1613
        %v2322 = vpack.c.b16 %v1626, %v1614
        %v2323 = vpack.c.b16 %v1627, %v1615
        %v2324 = vpack.c.b16 %v1640, %v1628
        %v2325 = vpack.c.b16 %v1641, %v1629
        %v2326 = vpack.c.b16 %v1642, %v1630
        %v2327 = vpack.c.b16 %v1643, %v1631
        %v2328 = vpack.c.b16 %v1644, %v1632
        %v2329 = vpack.c.b16 %v1645, %v1633
        %v2330 = vpack.c.b16 %v1646, %v1634
        %v2331 = vpack.c.b16 %v1647, %v1635
        %v2332 = vpack.c.b16 %v1648, %v1636
        %v2333 = vpack.c.b16 %v1649, %v1637
        %v2334 = vpack.c.b16 %v1650, %v1638
        %v2335 = vpack.c.b16 %v1651, %v1639
        %v2336 = vpack.c.b16 %v1664, %v1652
        %v2337 = vpack.c.b16 %v1665, %v1653
        %v2338 = vpack.c.b16 %v1666, %v1654
        %v2339 = vpack.c.b16 %v1667, %v1655
        %v2340 = vpack.c.b16 %v1668, %v1656
        %v2341 = vpack.c.b16 %v1669, %v1657
        %v2342 = vpack.c.b16 %v1670, %v1658
        %v2343 = vpack.c.b16 %v1671, %v1659
        %v2344 = vpack.c.b16 %v1672, %v1660
        %v2345 = vpack.c.b16 %v1673, %v1661
        %v2346 = vpack.c.b16 %v1674, %v1662
        %v2347 = vpack.c.b16 %v1675, %v1663
        %v2348 = vpack.c.b16 %v1688, %v1676
        %v2349 = vpack.c.b16 %v1689, %v1677
        %v2350 = vpack.c.b16 %v1690, %v1678
        %v2351 = vpack.c.b16 %v1691, %v1679
        %v2352 = vpack.c.b16 %v1692, %v1680
        %v2353 = vpack.c.b16 %v1693, %v1681
        %v2354 = vpack.c.b16 %v1694, %v1682
        %v2355 = vpack.c.b16 %v1695, %v1683
        %v2356 = vpack.c.b16 %v1696, %v1684
        %v2357 = vpack.c.b16 %v1697, %v1685
        %v2358 = vpack.c.b16 %v1698, %v1686
        %v2359 = vpack.c.b16 %v1699, %v1687
        %v2360 = vpack.c.b16 %v1712, %v1700
        %v2361 = vpack.c.b16 %v1713, %v1701
        %v2362 = vpack.c.b16 %v1714, %v1702
        %v2363 = vpack.c.b16 %v1715, %v1703
        %v2364 = vpack.c.b16 %v1716, %v1704
        %v2365 = vpack.c.b16 %v1717, %v1705
        %v2366 = vpack.c.b16 %v1718, %v1706
        %v2367 = vpack.c.b16 %v1719, %v1707
        %v2368 = vpack.c.b16 %v1720, %v1708
        %v2369 = vpack.c.b16 %v1721, %v1709
        %v2370 = vpack.c.b16 %v1722, %v1710
        %v2371 = vpack.c.b16 %v1723, %v1711
        %v2372 = vpack.c.b16 %v1736, %v1724
        %v2373 = vpack.c.b16 %v1737, %v1725
        %v2374 = vpack.c.b16 %v1738, %v1726
        %v2375 = vpack.c.b16 %v1739, %v1727
        %v2376 = vpack.c.b16 %v1740, %v1728
        %v2377 = vpack.c.b16 %v1741, %v1729
        %v2378 = vpack.c.b16 %v1742, %v1730
        %v2379 = vpack.c.b16 %v1743, %v1731
        %v2380 = vpack.c.b16 %v1744, %v1732
        %v2381 = vpack.c.b16 %v1745, %v1733
        %v2382 = vpack.c.b16 %v1746, %v1734
        %v2383 = vpack.c.b16 %v1747, %v1735
        %v2384 = vpack.c.b16 %v1760, %v1748
        %v2385 = vpack.c.b16 %v1761, %v1749
        %v2386 = vpack.c.b16 %v1762, %v1750
        %v2387 = vpack.c.b16 %v1763, %v1751
        %v2388 = vpack.c.b16 %v1764, %v1752
        %v2389 = vpack.c.b16 %v1765, %v1753
        %v2390 = vpack.c.b16 %v1766, %v1754
        %v2391 = vpack.c.b16 %v1767, %v1755
        %v2392 = vpack.c.b16 %v1768, %v1756
        %v2393 = vpack.c.b16 %v1769, %v1757
        %v2394 = vpack.c.b16 %v1770, %v1758
        %v2395 = vpack.c.b16 %v1771, %v1759
        %v2396 = vpack.c.b16 %v1784, %v1772
        %v2397 = vpack.c.b16 %v1785, %v1773
        %v2398 = vpack.c.b16 %v1786, %v1774
        %v2399 = vpack.c.b16 %v1787, %v1775
        %v2400 = vpack.c.b16 %v1788, %v1776
        %v2401 = vpack.c.b16 %v1789, %v1777
        %v2402 = vpack.c.b16 %v1790, %v1778
        %v2403 = vpack.c.b16 %v1791, %v1779
        %v2404 = vpack.c.b16 %v1792, %v1780
        %v2405 = vpack.c.b16 %v1793, %v1781
        %v2406 = vpack.c.b16 %v1794, %v1782
        %v2407 = vpack.c.b16 %v1795, %v1783
        %v2408 = vpack.c.b16 %v1808, %v1796
        %v2409 = vpack.c.b16 %v1809, %v1797
        %v2410 = vpack.c.b16 %v1810, %v1798
        %v2411 = vpack.c.b16 %v1811, %v1799
        %v2412 = vpack.c.b16 %v1812, %v1800
        %v2413 = vpack.c.b16 %v1813, %v1801
        %v2414 = vpack.c.b16 %v1814, %v1802
        %v2415 = vpack.c.b16 %v1815, %v1803
        %v2416 = vpack.c.b16 %v1816, %v1804
        %v2417 = vpack.c.b16 %v1817, %v1805
        %v2418 = vpack.c.b16 %v1818, %v1806
        %v2419 = vpack.c.b16 %v1819, %v1807
        %v2420 = vpack.c.b16 %v1832, %v1820
        %v2421 = vpack.c.b16 %v1833, %v1821
        %v2422 = vpack.c.b16 %v1834, %v1822
        %v2423 = vpack.c.b16 %v1835, %v1823
        %v2424 = vpack.c.b16 %v1836, %v1824
        %v2425 = vpack.c.b16 %v1837, %v1825
        %v2426 = vpack.c.b16 %v1838, %v1826
        %v2427 = vpack.c.b16 %v1839, %v1827
        %v2428 = vpack.c.b16 %v1840, %v1828
        %v2429 = vpack.c.b16 %v1841, %v1829
        %v2430 = vpack.c.b16 %v1842, %v1830
        %v2431 = vpack.c.b16 %v1843, %v1831
        %v2432 = vpack.c.b16 %v1856, %v1844
        %v2433 = vpack.c.b16 %v1857, %v1845
        %v2434 = vpack.c.b16 %v1858, %v1846
        %v2435 = vpack.c.b16 %v1859, %v1847
        %v2436 = vpack.c.b16 %v1860, %v1848
        %v2437 = vpack.c.b16 %v1861, %v1849
        %v2438 = vpack.c.b16 %v1862, %v1850
        %v2439 = vpack.c.b16 %v1863, %v1851
        %v2440 = vpack.c.b16 %v1864, %v1852
        %v2441 = vpack.c.b16 %v1865, %v1853
        %v2442 = vpack.c.b16 %v1866, %v1854
        %v2443 = vpack.c.b16 %v1867, %v1855
        %v2444 = vpack.c.b16 %v1880, %v1868
        %v2445 = vpack.c.b16 %v1881, %v1869
        %v2446 = vpack.c.b16 %v1882, %v1870
        %v2447 = vpack.c.b16 %v1883, %v1871
        %v2448 = vpack.c.b16 %v1884, %v1872
        %v2449 = vpack.c.b16 %v1885, %v1873
        %v2450 = vpack.c.b16 %v1886, %v1874
        %v2451 = vpack.c.b16 %v1887, %v1875
        %v2452 = vpack.c.b16 %v1888, %v1876
        %v2453 = vpack.c.b16 %v1889, %v1877
        %v2454 = vpack.c.b16 %v1890, %v1878
        %v2455 = vpack.c.b16 %v1891, %v1879
        %v2456 = vpack.c.b16 %v1904, %v1892
        %v2457 = vpack.c.b16 %v1905, %v1893
        %v2458 = vpack.c.b16 %v1906, %v1894
        %v2459 = vpack.c.b16 %v1907, %v1895
        %v2460 = vpack.c.b16 %v1908, %v1896
        %v2461 = vpack.c.b16 %v1909, %v1897
        %v2462 = vpack.c.b16 %v1910, %v1898
        %v2463 = vpack.c.b16 %v1911, %v1899
        %v2464 = vpack.c.b16 %v1912, %v1900
        %v2465 = vpack.c.b16 %v1913, %v1901
        %v2466 = vpack.c.b16 %v1914, %v1902
        %v2467 = vpack.c.b16 %v1915, %v1903
        %v2468 = vpack.c.b16 %v1928, %v1916
        %v2469 = vpack.c.b16 %v1929, %v1917
        %v2470 = vpack.c.b16 %v1930, %v1918
        %v2471 = vpack.c.b16 %v1931, %v1919
        %v2472 = vpack.c.b16 %v1932, %v1920
        %v2473 = vpack.c.b16 %v1933, %v1921
        %v2474 = vpack.c.b16 %v1934, %v1922
        %v2475 = vpack.c.b16 %v1935, %v1923
        %v2476 = vpack.c.b16 %v1936, %v1924
        %v2477 = vpack.c.b16 %v1937, %v1925
        %v2478 = vpack.c.b16 %v1938, %v1926
        %v2479 = vpack.c.b16 %v1939, %v1927
        %v2480 = vpack.c.b16 %v1952, %v1940
        %v2481 = vpack.c.b16 %v1953, %v1941
        %v2482 = vpack.c.b16 %v1954, %v1942
        %v2483 = vpack.c.b16 %v1955, %v1943
        %v2484 = vpack.c.b16 %v1956, %v1944
        %v2485 = vpack.c.b16 %v1957, %v1945
        %v2486 = vpack.c.b16 %v1958, %v1946
        %v2487 = vpack.c.b16 %v1959, %v1947
        %v2488 = vpack.c.b16 %v1960, %v1948
        %v2489 = vpack.c.b16 %v1961, %v1949
        %v2490 = vpack.c.b16 %v1962, %v1950
        %v2491 = vpack.c.b16 %v1963, %v1951
        %v2492 = vpack.c.b16 %v1976, %v1964
        %v2493 = vpack.c.b16 %v1977, %v1965
        %v2494 = vpack.c.b16 %v1978, %v1966
        %v2495 = vpack.c.b16 %v1979, %v1967
        %v2496 = vpack.c.b16 %v1980, %v1968
        %v2497 = vpack.c.b16 %v1981, %v1969
        %v2498 = vpack.c.b16 %v1982, %v1970
        %v2499 = vpack.c.b16 %v1983, %v1971
        %v2500 = vpack.c.b16 %v1984, %v1972
        %v2501 = vpack.c.b16 %v1985, %v1973
        %v2502 = vpack.c.b16 %v1986, %v1974
        %v2503 = vpack.c.b16 %v1987, %v1975
        %v2504 = vpack.c.b16 %v2000, %v1988
        %v2505 = vpack.c.b16 %v2001, %v1989
        %v2506 = vpack.c.b16 %v2002, %v1990
        %v2507 = vpack.c.b16 %v2003, %v1991
        %v2508 = vpack.c.b16 %v2004, %v1992
        %v2509 = vpack.c.b16 %v2005, %v1993
        %v2510 = vpack.c.b16 %v2006, %v1994
        %v2511 = vpack.c.b16 %v2007, %v1995
        %v2512 = vpack.c.b16 %v2008, %v1996
        %v2513 = vpack.c.b16 %v2009, %v1997
        %v2514 = vpack.c.b16 %v2010, %v1998
        %v2515 = vpack.c.b16 %v2011, %v1999
        %v2516 = vpack.c.b16 %v2024, %v2012
        %v2517 = vpack.c.b16 %v2025, %v2013
        %v2518 = vpack.c.b16 %v2026, %v2014
        %v2519 = vpack.c.b16 %v2027, %v2015
        %v2520 = vpack.c.b16 %v2028, %v2016
        %v2521 = vpack.c.b16 %v2029, %v2017
        %v2522 = vpack.c.b16 %v2030, %v2018
        %v2523 = vpack.c.b16 %v2031, %v2019
        %v2524 = vpack.c.b16 %v2032, %v2020
        %v2525 = vpack.c.b16 %v2033, %v2021
        %v2526 = vpack.c.b16 %v2034, %v2022
        %v2527 = vpack.c.b16 %v2035, %v2023
        %v2528 = vpack.c.b16 %v2048, %v2036
        %v2529 = vpack.c.b16 %v2049, %v2037
        %v2530 = vpack.c.b16 %v2050, %v2038
        %v2531 = vpack.c.b16 %v2051, %v2039
        %v2532 = vpack.c.b16 %v2052, %v2040
        %v2533 = vpack.c.b16 %v2053, %v2041
        %v2534 = vpack.c.b16 %v2054, %v2042
        %v2535 = vpack.c.b16 %v2055, %v2043
        %v2536 = vpack.c.b16 %v2056, %v2044
        %v2537 = vpack.c.b16 %v2057, %v2045
        %v2538 = vpack.c.b16 %v2058, %v2046
        %v2539 = vpack.c.b16 %v2059, %v2047
        %v2540 = vpack.c.b16 %v2072, %v2060
        %v2541 = vpack.c.b16 %v2073, %v2061
        %v2542 = vpack.c.b16 %v2074, %v2062
        %v2543 = vpack.c.b16 %v2075, %v2063
        %v2544 = vpack.c.b16 %v2076, %v2064
        %v2545 = vpack.c.b16 %v2077, %v2065
        %v2546 = vpack.c.b16 %v2078, %v2066
        %v2547 = vpack.c.b16 %v2079, %v2067
        %v2548 = vpack.c.b16 %v2080, %v2068
        %v2549 = vpack.c.b16 %v2081, %v2069
        %v2550 = vpack.c.b16 %v2082, %v2070
        %v2551 = vpack.c.b16 %v2083, %v2071
        %v2552 = vpack.c.b16 %v2096, %v2084
        %v2553 = vpack.c.b16 %v2097, %v2085
        %v2554 = vpack.c.b16 %v2098, %v2086
        %v2555 = vpack.c.b16 %v2099, %v2087
        %v2556 = vpack.c.b16 %v2100, %v2088
        %v2557 = vpack.c.b16 %v2101, %v2089
        %v2558 = vpack.c.b16 %v2102, %v2090
        %v2559 = vpack.c.b16 %v2103, %v2091
        %v2560 = vpack.c.b16 %v2104, %v2092
        %v2561 = vpack.c.b16 %v2105, %v2093
        %v2562 = vpack.c.b16 %v2106, %v2094
        %v2563 = vpack.c.b16 %v2107, %v2095
        %v2564 = vpack.c.b16 %v2120, %v2108
        %v2565 = vpack.c.b16 %v2121, %v2109
        %v2566 = vpack.c.b16 %v2122, %v2110
        %v2567 = vpack.c.b16 %v2123, %v2111
        %v2568 = vpack.c.b16 %v2124, %v2112
        %v2569 = vpack.c.b16 %v2125, %v2113
        %v2570 = vpack.c.b16 %v2126, %v2114
        %v2571 = vpack.c.b16 %v2127, %v2115
        %v2572 = vpack.c.b16 %v2128, %v2116
        %v2573 = vpack.c.b16 %v2129, %v2117
        %v2574 = vpack.c.b16 %v2130, %v2118
        %v2575 = vpack.c.b16 %v2131, %v2119
        %v2576 = vpack.c.b16 %v2144, %v2132
        %v2577 = vpack.c.b16 %v2145, %v2133
        %v2578 = vpack.c.b16 %v2146, %v2134
        %v2579 = vpack.c.b16 %v2147, %v2135
        %v2580 = vpack.c.b16 %v2148, %v2136
        %v2581 = vpack.c.b16 %v2149, %v2137
        %v2582 = vpack.c.b16 %v2150, %v2138
        %v2583 = vpack.c.b16 %v2151, %v2139
        %v2584 = vpack.c.b16 %v2152, %v2140
        %v2585 = vpack.c.b16 %v2153, %v2141
        %v2586 = vpack.c.b16 %v2154, %v2142
        %v2587 = vpack.c.b16 %v2155, %v2143
        %v2588 = vpack.c.b16 %v2168, %v2156
        %v2589 = vpack.c.b16 %v2169, %v2157
        %v2590 = vpack.c.b16 %v2170, %v2158
        %v2591 = vpack.c.b16 %v2171, %v2159
        %v2592 = vpack.c.b16 %v2172, %v2160
        %v2593 = vpack.c.b16 %v2173, %v2161
        %v2594 = vpack.c.b16 %v2174, %v2162
        %v2595 = vpack.c.b16 %v2175, %v2163
        %v2596 = vpack.c.b16 %v2176, %v2164
        %v2597 = vpack.c.b16 %v2177, %v2165
        %v2598 = vpack.c.b16 %v2178, %v2166
        %v2599 = vpack.c.b16 %v2179, %v2167
        %v2600 = vpack.c.b16 %v2192, %v2180
        %v2601 = vpack.c.b16 %v2193, %v2181
        %v2602 = vpack.c.b16 %v2194, %v2182
        %v2603 = vpack.c.b16 %v2195, %v2183
        %v2604 = vpack.c.b16 %v2196, %v2184
        %v2605 = vpack.c.b16 %v2197, %v2185
        %v2606 = vpack.c.b16 %v2198, %v2186
        %v2607 = vpack.c.b16 %v2199, %v2187
        %v2608 = vpack.c.b16 %v2200, %v2188
        %v2609 = vpack.c.b16 %v2201, %v2189
        %v2610 = vpack.c.b16 %v2202, %v2190
        %v2611 = vpack.c.b16 %v2203, %v2191
        %v2612 = vpack.c.b16 %v2216, %v2204
        %v2613 = vpack.c.b16 %v2217, %v2205
        %v2614 = vpack.c.b16 %v2218, %v2206
        %v2615 = vpack.c.b16 %v2219, %v2207
        %v2616 = vpack.c.b16 %v2220, %v2208
        %v2617 = vpack.c.b16 %v2221, %v2209
        %v2618 = vpack.c.b16 %v2222, %v2210
        %v2619 = vpack.c.b16 %v2223, %v2211
        %v2620 = vpack.c.b16 %v2224, %v2212
        %v2621 = vpack.c.b16 %v2225, %v2213
        %v2622 = vpack.c.b16 %v2226, %v2214
        %v2623 = vpack.c.b16 %v2227, %v2215
        %v2624 = vpack.c.b16 %v2240, %v2228
        %v2625 = vpack.c.b16 %v2241, %v2229
        %v2626 = vpack.c.b16 %v2242, %v2230
        %v2627 = vpack.c.b16 %v2243, %v2231
        %v2628 = vpack.c.b16 %v2244, %v2232
        %v2629 = vpack.c.b16 %v2245, %v2233
        %v2630 = vpack.c.b16 %v2246, %v2234
        %v2631 = vpack.c.b16 %v2247, %v2235
        %v2632 = vpack.c.b16 %v2248, %v2236
        %v2633 = vpack.c.b16 %v2249, %v2237
        %v2634 = vpack.c.b16 %v2250, %v2238
        %v2635 = vpack.c.b16 %v2251, %v2239
        %3020 = vmatprep.subr.bf16.mxu0 %v2253
        %3021 = vmatpush1.bf16.msra.mxu0 %v2252
        %3022 = vmatprep.subr.bf16.mxu0 %v2265
        %3023 = vmatpush1.bf16.msra.mxu0 %v2264
        %3024 = vmatprep.subr.bf16.mxu0 %v2277
        %3025 = vmatpush1.bf16.msra.mxu0 %v2276
        %3026 = vmatprep.subr.bf16.mxu0 %v2289
        %3027 = vmatpush1.bf16.msra.mxu0 %v2288
        %3028 = vmatprep.subr.bf16.mxu0 %v2301
        %3029 = vmatpush1.bf16.msra.mxu0 %v2300
        %3030 = vmatprep.subr.bf16.mxu0 %v2313
        %3031 = vmatpush1.bf16.msra.mxu0 %v2312
        %3032 = vmatprep.subr.bf16.mxu0 %v2325
        %3033 = vmatpush1.bf16.msra.mxu0 %v2324
        %3034 = vmatprep.subr.bf16.mxu0 %v2337
        %3035 = vmatpush1.bf16.msra.mxu0 %v2336
        %3036 = vmatprep.subr.bf16.mxu0 %v2349
        %3037 = vmatpush1.bf16.msra.mxu0 %v2348
        %3038 = vmatprep.subr.bf16.mxu0 %v2361
        %3039 = vmatpush1.bf16.msra.mxu0 %v2360
        %3040 = vmatprep.subr.bf16.mxu0 %v2373
        %3041 = vmatpush1.bf16.msra.mxu0 %v2372
        %3042 = vmatprep.subr.bf16.mxu0 %v2385
        %3043 = vmatpush1.bf16.msra.mxu0 %v2384
        %3044 = vmatprep.subr.bf16.mxu0 %v2397
        %3045 = vmatpush1.bf16.msra.mxu0 %v2396
        %3046 = vmatprep.subr.bf16.mxu0 %v2409
        %3047 = vmatpush1.bf16.msra.mxu0 %v2408
        %3048 = vmatprep.subr.bf16.mxu0 %v2421
        %3049 = vmatpush1.bf16.msra.mxu0 %v2420
        %3050 = vmatprep.subr.bf16.mxu0 %v2433
        %3051 = vmatpush1.bf16.msra.mxu0 %v2432
        %3052 = vmatprep.mubr.bf16.mxu0 %v651
        %3053 = vmatmul.mubr.bf16.gmra.mrb[0].mxu0 %v650
        %v3054 = vpop.f32.mrb[0].mxu0
        %v3055 = vadd.f32 %v1043, %v3054
        %v3056 = vpop.f32.mrb[0].mxu0
        %v3057 = vadd.f32 %v1047, %v3056
        %v3058 = vpop.f32.mrb[0].mxu0
        %v3059 = vadd.f32 %v1043, %v3058
        %v3060 = vpop.f32.mrb[0].mxu0
        %v3061 = vadd.f32 %v1047, %v3060
        %3062 = vdwg.mxu0
        %3063 = vmatprep.subr.bf16.mxu0 %v2445
        %3064 = vmatpush1.bf16.msra.mxu0 %v2444
        %3065 = vmatprep.subr.bf16.mxu0 %v2457
        %3066 = vmatpush1.bf16.msra.mxu0 %v2456
        %3067 = vmatprep.subr.bf16.mxu0 %v2469
        %3068 = vmatpush1.bf16.msra.mxu0 %v2468
        %3069 = vmatprep.subr.bf16.mxu0 %v2481
        %3070 = vmatpush1.bf16.msra.mxu0 %v2480
        %3071 = vmatprep.subr.bf16.mxu0 %v2493
        %3072 = vmatpush1.bf16.msra.mxu0 %v2492
        %3073 = vmatprep.subr.bf16.mxu0 %v2505
        %3074 = vmatpush1.bf16.msra.mxu0 %v2504
        %3075 = vmatprep.subr.bf16.mxu0 %v2517
        %3076 = vmatpush1.bf16.msra.mxu0 %v2516
        %3077 = vmatprep.subr.bf16.mxu0 %v2529
        %3078 = vmatpush1.bf16.msra.mxu0 %v2528
        %3079 = vmatprep.subr.bf16.mxu0 %v2541
        %3080 = vmatpush1.bf16.msra.mxu0 %v2540
        %3081 = vmatprep.subr.bf16.mxu0 %v2553
        %3082 = vmatpush1.bf16.msra.mxu0 %v2552
        %3083 = vmatprep.subr.bf16.mxu0 %v2565
        %3084 = vmatpush1.bf16.msra.mxu0 %v2564
        %3085 = vmatprep.subr.bf16.mxu0 %v2577
        %3086 = vmatpush1.bf16.msra.mxu0 %v2576
        %3087 = vmatprep.subr.bf16.mxu0 %v2589
        %3088 = vmatpush1.bf16.msra.mxu0 %v2588
        %3089 = vmatprep.subr.bf16.mxu0 %v2601
        %3090 = vmatpush1.bf16.msra.mxu0 %v2600
        %3091 = vmatprep.subr.bf16.mxu0 %v2613
        %3092 = vmatpush1.bf16.msra.mxu0 %v2612
        %3093 = vmatprep.subr.bf16.mxu0 %v2625
        %3094 = vmatpush1.bf16.msra.mxu0 %v2624
        %3095 = vmatprep.mubr.bf16.mxu0 %v653
        %3096 = vmatmul.mubr.bf16.gmra.mrb[0].mxu0 %v652
        %v3097 = vpop.f32.mrb[0].mxu0
        %v3098 = vadd.f32 %v3055, %v3097
        %v3099 = vpop.f32.mrb[0].mxu0
        %v3100 = vadd.f32 %v3057, %v3099
        %v3101 = vpop.f32.mrb[0].mxu0
        %v3102 = vadd.f32 %v3059, %v3101
        %v3103 = vpop.f32.mrb[0].mxu0
        %v3104 = vadd.f32 %v3061, %v3103
        %3105 = vdwg.mxu0
        %3106 = vmatprep.subr.bf16.mxu0 %v2255
        %3107 = vmatpush1.bf16.msra.mxu0 %v2254
        %3108 = vmatprep.subr.bf16.mxu0 %v2267
        %3109 = vmatpush1.bf16.msra.mxu0 %v2266
        %3110 = vmatprep.subr.bf16.mxu0 %v2279
        %3111 = vmatpush1.bf16.msra.mxu0 %v2278
        %3112 = vmatprep.subr.bf16.mxu0 %v2291
        %3113 = vmatpush1.bf16.msra.mxu0 %v2290
        %3114 = vmatprep.subr.bf16.mxu0 %v2303
        %3115 = vmatpush1.bf16.msra.mxu0 %v2302
        %3116 = vmatprep.subr.bf16.mxu0 %v2315
        %3117 = vmatpush1.bf16.msra.mxu0 %v2314
        %3118 = vmatprep.subr.bf16.mxu0 %v2327
        %3119 = vmatpush1.bf16.msra.mxu0 %v2326
        %3120 = vmatprep.subr.bf16.mxu0 %v2339
        %3121 = vmatpush1.bf16.msra.mxu0 %v2338
        %3122 = vmatprep.subr.bf16.mxu0 %v2351
        %3123 = vmatpush1.bf16.msra.mxu0 %v2350
        %3124 = vmatprep.subr.bf16.mxu0 %v2363
        %3125 = vmatpush1.bf16.msra.mxu0 %v2362
        %3126 = vmatprep.subr.bf16.mxu0 %v2375
        %3127 = vmatpush1.bf16.msra.mxu0 %v2374
        %3128 = vmatprep.subr.bf16.mxu0 %v2387
        %3129 = vmatpush1.bf16.msra.mxu0 %v2386
        %3130 = vmatprep.subr.bf16.mxu0 %v2399
        %3131 = vmatpush1.bf16.msra.mxu0 %v2398
        %3132 = vmatprep.subr.bf16.mxu0 %v2411
        %3133 = vmatpush1.bf16.msra.mxu0 %v2410
        %3134 = vmatprep.subr.bf16.mxu0 %v2423
        %3135 = vmatpush1.bf16.msra.mxu0 %v2422
        %3136 = vmatprep.subr.bf16.mxu0 %v2435
        %3137 = vmatpush1.bf16.msra.mxu0 %v2434
        %3138 = vmatprep.mubr.bf16.mxu0 %v651
        %3139 = vmatmul.mubr.bf16.gmra.mrb[0].mxu0 %v650
        %v3140 = vpop.f32.mrb[0].mxu0
        %v3141 = vadd.f32 %v1051, %v3140
        %v3142 = vpop.f32.mrb[0].mxu0
        %v3143 = vadd.f32 %v1055, %v3142
        %v3144 = vpop.f32.mrb[0].mxu0
        %v3145 = vadd.f32 %v1051, %v3144
        %v3146 = vpop.f32.mrb[0].mxu0
        %v3147 = vadd.f32 %v1055, %v3146
        %3148 = vdwg.mxu0
        %3149 = vmatprep.subr.bf16.mxu0 %v2447
        %3150 = vmatpush1.bf16.msra.mxu0 %v2446
        %3151 = vmatprep.subr.bf16.mxu0 %v2459
        %3152 = vmatpush1.bf16.msra.mxu0 %v2458
        %3153 = vmatprep.subr.bf16.mxu0 %v2471
        %3154 = vmatpush1.bf16.msra.mxu0 %v2470
        %3155 = vmatprep.subr.bf16.mxu0 %v2483
        %3156 = vmatpush1.bf16.msra.mxu0 %v2482
        %3157 = vmatprep.subr.bf16.mxu0 %v2495
        %3158 = vmatpush1.bf16.msra.mxu0 %v2494
        %3159 = vmatprep.subr.bf16.mxu0 %v2507
        %3160 = vmatpush1.bf16.msra.mxu0 %v2506
        %3161 = vmatprep.subr.bf16.mxu0 %v2519
        %3162 = vmatpush1.bf16.msra.mxu0 %v2518
        %3163 = vmatprep.subr.bf16.mxu0 %v2531
        %3164 = vmatpush1.bf16.msra.mxu0 %v2530
        %3165 = vmatprep.subr.bf16.mxu0 %v2543
        %3166 = vmatpush1.bf16.msra.mxu0 %v2542
        %3167 = vmatprep.subr.bf16.mxu0 %v2555
        %3168 = vmatpush1.bf16.msra.mxu0 %v2554
        %3169 = vmatprep.subr.bf16.mxu0 %v2567
        %3170 = vmatpush1.bf16.msra.mxu0 %v2566
        %3171 = vmatprep.subr.bf16.mxu0 %v2579
        %3172 = vmatpush1.bf16.msra.mxu0 %v2578
        %3173 = vmatprep.subr.bf16.mxu0 %v2591
        %3174 = vmatpush1.bf16.msra.mxu0 %v2590
        %3175 = vmatprep.subr.bf16.mxu0 %v2603
        %3176 = vmatpush1.bf16.msra.mxu0 %v2602
        %3177 = vmatprep.subr.bf16.mxu0 %v2615
        %3178 = vmatpush1.bf16.msra.mxu0 %v2614
        %3179 = vmatprep.subr.bf16.mxu0 %v2627
        %3180 = vmatpush1.bf16.msra.mxu0 %v2626
        %3181 = vmatprep.mubr.bf16.mxu0 %v653
        %3182 = vmatmul.mubr.bf16.gmra.mrb[0].mxu0 %v652
        %v3183 = vpop.f32.mrb[0].mxu0
        %v3184 = vadd.f32 %v3141, %v3183
        %v3185 = vpop.f32.mrb[0].mxu0
        %v3186 = vadd.f32 %v3143, %v3185
        %v3187 = vpop.f32.mrb[0].mxu0
        %v3188 = vadd.f32 %v3145, %v3187
        %v3189 = vpop.f32.mrb[0].mxu0
        %v3190 = vadd.f32 %v3147, %v3189
        %3191 = vdwg.mxu0
        %3192 = vmatprep.subr.bf16.mxu0 %v2257
        %3193 = vmatpush1.bf16.msra.mxu0 %v2256
        %3194 = vmatprep.subr.bf16.mxu0 %v2269
        %3195 = vmatpush1.bf16.msra.mxu0 %v2268
        %3196 = vmatprep.subr.bf16.mxu0 %v2281
        %3197 = vmatpush1.bf16.msra.mxu0 %v2280
        %3198 = vmatprep.subr.bf16.mxu0 %v2293
        %3199 = vmatpush1.bf16.msra.mxu0 %v2292
        %3200 = vmatprep.subr.bf16.mxu0 %v2305
        %3201 = vmatpush1.bf16.msra.mxu0 %v2304
        %3202 = vmatprep.subr.bf16.mxu0 %v2317
        %3203 = vmatpush1.bf16.msra.mxu0 %v2316
        %3204 = vmatprep.subr.bf16.mxu0 %v2329
        %3205 = vmatpush1.bf16.msra.mxu0 %v2328
        %3206 = vmatprep.subr.bf16.mxu0 %v2341
        %3207 = vmatpush1.bf16.msra.mxu0 %v2340
        %3208 = vmatprep.subr.bf16.mxu0 %v2353
        %3209 = vmatpush1.bf16.msra.mxu0 %v2352
        %3210 = vmatprep.subr.bf16.mxu0 %v2365
        %3211 = vmatpush1.bf16.msra.mxu0 %v2364
        %3212 = vmatprep.subr.bf16.mxu0 %v2377
        %3213 = vmatpush1.bf16.msra.mxu0 %v2376
        %3214 = vmatprep.subr.bf16.mxu0 %v2389
        %3215 = vmatpush1.bf16.msra.mxu0 %v2388
        %3216 = vmatprep.subr.bf16.mxu0 %v2401
        %3217 = vmatpush1.bf16.msra.mxu0 %v2400
        %3218 = vmatprep.subr.bf16.mxu0 %v2413
        %3219 = vmatpush1.bf16.msra.mxu0 %v2412
        %3220 = vmatprep.subr.bf16.mxu0 %v2425
        %3221 = vmatpush1.bf16.msra.mxu0 %v2424
        %3222 = vmatprep.subr.bf16.mxu0 %v2437
        %3223 = vmatpush1.bf16.msra.mxu0 %v2436
        %3224 = vmatprep.mubr.bf16.mxu0 %v651
        %3225 = vmatmul.mubr.bf16.gmra.mrb[0].mxu0 %v650
        %v3226 = vpop.f32.mrb[0].mxu0
        %v3227 = vadd.f32 %v1059, %v3226
        %v3228 = vpop.f32.mrb[0].mxu0
        %v3229 = vadd.f32 %v1063, %v3228
        %v3230 = vpop.f32.mrb[0].mxu0
        %v3231 = vadd.f32 %v1059, %v3230
        %v3232 = vpop.f32.mrb[0].mxu0
        %v3233 = vadd.f32 %v1063, %v3232
        %3234 = vdwg.mxu0
        %3235 = vmatprep.subr.bf16.mxu0 %v2449
        %3236 = vmatpush1.bf16.msra.mxu0 %v2448
        %3237 = vmatprep.subr.bf16.mxu0 %v2461
        %3238 = vmatpush1.bf16.msra.mxu0 %v2460
        %3239 = vmatprep.subr.bf16.mxu0 %v2473
        %3240 = vmatpush1.bf16.msra.mxu0 %v2472
        %3241 = vmatprep.subr.bf16.mxu0 %v2485
        %3242 = vmatpush1.bf16.msra.mxu0 %v2484
        %3243 = vmatprep.subr.bf16.mxu0 %v2497
        %3244 = vmatpush1.bf16.msra.mxu0 %v2496
        %3245 = vmatprep.subr.bf16.mxu0 %v2509
        %3246 = vmatpush1.bf16.msra.mxu0 %v2508
        %3247 = vmatprep.subr.bf16.mxu0 %v2521
        %3248 = vmatpush1.bf16.msra.mxu0 %v2520
        %3249 = vmatprep.subr.bf16.mxu0 %v2533
        %3250 = vmatpush1.bf16.msra.mxu0 %v2532
        %3251 = vmatprep.subr.bf16.mxu0 %v2545
        %3252 = vmatpush1.bf16.msra.mxu0 %v2544
        %3253 = vmatprep.subr.bf16.mxu0 %v2557
        %3254 = vmatpush1.bf16.msra.mxu0 %v2556
        %3255 = vmatprep.subr.bf16.mxu0 %v2569
        %3256 = vmatpush1.bf16.msra.mxu0 %v2568
        %3257 = vmatprep.subr.bf16.mxu0 %v2581
        %3258 = vmatpush1.bf16.msra.mxu0 %v2580
        %3259 = vmatprep.subr.bf16.mxu0 %v2593
        %3260 = vmatpush1.bf16.msra.mxu0 %v2592
        %3261 = vmatprep.subr.bf16.mxu0 %v2605
        %3262 = vmatpush1.bf16.msra.mxu0 %v2604
        %3263 = vmatprep.subr.bf16.mxu0 %v2617
        %3264 = vmatpush1.bf16.msra.mxu0 %v2616
        %3265 = vmatprep.subr.bf16.mxu0 %v2629
        %3266 = vmatpush1.bf16.msra.mxu0 %v2628
        %3267 = vmatprep.mubr.bf16.mxu0 %v653
        %3268 = vmatmul.mubr.bf16.gmra.mrb[0].mxu0 %v652
        %v3269 = vpop.f32.mrb[0].mxu0
        %v3270 = vadd.f32 %v3227, %v3269
        %v3271 = vpop.f32.mrb[0].mxu0
        %v3272 = vadd.f32 %v3229, %v3271
        %v3273 = vpop.f32.mrb[0].mxu0
        %v3274 = vadd.f32 %v3231, %v3273
        %v3275 = vpop.f32.mrb[0].mxu0
        %v3276 = vadd.f32 %v3233, %v3275
        %3277 = vdwg.mxu0
        %3278 = vmatprep.subr.bf16.mxu0 %v2259
        %3279 = vmatpush1.bf16.msra.mxu0 %v2258
        %3280 = vmatprep.subr.bf16.mxu0 %v2271
        %3281 = vmatpush1.bf16.msra.mxu0 %v2270
        %3282 = vmatprep.subr.bf16.mxu0 %v2283
        %3283 = vmatpush1.bf16.msra.mxu0 %v2282
        %3284 = vmatprep.subr.bf16.mxu0 %v2295
        %3285 = vmatpush1.bf16.msra.mxu0 %v2294
        %3286 = vmatprep.subr.bf16.mxu0 %v2307
        %3287 = vmatpush1.bf16.msra.mxu0 %v2306
        %3288 = vmatprep.subr.bf16.mxu0 %v2319
        %3289 = vmatpush1.bf16.msra.mxu0 %v2318
        %3290 = vmatprep.subr.bf16.mxu0 %v2331
        %3291 = vmatpush1.bf16.msra.mxu0 %v2330
        %3292 = vmatprep.subr.bf16.mxu0 %v2343
        %3293 = vmatpush1.bf16.msra.mxu0 %v2342
        %3294 = vmatprep.subr.bf16.mxu0 %v2355
        %3295 = vmatpush1.bf16.msra.mxu0 %v2354
        %3296 = vmatprep.subr.bf16.mxu0 %v2367
        %3297 = vmatpush1.bf16.msra.mxu0 %v2366
        %3298 = vmatprep.subr.bf16.mxu0 %v2379
        %3299 = vmatpush1.bf16.msra.mxu0 %v2378
        %3300 = vmatprep.subr.bf16.mxu0 %v2391
        %3301 = vmatpush1.bf16.msra.mxu0 %v2390
        %3302 = vmatprep.subr.bf16.mxu0 %v2403
        %3303 = vmatpush1.bf16.msra.mxu0 %v2402
        %3304 = vmatprep.subr.bf16.mxu0 %v2415
        %3305 = vmatpush1.bf16.msra.mxu0 %v2414
        %3306 = vmatprep.subr.bf16.mxu0 %v2427
        %3307 = vmatpush1.bf16.msra.mxu0 %v2426
        %3308 = vmatprep.subr.bf16.mxu0 %v2439
        %3309 = vmatpush1.bf16.msra.mxu0 %v2438
        %3310 = vmatprep.mubr.bf16.mxu0 %v651
        %3311 = vmatmul.mubr.bf16.gmra.mrb[0].mxu0 %v650
        %v3312 = vpop.f32.mrb[0].mxu0
        %v3313 = vadd.f32 %v1067, %v3312
        %v3314 = vpop.f32.mrb[0].mxu0
        %v3315 = vadd.f32 %v1071, %v3314
        %v3316 = vpop.f32.mrb[0].mxu0
        %v3317 = vadd.f32 %v1067, %v3316
        %v3318 = vpop.f32.mrb[0].mxu0
        %v3319 = vadd.f32 %v1071, %v3318
        %3320 = vdwg.mxu0
        %3321 = vmatprep.subr.bf16.mxu0 %v2451
        %3322 = vmatpush1.bf16.msra.mxu0 %v2450
        %3323 = vmatprep.subr.bf16.mxu0 %v2463
        %3324 = vmatpush1.bf16.msra.mxu0 %v2462
        %3325 = vmatprep.subr.bf16.mxu0 %v2475
        %3326 = vmatpush1.bf16.msra.mxu0 %v2474
        %3327 = vmatprep.subr.bf16.mxu0 %v2487
        %3328 = vmatpush1.bf16.msra.mxu0 %v2486
        %3329 = vmatprep.subr.bf16.mxu0 %v2499
        %3330 = vmatpush1.bf16.msra.mxu0 %v2498
        %3331 = vmatprep.subr.bf16.mxu0 %v2511
        %3332 = vmatpush1.bf16.msra.mxu0 %v2510
        %3333 = vmatprep.subr.bf16.mxu0 %v2523
        %3334 = vmatpush1.bf16.msra.mxu0 %v2522
        %3335 = vmatprep.subr.bf16.mxu0 %v2535
        %3336 = vmatpush1.bf16.msra.mxu0 %v2534
        %3337 = vmatprep.subr.bf16.mxu0 %v2547
        %3338 = vmatpush1.bf16.msra.mxu0 %v2546
        %3339 = vmatprep.subr.bf16.mxu0 %v2559
        %3340 = vmatpush1.bf16.msra.mxu0 %v2558
        %3341 = vmatprep.subr.bf16.mxu0 %v2571
        %3342 = vmatpush1.bf16.msra.mxu0 %v2570
        %3343 = vmatprep.subr.bf16.mxu0 %v2583
        %3344 = vmatpush1.bf16.msra.mxu0 %v2582
        %3345 = vmatprep.subr.bf16.mxu0 %v2595
        %3346 = vmatpush1.bf16.msra.mxu0 %v2594
        %3347 = vmatprep.subr.bf16.mxu0 %v2607
        %3348 = vmatpush1.bf16.msra.mxu0 %v2606
        %3349 = vmatprep.subr.bf16.mxu0 %v2619
        %3350 = vmatpush1.bf16.msra.mxu0 %v2618
        %3351 = vmatprep.subr.bf16.mxu0 %v2631
        %3352 = vmatpush1.bf16.msra.mxu0 %v2630
        %3353 = vmatprep.mubr.bf16.mxu0 %v653
        %3354 = vmatmul.mubr.bf16.gmra.mrb[0].mxu0 %v652
        %v3355 = vpop.f32.mrb[0].mxu0
        %v3356 = vadd.f32 %v3313, %v3355
        %v3357 = vpop.f32.mrb[0].mxu0
        %v3358 = vadd.f32 %v3315, %v3357
        %v3359 = vpop.f32.mrb[0].mxu0
        %v3360 = vadd.f32 %v3317, %v3359
        %v3361 = vpop.f32.mrb[0].mxu0
        %v3362 = vadd.f32 %v3319, %v3361
        %3363 = vdwg.mxu0
        %3364 = vmatprep.subr.bf16.mxu0 %v2261
        %3365 = vmatpush1.bf16.msra.mxu0 %v2260
        %3366 = vmatprep.subr.bf16.mxu0 %v2273
        %3367 = vmatpush1.bf16.msra.mxu0 %v2272
        %3368 = vmatprep.subr.bf16.mxu0 %v2285
        %3369 = vmatpush1.bf16.msra.mxu0 %v2284
        %3370 = vmatprep.subr.bf16.mxu0 %v2297
        %3371 = vmatpush1.bf16.msra.mxu0 %v2296
        %3372 = vmatprep.subr.bf16.mxu0 %v2309
        %3373 = vmatpush1.bf16.msra.mxu0 %v2308
        %3374 = vmatprep.subr.bf16.mxu0 %v2321
        %3375 = vmatpush1.bf16.msra.mxu0 %v2320
        %3376 = vmatprep.subr.bf16.mxu0 %v2333
        %3377 = vmatpush1.bf16.msra.mxu0 %v2332
        %3378 = vmatprep.subr.bf16.mxu0 %v2345
        %3379 = vmatpush1.bf16.msra.mxu0 %v2344
        %3380 = vmatprep.subr.bf16.mxu0 %v2357
        %3381 = vmatpush1.bf16.msra.mxu0 %v2356
        %3382 = vmatprep.subr.bf16.mxu0 %v2369
        %3383 = vmatpush1.bf16.msra.mxu0 %v2368
        %3384 = vmatprep.subr.bf16.mxu0 %v2381
        %3385 = vmatpush1.bf16.msra.mxu0 %v2380
        %3386 = vmatprep.subr.bf16.mxu0 %v2393
        %3387 = vmatpush1.bf16.msra.mxu0 %v2392
        %3388 = vmatprep.subr.bf16.mxu0 %v2405
        %3389 = vmatpush1.bf16.msra.mxu0 %v2404
        %3390 = vmatprep.subr.bf16.mxu0 %v2417
        %3391 = vmatpush1.bf16.msra.mxu0 %v2416
        %3392 = vmatprep.subr.bf16.mxu0 %v2429
        %3393 = vmatpush1.bf16.msra.mxu0 %v2428
        %3394 = vmatprep.subr.bf16.mxu0 %v2441
        %3395 = vmatpush1.bf16.msra.mxu0 %v2440
        %3396 = vmatprep.mubr.bf16.mxu0 %v651
        %3397 = vmatmul.mubr.bf16.gmra.mrb[0].mxu0 %v650
        %v3398 = vpop.f32.mrb[0].mxu0
        %v3399 = vadd.f32 %v1075, %v3398
        %v3400 = vpop.f32.mrb[0].mxu0
        %v3401 = vadd.f32 %v1079, %v3400
        %v3402 = vpop.f32.mrb[0].mxu0
        %v3403 = vadd.f32 %v1075, %v3402
        %v3404 = vpop.f32.mrb[0].mxu0
        %v3405 = vadd.f32 %v1079, %v3404
        %3406 = vdwg.mxu0
        %3407 = vmatprep.subr.bf16.mxu0 %v2453
        %3408 = vmatpush1.bf16.msra.mxu0 %v2452
        %3409 = vmatprep.subr.bf16.mxu0 %v2465
        %3410 = vmatpush1.bf16.msra.mxu0 %v2464
        %3411 = vmatprep.subr.bf16.mxu0 %v2477
        %3412 = vmatpush1.bf16.msra.mxu0 %v2476
        %3413 = vmatprep.subr.bf16.mxu0 %v2489
        %3414 = vmatpush1.bf16.msra.mxu0 %v2488
        %3415 = vmatprep.subr.bf16.mxu0 %v2501
        %3416 = vmatpush1.bf16.msra.mxu0 %v2500
        %3417 = vmatprep.subr.bf16.mxu0 %v2513
        %3418 = vmatpush1.bf16.msra.mxu0 %v2512
        %3419 = vmatprep.subr.bf16.mxu0 %v2525
        %3420 = vmatpush1.bf16.msra.mxu0 %v2524
        %3421 = vmatprep.subr.bf16.mxu0 %v2537
        %3422 = vmatpush1.bf16.msra.mxu0 %v2536
        %3423 = vmatprep.subr.bf16.mxu0 %v2549
        %3424 = vmatpush1.bf16.msra.mxu0 %v2548
        %3425 = vmatprep.subr.bf16.mxu0 %v2561
        %3426 = vmatpush1.bf16.msra.mxu0 %v2560
        %3427 = vmatprep.subr.bf16.mxu0 %v2573
        %3428 = vmatpush1.bf16.msra.mxu0 %v2572
        %3429 = vmatprep.subr.bf16.mxu0 %v2585
        %3430 = vmatpush1.bf16.msra.mxu0 %v2584
        %3431 = vmatprep.subr.bf16.mxu0 %v2597
        %3432 = vmatpush1.bf16.msra.mxu0 %v2596
        %3433 = vmatprep.subr.bf16.mxu0 %v2609
        %3434 = vmatpush1.bf16.msra.mxu0 %v2608
        %3435 = vmatprep.subr.bf16.mxu0 %v2621
        %3436 = vmatpush1.bf16.msra.mxu0 %v2620
        %3437 = vmatprep.subr.bf16.mxu0 %v2633
        %3438 = vmatpush1.bf16.msra.mxu0 %v2632
        %3439 = vmatprep.mubr.bf16.mxu0 %v653
        %3440 = vmatmul.mubr.bf16.gmra.mrb[0].mxu0 %v652
        %v3441 = vpop.f32.mrb[0].mxu0
        %v3442 = vadd.f32 %v3399, %v3441
        %v3443 = vpop.f32.mrb[0].mxu0
        %v3444 = vadd.f32 %v3401, %v3443
        %v3445 = vpop.f32.mrb[0].mxu0
        %v3446 = vadd.f32 %v3403, %v3445
        %v3447 = vpop.f32.mrb[0].mxu0
        %v3448 = vadd.f32 %v3405, %v3447
        %3449 = vdwg.mxu0
        %3450 = vmatprep.subr.bf16.mxu0 %v2263
        %3451 = vmatpush1.bf16.msra.mxu0 %v2262
        %3452 = vmatprep.subr.bf16.mxu0 %v2275
        %3453 = vmatpush1.bf16.msra.mxu0 %v2274
        %3454 = vmatprep.subr.bf16.mxu0 %v2287
        %3455 = vmatpush1.bf16.msra.mxu0 %v2286
        %3456 = vmatprep.subr.bf16.mxu0 %v2299
        %3457 = vmatpush1.bf16.msra.mxu0 %v2298
        %3458 = vmatprep.subr.bf16.mxu0 %v2311
        %3459 = vmatpush1.bf16.msra.mxu0 %v2310
        %3460 = vmatprep.subr.bf16.mxu0 %v2323
        %3461 = vmatpush1.bf16.msra.mxu0 %v2322
        %3462 = vmatprep.subr.bf16.mxu0 %v2335
        %3463 = vmatpush1.bf16.msra.mxu0 %v2334
        %3464 = vmatprep.subr.bf16.mxu0 %v2347
        %3465 = vmatpush1.bf16.msra.mxu0 %v2346
        %3466 = vmatprep.subr.bf16.mxu0 %v2359
        %3467 = vmatpush1.bf16.msra.mxu0 %v2358
        %3468 = vmatprep.subr.bf16.mxu0 %v2371
        %3469 = vmatpush1.bf16.msra.mxu0 %v2370
        %3470 = vmatprep.subr.bf16.mxu0 %v2383
        %3471 = vmatpush1.bf16.msra.mxu0 %v2382
        %3472 = vmatprep.subr.bf16.mxu0 %v2395
        %3473 = vmatpush1.bf16.msra.mxu0 %v2394
        %3474 = vmatprep.subr.bf16.mxu0 %v2407
        %3475 = vmatpush1.bf16.msra.mxu0 %v2406
        %3476 = vmatprep.subr.bf16.mxu0 %v2419
        %3477 = vmatpush1.bf16.msra.mxu0 %v2418
        %3478 = vmatprep.subr.bf16.mxu0 %v2431
        %3479 = vmatpush1.bf16.msra.mxu0 %v2430
        %3480 = vmatprep.subr.bf16.mxu0 %v2443
        %3481 = vmatpush1.bf16.msra.mxu0 %v2442
        %3482 = vmatprep.mubr.bf16.mxu0 %v651
        %3483 = vmatmul.mubr.bf16.gmra.mrb[0].mxu0 %v650
        %v3484 = vpop.f32.mrb[0].mxu0
        %v3485 = vadd.f32 %v1083, %v3484
        %v3486 = vpop.f32.mrb[0].mxu0
        %v3487 = vadd.f32 %v1087, %v3486
        %v3488 = vpop.f32.mrb[0].mxu0
        %v3489 = vadd.f32 %v1083, %v3488
        %v3490 = vpop.f32.mrb[0].mxu0
        %v3491 = vadd.f32 %v1087, %v3490
        %3492 = vdwg.mxu0
        %3493 = vmatprep.subr.bf16.mxu0 %v2455
        %3494 = vmatpush1.bf16.msra.mxu0 %v2454
        %3495 = vmatprep.subr.bf16.mxu0 %v2467
        %3496 = vmatpush1.bf16.msra.mxu0 %v2466
        %3497 = vmatprep.subr.bf16.mxu0 %v2479
        %3498 = vmatpush1.bf16.msra.mxu0 %v2478
        %3499 = vmatprep.subr.bf16.mxu0 %v2491
        %3500 = vmatpush1.bf16.msra.mxu0 %v2490
        %3501 = vmatprep.subr.bf16.mxu0 %v2503
        %3502 = vmatpush1.bf16.msra.mxu0 %v2502
        %3503 = vmatprep.subr.bf16.mxu0 %v2515
        %3504 = vmatpush1.bf16.msra.mxu0 %v2514
        %3505 = vmatprep.subr.bf16.mxu0 %v2527
        %3506 = vmatpush1.bf16.msra.mxu0 %v2526
        %3507 = vmatprep.subr.bf16.mxu0 %v2539
        %3508 = vmatpush1.bf16.msra.mxu0 %v2538
        %3509 = vmatprep.subr.bf16.mxu0 %v2551
        %3510 = vmatpush1.bf16.msra.mxu0 %v2550
        %3511 = vmatprep.subr.bf16.mxu0 %v2563
        %3512 = vmatpush1.bf16.msra.mxu0 %v2562
        %3513 = vmatprep.subr.bf16.mxu0 %v2575
        %3514 = vmatpush1.bf16.msra.mxu0 %v2574
        %3515 = vmatprep.subr.bf16.mxu0 %v2587
        %3516 = vmatpush1.bf16.msra.mxu0 %v2586
        %3517 = vmatprep.subr.bf16.mxu0 %v2599
        %3518 = vmatpush1.bf16.msra.mxu0 %v2598
        %3519 = vmatprep.subr.bf16.mxu0 %v2611
        %3520 = vmatpush1.bf16.msra.mxu0 %v2610
        %3521 = vmatprep.subr.bf16.mxu0 %v2623
        %3522 = vmatpush1.bf16.msra.mxu0 %v2622
        %3523 = vmatprep.subr.bf16.mxu0 %v2635
        %3524 = vmatpush1.bf16.msra.mxu0 %v2634
        %3525 = vmatprep.mubr.bf16.mxu0 %v653
        %3526 = vmatmul.mubr.bf16.gmra.mrb[0].mxu0 %v652
        %v3527 = vpop.f32.mrb[0].mxu0
        %v3528 = vadd.f32 %v3485, %v3527
        %v3529 = vpop.f32.mrb[0].mxu0
        %v3530 = vadd.f32 %v3487, %v3529
        %v3531 = vpop.f32.mrb[0].mxu0
        %v3532 = vadd.f32 %v3489, %v3531
        %v3533 = vpop.f32.mrb[0].mxu0
        %v3534 = vadd.f32 %v3491, %v3533
        %3535 = vdwg.mxu0
        %vm3536 = vcmask 523264
        %v3538 = vsel %vm3536, %v3098, 0
        %v3541 = vsel %vm3536, %v3270, 0
        %3543 = vmatprep.subr.mxu0 0.0
        %3544 = vmatpush1.xpose.msra.mxu0 %v3541
        %3545 = vmatprep.subr.mxu0 0.0
        %3546 = vmatpush1.xpose.msra.mxu0 0.0
        %3547 = vmatprep.subr.mxu0 0.0
        %3548 = vmatpush1.xpose.msra.mxu0 0.0
        %3549 = vmatprep.subr.mxu0 0.0
        %3550 = vmatpush1.xpose.msra.mxu0 0.0
        %3551 = vmatprep.subr.mxu0 0.0
        %3552 = vmatpush1.xpose.msra.mxu0 0.0
        %3553 = vmatprep.subr.mxu0 0.0
        %3554 = vmatpush1.xpose.msra.mxu0 0.0
        %3555 = vmatprep.subr.mxu0 0.0
        %3556 = vmatpush1.xpose.msra.mxu0 0.0
        %3557 = vmatprep.subr.mxu0 0.0
        %3558 = vmatpush1.xpose.msra.mxu0 0.0
        %3559 = vmatprep.subr.mxu0 0.0
        %3560 = vmatpush1.xpose.msra.mxu0 0.0
        %3561 = vmatprep.subr.mxu0 0.0
        %3562 = vmatpush1.xpose.msra.mxu0 0.0
        %3563 = vmatprep.subr.mxu0 0.0
        %3564 = vmatpush1.xpose.msra.mxu0 0.0
        %3565 = vmatprep.subr.mxu0 0.0
        %3566 = vmatpush1.xpose.msra.mxu0 0.0
        %3567 = vmatprep.subr.mxu0 0.0
        %3568 = vmatpush1.xpose.msra.mxu0 0.0
        %3569 = vmatprep.subr.mxu0 0.0
        %3570 = vmatpush1.xpose.msra.mxu0 0.0
        %3571 = vmatprep.subr.mxu0 0.0
        %3572 = vmatpush1.xpose.msra.mxu0 0.0
        %3573 = vmatprep.subr.mxu0 0.0
        %3574 = vmatpush1.xpose.msra.mxu0 0.0
        %3575 = vmatprep.subr.mxu0 0.0
        %3576 = vmatpush1.xpose.msra.mxu0 0.0
        %3577 = vmatprep.subr.mxu0 0.0
        %3578 = vmatpush1.xpose.msra.mxu0 0.0
        %3579 = vmatprep.subr.mxu0 0.0
        %3580 = vmatpush1.xpose.msra.mxu0 0.0
        %3581 = vmatprep.subr.mxu0 0.0
        %3582 = vmatpush1.xpose.msra.mxu0 0.0
        %3583 = vmatprep.subr.mxu0 0.0
        %3584 = vmatpush1.xpose.msra.mxu0 0.0
        %3585 = vmatprep.subr.mxu0 0.0
        %3586 = vmatpush1.xpose.msra.mxu0 0.0
        %3587 = vmatprep.subr.mxu0 0.0
        %3588 = vmatpush1.xpose.msra.mxu0 0.0
        %3589 = vmatprep.subr.mxu0 0.0
        %3590 = vmatpush1.xpose.msra.mxu0 0.0
        %3591 = vmatprep.subr.mxu0 0.0
        %3592 = vmatpush1.xpose.msra.mxu0 0.0
        %3593 = vmatprep.subr.mxu0 0.0
        %3594 = vmatpush1.xpose.msra.mxu0 0.0
        %3595 = vmatprep.subr.mxu0 0.0
        %3596 = vmatpush1.xpose.msra.mxu0 0.0
        %3597 = vmatprep.subr.mxu0 0.0
        %3598 = vmatpush1.xpose.msra.mxu0 0.0
        %3599 = vmatprep.subr.mxu0 0.0
        %3600 = vmatpush1.xpose.msra.mxu0 0.0
        %3601 = vmatprep.subr.mxu0 0.0
        %3602 = vmatpush1.xpose.msra.mxu0 0.0
        %3603 = vmatprep.subr.mxu0 0.0
        %3604 = vmatpush1.xpose.msra.mxu0 0.0
        %3605 = vmatprep.subr.mxu0 0.0
        %3606 = vmatpush1.xpose.msra.mxu0 0.0
        %3607 = vmatprep.mubr.f32.mxu0 0.0
        %3608 = vmatmul.mubr.f32.gmra.mrb[0].mxu0 %v3538
        %v3609 = vpop.f32.mrb[0].mxu0
        %v3610 = vadd.f32 0.0, %v3609
        %v3611 = vpop.f32.mrb[0].mxu0
        %3612 = vdwg.mxu0
        %v3614 = vsel %vm3536, %v3102, 0
        %v3617 = vsel %vm3536, %v3274, 0
        %3619 = vmatprep.subr.mxu0 0.0
        %3620 = vmatpush1.xpose.msra.mxu0 %v3617
        %3621 = vmatprep.subr.mxu0 0.0
        %3622 = vmatpush1.xpose.msra.mxu0 0.0
        %3623 = vmatprep.subr.mxu0 0.0
        %3624 = vmatpush1.xpose.msra.mxu0 0.0
        %3625 = vmatprep.subr.mxu0 0.0
        %3626 = vmatpush1.xpose.msra.mxu0 0.0
        %3627 = vmatprep.subr.mxu0 0.0
        %3628 = vmatpush1.xpose.msra.mxu0 0.0
        %3629 = vmatprep.subr.mxu0 0.0
        %3630 = vmatpush1.xpose.msra.mxu0 0.0
        %3631 = vmatprep.subr.mxu0 0.0
        %3632 = vmatpush1.xpose.msra.mxu0 0.0
        %3633 = vmatprep.subr.mxu0 0.0
        %3634 = vmatpush1.xpose.msra.mxu0 0.0
        %3635 = vmatprep.subr.mxu0 0.0
        %3636 = vmatpush1.xpose.msra.mxu0 0.0
        %3637 = vmatprep.subr.mxu0 0.0
        %3638 = vmatpush1.xpose.msra.mxu0 0.0
        %3639 = vmatprep.subr.mxu0 0.0
        %3640 = vmatpush1.xpose.msra.mxu0 0.0
        %3641 = vmatprep.subr.mxu0 0.0
        %3642 = vmatpush1.xpose.msra.mxu0 0.0
        %3643 = vmatprep.subr.mxu0 0.0
        %3644 = vmatpush1.xpose.msra.mxu0 0.0
        %3645 = vmatprep.subr.mxu0 0.0
        %3646 = vmatpush1.xpose.msra.mxu0 0.0
        %3647 = vmatprep.subr.mxu0 0.0
        %3648 = vmatpush1.xpose.msra.mxu0 0.0
        %3649 = vmatprep.subr.mxu0 0.0
        %3650 = vmatpush1.xpose.msra.mxu0 0.0
        %3651 = vmatprep.subr.mxu0 0.0
        %3652 = vmatpush1.xpose.msra.mxu0 0.0
        %3653 = vmatprep.subr.mxu0 0.0
        %3654 = vmatpush1.xpose.msra.mxu0 0.0
        %3655 = vmatprep.subr.mxu0 0.0
        %3656 = vmatpush1.xpose.msra.mxu0 0.0
        %3657 = vmatprep.subr.mxu0 0.0
        %3658 = vmatpush1.xpose.msra.mxu0 0.0
        %3659 = vmatprep.subr.mxu0 0.0
        %3660 = vmatpush1.xpose.msra.mxu0 0.0
        %3661 = vmatprep.subr.mxu0 0.0
        %3662 = vmatpush1.xpose.msra.mxu0 0.0
        %3663 = vmatprep.subr.mxu0 0.0
        %3664 = vmatpush1.xpose.msra.mxu0 0.0
        %3665 = vmatprep.subr.mxu0 0.0
        %3666 = vmatpush1.xpose.msra.mxu0 0.0
        %3667 = vmatprep.subr.mxu0 0.0
        %3668 = vmatpush1.xpose.msra.mxu0 0.0
        %3669 = vmatprep.subr.mxu0 0.0
        %3670 = vmatpush1.xpose.msra.mxu0 0.0
        %3671 = vmatprep.subr.mxu0 0.0
        %3672 = vmatpush1.xpose.msra.mxu0 0.0
        %3673 = vmatprep.subr.mxu0 0.0
        %3674 = vmatpush1.xpose.msra.mxu0 0.0
        %3675 = vmatprep.subr.mxu0 0.0
        %3676 = vmatpush1.xpose.msra.mxu0 0.0
        %3677 = vmatprep.subr.mxu0 0.0
        %3678 = vmatpush1.xpose.msra.mxu0 0.0
        %3679 = vmatprep.subr.mxu0 0.0
        %3680 = vmatpush1.xpose.msra.mxu0 0.0
        %3681 = vmatprep.subr.mxu0 0.0
        %3682 = vmatpush1.xpose.msra.mxu0 0.0
        %3683 = vmatprep.mubr.f32.mxu0 0.0
        %3684 = vmatmul.mubr.f32.gmra.mrb[0].mxu0 %v3614
        %v3685 = vpop.f32.mrb[0].mxu0
        %v3686 = vadd.f32 0.0, %v3685
        %v3687 = vpop.f32.mrb[0].mxu0
        %3688 = vdwg.mxu0
        %vm3689 = vcmask 64512
        %v3690 = vsel %vm3689, %v3610, -inf
        %3691 = vmax.xlane.f32.xlu0 %v3690
        %v3692 = vpop.xlane.xlu0 %3691
        %v3693 = vsel %vm3689, %v3686, -inf
        %3694 = vmax.xlane.f32.xlu0 %v3693
        %v3695 = vpop.xlane.xlu0 %3694
        %v3696 = vsub.f32 %v3610, %v3692
        %v3697 = vsub.f32 %v3686, %v3695
        %v3698 = vmul.f32 %v3696, 1.442695
        %v3699 = vpow.pop %v3698
        %v3700 = vmul.f32 %v3697, 1.442695
        %v3701 = vpow.pop %v3700
        %v3702 = vsel %vm3689, %v3699, 0.0
        %3703 = vadd.xlane.f32.xlu0 %v3702
        %v3704 = vpop.xlane.xlu0 %3703
        %v3705 = vsel %vm3689, %v3701, 0.0
        %3706 = vadd.xlane.f32.xlu0 %v3705
        %v3707 = vpop.xlane.xlu0 %3706
        %v3708 = vrcp.pop %v3704
        %v3709 = vrcp.pop %v3707
        %v3710 = vmul.f32 %v3699, %v3708
        %v3711 = vmul.f32 %v3701, %v3709
        %v3713 = vsel %vm3689, %v3710, 0
        %3715 = vmatprep.subr.mxu0 0.0
        %3716 = vmatpush1.msra.mxu0 %v3442
        %3717 = vmatprep.subr.mxu0 0.0
        %3718 = vmatpush1.msra.mxu0 0.0
        %3719 = vmatprep.subr.mxu0 0.0
        %3720 = vmatpush1.msra.mxu0 0.0
        %3721 = vmatprep.subr.mxu0 0.0
        %3722 = vmatpush1.msra.mxu0 0.0
        %3723 = vmatprep.subr.mxu0 0.0
        %3724 = vmatpush1.msra.mxu0 0.0
        %3725 = vmatprep.subr.mxu0 0.0
        %3726 = vmatpush1.msra.mxu0 0.0
        %3727 = vmatprep.subr.mxu0 0.0
        %3728 = vmatpush1.msra.mxu0 0.0
        %3729 = vmatprep.subr.mxu0 0.0
        %3730 = vmatpush1.msra.mxu0 0.0
        %3731 = vmatprep.subr.mxu0 0.0
        %3732 = vmatpush1.msra.mxu0 0.0
        %3733 = vmatprep.subr.mxu0 0.0
        %3734 = vmatpush1.msra.mxu0 0.0
        %3735 = vmatprep.subr.mxu0 0.0
        %3736 = vmatpush1.msra.mxu0 0.0
        %3737 = vmatprep.subr.mxu0 0.0
        %3738 = vmatpush1.msra.mxu0 0.0
        %3739 = vmatprep.subr.mxu0 0.0
        %3740 = vmatpush1.msra.mxu0 0.0
        %3741 = vmatprep.subr.mxu0 0.0
        %3742 = vmatpush1.msra.mxu0 0.0
        %3743 = vmatprep.subr.mxu0 0.0
        %3744 = vmatpush1.msra.mxu0 0.0
        %3745 = vmatprep.subr.mxu0 0.0
        %3746 = vmatpush1.msra.mxu0 0.0
        %3747 = vmatprep.subr.mxu0 0.0
        %3748 = vmatpush1.msra.mxu0 0.0
        %3749 = vmatprep.subr.mxu0 0.0
        %3750 = vmatpush1.msra.mxu0 0.0
        %3751 = vmatprep.subr.mxu0 0.0
        %3752 = vmatpush1.msra.mxu0 0.0
        %3753 = vmatprep.subr.mxu0 0.0
        %3754 = vmatpush1.msra.mxu0 0.0
        %3755 = vmatprep.subr.mxu0 0.0
        %3756 = vmatpush1.msra.mxu0 0.0
        %3757 = vmatprep.subr.mxu0 0.0
        %3758 = vmatpush1.msra.mxu0 0.0
        %3759 = vmatprep.subr.mxu0 0.0
        %3760 = vmatpush1.msra.mxu0 0.0
        %3761 = vmatprep.subr.mxu0 0.0
        %3762 = vmatpush1.msra.mxu0 0.0
        %3763 = vmatprep.subr.mxu0 0.0
        %3764 = vmatpush1.msra.mxu0 0.0
        %3765 = vmatprep.subr.mxu0 0.0
        %3766 = vmatpush1.msra.mxu0 0.0
        %3767 = vmatprep.subr.mxu0 0.0
        %3768 = vmatpush1.msra.mxu0 0.0
        %3769 = vmatprep.subr.mxu0 0.0
        %3770 = vmatpush1.msra.mxu0 0.0
        %3771 = vmatprep.subr.mxu0 0.0
        %3772 = vmatpush1.msra.mxu0 0.0
        %3773 = vmatprep.subr.mxu0 0.0
        %3774 = vmatpush1.msra.mxu0 0.0
        %3775 = vmatprep.subr.mxu0 0.0
        %3776 = vmatpush1.msra.mxu0 0.0
        %3777 = vmatprep.subr.mxu0 0.0
        %3778 = vmatpush1.msra.mxu0 0.0
        %3779 = vmatprep.mubr.f32.mxu0 0.0
        %3780 = vmatmul.mubr.f32.gmra.mrb[0].mxu0 %v3713
        %v3781 = vpop.f32.mrb[0].mxu0
        %v3782 = vadd.f32 0.0, %v3781
        %v3783 = vpop.f32.mrb[0].mxu0
        %3784 = vdwg.mxu0
        %v3786 = vsel %vm3689, %v3711, 0
        %3788 = vmatprep.subr.mxu0 0.0
        %3789 = vmatpush1.msra.mxu0 %v3446
        %3790 = vmatprep.subr.mxu0 0.0
        %3791 = vmatpush1.msra.mxu0 0.0
        %3792 = vmatprep.subr.mxu0 0.0
        %3793 = vmatpush1.msra.mxu0 0.0
        %3794 = vmatprep.subr.mxu0 0.0
        %3795 = vmatpush1.msra.mxu0 0.0
        %3796 = vmatprep.subr.mxu0 0.0
        %3797 = vmatpush1.msra.mxu0 0.0
        %3798 = vmatprep.subr.mxu0 0.0
        %3799 = vmatpush1.msra.mxu0 0.0
        %3800 = vmatprep.subr.mxu0 0.0
        %3801 = vmatpush1.msra.mxu0 0.0
        %3802 = vmatprep.subr.mxu0 0.0
        %3803 = vmatpush1.msra.mxu0 0.0
        %3804 = vmatprep.subr.mxu0 0.0
        %3805 = vmatpush1.msra.mxu0 0.0
        %3806 = vmatprep.subr.mxu0 0.0
        %3807 = vmatpush1.msra.mxu0 0.0
        %3808 = vmatprep.subr.mxu0 0.0
        %3809 = vmatpush1.msra.mxu0 0.0
        %3810 = vmatprep.subr.mxu0 0.0
        %3811 = vmatpush1.msra.mxu0 0.0
        %3812 = vmatprep.subr.mxu0 0.0
        %3813 = vmatpush1.msra.mxu0 0.0
        %3814 = vmatprep.subr.mxu0 0.0
        %3815 = vmatpush1.msra.mxu0 0.0
        %3816 = vmatprep.subr.mxu0 0.0
        %3817 = vmatpush1.msra.mxu0 0.0
        %3818 = vmatprep.subr.mxu0 0.0
        %3819 = vmatpush1.msra.mxu0 0.0
        %3820 = vmatprep.subr.mxu0 0.0
        %3821 = vmatpush1.msra.mxu0 0.0
        %3822 = vmatprep.subr.mxu0 0.0
        %3823 = vmatpush1.msra.mxu0 0.0
        %3824 = vmatprep.subr.mxu0 0.0
        %3825 = vmatpush1.msra.mxu0 0.0
        %3826 = vmatprep.subr.mxu0 0.0
        %3827 = vmatpush1.msra.mxu0 0.0
        %3828 = vmatprep.subr.mxu0 0.0
        %3829 = vmatpush1.msra.mxu0 0.0
        %3830 = vmatprep.subr.mxu0 0.0
        %3831 = vmatpush1.msra.mxu0 0.0
        %3832 = vmatprep.subr.mxu0 0.0
        %3833 = vmatpush1.msra.mxu0 0.0
        %3834 = vmatprep.subr.mxu0 0.0
        %3835 = vmatpush1.msra.mxu0 0.0
        %3836 = vmatprep.subr.mxu0 0.0
        %3837 = vmatpush1.msra.mxu0 0.0
        %3838 = vmatprep.subr.mxu0 0.0
        %3839 = vmatpush1.msra.mxu0 0.0
        %3840 = vmatprep.subr.mxu0 0.0
        %3841 = vmatpush1.msra.mxu0 0.0
        %3842 = vmatprep.subr.mxu0 0.0
        %3843 = vmatpush1.msra.mxu0 0.0
        %3844 = vmatprep.subr.mxu0 0.0
        %3845 = vmatpush1.msra.mxu0 0.0
        %3846 = vmatprep.subr.mxu0 0.0
        %3847 = vmatpush1.msra.mxu0 0.0
        %3848 = vmatprep.subr.mxu0 0.0
        %3849 = vmatpush1.msra.mxu0 0.0
        %3850 = vmatprep.subr.mxu0 0.0
        %3851 = vmatpush1.msra.mxu0 0.0
        %3852 = vmatprep.mubr.f32.mxu0 0.0
        %3853 = vmatmul.mubr.f32.gmra.mrb[0].mxu0 %v3786
        %v3854 = vpop.f32.mrb[0].mxu0
        %v3855 = vadd.f32 0.0, %v3854
        %v3856 = vpop.f32.mrb[0].mxu0
        %3857 = vdwg.mxu0
        %3858 = vrot.lane.b32.xlu0 %v3098, 64
        %v3859 = vpop.permute.xlu0 %3858
        %3860 = vrot.lane.b32.xlu0 %v3270, 64
        %v3861 = vpop.permute.xlu0 %3860
        %v3862 = vsel %vm3536, %v3859, 0
        %v3864 = vsel %vm3536, %v3861, 0
        %3866 = vmatprep.subr.mxu0 0.0
        %3867 = vmatpush1.xpose.msra.mxu0 %v3864
        %3868 = vmatprep.subr.mxu0 0.0
        %3869 = vmatpush1.xpose.msra.mxu0 0.0
        %3870 = vmatprep.subr.mxu0 0.0
        %3871 = vmatpush1.xpose.msra.mxu0 0.0
        %3872 = vmatprep.subr.mxu0 0.0
        %3873 = vmatpush1.xpose.msra.mxu0 0.0
        %3874 = vmatprep.subr.mxu0 0.0
        %3875 = vmatpush1.xpose.msra.mxu0 0.0
        %3876 = vmatprep.subr.mxu0 0.0
        %3877 = vmatpush1.xpose.msra.mxu0 0.0
        %3878 = vmatprep.subr.mxu0 0.0
        %3879 = vmatpush1.xpose.msra.mxu0 0.0
        %3880 = vmatprep.subr.mxu0 0.0
        %3881 = vmatpush1.xpose.msra.mxu0 0.0
        %3882 = vmatprep.subr.mxu0 0.0
        %3883 = vmatpush1.xpose.msra.mxu0 0.0
        %3884 = vmatprep.subr.mxu0 0.0
        %3885 = vmatpush1.xpose.msra.mxu0 0.0
        %3886 = vmatprep.subr.mxu0 0.0
        %3887 = vmatpush1.xpose.msra.mxu0 0.0
        %3888 = vmatprep.subr.mxu0 0.0
        %3889 = vmatpush1.xpose.msra.mxu0 0.0
        %3890 = vmatprep.subr.mxu0 0.0
        %3891 = vmatpush1.xpose.msra.mxu0 0.0
        %3892 = vmatprep.subr.mxu0 0.0
        %3893 = vmatpush1.xpose.msra.mxu0 0.0
        %3894 = vmatprep.subr.mxu0 0.0
        %3895 = vmatpush1.xpose.msra.mxu0 0.0
        %3896 = vmatprep.subr.mxu0 0.0
        %3897 = vmatpush1.xpose.msra.mxu0 0.0
        %3898 = vmatprep.subr.mxu0 0.0
        %3899 = vmatpush1.xpose.msra.mxu0 0.0
        %3900 = vmatprep.subr.mxu0 0.0
        %3901 = vmatpush1.xpose.msra.mxu0 0.0
        %3902 = vmatprep.subr.mxu0 0.0
        %3903 = vmatpush1.xpose.msra.mxu0 0.0
        %3904 = vmatprep.subr.mxu0 0.0
        %3905 = vmatpush1.xpose.msra.mxu0 0.0
        %3906 = vmatprep.subr.mxu0 0.0
        %3907 = vmatpush1.xpose.msra.mxu0 0.0
        %3908 = vmatprep.subr.mxu0 0.0
        %3909 = vmatpush1.xpose.msra.mxu0 0.0
        %3910 = vmatprep.subr.mxu0 0.0
        %3911 = vmatpush1.xpose.msra.mxu0 0.0
        %3912 = vmatprep.subr.mxu0 0.0
        %3913 = vmatpush1.xpose.msra.mxu0 0.0
        %3914 = vmatprep.subr.mxu0 0.0
        %3915 = vmatpush1.xpose.msra.mxu0 0.0
        %3916 = vmatprep.subr.mxu0 0.0
        %3917 = vmatpush1.xpose.msra.mxu0 0.0
        %3918 = vmatprep.subr.mxu0 0.0
        %3919 = vmatpush1.xpose.msra.mxu0 0.0
        %3920 = vmatprep.subr.mxu0 0.0
        %3921 = vmatpush1.xpose.msra.mxu0 0.0
        %3922 = vmatprep.subr.mxu0 0.0
        %3923 = vmatpush1.xpose.msra.mxu0 0.0
        %3924 = vmatprep.subr.mxu0 0.0
        %3925 = vmatpush1.xpose.msra.mxu0 0.0
        %3926 = vmatprep.subr.mxu0 0.0
        %3927 = vmatpush1.xpose.msra.mxu0 0.0
        %3928 = vmatprep.subr.mxu0 0.0
        %3929 = vmatpush1.xpose.msra.mxu0 0.0
        %3930 = vmatprep.mubr.f32.mxu0 0.0
        %3931 = vmatmul.mubr.f32.gmra.mrb[0].mxu0 %v3862
        %v3932 = vpop.f32.mrb[0].mxu0
        %v3933 = vadd.f32 0.0, %v3932
        %v3934 = vpop.f32.mrb[0].mxu0
        %3935 = vdwg.mxu0
        %3936 = vrot.lane.b32.xlu0 %v3102, 64
        %v3937 = vpop.permute.xlu0 %3936
        %3938 = vrot.lane.b32.xlu0 %v3274, 64
        %v3939 = vpop.permute.xlu0 %3938
        %v3940 = vsel %vm3536, %v3937, 0
        %v3942 = vsel %vm3536, %v3939, 0
        %3944 = vmatprep.subr.mxu0 0.0
        %3945 = vmatpush1.xpose.msra.mxu0 %v3942
        %3946 = vmatprep.subr.mxu0 0.0
        %3947 = vmatpush1.xpose.msra.mxu0 0.0
        %3948 = vmatprep.subr.mxu0 0.0
        %3949 = vmatpush1.xpose.msra.mxu0 0.0
        %3950 = vmatprep.subr.mxu0 0.0
        %3951 = vmatpush1.xpose.msra.mxu0 0.0
        %3952 = vmatprep.subr.mxu0 0.0
        %3953 = vmatpush1.xpose.msra.mxu0 0.0
        %3954 = vmatprep.subr.mxu0 0.0
        %3955 = vmatpush1.xpose.msra.mxu0 0.0
        %3956 = vmatprep.subr.mxu0 0.0
        %3957 = vmatpush1.xpose.msra.mxu0 0.0
        %3958 = vmatprep.subr.mxu0 0.0
        %3959 = vmatpush1.xpose.msra.mxu0 0.0
        %3960 = vmatprep.subr.mxu0 0.0
        %3961 = vmatpush1.xpose.msra.mxu0 0.0
        %3962 = vmatprep.subr.mxu0 0.0
        %3963 = vmatpush1.xpose.msra.mxu0 0.0
        %3964 = vmatprep.subr.mxu0 0.0
        %3965 = vmatpush1.xpose.msra.mxu0 0.0
        %3966 = vmatprep.subr.mxu0 0.0
        %3967 = vmatpush1.xpose.msra.mxu0 0.0
        %3968 = vmatprep.subr.mxu0 0.0
        %3969 = vmatpush1.xpose.msra.mxu0 0.0
        %3970 = vmatprep.subr.mxu0 0.0
        %3971 = vmatpush1.xpose.msra.mxu0 0.0
        %3972 = vmatprep.subr.mxu0 0.0
        %3973 = vmatpush1.xpose.msra.mxu0 0.0
        %3974 = vmatprep.subr.mxu0 0.0
        %3975 = vmatpush1.xpose.msra.mxu0 0.0
        %3976 = vmatprep.subr.mxu0 0.0
        %3977 = vmatpush1.xpose.msra.mxu0 0.0
        %3978 = vmatprep.subr.mxu0 0.0
        %3979 = vmatpush1.xpose.msra.mxu0 0.0
        %3980 = vmatprep.subr.mxu0 0.0
        %3981 = vmatpush1.xpose.msra.mxu0 0.0
        %3982 = vmatprep.subr.mxu0 0.0
        %3983 = vmatpush1.xpose.msra.mxu0 0.0
        %3984 = vmatprep.subr.mxu0 0.0
        %3985 = vmatpush1.xpose.msra.mxu0 0.0
        %3986 = vmatprep.subr.mxu0 0.0
        %3987 = vmatpush1.xpose.msra.mxu0 0.0
        %3988 = vmatprep.subr.mxu0 0.0
        %3989 = vmatpush1.xpose.msra.mxu0 0.0
        %3990 = vmatprep.subr.mxu0 0.0
        %3991 = vmatpush1.xpose.msra.mxu0 0.0
        %3992 = vmatprep.subr.mxu0 0.0
        %3993 = vmatpush1.xpose.msra.mxu0 0.0
        %3994 = vmatprep.subr.mxu0 0.0
        %3995 = vmatpush1.xpose.msra.mxu0 0.0
        %3996 = vmatprep.subr.mxu0 0.0
        %3997 = vmatpush1.xpose.msra.mxu0 0.0
        %3998 = vmatprep.subr.mxu0 0.0
        %3999 = vmatpush1.xpose.msra.mxu0 0.0
        %4000 = vmatprep.subr.mxu0 0.0
        %4001 = vmatpush1.xpose.msra.mxu0 0.0
        %4002 = vmatprep.subr.mxu0 0.0
        %4003 = vmatpush1.xpose.msra.mxu0 0.0
        %4004 = vmatprep.subr.mxu0 0.0
        %4005 = vmatpush1.xpose.msra.mxu0 0.0
        %4006 = vmatprep.subr.mxu0 0.0
        %4007 = vmatpush1.xpose.msra.mxu0 0.0
        %4008 = vmatprep.mubr.f32.mxu0 0.0
        %4009 = vmatmul.mubr.f32.gmra.mrb[0].mxu0 %v3940
        %v4010 = vpop.f32.mrb[0].mxu0
        %v4011 = vadd.f32 0.0, %v4010
        %v4012 = vpop.f32.mrb[0].mxu0
        %4013 = vdwg.mxu0
        %v4014 = vsel %vm3689, %v3933, -inf
        %4015 = vmax.xlane.f32.xlu0 %v4014
        %v4016 = vpop.xlane.xlu0 %4015
        %v4017 = vsel %vm3689, %v4011, -inf
        %4018 = vmax.xlane.f32.xlu0 %v4017
        %v4019 = vpop.xlane.xlu0 %4018
        %v4020 = vsub.f32 %v3933, %v4016
        %v4021 = vsub.f32 %v4011, %v4019
        %v4022 = vmul.f32 %v4020, 1.442695
        %v4023 = vpow.pop %v4022
        %v4024 = vmul.f32 %v4021, 1.442695
        %v4025 = vpow.pop %v4024
        %v4026 = vsel %vm3689, %v4023, 0.0
        %4027 = vadd.xlane.f32.xlu0 %v4026
        %v4028 = vpop.xlane.xlu0 %4027
        %v4029 = vsel %vm3689, %v4025, 0.0
        %4030 = vadd.xlane.f32.xlu0 %v4029
        %v4031 = vpop.xlane.xlu0 %4030
        %v4032 = vrcp.pop %v4028
        %v4033 = vrcp.pop %v4031
        %v4034 = vmul.f32 %v4023, %v4032
        %v4035 = vmul.f32 %v4025, %v4033
        %4037 = vrot.lane.b32.xlu0 %v3442, 64
        %v4038 = vpop.permute.xlu0 %4037
        %v4041 = vsel %vm3689, %v4034, 0
        %4043 = vmatprep.subr.mxu0 0.0
        %4044 = vmatpush1.msra.mxu0 %v4038
        %4045 = vmatprep.subr.mxu0 0.0
        %4046 = vmatpush1.msra.mxu0 0.0
        %4047 = vmatprep.subr.mxu0 0.0
        %4048 = vmatpush1.msra.mxu0 0.0
        %4049 = vmatprep.subr.mxu0 0.0
        %4050 = vmatpush1.msra.mxu0 0.0
        %4051 = vmatprep.subr.mxu0 0.0
        %4052 = vmatpush1.msra.mxu0 0.0
        %4053 = vmatprep.subr.mxu0 0.0
        %4054 = vmatpush1.msra.mxu0 0.0
        %4055 = vmatprep.subr.mxu0 0.0
        %4056 = vmatpush1.msra.mxu0 0.0
        %4057 = vmatprep.subr.mxu0 0.0
        %4058 = vmatpush1.msra.mxu0 0.0
        %4059 = vmatprep.subr.mxu0 0.0
        %4060 = vmatpush1.msra.mxu0 0.0
        %4061 = vmatprep.subr.mxu0 0.0
        %4062 = vmatpush1.msra.mxu0 0.0
        %4063 = vmatprep.subr.mxu0 0.0
        %4064 = vmatpush1.msra.mxu0 0.0
        %4065 = vmatprep.subr.mxu0 0.0
        %4066 = vmatpush1.msra.mxu0 0.0
        %4067 = vmatprep.subr.mxu0 0.0
        %4068 = vmatpush1.msra.mxu0 0.0
        %4069 = vmatprep.subr.mxu0 0.0
        %4070 = vmatpush1.msra.mxu0 0.0
        %4071 = vmatprep.subr.mxu0 0.0
        %4072 = vmatpush1.msra.mxu0 0.0
        %4073 = vmatprep.subr.mxu0 0.0
        %4074 = vmatpush1.msra.mxu0 0.0
        %4075 = vmatprep.subr.mxu0 0.0
        %4076 = vmatpush1.msra.mxu0 0.0
        %4077 = vmatprep.subr.mxu0 0.0
        %4078 = vmatpush1.msra.mxu0 0.0
        %4079 = vmatprep.subr.mxu0 0.0
        %4080 = vmatpush1.msra.mxu0 0.0
        %4081 = vmatprep.subr.mxu0 0.0
        %4082 = vmatpush1.msra.mxu0 0.0
        %4083 = vmatprep.subr.mxu0 0.0
        %4084 = vmatpush1.msra.mxu0 0.0
        %4085 = vmatprep.subr.mxu0 0.0
        %4086 = vmatpush1.msra.mxu0 0.0
        %4087 = vmatprep.subr.mxu0 0.0
        %4088 = vmatpush1.msra.mxu0 0.0
        %4089 = vmatprep.subr.mxu0 0.0
        %4090 = vmatpush1.msra.mxu0 0.0
        %4091 = vmatprep.subr.mxu0 0.0
        %4092 = vmatpush1.msra.mxu0 0.0
        %4093 = vmatprep.subr.mxu0 0.0
        %4094 = vmatpush1.msra.mxu0 0.0
        %4095 = vmatprep.subr.mxu0 0.0
        %4096 = vmatpush1.msra.mxu0 0.0
        %4097 = vmatprep.subr.mxu0 0.0
        %4098 = vmatpush1.msra.mxu0 0.0
        %4099 = vmatprep.subr.mxu0 0.0
        %4100 = vmatpush1.msra.mxu0 0.0
        %4101 = vmatprep.subr.mxu0 0.0
        %4102 = vmatpush1.msra.mxu0 0.0
        %4103 = vmatprep.subr.mxu0 0.0
        %4104 = vmatpush1.msra.mxu0 0.0
        %4105 = vmatprep.subr.mxu0 0.0
        %4106 = vmatpush1.msra.mxu0 0.0
        %4107 = vmatprep.mubr.f32.mxu0 0.0
        %4108 = vmatmul.mubr.f32.gmra.mrb[0].mxu0 %v4041
        %v4109 = vpop.f32.mrb[0].mxu0
        %v4110 = vadd.f32 0.0, %v4109
        %v4111 = vpop.f32.mrb[0].mxu0
        %4112 = vdwg.mxu0
        %4114 = vrot.lane.b32.xlu0 %v3446, 64
        %v4115 = vpop.permute.xlu0 %4114
        %v4118 = vsel %vm3689, %v4035, 0
        %4120 = vmatprep.subr.mxu0 0.0
        %4121 = vmatpush1.msra.mxu0 %v4115
        %4122 = vmatprep.subr.mxu0 0.0
        %4123 = vmatpush1.msra.mxu0 0.0
        %4124 = vmatprep.subr.mxu0 0.0
        %4125 = vmatpush1.msra.mxu0 0.0
        %4126 = vmatprep.subr.mxu0 0.0
        %4127 = vmatpush1.msra.mxu0 0.0
        %4128 = vmatprep.subr.mxu0 0.0
        %4129 = vmatpush1.msra.mxu0 0.0
        %4130 = vmatprep.subr.mxu0 0.0
        %4131 = vmatpush1.msra.mxu0 0.0
        %4132 = vmatprep.subr.mxu0 0.0
        %4133 = vmatpush1.msra.mxu0 0.0
        %4134 = vmatprep.subr.mxu0 0.0
        %4135 = vmatpush1.msra.mxu0 0.0
        %4136 = vmatprep.subr.mxu0 0.0
        %4137 = vmatpush1.msra.mxu0 0.0
        %4138 = vmatprep.subr.mxu0 0.0
        %4139 = vmatpush1.msra.mxu0 0.0
        %4140 = vmatprep.subr.mxu0 0.0
        %4141 = vmatpush1.msra.mxu0 0.0
        %4142 = vmatprep.subr.mxu0 0.0
        %4143 = vmatpush1.msra.mxu0 0.0
        %4144 = vmatprep.subr.mxu0 0.0
        %4145 = vmatpush1.msra.mxu0 0.0
        %4146 = vmatprep.subr.mxu0 0.0
        %4147 = vmatpush1.msra.mxu0 0.0
        %4148 = vmatprep.subr.mxu0 0.0
        %4149 = vmatpush1.msra.mxu0 0.0
        %4150 = vmatprep.subr.mxu0 0.0
        %4151 = vmatpush1.msra.mxu0 0.0
        %4152 = vmatprep.subr.mxu0 0.0
        %4153 = vmatpush1.msra.mxu0 0.0
        %4154 = vmatprep.subr.mxu0 0.0
        %4155 = vmatpush1.msra.mxu0 0.0
        %4156 = vmatprep.subr.mxu0 0.0
        %4157 = vmatpush1.msra.mxu0 0.0
        %4158 = vmatprep.subr.mxu0 0.0
        %4159 = vmatpush1.msra.mxu0 0.0
        %4160 = vmatprep.subr.mxu0 0.0
        %4161 = vmatpush1.msra.mxu0 0.0
        %4162 = vmatprep.subr.mxu0 0.0
        %4163 = vmatpush1.msra.mxu0 0.0
        %4164 = vmatprep.subr.mxu0 0.0
        %4165 = vmatpush1.msra.mxu0 0.0
        %4166 = vmatprep.subr.mxu0 0.0
        %4167 = vmatpush1.msra.mxu0 0.0
        %4168 = vmatprep.subr.mxu0 0.0
        %4169 = vmatpush1.msra.mxu0 0.0
        %4170 = vmatprep.subr.mxu0 0.0
        %4171 = vmatpush1.msra.mxu0 0.0
        %4172 = vmatprep.subr.mxu0 0.0
        %4173 = vmatpush1.msra.mxu0 0.0
        %4174 = vmatprep.subr.mxu0 0.0
        %4175 = vmatpush1.msra.mxu0 0.0
        %4176 = vmatprep.subr.mxu0 0.0
        %4177 = vmatpush1.msra.mxu0 0.0
        %4178 = vmatprep.subr.mxu0 0.0
        %4179 = vmatpush1.msra.mxu0 0.0
        %4180 = vmatprep.subr.mxu0 0.0
        %4181 = vmatpush1.msra.mxu0 0.0
        %4182 = vmatprep.subr.mxu0 0.0
        %4183 = vmatpush1.msra.mxu0 0.0
        %4184 = vmatprep.mubr.f32.mxu0 0.0
        %4185 = vmatmul.mubr.f32.gmra.mrb[0].mxu0 %v4118
        %v4186 = vpop.f32.mrb[0].mxu0
        %v4187 = vadd.f32 0.0, %v4186
        %v4188 = vpop.f32.mrb[0].mxu0
        %4189 = vdwg.mxu0
        %v4191 = vsel %vm3536, %v3100, 0
        %v4194 = vsel %vm3536, %v3272, 0
        %4196 = vmatprep.subr.mxu0 0.0
        %4197 = vmatpush1.xpose.msra.mxu0 %v4194
        %4198 = vmatprep.subr.mxu0 0.0
        %4199 = vmatpush1.xpose.msra.mxu0 0.0
        %4200 = vmatprep.subr.mxu0 0.0
        %4201 = vmatpush1.xpose.msra.mxu0 0.0
        %4202 = vmatprep.subr.mxu0 0.0
        %4203 = vmatpush1.xpose.msra.mxu0 0.0
        %4204 = vmatprep.subr.mxu0 0.0
        %4205 = vmatpush1.xpose.msra.mxu0 0.0
        %4206 = vmatprep.subr.mxu0 0.0
        %4207 = vmatpush1.xpose.msra.mxu0 0.0
        %4208 = vmatprep.subr.mxu0 0.0
        %4209 = vmatpush1.xpose.msra.mxu0 0.0
        %4210 = vmatprep.subr.mxu0 0.0
        %4211 = vmatpush1.xpose.msra.mxu0 0.0
        %4212 = vmatprep.subr.mxu0 0.0
        %4213 = vmatpush1.xpose.msra.mxu0 0.0
        %4214 = vmatprep.subr.mxu0 0.0
        %4215 = vmatpush1.xpose.msra.mxu0 0.0
        %4216 = vmatprep.subr.mxu0 0.0
        %4217 = vmatpush1.xpose.msra.mxu0 0.0
        %4218 = vmatprep.subr.mxu0 0.0
        %4219 = vmatpush1.xpose.msra.mxu0 0.0
        %4220 = vmatprep.subr.mxu0 0.0
        %4221 = vmatpush1.xpose.msra.mxu0 0.0
        %4222 = vmatprep.subr.mxu0 0.0
        %4223 = vmatpush1.xpose.msra.mxu0 0.0
        %4224 = vmatprep.subr.mxu0 0.0
        %4225 = vmatpush1.xpose.msra.mxu0 0.0
        %4226 = vmatprep.subr.mxu0 0.0
        %4227 = vmatpush1.xpose.msra.mxu0 0.0
        %4228 = vmatprep.subr.mxu0 0.0
        %4229 = vmatpush1.xpose.msra.mxu0 0.0
        %4230 = vmatprep.subr.mxu0 0.0
        %4231 = vmatpush1.xpose.msra.mxu0 0.0
        %4232 = vmatprep.subr.mxu0 0.0
        %4233 = vmatpush1.xpose.msra.mxu0 0.0
        %4234 = vmatprep.subr.mxu0 0.0
        %4235 = vmatpush1.xpose.msra.mxu0 0.0
        %4236 = vmatprep.subr.mxu0 0.0
        %4237 = vmatpush1.xpose.msra.mxu0 0.0
        %4238 = vmatprep.subr.mxu0 0.0
        %4239 = vmatpush1.xpose.msra.mxu0 0.0
        %4240 = vmatprep.subr.mxu0 0.0
        %4241 = vmatpush1.xpose.msra.mxu0 0.0
        %4242 = vmatprep.subr.mxu0 0.0
        %4243 = vmatpush1.xpose.msra.mxu0 0.0
        %4244 = vmatprep.subr.mxu0 0.0
        %4245 = vmatpush1.xpose.msra.mxu0 0.0
        %4246 = vmatprep.subr.mxu0 0.0
        %4247 = vmatpush1.xpose.msra.mxu0 0.0
        %4248 = vmatprep.subr.mxu0 0.0
        %4249 = vmatpush1.xpose.msra.mxu0 0.0
        %4250 = vmatprep.subr.mxu0 0.0
        %4251 = vmatpush1.xpose.msra.mxu0 0.0
        %4252 = vmatprep.subr.mxu0 0.0
        %4253 = vmatpush1.xpose.msra.mxu0 0.0
        %4254 = vmatprep.subr.mxu0 0.0
        %4255 = vmatpush1.xpose.msra.mxu0 0.0
        %4256 = vmatprep.subr.mxu0 0.0
        %4257 = vmatpush1.xpose.msra.mxu0 0.0
        %4258 = vmatprep.subr.mxu0 0.0
        %4259 = vmatpush1.xpose.msra.mxu0 0.0
        %4260 = vmatprep.mubr.f32.mxu0 0.0
        %4261 = vmatmul.mubr.f32.gmra.mrb[0].mxu0 %v4191
        %v4262 = vpop.f32.mrb[0].mxu0
        %v4263 = vadd.f32 0.0, %v4262
        %v4264 = vpop.f32.mrb[0].mxu0
        %4265 = vdwg.mxu0
        %v4267 = vsel %vm3536, %v3104, 0
        %v4270 = vsel %vm3536, %v3276, 0
        %4272 = vmatprep.subr.mxu0 0.0
        %4273 = vmatpush1.xpose.msra.mxu0 %v4270
        %4274 = vmatprep.subr.mxu0 0.0
        %4275 = vmatpush1.xpose.msra.mxu0 0.0
        %4276 = vmatprep.subr.mxu0 0.0
        %4277 = vmatpush1.xpose.msra.mxu0 0.0
        %4278 = vmatprep.subr.mxu0 0.0
        %4279 = vmatpush1.xpose.msra.mxu0 0.0
        %4280 = vmatprep.subr.mxu0 0.0
        %4281 = vmatpush1.xpose.msra.mxu0 0.0
        %4282 = vmatprep.subr.mxu0 0.0
        %4283 = vmatpush1.xpose.msra.mxu0 0.0
        %4284 = vmatprep.subr.mxu0 0.0
        %4285 = vmatpush1.xpose.msra.mxu0 0.0
        %4286 = vmatprep.subr.mxu0 0.0
        %4287 = vmatpush1.xpose.msra.mxu0 0.0
        %4288 = vmatprep.subr.mxu0 0.0
        %4289 = vmatpush1.xpose.msra.mxu0 0.0
        %4290 = vmatprep.subr.mxu0 0.0
        %4291 = vmatpush1.xpose.msra.mxu0 0.0
        %4292 = vmatprep.subr.mxu0 0.0
        %4293 = vmatpush1.xpose.msra.mxu0 0.0
        %4294 = vmatprep.subr.mxu0 0.0
        %4295 = vmatpush1.xpose.msra.mxu0 0.0
        %4296 = vmatprep.subr.mxu0 0.0
        %4297 = vmatpush1.xpose.msra.mxu0 0.0
        %4298 = vmatprep.subr.mxu0 0.0
        %4299 = vmatpush1.xpose.msra.mxu0 0.0
        %4300 = vmatprep.subr.mxu0 0.0
        %4301 = vmatpush1.xpose.msra.mxu0 0.0
        %4302 = vmatprep.subr.mxu0 0.0
        %4303 = vmatpush1.xpose.msra.mxu0 0.0
        %4304 = vmatprep.subr.mxu0 0.0
        %4305 = vmatpush1.xpose.msra.mxu0 0.0
        %4306 = vmatprep.subr.mxu0 0.0
        %4307 = vmatpush1.xpose.msra.mxu0 0.0
        %4308 = vmatprep.subr.mxu0 0.0
        %4309 = vmatpush1.xpose.msra.mxu0 0.0
        %4310 = vmatprep.subr.mxu0 0.0
        %4311 = vmatpush1.xpose.msra.mxu0 0.0
        %4312 = vmatprep.subr.mxu0 0.0
        %4313 = vmatpush1.xpose.msra.mxu0 0.0
        %4314 = vmatprep.subr.mxu0 0.0
        %4315 = vmatpush1.xpose.msra.mxu0 0.0
        %4316 = vmatprep.subr.mxu0 0.0
        %4317 = vmatpush1.xpose.msra.mxu0 0.0
        %4318 = vmatprep.subr.mxu0 0.0
        %4319 = vmatpush1.xpose.msra.mxu0 0.0
        %4320 = vmatprep.subr.mxu0 0.0
        %4321 = vmatpush1.xpose.msra.mxu0 0.0
        %4322 = vmatprep.subr.mxu0 0.0
        %4323 = vmatpush1.xpose.msra.mxu0 0.0
        %4324 = vmatprep.subr.mxu0 0.0
        %4325 = vmatpush1.xpose.msra.mxu0 0.0
        %4326 = vmatprep.subr.mxu0 0.0
        %4327 = vmatpush1.xpose.msra.mxu0 0.0
        %4328 = vmatprep.subr.mxu0 0.0
        %4329 = vmatpush1.xpose.msra.mxu0 0.0
        %4330 = vmatprep.subr.mxu0 0.0
        %4331 = vmatpush1.xpose.msra.mxu0 0.0
        %4332 = vmatprep.subr.mxu0 0.0
        %4333 = vmatpush1.xpose.msra.mxu0 0.0
        %4334 = vmatprep.subr.mxu0 0.0
        %4335 = vmatpush1.xpose.msra.mxu0 0.0
        %4336 = vmatprep.mubr.f32.mxu0 0.0
        %4337 = vmatmul.mubr.f32.gmra.mrb[0].mxu0 %v4267
        %v4338 = vpop.f32.mrb[0].mxu0
        %v4339 = vadd.f32 0.0, %v4338
        %v4340 = vpop.f32.mrb[0].mxu0
        %4341 = vdwg.mxu0
        %v4342 = vsel %vm3689, %v4263, -inf
        %4343 = vmax.xlane.f32.xlu0 %v4342
        %v4344 = vpop.xlane.xlu0 %4343
        %v4345 = vsel %vm3689, %v4339, -inf
        %4346 = vmax.xlane.f32.xlu0 %v4345
        %v4347 = vpop.xlane.xlu0 %4346
        %v4348 = vsub.f32 %v4263, %v4344
        %v4349 = vsub.f32 %v4339, %v4347
        %v4350 = vmul.f32 %v4348, 1.442695
        %v4351 = vpow.pop %v4350
        %v4352 = vmul.f32 %v4349, 1.442695
        %v4353 = vpow.pop %v4352
        %v4354 = vsel %vm3689, %v4351, 0.0
        %4355 = vadd.xlane.f32.xlu0 %v4354
        %v4356 = vpop.xlane.xlu0 %4355
        %v4357 = vsel %vm3689, %v4353, 0.0
        %4358 = vadd.xlane.f32.xlu0 %v4357
        %v4359 = vpop.xlane.xlu0 %4358
        %v4360 = vrcp.pop %v4356
        %v4361 = vrcp.pop %v4359
        %v4362 = vmul.f32 %v4351, %v4360
        %v4363 = vmul.f32 %v4353, %v4361
        %v4365 = vsel %vm3689, %v4362, 0
        %4367 = vmatprep.subr.mxu0 0.0
        %4368 = vmatpush1.msra.mxu0 %v3444
        %4369 = vmatprep.subr.mxu0 0.0
        %4370 = vmatpush1.msra.mxu0 0.0
        %4371 = vmatprep.subr.mxu0 0.0
        %4372 = vmatpush1.msra.mxu0 0.0
        %4373 = vmatprep.subr.mxu0 0.0
        %4374 = vmatpush1.msra.mxu0 0.0
        %4375 = vmatprep.subr.mxu0 0.0
        %4376 = vmatpush1.msra.mxu0 0.0
        %4377 = vmatprep.subr.mxu0 0.0
        %4378 = vmatpush1.msra.mxu0 0.0
        %4379 = vmatprep.subr.mxu0 0.0
        %4380 = vmatpush1.msra.mxu0 0.0
        %4381 = vmatprep.subr.mxu0 0.0
        %4382 = vmatpush1.msra.mxu0 0.0
        %4383 = vmatprep.subr.mxu0 0.0
        %4384 = vmatpush1.msra.mxu0 0.0
        %4385 = vmatprep.subr.mxu0 0.0
        %4386 = vmatpush1.msra.mxu0 0.0
        %4387 = vmatprep.subr.mxu0 0.0
        %4388 = vmatpush1.msra.mxu0 0.0
        %4389 = vmatprep.subr.mxu0 0.0
        %4390 = vmatpush1.msra.mxu0 0.0
        %4391 = vmatprep.subr.mxu0 0.0
        %4392 = vmatpush1.msra.mxu0 0.0
        %4393 = vmatprep.subr.mxu0 0.0
        %4394 = vmatpush1.msra.mxu0 0.0
        %4395 = vmatprep.subr.mxu0 0.0
        %4396 = vmatpush1.msra.mxu0 0.0
        %4397 = vmatprep.subr.mxu0 0.0
        %4398 = vmatpush1.msra.mxu0 0.0
        %4399 = vmatprep.subr.mxu0 0.0
        %4400 = vmatpush1.msra.mxu0 0.0
        %4401 = vmatprep.subr.mxu0 0.0
        %4402 = vmatpush1.msra.mxu0 0.0
        %4403 = vmatprep.subr.mxu0 0.0
        %4404 = vmatpush1.msra.mxu0 0.0
        %4405 = vmatprep.subr.mxu0 0.0
        %4406 = vmatpush1.msra.mxu0 0.0
        %4407 = vmatprep.subr.mxu0 0.0
        %4408 = vmatpush1.msra.mxu0 0.0
        %4409 = vmatprep.subr.mxu0 0.0
        %4410 = vmatpush1.msra.mxu0 0.0
        %4411 = vmatprep.subr.mxu0 0.0
        %4412 = vmatpush1.msra.mxu0 0.0
        %4413 = vmatprep.subr.mxu0 0.0
        %4414 = vmatpush1.msra.mxu0 0.0
        %4415 = vmatprep.subr.mxu0 0.0
        %4416 = vmatpush1.msra.mxu0 0.0
        %4417 = vmatprep.subr.mxu0 0.0
        %4418 = vmatpush1.msra.mxu0 0.0
        %4419 = vmatprep.subr.mxu0 0.0
        %4420 = vmatpush1.msra.mxu0 0.0
        %4421 = vmatprep.subr.mxu0 0.0
        %4422 = vmatpush1.msra.mxu0 0.0
        %4423 = vmatprep.subr.mxu0 0.0
        %4424 = vmatpush1.msra.mxu0 0.0
        %4425 = vmatprep.subr.mxu0 0.0
        %4426 = vmatpush1.msra.mxu0 0.0
        %4427 = vmatprep.subr.mxu0 0.0
        %4428 = vmatpush1.msra.mxu0 0.0
        %4429 = vmatprep.subr.mxu0 0.0
        %4430 = vmatpush1.msra.mxu0 0.0
        %4431 = vmatprep.mubr.f32.mxu0 0.0
        %4432 = vmatmul.mubr.f32.gmra.mrb[0].mxu0 %v4365
        %v4433 = vpop.f32.mrb[0].mxu0
        %v4434 = vadd.f32 0.0, %v4433
        %v4435 = vpop.f32.mrb[0].mxu0
        %4436 = vdwg.mxu0
        %v4438 = vsel %vm3689, %v4363, 0
        %4440 = vmatprep.subr.mxu0 0.0
        %4441 = vmatpush1.msra.mxu0 %v3448
        %4442 = vmatprep.subr.mxu0 0.0
        %4443 = vmatpush1.msra.mxu0 0.0
        %4444 = vmatprep.subr.mxu0 0.0
        %4445 = vmatpush1.msra.mxu0 0.0
        %4446 = vmatprep.subr.mxu0 0.0
        %4447 = vmatpush1.msra.mxu0 0.0
        %4448 = vmatprep.subr.mxu0 0.0
        %4449 = vmatpush1.msra.mxu0 0.0
        %4450 = vmatprep.subr.mxu0 0.0
        %4451 = vmatpush1.msra.mxu0 0.0
        %4452 = vmatprep.subr.mxu0 0.0
        %4453 = vmatpush1.msra.mxu0 0.0
        %4454 = vmatprep.subr.mxu0 0.0
        %4455 = vmatpush1.msra.mxu0 0.0
        %4456 = vmatprep.subr.mxu0 0.0
        %4457 = vmatpush1.msra.mxu0 0.0
        %4458 = vmatprep.subr.mxu0 0.0
        %4459 = vmatpush1.msra.mxu0 0.0
        %4460 = vmatprep.subr.mxu0 0.0
        %4461 = vmatpush1.msra.mxu0 0.0
        %4462 = vmatprep.subr.mxu0 0.0
        %4463 = vmatpush1.msra.mxu0 0.0
        %4464 = vmatprep.subr.mxu0 0.0
        %4465 = vmatpush1.msra.mxu0 0.0
        %4466 = vmatprep.subr.mxu0 0.0
        %4467 = vmatpush1.msra.mxu0 0.0
        %4468 = vmatprep.subr.mxu0 0.0
        %4469 = vmatpush1.msra.mxu0 0.0
        %4470 = vmatprep.subr.mxu0 0.0
        %4471 = vmatpush1.msra.mxu0 0.0
        %4472 = vmatprep.subr.mxu0 0.0
        %4473 = vmatpush1.msra.mxu0 0.0
        %4474 = vmatprep.subr.mxu0 0.0
        %4475 = vmatpush1.msra.mxu0 0.0
        %4476 = vmatprep.subr.mxu0 0.0
        %4477 = vmatpush1.msra.mxu0 0.0
        %4478 = vmatprep.subr.mxu0 0.0
        %4479 = vmatpush1.msra.mxu0 0.0
        %4480 = vmatprep.subr.mxu0 0.0
        %4481 = vmatpush1.msra.mxu0 0.0
        %4482 = vmatprep.subr.mxu0 0.0
        %4483 = vmatpush1.msra.mxu0 0.0
        %4484 = vmatprep.subr.mxu0 0.0
        %4485 = vmatpush1.msra.mxu0 0.0
        %4486 = vmatprep.subr.mxu0 0.0
        %4487 = vmatpush1.msra.mxu0 0.0
        %4488 = vmatprep.subr.mxu0 0.0
        %4489 = vmatpush1.msra.mxu0 0.0
        %4490 = vmatprep.subr.mxu0 0.0
        %4491 = vmatpush1.msra.mxu0 0.0
        %4492 = vmatprep.subr.mxu0 0.0
        %4493 = vmatpush1.msra.mxu0 0.0
        %4494 = vmatprep.subr.mxu0 0.0
        %4495 = vmatpush1.msra.mxu0 0.0
        %4496 = vmatprep.subr.mxu0 0.0
        %4497 = vmatpush1.msra.mxu0 0.0
        %4498 = vmatprep.subr.mxu0 0.0
        %4499 = vmatpush1.msra.mxu0 0.0
        %4500 = vmatprep.subr.mxu0 0.0
        %4501 = vmatpush1.msra.mxu0 0.0
        %4502 = vmatprep.subr.mxu0 0.0
        %4503 = vmatpush1.msra.mxu0 0.0
        %4504 = vmatprep.mubr.f32.mxu0 0.0
        %4505 = vmatmul.mubr.f32.gmra.mrb[0].mxu0 %v4438
        %v4506 = vpop.f32.mrb[0].mxu0
        %v4507 = vadd.f32 0.0, %v4506
        %v4508 = vpop.f32.mrb[0].mxu0
        %4509 = vdwg.mxu0
        %4510 = vrot.lane.b32.xlu0 %v3100, 64
        %v4511 = vpop.permute.xlu0 %4510
        %4512 = vrot.lane.b32.xlu0 %v3272, 64
        %v4513 = vpop.permute.xlu0 %4512
        %v4514 = vsel %vm3536, %v4511, 0
        %v4516 = vsel %vm3536, %v4513, 0
        %4518 = vmatprep.subr.mxu0 0.0
        %4519 = vmatpush1.xpose.msra.mxu0 %v4516
        %4520 = vmatprep.subr.mxu0 0.0
        %4521 = vmatpush1.xpose.msra.mxu0 0.0
        %4522 = vmatprep.subr.mxu0 0.0
        %4523 = vmatpush1.xpose.msra.mxu0 0.0
        %4524 = vmatprep.subr.mxu0 0.0
        %4525 = vmatpush1.xpose.msra.mxu0 0.0
        %4526 = vmatprep.subr.mxu0 0.0
        %4527 = vmatpush1.xpose.msra.mxu0 0.0
        %4528 = vmatprep.subr.mxu0 0.0
        %4529 = vmatpush1.xpose.msra.mxu0 0.0
        %4530 = vmatprep.subr.mxu0 0.0
        %4531 = vmatpush1.xpose.msra.mxu0 0.0
        %4532 = vmatprep.subr.mxu0 0.0
        %4533 = vmatpush1.xpose.msra.mxu0 0.0
        %4534 = vmatprep.subr.mxu0 0.0
        %4535 = vmatpush1.xpose.msra.mxu0 0.0
        %4536 = vmatprep.subr.mxu0 0.0
        %4537 = vmatpush1.xpose.msra.mxu0 0.0
        %4538 = vmatprep.subr.mxu0 0.0
        %4539 = vmatpush1.xpose.msra.mxu0 0.0
        %4540 = vmatprep.subr.mxu0 0.0
        %4541 = vmatpush1.xpose.msra.mxu0 0.0
        %4542 = vmatprep.subr.mxu0 0.0
        %4543 = vmatpush1.xpose.msra.mxu0 0.0
        %4544 = vmatprep.subr.mxu0 0.0
        %4545 = vmatpush1.xpose.msra.mxu0 0.0
        %4546 = vmatprep.subr.mxu0 0.0
        %4547 = vmatpush1.xpose.msra.mxu0 0.0
        %4548 = vmatprep.subr.mxu0 0.0
        %4549 = vmatpush1.xpose.msra.mxu0 0.0
        %4550 = vmatprep.subr.mxu0 0.0
        %4551 = vmatpush1.xpose.msra.mxu0 0.0
        %4552 = vmatprep.subr.mxu0 0.0
        %4553 = vmatpush1.xpose.msra.mxu0 0.0
        %4554 = vmatprep.subr.mxu0 0.0
        %4555 = vmatpush1.xpose.msra.mxu0 0.0
        %4556 = vmatprep.subr.mxu0 0.0
        %4557 = vmatpush1.xpose.msra.mxu0 0.0
        %4558 = vmatprep.subr.mxu0 0.0
        %4559 = vmatpush1.xpose.msra.mxu0 0.0
        %4560 = vmatprep.subr.mxu0 0.0
        %4561 = vmatpush1.xpose.msra.mxu0 0.0
        %4562 = vmatprep.subr.mxu0 0.0
        %4563 = vmatpush1.xpose.msra.mxu0 0.0
        %4564 = vmatprep.subr.mxu0 0.0
        %4565 = vmatpush1.xpose.msra.mxu0 0.0
        %4566 = vmatprep.subr.mxu0 0.0
        %4567 = vmatpush1.xpose.msra.mxu0 0.0
        %4568 = vmatprep.subr.mxu0 0.0
        %4569 = vmatpush1.xpose.msra.mxu0 0.0
        %4570 = vmatprep.subr.mxu0 0.0
        %4571 = vmatpush1.xpose.msra.mxu0 0.0
        %4572 = vmatprep.subr.mxu0 0.0
        %4573 = vmatpush1.xpose.msra.mxu0 0.0
        %4574 = vmatprep.subr.mxu0 0.0
        %4575 = vmatpush1.xpose.msra.mxu0 0.0
        %4576 = vmatprep.subr.mxu0 0.0
        %4577 = vmatpush1.xpose.msra.mxu0 0.0
        %4578 = vmatprep.subr.mxu0 0.0
        %4579 = vmatpush1.xpose.msra.mxu0 0.0
        %4580 = vmatprep.subr.mxu0 0.0
        %4581 = vmatpush1.xpose.msra.mxu0 0.0
        %4582 = vmatprep.mubr.f32.mxu0 0.0
        %4583 = vmatmul.mubr.f32.gmra.mrb[0].mxu0 %v4514
        %v4584 = vpop.f32.mrb[0].mxu0
        %v4585 = vadd.f32 0.0, %v4584
        %v4586 = vpop.f32.mrb[0].mxu0
        %4587 = vdwg.mxu0
        %4588 = vrot.lane.b32.xlu0 %v3104, 64
        %v4589 = vpop.permute.xlu0 %4588
        %4590 = vrot.lane.b32.xlu0 %v3276, 64
        %v4591 = vpop.permute.xlu0 %4590
        %v4592 = vsel %vm3536, %v4589, 0
        %v4594 = vsel %vm3536, %v4591, 0
        %4596 = vmatprep.subr.mxu0 0.0
        %4597 = vmatpush1.xpose.msra.mxu0 %v4594
        %4598 = vmatprep.subr.mxu0 0.0
        %4599 = vmatpush1.xpose.msra.mxu0 0.0
        %4600 = vmatprep.subr.mxu0 0.0
        %4601 = vmatpush1.xpose.msra.mxu0 0.0
        %4602 = vmatprep.subr.mxu0 0.0
        %4603 = vmatpush1.xpose.msra.mxu0 0.0
        %4604 = vmatprep.subr.mxu0 0.0
        %4605 = vmatpush1.xpose.msra.mxu0 0.0
        %4606 = vmatprep.subr.mxu0 0.0
        %4607 = vmatpush1.xpose.msra.mxu0 0.0
        %4608 = vmatprep.subr.mxu0 0.0
        %4609 = vmatpush1.xpose.msra.mxu0 0.0
        %4610 = vmatprep.subr.mxu0 0.0
        %4611 = vmatpush1.xpose.msra.mxu0 0.0
        %4612 = vmatprep.subr.mxu0 0.0
        %4613 = vmatpush1.xpose.msra.mxu0 0.0
        %4614 = vmatprep.subr.mxu0 0.0
        %4615 = vmatpush1.xpose.msra.mxu0 0.0
        %4616 = vmatprep.subr.mxu0 0.0
        %4617 = vmatpush1.xpose.msra.mxu0 0.0
        %4618 = vmatprep.subr.mxu0 0.0
        %4619 = vmatpush1.xpose.msra.mxu0 0.0
        %4620 = vmatprep.subr.mxu0 0.0
        %4621 = vmatpush1.xpose.msra.mxu0 0.0
        %4622 = vmatprep.subr.mxu0 0.0
        %4623 = vmatpush1.xpose.msra.mxu0 0.0
        %4624 = vmatprep.subr.mxu0 0.0
        %4625 = vmatpush1.xpose.msra.mxu0 0.0
        %4626 = vmatprep.subr.mxu0 0.0
        %4627 = vmatpush1.xpose.msra.mxu0 0.0
        %4628 = vmatprep.subr.mxu0 0.0
        %4629 = vmatpush1.xpose.msra.mxu0 0.0
        %4630 = vmatprep.subr.mxu0 0.0
        %4631 = vmatpush1.xpose.msra.mxu0 0.0
        %4632 = vmatprep.subr.mxu0 0.0
        %4633 = vmatpush1.xpose.msra.mxu0 0.0
        %4634 = vmatprep.subr.mxu0 0.0
        %4635 = vmatpush1.xpose.msra.mxu0 0.0
        %4636 = vmatprep.subr.mxu0 0.0
        %4637 = vmatpush1.xpose.msra.mxu0 0.0
        %4638 = vmatprep.subr.mxu0 0.0
        %4639 = vmatpush1.xpose.msra.mxu0 0.0
        %4640 = vmatprep.subr.mxu0 0.0
        %4641 = vmatpush1.xpose.msra.mxu0 0.0
        %4642 = vmatprep.subr.mxu0 0.0
        %4643 = vmatpush1.xpose.msra.mxu0 0.0
        %4644 = vmatprep.subr.mxu0 0.0
        %4645 = vmatpush1.xpose.msra.mxu0 0.0
        %4646 = vmatprep.subr.mxu0 0.0
        %4647 = vmatpush1.xpose.msra.mxu0 0.0
        %4648 = vmatprep.subr.mxu0 0.0
        %4649 = vmatpush1.xpose.msra.mxu0 0.0
        %4650 = vmatprep.subr.mxu0 0.0
        %4651 = vmatpush1.xpose.msra.mxu0 0.0
        %4652 = vmatprep.subr.mxu0 0.0
        %4653 = vmatpush1.xpose.msra.mxu0 0.0
        %4654 = vmatprep.subr.mxu0 0.0
        %4655 = vmatpush1.xpose.msra.mxu0 0.0
        %4656 = vmatprep.subr.mxu0 0.0
        %4657 = vmatpush1.xpose.msra.mxu0 0.0
        %4658 = vmatprep.subr.mxu0 0.0
        %4659 = vmatpush1.xpose.msra.mxu0 0.0
        %4660 = vmatprep.mubr.f32.mxu0 0.0
        %4661 = vmatmul.mubr.f32.gmra.mrb[0].mxu0 %v4592
        %v4662 = vpop.f32.mrb[0].mxu0
        %v4663 = vadd.f32 0.0, %v4662
        %v4664 = vpop.f32.mrb[0].mxu0
        %4665 = vdwg.mxu0
        %v4666 = vsel %vm3689, %v4585, -inf
        %4667 = vmax.xlane.f32.xlu0 %v4666
        %v4668 = vpop.xlane.xlu0 %4667
        %v4669 = vsel %vm3689, %v4663, -inf
        %4670 = vmax.xlane.f32.xlu0 %v4669
        %v4671 = vpop.xlane.xlu0 %4670
        %v4672 = vsub.f32 %v4585, %v4668
        %v4673 = vsub.f32 %v4663, %v4671
        %v4674 = vmul.f32 %v4672, 1.442695
        %v4675 = vpow.pop %v4674
        %v4676 = vmul.f32 %v4673, 1.442695
        %v4677 = vpow.pop %v4676
        %v4678 = vsel %vm3689, %v4675, 0.0
        %4679 = vadd.xlane.f32.xlu0 %v4678
        %v4680 = vpop.xlane.xlu0 %4679
        %v4681 = vsel %vm3689, %v4677, 0.0
        %4682 = vadd.xlane.f32.xlu0 %v4681
        %v4683 = vpop.xlane.xlu0 %4682
        %v4684 = vrcp.pop %v4680
        %v4685 = vrcp.pop %v4683
        %v4686 = vmul.f32 %v4675, %v4684
        %v4687 = vmul.f32 %v4677, %v4685
        %4689 = vrot.lane.b32.xlu0 %v3444, 64
        %v4690 = vpop.permute.xlu0 %4689
        %v4693 = vsel %vm3689, %v4686, 0
        %4695 = vmatprep.subr.mxu0 0.0
        %4696 = vmatpush1.msra.mxu0 %v4690
        %4697 = vmatprep.subr.mxu0 0.0
        %4698 = vmatpush1.msra.mxu0 0.0
        %4699 = vmatprep.subr.mxu0 0.0
        %4700 = vmatpush1.msra.mxu0 0.0
        %4701 = vmatprep.subr.mxu0 0.0
        %4702 = vmatpush1.msra.mxu0 0.0
        %4703 = vmatprep.subr.mxu0 0.0
        %4704 = vmatpush1.msra.mxu0 0.0
        %4705 = vmatprep.subr.mxu0 0.0
        %4706 = vmatpush1.msra.mxu0 0.0
        %4707 = vmatprep.subr.mxu0 0.0
        %4708 = vmatpush1.msra.mxu0 0.0
        %4709 = vmatprep.subr.mxu0 0.0
        %4710 = vmatpush1.msra.mxu0 0.0
        %4711 = vmatprep.subr.mxu0 0.0
        %4712 = vmatpush1.msra.mxu0 0.0
        %4713 = vmatprep.subr.mxu0 0.0
        %4714 = vmatpush1.msra.mxu0 0.0
        %4715 = vmatprep.subr.mxu0 0.0
        %4716 = vmatpush1.msra.mxu0 0.0
        %4717 = vmatprep.subr.mxu0 0.0
        %4718 = vmatpush1.msra.mxu0 0.0
        %4719 = vmatprep.subr.mxu0 0.0
        %4720 = vmatpush1.msra.mxu0 0.0
        %4721 = vmatprep.subr.mxu0 0.0
        %4722 = vmatpush1.msra.mxu0 0.0
        %4723 = vmatprep.subr.mxu0 0.0
        %4724 = vmatpush1.msra.mxu0 0.0
        %4725 = vmatprep.subr.mxu0 0.0
        %4726 = vmatpush1.msra.mxu0 0.0
        %4727 = vmatprep.subr.mxu0 0.0
        %4728 = vmatpush1.msra.mxu0 0.0
        %4729 = vmatprep.subr.mxu0 0.0
        %4730 = vmatpush1.msra.mxu0 0.0
        %4731 = vmatprep.subr.mxu0 0.0
        %4732 = vmatpush1.msra.mxu0 0.0
        %4733 = vmatprep.subr.mxu0 0.0
        %4734 = vmatpush1.msra.mxu0 0.0
        %4735 = vmatprep.subr.mxu0 0.0
        %4736 = vmatpush1.msra.mxu0 0.0
        %4737 = vmatprep.subr.mxu0 0.0
        %4738 = vmatpush1.msra.mxu0 0.0
        %4739 = vmatprep.subr.mxu0 0.0
        %4740 = vmatpush1.msra.mxu0 0.0
        %4741 = vmatprep.subr.mxu0 0.0
        %4742 = vmatpush1.msra.mxu0 0.0
        %4743 = vmatprep.subr.mxu0 0.0
        %4744 = vmatpush1.msra.mxu0 0.0
        %4745 = vmatprep.subr.mxu0 0.0
        %4746 = vmatpush1.msra.mxu0 0.0
        %4747 = vmatprep.subr.mxu0 0.0
        %4748 = vmatpush1.msra.mxu0 0.0
        %4749 = vmatprep.subr.mxu0 0.0
        %4750 = vmatpush1.msra.mxu0 0.0
        %4751 = vmatprep.subr.mxu0 0.0
        %4752 = vmatpush1.msra.mxu0 0.0
        %4753 = vmatprep.subr.mxu0 0.0
        %4754 = vmatpush1.msra.mxu0 0.0
        %4755 = vmatprep.subr.mxu0 0.0
        %4756 = vmatpush1.msra.mxu0 0.0
        %4757 = vmatprep.subr.mxu0 0.0
        %4758 = vmatpush1.msra.mxu0 0.0
        %4759 = vmatprep.mubr.f32.mxu0 0.0
        %4760 = vmatmul.mubr.f32.gmra.mrb[0].mxu0 %v4693
        %v4761 = vpop.f32.mrb[0].mxu0
        %v4762 = vadd.f32 0.0, %v4761
        %v4763 = vpop.f32.mrb[0].mxu0
        %4764 = vdwg.mxu0
        %4766 = vrot.lane.b32.xlu0 %v3448, 64
        %v4767 = vpop.permute.xlu0 %4766
        %v4770 = vsel %vm3689, %v4687, 0
        %4772 = vmatprep.subr.mxu0 0.0
        %4773 = vmatpush1.msra.mxu0 %v4767
        %4774 = vmatprep.subr.mxu0 0.0
        %4775 = vmatpush1.msra.mxu0 0.0
        %4776 = vmatprep.subr.mxu0 0.0
        %4777 = vmatpush1.msra.mxu0 0.0
        %4778 = vmatprep.subr.mxu0 0.0
        %4779 = vmatpush1.msra.mxu0 0.0
        %4780 = vmatprep.subr.mxu0 0.0
        %4781 = vmatpush1.msra.mxu0 0.0
        %4782 = vmatprep.subr.mxu0 0.0
        %4783 = vmatpush1.msra.mxu0 0.0
        %4784 = vmatprep.subr.mxu0 0.0
        %4785 = vmatpush1.msra.mxu0 0.0
        %4786 = vmatprep.subr.mxu0 0.0
        %4787 = vmatpush1.msra.mxu0 0.0
        %4788 = vmatprep.subr.mxu0 0.0
        %4789 = vmatpush1.msra.mxu0 0.0
        %4790 = vmatprep.subr.mxu0 0.0
        %4791 = vmatpush1.msra.mxu0 0.0
        %4792 = vmatprep.subr.mxu0 0.0
        %4793 = vmatpush1.msra.mxu0 0.0
        %4794 = vmatprep.subr.mxu0 0.0
        %4795 = vmatpush1.msra.mxu0 0.0
        %4796 = vmatprep.subr.mxu0 0.0
        %4797 = vmatpush1.msra.mxu0 0.0
        %4798 = vmatprep.subr.mxu0 0.0
        %4799 = vmatpush1.msra.mxu0 0.0
        %4800 = vmatprep.subr.mxu0 0.0
        %4801 = vmatpush1.msra.mxu0 0.0
        %4802 = vmatprep.subr.mxu0 0.0
        %4803 = vmatpush1.msra.mxu0 0.0
        %4804 = vmatprep.subr.mxu0 0.0
        %4805 = vmatpush1.msra.mxu0 0.0
        %4806 = vmatprep.subr.mxu0 0.0
        %4807 = vmatpush1.msra.mxu0 0.0
        %4808 = vmatprep.subr.mxu0 0.0
        %4809 = vmatpush1.msra.mxu0 0.0
        %4810 = vmatprep.subr.mxu0 0.0
        %4811 = vmatpush1.msra.mxu0 0.0
        %4812 = vmatprep.subr.mxu0 0.0
        %4813 = vmatpush1.msra.mxu0 0.0
        %4814 = vmatprep.subr.mxu0 0.0
        %4815 = vmatpush1.msra.mxu0 0.0
        %4816 = vmatprep.subr.mxu0 0.0
        %4817 = vmatpush1.msra.mxu0 0.0
        %4818 = vmatprep.subr.mxu0 0.0
        %4819 = vmatpush1.msra.mxu0 0.0
        %4820 = vmatprep.subr.mxu0 0.0
        %4821 = vmatpush1.msra.mxu0 0.0
        %4822 = vmatprep.subr.mxu0 0.0
        %4823 = vmatpush1.msra.mxu0 0.0
        %4824 = vmatprep.subr.mxu0 0.0
        %4825 = vmatpush1.msra.mxu0 0.0
        %4826 = vmatprep.subr.mxu0 0.0
        %4827 = vmatpush1.msra.mxu0 0.0
        %4828 = vmatprep.subr.mxu0 0.0
        %4829 = vmatpush1.msra.mxu0 0.0
        %4830 = vmatprep.subr.mxu0 0.0
        %4831 = vmatpush1.msra.mxu0 0.0
        %4832 = vmatprep.subr.mxu0 0.0
        %4833 = vmatpush1.msra.mxu0 0.0
        %4834 = vmatprep.subr.mxu0 0.0
        %4835 = vmatpush1.msra.mxu0 0.0
        %4836 = vmatprep.mubr.f32.mxu0 0.0
        %4837 = vmatmul.mubr.f32.gmra.mrb[0].mxu0 %v4770
        %v4838 = vpop.f32.mrb[0].mxu0
        %v4839 = vadd.f32 0.0, %v4838
        %v4840 = vpop.f32.mrb[0].mxu0
        %4841 = vdwg.mxu0
        %v4843 = vsel %vm3536, %v3184, 0
        %v4846 = vsel %vm3536, %v3356, 0
        %4848 = vmatprep.subr.mxu0 0.0
        %4849 = vmatpush1.xpose.msra.mxu0 %v4846
        %4850 = vmatprep.subr.mxu0 0.0
        %4851 = vmatpush1.xpose.msra.mxu0 0.0
        %4852 = vmatprep.subr.mxu0 0.0
        %4853 = vmatpush1.xpose.msra.mxu0 0.0
        %4854 = vmatprep.subr.mxu0 0.0
        %4855 = vmatpush1.xpose.msra.mxu0 0.0
        %4856 = vmatprep.subr.mxu0 0.0
        %4857 = vmatpush1.xpose.msra.mxu0 0.0
        %4858 = vmatprep.subr.mxu0 0.0
        %4859 = vmatpush1.xpose.msra.mxu0 0.0
        %4860 = vmatprep.subr.mxu0 0.0
        %4861 = vmatpush1.xpose.msra.mxu0 0.0
        %4862 = vmatprep.subr.mxu0 0.0
        %4863 = vmatpush1.xpose.msra.mxu0 0.0
        %4864 = vmatprep.subr.mxu0 0.0
        %4865 = vmatpush1.xpose.msra.mxu0 0.0
        %4866 = vmatprep.subr.mxu0 0.0
        %4867 = vmatpush1.xpose.msra.mxu0 0.0
        %4868 = vmatprep.subr.mxu0 0.0
        %4869 = vmatpush1.xpose.msra.mxu0 0.0
        %4870 = vmatprep.subr.mxu0 0.0
        %4871 = vmatpush1.xpose.msra.mxu0 0.0
        %4872 = vmatprep.subr.mxu0 0.0
        %4873 = vmatpush1.xpose.msra.mxu0 0.0
        %4874 = vmatprep.subr.mxu0 0.0
        %4875 = vmatpush1.xpose.msra.mxu0 0.0
        %4876 = vmatprep.subr.mxu0 0.0
        %4877 = vmatpush1.xpose.msra.mxu0 0.0
        %4878 = vmatprep.subr.mxu0 0.0
        %4879 = vmatpush1.xpose.msra.mxu0 0.0
        %4880 = vmatprep.subr.mxu0 0.0
        %4881 = vmatpush1.xpose.msra.mxu0 0.0
        %4882 = vmatprep.subr.mxu0 0.0
        %4883 = vmatpush1.xpose.msra.mxu0 0.0
        %4884 = vmatprep.subr.mxu0 0.0
        %4885 = vmatpush1.xpose.msra.mxu0 0.0
        %4886 = vmatprep.subr.mxu0 0.0
        %4887 = vmatpush1.xpose.msra.mxu0 0.0
        %4888 = vmatprep.subr.mxu0 0.0
        %4889 = vmatpush1.xpose.msra.mxu0 0.0
        %4890 = vmatprep.subr.mxu0 0.0
        %4891 = vmatpush1.xpose.msra.mxu0 0.0
        %4892 = vmatprep.subr.mxu0 0.0
        %4893 = vmatpush1.xpose.msra.mxu0 0.0
        %4894 = vmatprep.subr.mxu0 0.0
        %4895 = vmatpush1.xpose.msra.mxu0 0.0
        %4896 = vmatprep.subr.mxu0 0.0
        %4897 = vmatpush1.xpose.msra.mxu0 0.0
        %4898 = vmatprep.subr.mxu0 0.0
        %4899 = vmatpush1.xpose.msra.mxu0 0.0
        %4900 = vmatprep.subr.mxu0 0.0
        %4901 = vmatpush1.xpose.msra.mxu0 0.0
        %4902 = vmatprep.subr.mxu0 0.0
        %4903 = vmatpush1.xpose.msra.mxu0 0.0
        %4904 = vmatprep.subr.mxu0 0.0
        %4905 = vmatpush1.xpose.msra.mxu0 0.0
        %4906 = vmatprep.subr.mxu0 0.0
        %4907 = vmatpush1.xpose.msra.mxu0 0.0
        %4908 = vmatprep.subr.mxu0 0.0
        %4909 = vmatpush1.xpose.msra.mxu0 0.0
        %4910 = vmatprep.subr.mxu0 0.0
        %4911 = vmatpush1.xpose.msra.mxu0 0.0
        %4912 = vmatprep.mubr.f32.mxu0 0.0
        %4913 = vmatmul.mubr.f32.gmra.mrb[0].mxu0 %v4843
        %v4914 = vpop.f32.mrb[0].mxu0
        %v4915 = vadd.f32 0.0, %v4914
        %v4916 = vpop.f32.mrb[0].mxu0
        %4917 = vdwg.mxu0
        %v4919 = vsel %vm3536, %v3188, 0
        %v4922 = vsel %vm3536, %v3360, 0
        %4924 = vmatprep.subr.mxu0 0.0
        %4925 = vmatpush1.xpose.msra.mxu0 %v4922
        %4926 = vmatprep.subr.mxu0 0.0
        %4927 = vmatpush1.xpose.msra.mxu0 0.0
        %4928 = vmatprep.subr.mxu0 0.0
        %4929 = vmatpush1.xpose.msra.mxu0 0.0
        %4930 = vmatprep.subr.mxu0 0.0
        %4931 = vmatpush1.xpose.msra.mxu0 0.0
        %4932 = vmatprep.subr.mxu0 0.0
        %4933 = vmatpush1.xpose.msra.mxu0 0.0
        %4934 = vmatprep.subr.mxu0 0.0
        %4935 = vmatpush1.xpose.msra.mxu0 0.0
        %4936 = vmatprep.subr.mxu0 0.0
        %4937 = vmatpush1.xpose.msra.mxu0 0.0
        %4938 = vmatprep.subr.mxu0 0.0
        %4939 = vmatpush1.xpose.msra.mxu0 0.0
        %4940 = vmatprep.subr.mxu0 0.0
        %4941 = vmatpush1.xpose.msra.mxu0 0.0
        %4942 = vmatprep.subr.mxu0 0.0
        %4943 = vmatpush1.xpose.msra.mxu0 0.0
        %4944 = vmatprep.subr.mxu0 0.0
        %4945 = vmatpush1.xpose.msra.mxu0 0.0
        %4946 = vmatprep.subr.mxu0 0.0
        %4947 = vmatpush1.xpose.msra.mxu0 0.0
        %4948 = vmatprep.subr.mxu0 0.0
        %4949 = vmatpush1.xpose.msra.mxu0 0.0
        %4950 = vmatprep.subr.mxu0 0.0
        %4951 = vmatpush1.xpose.msra.mxu0 0.0
        %4952 = vmatprep.subr.mxu0 0.0
        %4953 = vmatpush1.xpose.msra.mxu0 0.0
        %4954 = vmatprep.subr.mxu0 0.0
        %4955 = vmatpush1.xpose.msra.mxu0 0.0
        %4956 = vmatprep.subr.mxu0 0.0
        %4957 = vmatpush1.xpose.msra.mxu0 0.0
        %4958 = vmatprep.subr.mxu0 0.0
        %4959 = vmatpush1.xpose.msra.mxu0 0.0
        %4960 = vmatprep.subr.mxu0 0.0
        %4961 = vmatpush1.xpose.msra.mxu0 0.0
        %4962 = vmatprep.subr.mxu0 0.0
        %4963 = vmatpush1.xpose.msra.mxu0 0.0
        %4964 = vmatprep.subr.mxu0 0.0
        %4965 = vmatpush1.xpose.msra.mxu0 0.0
        %4966 = vmatprep.subr.mxu0 0.0
        %4967 = vmatpush1.xpose.msra.mxu0 0.0
        %4968 = vmatprep.subr.mxu0 0.0
        %4969 = vmatpush1.xpose.msra.mxu0 0.0
        %4970 = vmatprep.subr.mxu0 0.0
        %4971 = vmatpush1.xpose.msra.mxu0 0.0
        %4972 = vmatprep.subr.mxu0 0.0
        %4973 = vmatpush1.xpose.msra.mxu0 0.0
        %4974 = vmatprep.subr.mxu0 0.0
        %4975 = vmatpush1.xpose.msra.mxu0 0.0
        %4976 = vmatprep.subr.mxu0 0.0
        %4977 = vmatpush1.xpose.msra.mxu0 0.0
        %4978 = vmatprep.subr.mxu0 0.0
        %4979 = vmatpush1.xpose.msra.mxu0 0.0
        %4980 = vmatprep.subr.mxu0 0.0
        %4981 = vmatpush1.xpose.msra.mxu0 0.0
        %4982 = vmatprep.subr.mxu0 0.0
        %4983 = vmatpush1.xpose.msra.mxu0 0.0
        %4984 = vmatprep.subr.mxu0 0.0
        %4985 = vmatpush1.xpose.msra.mxu0 0.0
        %4986 = vmatprep.subr.mxu0 0.0
        %4987 = vmatpush1.xpose.msra.mxu0 0.0
        %4988 = vmatprep.mubr.f32.mxu0 0.0
        %4989 = vmatmul.mubr.f32.gmra.mrb[0].mxu0 %v4919
        %v4990 = vpop.f32.mrb[0].mxu0
        %v4991 = vadd.f32 0.0, %v4990
        %v4992 = vpop.f32.mrb[0].mxu0
        %4993 = vdwg.mxu0
        %v4994 = vsel %vm3689, %v4915, -inf
        %4995 = vmax.xlane.f32.xlu0 %v4994
        %v4996 = vpop.xlane.xlu0 %4995
        %v4997 = vsel %vm3689, %v4991, -inf
        %4998 = vmax.xlane.f32.xlu0 %v4997
        %v4999 = vpop.xlane.xlu0 %4998
        %v5000 = vsub.f32 %v4915, %v4996
        %v5001 = vsub.f32 %v4991, %v4999
        %v5002 = vmul.f32 %v5000, 1.442695
        %v5003 = vpow.pop %v5002
        %v5004 = vmul.f32 %v5001, 1.442695
        %v5005 = vpow.pop %v5004
        %v5006 = vsel %vm3689, %v5003, 0.0
        %5007 = vadd.xlane.f32.xlu0 %v5006
        %v5008 = vpop.xlane.xlu0 %5007
        %v5009 = vsel %vm3689, %v5005, 0.0
        %5010 = vadd.xlane.f32.xlu0 %v5009
        %v5011 = vpop.xlane.xlu0 %5010
        %v5012 = vrcp.pop %v5008
        %v5013 = vrcp.pop %v5011
        %v5014 = vmul.f32 %v5003, %v5012
        %v5015 = vmul.f32 %v5005, %v5013
        %v5017 = vsel %vm3689, %v5014, 0
        %5019 = vmatprep.subr.mxu0 0.0
        %5020 = vmatpush1.msra.mxu0 %v3528
        %5021 = vmatprep.subr.mxu0 0.0
        %5022 = vmatpush1.msra.mxu0 0.0
        %5023 = vmatprep.subr.mxu0 0.0
        %5024 = vmatpush1.msra.mxu0 0.0
        %5025 = vmatprep.subr.mxu0 0.0
        %5026 = vmatpush1.msra.mxu0 0.0
        %5027 = vmatprep.subr.mxu0 0.0
        %5028 = vmatpush1.msra.mxu0 0.0
        %5029 = vmatprep.subr.mxu0 0.0
        %5030 = vmatpush1.msra.mxu0 0.0
        %5031 = vmatprep.subr.mxu0 0.0
        %5032 = vmatpush1.msra.mxu0 0.0
        %5033 = vmatprep.subr.mxu0 0.0
        %5034 = vmatpush1.msra.mxu0 0.0
        %5035 = vmatprep.subr.mxu0 0.0
        %5036 = vmatpush1.msra.mxu0 0.0
        %5037 = vmatprep.subr.mxu0 0.0
        %5038 = vmatpush1.msra.mxu0 0.0
        %5039 = vmatprep.subr.mxu0 0.0
        %5040 = vmatpush1.msra.mxu0 0.0
        %5041 = vmatprep.subr.mxu0 0.0
        %5042 = vmatpush1.msra.mxu0 0.0
        %5043 = vmatprep.subr.mxu0 0.0
        %5044 = vmatpush1.msra.mxu0 0.0
        %5045 = vmatprep.subr.mxu0 0.0
        %5046 = vmatpush1.msra.mxu0 0.0
        %5047 = vmatprep.subr.mxu0 0.0
        %5048 = vmatpush1.msra.mxu0 0.0
        %5049 = vmatprep.subr.mxu0 0.0
        %5050 = vmatpush1.msra.mxu0 0.0
        %5051 = vmatprep.subr.mxu0 0.0
        %5052 = vmatpush1.msra.mxu0 0.0
        %5053 = vmatprep.subr.mxu0 0.0
        %5054 = vmatpush1.msra.mxu0 0.0
        %5055 = vmatprep.subr.mxu0 0.0
        %5056 = vmatpush1.msra.mxu0 0.0
        %5057 = vmatprep.subr.mxu0 0.0
        %5058 = vmatpush1.msra.mxu0 0.0
        %5059 = vmatprep.subr.mxu0 0.0
        %5060 = vmatpush1.msra.mxu0 0.0
        %5061 = vmatprep.subr.mxu0 0.0
        %5062 = vmatpush1.msra.mxu0 0.0
        %5063 = vmatprep.subr.mxu0 0.0
        %5064 = vmatpush1.msra.mxu0 0.0
        %5065 = vmatprep.subr.mxu0 0.0
        %5066 = vmatpush1.msra.mxu0 0.0
        %5067 = vmatprep.subr.mxu0 0.0
        %5068 = vmatpush1.msra.mxu0 0.0
        %5069 = vmatprep.subr.mxu0 0.0
        %5070 = vmatpush1.msra.mxu0 0.0
        %5071 = vmatprep.subr.mxu0 0.0
        %5072 = vmatpush1.msra.mxu0 0.0
        %5073 = vmatprep.subr.mxu0 0.0
        %5074 = vmatpush1.msra.mxu0 0.0
        %5075 = vmatprep.subr.mxu0 0.0
        %5076 = vmatpush1.msra.mxu0 0.0
        %5077 = vmatprep.subr.mxu0 0.0
        %5078 = vmatpush1.msra.mxu0 0.0
        %5079 = vmatprep.subr.mxu0 0.0
        %5080 = vmatpush1.msra.mxu0 0.0
        %5081 = vmatprep.subr.mxu0 0.0
        %5082 = vmatpush1.msra.mxu0 0.0
        %5083 = vmatprep.mubr.f32.mxu0 0.0
        %5084 = vmatmul.mubr.f32.gmra.mrb[0].mxu0 %v5017
        %v5085 = vpop.f32.mrb[0].mxu0
        %v5086 = vadd.f32 0.0, %v5085
        %v5087 = vpop.f32.mrb[0].mxu0
        %5088 = vdwg.mxu0
        %v5090 = vsel %vm3689, %v5015, 0
        %5092 = vmatprep.subr.mxu0 0.0
        %5093 = vmatpush1.msra.mxu0 %v3532
        %5094 = vmatprep.subr.mxu0 0.0
        %5095 = vmatpush1.msra.mxu0 0.0
        %5096 = vmatprep.subr.mxu0 0.0
        %5097 = vmatpush1.msra.mxu0 0.0
        %5098 = vmatprep.subr.mxu0 0.0
        %5099 = vmatpush1.msra.mxu0 0.0
        %5100 = vmatprep.subr.mxu0 0.0
        %5101 = vmatpush1.msra.mxu0 0.0
        %5102 = vmatprep.subr.mxu0 0.0
        %5103 = vmatpush1.msra.mxu0 0.0
        %5104 = vmatprep.subr.mxu0 0.0
        %5105 = vmatpush1.msra.mxu0 0.0
        %5106 = vmatprep.subr.mxu0 0.0
        %5107 = vmatpush1.msra.mxu0 0.0
        %5108 = vmatprep.subr.mxu0 0.0
        %5109 = vmatpush1.msra.mxu0 0.0
        %5110 = vmatprep.subr.mxu0 0.0
        %5111 = vmatpush1.msra.mxu0 0.0
        %5112 = vmatprep.subr.mxu0 0.0
        %5113 = vmatpush1.msra.mxu0 0.0
        %5114 = vmatprep.subr.mxu0 0.0
        %5115 = vmatpush1.msra.mxu0 0.0
        %5116 = vmatprep.subr.mxu0 0.0
        %5117 = vmatpush1.msra.mxu0 0.0
        %5118 = vmatprep.subr.mxu0 0.0
        %5119 = vmatpush1.msra.mxu0 0.0
        %5120 = vmatprep.subr.mxu0 0.0
        %5121 = vmatpush1.msra.mxu0 0.0
        %5122 = vmatprep.subr.mxu0 0.0
        %5123 = vmatpush1.msra.mxu0 0.0
        %5124 = vmatprep.subr.mxu0 0.0
        %5125 = vmatpush1.msra.mxu0 0.0
        %5126 = vmatprep.subr.mxu0 0.0
        %5127 = vmatpush1.msra.mxu0 0.0
        %5128 = vmatprep.subr.mxu0 0.0
        %5129 = vmatpush1.msra.mxu0 0.0
        %5130 = vmatprep.subr.mxu0 0.0
        %5131 = vmatpush1.msra.mxu0 0.0
        %5132 = vmatprep.subr.mxu0 0.0
        %5133 = vmatpush1.msra.mxu0 0.0
        %5134 = vmatprep.subr.mxu0 0.0
        %5135 = vmatpush1.msra.mxu0 0.0
        %5136 = vmatprep.subr.mxu0 0.0
        %5137 = vmatpush1.msra.mxu0 0.0
        %5138 = vmatprep.subr.mxu0 0.0
        %5139 = vmatpush1.msra.mxu0 0.0
        %5140 = vmatprep.subr.mxu0 0.0
        %5141 = vmatpush1.msra.mxu0 0.0
        %5142 = vmatprep.subr.mxu0 0.0
        %5143 = vmatpush1.msra.mxu0 0.0
        %5144 = vmatprep.subr.mxu0 0.0
        %5145 = vmatpush1.msra.mxu0 0.0
        %5146 = vmatprep.subr.mxu0 0.0
        %5147 = vmatpush1.msra.mxu0 0.0
        %5148 = vmatprep.subr.mxu0 0.0
        %5149 = vmatpush1.msra.mxu0 0.0
        %5150 = vmatprep.subr.mxu0 0.0
        %5151 = vmatpush1.msra.mxu0 0.0
        %5152 = vmatprep.subr.mxu0 0.0
        %5153 = vmatpush1.msra.mxu0 0.0
        %5154 = vmatprep.subr.mxu0 0.0
        %5155 = vmatpush1.msra.mxu0 0.0
        %5156 = vmatprep.mubr.f32.mxu0 0.0
        %5157 = vmatmul.mubr.f32.gmra.mrb[0].mxu0 %v5090
        %v5158 = vpop.f32.mrb[0].mxu0
        %v5159 = vadd.f32 0.0, %v5158
        %v5160 = vpop.f32.mrb[0].mxu0
        %5161 = vdwg.mxu0
        %5162 = vrot.lane.b32.xlu0 %v3184, 64
        %v5163 = vpop.permute.xlu0 %5162
        %5164 = vrot.lane.b32.xlu0 %v3356, 64
        %v5165 = vpop.permute.xlu0 %5164
        %v5166 = vsel %vm3536, %v5163, 0
        %v5168 = vsel %vm3536, %v5165, 0
        %5170 = vmatprep.subr.mxu0 0.0
        %5171 = vmatpush1.xpose.msra.mxu0 %v5168
        %5172 = vmatprep.subr.mxu0 0.0
        %5173 = vmatpush1.xpose.msra.mxu0 0.0
        %5174 = vmatprep.subr.mxu0 0.0
        %5175 = vmatpush1.xpose.msra.mxu0 0.0
        %5176 = vmatprep.subr.mxu0 0.0
        %5177 = vmatpush1.xpose.msra.mxu0 0.0
        %5178 = vmatprep.subr.mxu0 0.0
        %5179 = vmatpush1.xpose.msra.mxu0 0.0
        %5180 = vmatprep.subr.mxu0 0.0
        %5181 = vmatpush1.xpose.msra.mxu0 0.0
        %5182 = vmatprep.subr.mxu0 0.0
        %5183 = vmatpush1.xpose.msra.mxu0 0.0
        %5184 = vmatprep.subr.mxu0 0.0
        %5185 = vmatpush1.xpose.msra.mxu0 0.0
        %5186 = vmatprep.subr.mxu0 0.0
        %5187 = vmatpush1.xpose.msra.mxu0 0.0
        %5188 = vmatprep.subr.mxu0 0.0
        %5189 = vmatpush1.xpose.msra.mxu0 0.0
        %5190 = vmatprep.subr.mxu0 0.0
        %5191 = vmatpush1.xpose.msra.mxu0 0.0
        %5192 = vmatprep.subr.mxu0 0.0
        %5193 = vmatpush1.xpose.msra.mxu0 0.0
        %5194 = vmatprep.subr.mxu0 0.0
        %5195 = vmatpush1.xpose.msra.mxu0 0.0
        %5196 = vmatprep.subr.mxu0 0.0
        %5197 = vmatpush1.xpose.msra.mxu0 0.0
        %5198 = vmatprep.subr.mxu0 0.0
        %5199 = vmatpush1.xpose.msra.mxu0 0.0
        %5200 = vmatprep.subr.mxu0 0.0
        %5201 = vmatpush1.xpose.msra.mxu0 0.0
        %5202 = vmatprep.subr.mxu0 0.0
        %5203 = vmatpush1.xpose.msra.mxu0 0.0
        %5204 = vmatprep.subr.mxu0 0.0
        %5205 = vmatpush1.xpose.msra.mxu0 0.0
        %5206 = vmatprep.subr.mxu0 0.0
        %5207 = vmatpush1.xpose.msra.mxu0 0.0
        %5208 = vmatprep.subr.mxu0 0.0
        %5209 = vmatpush1.xpose.msra.mxu0 0.0
        %5210 = vmatprep.subr.mxu0 0.0
        %5211 = vmatpush1.xpose.msra.mxu0 0.0
        %5212 = vmatprep.subr.mxu0 0.0
        %5213 = vmatpush1.xpose.msra.mxu0 0.0
        %5214 = vmatprep.subr.mxu0 0.0
        %5215 = vmatpush1.xpose.msra.mxu0 0.0
        %5216 = vmatprep.subr.mxu0 0.0
        %5217 = vmatpush1.xpose.msra.mxu0 0.0
        %5218 = vmatprep.subr.mxu0 0.0
        %5219 = vmatpush1.xpose.msra.mxu0 0.0
        %5220 = vmatprep.subr.mxu0 0.0
        %5221 = vmatpush1.xpose.msra.mxu0 0.0
        %5222 = vmatprep.subr.mxu0 0.0
        %5223 = vmatpush1.xpose.msra.mxu0 0.0
        %5224 = vmatprep.subr.mxu0 0.0
        %5225 = vmatpush1.xpose.msra.mxu0 0.0
        %5226 = vmatprep.subr.mxu0 0.0
        %5227 = vmatpush1.xpose.msra.mxu0 0.0
        %5228 = vmatprep.subr.mxu0 0.0
        %5229 = vmatpush1.xpose.msra.mxu0 0.0
        %5230 = vmatprep.subr.mxu0 0.0
        %5231 = vmatpush1.xpose.msra.mxu0 0.0
        %5232 = vmatprep.subr.mxu0 0.0
        %5233 = vmatpush1.xpose.msra.mxu0 0.0
        %5234 = vmatprep.mubr.f32.mxu0 0.0
        %5235 = vmatmul.mubr.f32.gmra.mrb[0].mxu0 %v5166
        %v5236 = vpop.f32.mrb[0].mxu0
        %v5237 = vadd.f32 0.0, %v5236
        %v5238 = vpop.f32.mrb[0].mxu0
        %5239 = vdwg.mxu0
        %5240 = vrot.lane.b32.xlu0 %v3188, 64
        %v5241 = vpop.permute.xlu0 %5240
        %5242 = vrot.lane.b32.xlu0 %v3360, 64
        %v5243 = vpop.permute.xlu0 %5242
        %v5244 = vsel %vm3536, %v5241, 0
        %v5246 = vsel %vm3536, %v5243, 0
        %5248 = vmatprep.subr.mxu0 0.0
        %5249 = vmatpush1.xpose.msra.mxu0 %v5246
        %5250 = vmatprep.subr.mxu0 0.0
        %5251 = vmatpush1.xpose.msra.mxu0 0.0
        %5252 = vmatprep.subr.mxu0 0.0
        %5253 = vmatpush1.xpose.msra.mxu0 0.0
        %5254 = vmatprep.subr.mxu0 0.0
        %5255 = vmatpush1.xpose.msra.mxu0 0.0
        %5256 = vmatprep.subr.mxu0 0.0
        %5257 = vmatpush1.xpose.msra.mxu0 0.0
        %5258 = vmatprep.subr.mxu0 0.0
        %5259 = vmatpush1.xpose.msra.mxu0 0.0
        %5260 = vmatprep.subr.mxu0 0.0
        %5261 = vmatpush1.xpose.msra.mxu0 0.0
        %5262 = vmatprep.subr.mxu0 0.0
        %5263 = vmatpush1.xpose.msra.mxu0 0.0
        %5264 = vmatprep.subr.mxu0 0.0
        %5265 = vmatpush1.xpose.msra.mxu0 0.0
        %5266 = vmatprep.subr.mxu0 0.0
        %5267 = vmatpush1.xpose.msra.mxu0 0.0
        %5268 = vmatprep.subr.mxu0 0.0
        %5269 = vmatpush1.xpose.msra.mxu0 0.0
        %5270 = vmatprep.subr.mxu0 0.0
        %5271 = vmatpush1.xpose.msra.mxu0 0.0
        %5272 = vmatprep.subr.mxu0 0.0
        %5273 = vmatpush1.xpose.msra.mxu0 0.0
        %5274 = vmatprep.subr.mxu0 0.0
        %5275 = vmatpush1.xpose.msra.mxu0 0.0
        %5276 = vmatprep.subr.mxu0 0.0
        %5277 = vmatpush1.xpose.msra.mxu0 0.0
        %5278 = vmatprep.subr.mxu0 0.0
        %5279 = vmatpush1.xpose.msra.mxu0 0.0
        %5280 = vmatprep.subr.mxu0 0.0
        %5281 = vmatpush1.xpose.msra.mxu0 0.0
        %5282 = vmatprep.subr.mxu0 0.0
        %5283 = vmatpush1.xpose.msra.mxu0 0.0
        %5284 = vmatprep.subr.mxu0 0.0
        %5285 = vmatpush1.xpose.msra.mxu0 0.0
        %5286 = vmatprep.subr.mxu0 0.0
        %5287 = vmatpush1.xpose.msra.mxu0 0.0
        %5288 = vmatprep.subr.mxu0 0.0
        %5289 = vmatpush1.xpose.msra.mxu0 0.0
        %5290 = vmatprep.subr.mxu0 0.0
        %5291 = vmatpush1.xpose.msra.mxu0 0.0
        %5292 = vmatprep.subr.mxu0 0.0
        %5293 = vmatpush1.xpose.msra.mxu0 0.0
        %5294 = vmatprep.subr.mxu0 0.0
        %5295 = vmatpush1.xpose.msra.mxu0 0.0
        %5296 = vmatprep.subr.mxu0 0.0
        %5297 = vmatpush1.xpose.msra.mxu0 0.0
        %5298 = vmatprep.subr.mxu0 0.0
        %5299 = vmatpush1.xpose.msra.mxu0 0.0
        %5300 = vmatprep.subr.mxu0 0.0
        %5301 = vmatpush1.xpose.msra.mxu0 0.0
        %5302 = vmatprep.subr.mxu0 0.0
        %5303 = vmatpush1.xpose.msra.mxu0 0.0
        %5304 = vmatprep.subr.mxu0 0.0
        %5305 = vmatpush1.xpose.msra.mxu0 0.0
        %5306 = vmatprep.subr.mxu0 0.0
        %5307 = vmatpush1.xpose.msra.mxu0 0.0
        %5308 = vmatprep.subr.mxu0 0.0
        %5309 = vmatpush1.xpose.msra.mxu0 0.0
        %5310 = vmatprep.subr.mxu0 0.0
        %5311 = vmatpush1.xpose.msra.mxu0 0.0
        %5312 = vmatprep.mubr.f32.mxu0 0.0
        %5313 = vmatmul.mubr.f32.gmra.mrb[0].mxu0 %v5244
        %v5314 = vpop.f32.mrb[0].mxu0
        %v5315 = vadd.f32 0.0, %v5314
        %v5316 = vpop.f32.mrb[0].mxu0
        %5317 = vdwg.mxu0
        %v5318 = vsel %vm3689, %v5237, -inf
        %5319 = vmax.xlane.f32.xlu0 %v5318
        %v5320 = vpop.xlane.xlu0 %5319
        %v5321 = vsel %vm3689, %v5315, -inf
        %5322 = vmax.xlane.f32.xlu0 %v5321
        %v5323 = vpop.xlane.xlu0 %5322
        %v5324 = vsub.f32 %v5237, %v5320
        %v5325 = vsub.f32 %v5315, %v5323
        %v5326 = vmul.f32 %v5324, 1.442695
        %v5327 = vpow.pop %v5326
        %v5328 = vmul.f32 %v5325, 1.442695
        %v5329 = vpow.pop %v5328
        %v5330 = vsel %vm3689, %v5327, 0.0
        %5331 = vadd.xlane.f32.xlu0 %v5330
        %v5332 = vpop.xlane.xlu0 %5331
        %v5333 = vsel %vm3689, %v5329, 0.0
        %5334 = vadd.xlane.f32.xlu0 %v5333
        %v5335 = vpop.xlane.xlu0 %5334
        %v5336 = vrcp.pop %v5332
        %v5337 = vrcp.pop %v5335
        %v5338 = vmul.f32 %v5327, %v5336
        %v5339 = vmul.f32 %v5329, %v5337
        %5341 = vrot.lane.b32.xlu0 %v3528, 64
        %v5342 = vpop.permute.xlu0 %5341
        %v5345 = vsel %vm3689, %v5338, 0
        %5347 = vmatprep.subr.mxu0 0.0
        %5348 = vmatpush1.msra.mxu0 %v5342
        %5349 = vmatprep.subr.mxu0 0.0
        %5350 = vmatpush1.msra.mxu0 0.0
        %5351 = vmatprep.subr.mxu0 0.0
        %5352 = vmatpush1.msra.mxu0 0.0
        %5353 = vmatprep.subr.mxu0 0.0
        %5354 = vmatpush1.msra.mxu0 0.0
        %5355 = vmatprep.subr.mxu0 0.0
        %5356 = vmatpush1.msra.mxu0 0.0
        %5357 = vmatprep.subr.mxu0 0.0
        %5358 = vmatpush1.msra.mxu0 0.0
        %5359 = vmatprep.subr.mxu0 0.0
        %5360 = vmatpush1.msra.mxu0 0.0
        %5361 = vmatprep.subr.mxu0 0.0
        %5362 = vmatpush1.msra.mxu0 0.0
        %5363 = vmatprep.subr.mxu0 0.0
        %5364 = vmatpush1.msra.mxu0 0.0
        %5365 = vmatprep.subr.mxu0 0.0
        %5366 = vmatpush1.msra.mxu0 0.0
        %5367 = vmatprep.subr.mxu0 0.0
        %5368 = vmatpush1.msra.mxu0 0.0
        %5369 = vmatprep.subr.mxu0 0.0
        %5370 = vmatpush1.msra.mxu0 0.0
        %5371 = vmatprep.subr.mxu0 0.0
        %5372 = vmatpush1.msra.mxu0 0.0
        %5373 = vmatprep.subr.mxu0 0.0
        %5374 = vmatpush1.msra.mxu0 0.0
        %5375 = vmatprep.subr.mxu0 0.0
        %5376 = vmatpush1.msra.mxu0 0.0
        %5377 = vmatprep.subr.mxu0 0.0
        %5378 = vmatpush1.msra.mxu0 0.0
        %5379 = vmatprep.subr.mxu0 0.0
        %5380 = vmatpush1.msra.mxu0 0.0
        %5381 = vmatprep.subr.mxu0 0.0
        %5382 = vmatpush1.msra.mxu0 0.0
        %5383 = vmatprep.subr.mxu0 0.0
        %5384 = vmatpush1.msra.mxu0 0.0
        %5385 = vmatprep.subr.mxu0 0.0
        %5386 = vmatpush1.msra.mxu0 0.0
        %5387 = vmatprep.subr.mxu0 0.0
        %5388 = vmatpush1.msra.mxu0 0.0
        %5389 = vmatprep.subr.mxu0 0.0
        %5390 = vmatpush1.msra.mxu0 0.0
        %5391 = vmatprep.subr.mxu0 0.0
        %5392 = vmatpush1.msra.mxu0 0.0
        %5393 = vmatprep.subr.mxu0 0.0
        %5394 = vmatpush1.msra.mxu0 0.0
        %5395 = vmatprep.subr.mxu0 0.0
        %5396 = vmatpush1.msra.mxu0 0.0
        %5397 = vmatprep.subr.mxu0 0.0
        %5398 = vmatpush1.msra.mxu0 0.0
        %5399 = vmatprep.subr.mxu0 0.0
        %5400 = vmatpush1.msra.mxu0 0.0
        %5401 = vmatprep.subr.mxu0 0.0
        %5402 = vmatpush1.msra.mxu0 0.0
        %5403 = vmatprep.subr.mxu0 0.0
        %5404 = vmatpush1.msra.mxu0 0.0
        %5405 = vmatprep.subr.mxu0 0.0
        %5406 = vmatpush1.msra.mxu0 0.0
        %5407 = vmatprep.subr.mxu0 0.0
        %5408 = vmatpush1.msra.mxu0 0.0
        %5409 = vmatprep.subr.mxu0 0.0
        %5410 = vmatpush1.msra.mxu0 0.0
        %5411 = vmatprep.mubr.f32.mxu0 0.0
        %5412 = vmatmul.mubr.f32.gmra.mrb[0].mxu0 %v5345
        %v5413 = vpop.f32.mrb[0].mxu0
        %v5414 = vadd.f32 0.0, %v5413
        %v5415 = vpop.f32.mrb[0].mxu0
        %5416 = vdwg.mxu0
        %5418 = vrot.lane.b32.xlu0 %v3532, 64
        %v5419 = vpop.permute.xlu0 %5418
        %v5422 = vsel %vm3689, %v5339, 0
        %5424 = vmatprep.subr.mxu0 0.0
        %5425 = vmatpush1.msra.mxu0 %v5419
        %5426 = vmatprep.subr.mxu0 0.0
        %5427 = vmatpush1.msra.mxu0 0.0
        %5428 = vmatprep.subr.mxu0 0.0
        %5429 = vmatpush1.msra.mxu0 0.0
        %5430 = vmatprep.subr.mxu0 0.0
        %5431 = vmatpush1.msra.mxu0 0.0
        %5432 = vmatprep.subr.mxu0 0.0
        %5433 = vmatpush1.msra.mxu0 0.0
        %5434 = vmatprep.subr.mxu0 0.0
        %5435 = vmatpush1.msra.mxu0 0.0
        %5436 = vmatprep.subr.mxu0 0.0
        %5437 = vmatpush1.msra.mxu0 0.0
        %5438 = vmatprep.subr.mxu0 0.0
        %5439 = vmatpush1.msra.mxu0 0.0
        %5440 = vmatprep.subr.mxu0 0.0
        %5441 = vmatpush1.msra.mxu0 0.0
        %5442 = vmatprep.subr.mxu0 0.0
        %5443 = vmatpush1.msra.mxu0 0.0
        %5444 = vmatprep.subr.mxu0 0.0
        %5445 = vmatpush1.msra.mxu0 0.0
        %5446 = vmatprep.subr.mxu0 0.0
        %5447 = vmatpush1.msra.mxu0 0.0
        %5448 = vmatprep.subr.mxu0 0.0
        %5449 = vmatpush1.msra.mxu0 0.0
        %5450 = vmatprep.subr.mxu0 0.0
        %5451 = vmatpush1.msra.mxu0 0.0
        %5452 = vmatprep.subr.mxu0 0.0
        %5453 = vmatpush1.msra.mxu0 0.0
        %5454 = vmatprep.subr.mxu0 0.0
        %5455 = vmatpush1.msra.mxu0 0.0
        %5456 = vmatprep.subr.mxu0 0.0
        %5457 = vmatpush1.msra.mxu0 0.0
        %5458 = vmatprep.subr.mxu0 0.0
        %5459 = vmatpush1.msra.mxu0 0.0
        %5460 = vmatprep.subr.mxu0 0.0
        %5461 = vmatpush1.msra.mxu0 0.0
        %5462 = vmatprep.subr.mxu0 0.0
        %5463 = vmatpush1.msra.mxu0 0.0
        %5464 = vmatprep.subr.mxu0 0.0
        %5465 = vmatpush1.msra.mxu0 0.0
        %5466 = vmatprep.subr.mxu0 0.0
        %5467 = vmatpush1.msra.mxu0 0.0
        %5468 = vmatprep.subr.mxu0 0.0
        %5469 = vmatpush1.msra.mxu0 0.0
        %5470 = vmatprep.subr.mxu0 0.0
        %5471 = vmatpush1.msra.mxu0 0.0
        %5472 = vmatprep.subr.mxu0 0.0
        %5473 = vmatpush1.msra.mxu0 0.0
        %5474 = vmatprep.subr.mxu0 0.0
        %5475 = vmatpush1.msra.mxu0 0.0
        %5476 = vmatprep.subr.mxu0 0.0
        %5477 = vmatpush1.msra.mxu0 0.0
        %5478 = vmatprep.subr.mxu0 0.0
        %5479 = vmatpush1.msra.mxu0 0.0
        %5480 = vmatprep.subr.mxu0 0.0
        %5481 = vmatpush1.msra.mxu0 0.0
        %5482 = vmatprep.subr.mxu0 0.0
        %5483 = vmatpush1.msra.mxu0 0.0
        %5484 = vmatprep.subr.mxu0 0.0
        %5485 = vmatpush1.msra.mxu0 0.0
        %5486 = vmatprep.subr.mxu0 0.0
        %5487 = vmatpush1.msra.mxu0 0.0
        %5488 = vmatprep.mubr.f32.mxu0 0.0
        %5489 = vmatmul.mubr.f32.gmra.mrb[0].mxu0 %v5422
        %v5490 = vpop.f32.mrb[0].mxu0
        %v5491 = vadd.f32 0.0, %v5490
        %v5492 = vpop.f32.mrb[0].mxu0
        %5493 = vdwg.mxu0
        %v5495 = vsel %vm3536, %v3186, 0
        %v5498 = vsel %vm3536, %v3358, 0
        %5500 = vmatprep.subr.mxu0 0.0
        %5501 = vmatpush1.xpose.msra.mxu0 %v5498
        %5502 = vmatprep.subr.mxu0 0.0
        %5503 = vmatpush1.xpose.msra.mxu0 0.0
        %5504 = vmatprep.subr.mxu0 0.0
        %5505 = vmatpush1.xpose.msra.mxu0 0.0
        %5506 = vmatprep.subr.mxu0 0.0
        %5507 = vmatpush1.xpose.msra.mxu0 0.0
        %5508 = vmatprep.subr.mxu0 0.0
        %5509 = vmatpush1.xpose.msra.mxu0 0.0
        %5510 = vmatprep.subr.mxu0 0.0
        %5511 = vmatpush1.xpose.msra.mxu0 0.0
        %5512 = vmatprep.subr.mxu0 0.0
        %5513 = vmatpush1.xpose.msra.mxu0 0.0
        %5514 = vmatprep.subr.mxu0 0.0
        %5515 = vmatpush1.xpose.msra.mxu0 0.0
        %5516 = vmatprep.subr.mxu0 0.0
        %5517 = vmatpush1.xpose.msra.mxu0 0.0
        %5518 = vmatprep.subr.mxu0 0.0
        %5519 = vmatpush1.xpose.msra.mxu0 0.0
        %5520 = vmatprep.subr.mxu0 0.0
        %5521 = vmatpush1.xpose.msra.mxu0 0.0
        %5522 = vmatprep.subr.mxu0 0.0
        %5523 = vmatpush1.xpose.msra.mxu0 0.0
        %5524 = vmatprep.subr.mxu0 0.0
        %5525 = vmatpush1.xpose.msra.mxu0 0.0
        %5526 = vmatprep.subr.mxu0 0.0
        %5527 = vmatpush1.xpose.msra.mxu0 0.0
        %5528 = vmatprep.subr.mxu0 0.0
        %5529 = vmatpush1.xpose.msra.mxu0 0.0
        %5530 = vmatprep.subr.mxu0 0.0
        %5531 = vmatpush1.xpose.msra.mxu0 0.0
        %5532 = vmatprep.subr.mxu0 0.0
        %5533 = vmatpush1.xpose.msra.mxu0 0.0
        %5534 = vmatprep.subr.mxu0 0.0
        %5535 = vmatpush1.xpose.msra.mxu0 0.0
        %5536 = vmatprep.subr.mxu0 0.0
        %5537 = vmatpush1.xpose.msra.mxu0 0.0
        %5538 = vmatprep.subr.mxu0 0.0
        %5539 = vmatpush1.xpose.msra.mxu0 0.0
        %5540 = vmatprep.subr.mxu0 0.0
        %5541 = vmatpush1.xpose.msra.mxu0 0.0
        %5542 = vmatprep.subr.mxu0 0.0
        %5543 = vmatpush1.xpose.msra.mxu0 0.0
        %5544 = vmatprep.subr.mxu0 0.0
        %5545 = vmatpush1.xpose.msra.mxu0 0.0
        %5546 = vmatprep.subr.mxu0 0.0
        %5547 = vmatpush1.xpose.msra.mxu0 0.0
        %5548 = vmatprep.subr.mxu0 0.0
        %5549 = vmatpush1.xpose.msra.mxu0 0.0
        %5550 = vmatprep.subr.mxu0 0.0
        %5551 = vmatpush1.xpose.msra.mxu0 0.0
        %5552 = vmatprep.subr.mxu0 0.0
        %5553 = vmatpush1.xpose.msra.mxu0 0.0
        %5554 = vmatprep.subr.mxu0 0.0
        %5555 = vmatpush1.xpose.msra.mxu0 0.0
        %5556 = vmatprep.subr.mxu0 0.0
        %5557 = vmatpush1.xpose.msra.mxu0 0.0
        %5558 = vmatprep.subr.mxu0 0.0
        %5559 = vmatpush1.xpose.msra.mxu0 0.0
        %5560 = vmatprep.subr.mxu0 0.0
        %5561 = vmatpush1.xpose.msra.mxu0 0.0
        %5562 = vmatprep.subr.mxu0 0.0
        %5563 = vmatpush1.xpose.msra.mxu0 0.0
        %5564 = vmatprep.mubr.f32.mxu0 0.0
        %5565 = vmatmul.mubr.f32.gmra.mrb[0].mxu0 %v5495
        %v5566 = vpop.f32.mrb[0].mxu0
        %v5567 = vadd.f32 0.0, %v5566
        %v5568 = vpop.f32.mrb[0].mxu0
        %5569 = vdwg.mxu0
        %v5571 = vsel %vm3536, %v3190, 0
        %v5574 = vsel %vm3536, %v3362, 0
        %5576 = vmatprep.subr.mxu0 0.0
        %5577 = vmatpush1.xpose.msra.mxu0 %v5574
        %5578 = vmatprep.subr.mxu0 0.0
        %5579 = vmatpush1.xpose.msra.mxu0 0.0
        %5580 = vmatprep.subr.mxu0 0.0
        %5581 = vmatpush1.xpose.msra.mxu0 0.0
        %5582 = vmatprep.subr.mxu0 0.0
        %5583 = vmatpush1.xpose.msra.mxu0 0.0
        %5584 = vmatprep.subr.mxu0 0.0
        %5585 = vmatpush1.xpose.msra.mxu0 0.0
        %5586 = vmatprep.subr.mxu0 0.0
        %5587 = vmatpush1.xpose.msra.mxu0 0.0
        %5588 = vmatprep.subr.mxu0 0.0
        %5589 = vmatpush1.xpose.msra.mxu0 0.0
        %5590 = vmatprep.subr.mxu0 0.0
        %5591 = vmatpush1.xpose.msra.mxu0 0.0
        %5592 = vmatprep.subr.mxu0 0.0
        %5593 = vmatpush1.xpose.msra.mxu0 0.0
        %5594 = vmatprep.subr.mxu0 0.0
        %5595 = vmatpush1.xpose.msra.mxu0 0.0
        %5596 = vmatprep.subr.mxu0 0.0
        %5597 = vmatpush1.xpose.msra.mxu0 0.0
        %5598 = vmatprep.subr.mxu0 0.0
        %5599 = vmatpush1.xpose.msra.mxu0 0.0
        %5600 = vmatprep.subr.mxu0 0.0
        %5601 = vmatpush1.xpose.msra.mxu0 0.0
        %5602 = vmatprep.subr.mxu0 0.0
        %5603 = vmatpush1.xpose.msra.mxu0 0.0
        %5604 = vmatprep.subr.mxu0 0.0
        %5605 = vmatpush1.xpose.msra.mxu0 0.0
        %5606 = vmatprep.subr.mxu0 0.0
        %5607 = vmatpush1.xpose.msra.mxu0 0.0
        %5608 = vmatprep.subr.mxu0 0.0
        %5609 = vmatpush1.xpose.msra.mxu0 0.0
        %5610 = vmatprep.subr.mxu0 0.0
        %5611 = vmatpush1.xpose.msra.mxu0 0.0
        %5612 = vmatprep.subr.mxu0 0.0
        %5613 = vmatpush1.xpose.msra.mxu0 0.0
        %5614 = vmatprep.subr.mxu0 0.0
        %5615 = vmatpush1.xpose.msra.mxu0 0.0
        %5616 = vmatprep.subr.mxu0 0.0
        %5617 = vmatpush1.xpose.msra.mxu0 0.0
        %5618 = vmatprep.subr.mxu0 0.0
        %5619 = vmatpush1.xpose.msra.mxu0 0.0
        %5620 = vmatprep.subr.mxu0 0.0
        %5621 = vmatpush1.xpose.msra.mxu0 0.0
        %5622 = vmatprep.subr.mxu0 0.0
        %5623 = vmatpush1.xpose.msra.mxu0 0.0
        %5624 = vmatprep.subr.mxu0 0.0
        %5625 = vmatpush1.xpose.msra.mxu0 0.0
        %5626 = vmatprep.subr.mxu0 0.0
        %5627 = vmatpush1.xpose.msra.mxu0 0.0
        %5628 = vmatprep.subr.mxu0 0.0
        %5629 = vmatpush1.xpose.msra.mxu0 0.0
        %5630 = vmatprep.subr.mxu0 0.0
        %5631 = vmatpush1.xpose.msra.mxu0 0.0
        %5632 = vmatprep.subr.mxu0 0.0
        %5633 = vmatpush1.xpose.msra.mxu0 0.0
        %5634 = vmatprep.subr.mxu0 0.0
        %5635 = vmatpush1.xpose.msra.mxu0 0.0
        %5636 = vmatprep.subr.mxu0 0.0
        %5637 = vmatpush1.xpose.msra.mxu0 0.0
        %5638 = vmatprep.subr.mxu0 0.0
        %5639 = vmatpush1.xpose.msra.mxu0 0.0
        %5640 = vmatprep.mubr.f32.mxu0 0.0
        %5641 = vmatmul.mubr.f32.gmra.mrb[0].mxu0 %v5571
        %v5642 = vpop.f32.mrb[0].mxu0
        %v5643 = vadd.f32 0.0, %v5642
        %v5644 = vpop.f32.mrb[0].mxu0
        %5645 = vdwg.mxu0
        %v5646 = vsel %vm3689, %v5567, -inf
        %5647 = vmax.xlane.f32.xlu0 %v5646
        %v5648 = vpop.xlane.xlu0 %5647
        %v5649 = vsel %vm3689, %v5643, -inf
        %5650 = vmax.xlane.f32.xlu0 %v5649
        %v5651 = vpop.xlane.xlu0 %5650
        %v5652 = vsub.f32 %v5567, %v5648
        %v5653 = vsub.f32 %v5643, %v5651
        %v5654 = vmul.f32 %v5652, 1.442695
        %v5655 = vpow.pop %v5654
        %v5656 = vmul.f32 %v5653, 1.442695
        %v5657 = vpow.pop %v5656
        %v5658 = vsel %vm3689, %v5655, 0.0
        %5659 = vadd.xlane.f32.xlu0 %v5658
        %v5660 = vpop.xlane.xlu0 %5659
        %v5661 = vsel %vm3689, %v5657, 0.0
        %5662 = vadd.xlane.f32.xlu0 %v5661
        %v5663 = vpop.xlane.xlu0 %5662
        %v5664 = vrcp.pop %v5660
        %v5665 = vrcp.pop %v5663
        %v5666 = vmul.f32 %v5655, %v5664
        %v5667 = vmul.f32 %v5657, %v5665
        %v5669 = vsel %vm3689, %v5666, 0
        %5671 = vmatprep.subr.mxu0 0.0
        %5672 = vmatpush1.msra.mxu0 %v3530
        %5673 = vmatprep.subr.mxu0 0.0
        %5674 = vmatpush1.msra.mxu0 0.0
        %5675 = vmatprep.subr.mxu0 0.0
        %5676 = vmatpush1.msra.mxu0 0.0
        %5677 = vmatprep.subr.mxu0 0.0
        %5678 = vmatpush1.msra.mxu0 0.0
        %5679 = vmatprep.subr.mxu0 0.0
        %5680 = vmatpush1.msra.mxu0 0.0
        %5681 = vmatprep.subr.mxu0 0.0
        %5682 = vmatpush1.msra.mxu0 0.0
        %5683 = vmatprep.subr.mxu0 0.0
        %5684 = vmatpush1.msra.mxu0 0.0
        %5685 = vmatprep.subr.mxu0 0.0
        %5686 = vmatpush1.msra.mxu0 0.0
        %5687 = vmatprep.subr.mxu0 0.0
        %5688 = vmatpush1.msra.mxu0 0.0
        %5689 = vmatprep.subr.mxu0 0.0
        %5690 = vmatpush1.msra.mxu0 0.0
        %5691 = vmatprep.subr.mxu0 0.0
        %5692 = vmatpush1.msra.mxu0 0.0
        %5693 = vmatprep.subr.mxu0 0.0
        %5694 = vmatpush1.msra.mxu0 0.0
        %5695 = vmatprep.subr.mxu0 0.0
        %5696 = vmatpush1.msra.mxu0 0.0
        %5697 = vmatprep.subr.mxu0 0.0
        %5698 = vmatpush1.msra.mxu0 0.0
        %5699 = vmatprep.subr.mxu0 0.0
        %5700 = vmatpush1.msra.mxu0 0.0
        %5701 = vmatprep.subr.mxu0 0.0
        %5702 = vmatpush1.msra.mxu0 0.0
        %5703 = vmatprep.subr.mxu0 0.0
        %5704 = vmatpush1.msra.mxu0 0.0
        %5705 = vmatprep.subr.mxu0 0.0
        %5706 = vmatpush1.msra.mxu0 0.0
        %5707 = vmatprep.subr.mxu0 0.0
        %5708 = vmatpush1.msra.mxu0 0.0
        %5709 = vmatprep.subr.mxu0 0.0
        %5710 = vmatpush1.msra.mxu0 0.0
        %5711 = vmatprep.subr.mxu0 0.0
        %5712 = vmatpush1.msra.mxu0 0.0
        %5713 = vmatprep.subr.mxu0 0.0
        %5714 = vmatpush1.msra.mxu0 0.0
        %5715 = vmatprep.subr.mxu0 0.0
        %5716 = vmatpush1.msra.mxu0 0.0
        %5717 = vmatprep.subr.mxu0 0.0
        %5718 = vmatpush1.msra.mxu0 0.0
        %5719 = vmatprep.subr.mxu0 0.0
        %5720 = vmatpush1.msra.mxu0 0.0
        %5721 = vmatprep.subr.mxu0 0.0
        %5722 = vmatpush1.msra.mxu0 0.0
        %5723 = vmatprep.subr.mxu0 0.0
        %5724 = vmatpush1.msra.mxu0 0.0
        %5725 = vmatprep.subr.mxu0 0.0
        %5726 = vmatpush1.msra.mxu0 0.0
        %5727 = vmatprep.subr.mxu0 0.0
        %5728 = vmatpush1.msra.mxu0 0.0
        %5729 = vmatprep.subr.mxu0 0.0
        %5730 = vmatpush1.msra.mxu0 0.0
        %5731 = vmatprep.subr.mxu0 0.0
        %5732 = vmatpush1.msra.mxu0 0.0
        %5733 = vmatprep.subr.mxu0 0.0
        %5734 = vmatpush1.msra.mxu0 0.0
        %5735 = vmatprep.mubr.f32.mxu0 0.0
        %5736 = vmatmul.mubr.f32.gmra.mrb[0].mxu0 %v5669
        %v5737 = vpop.f32.mrb[0].mxu0
        %v5738 = vadd.f32 0.0, %v5737
        %v5739 = vpop.f32.mrb[0].mxu0
        %5740 = vdwg.mxu0
        %v5742 = vsel %vm3689, %v5667, 0
        %5744 = vmatprep.subr.mxu0 0.0
        %5745 = vmatpush1.msra.mxu0 %v3534
        %5746 = vmatprep.subr.mxu0 0.0
        %5747 = vmatpush1.msra.mxu0 0.0
        %5748 = vmatprep.subr.mxu0 0.0
        %5749 = vmatpush1.msra.mxu0 0.0
        %5750 = vmatprep.subr.mxu0 0.0
        %5751 = vmatpush1.msra.mxu0 0.0
        %5752 = vmatprep.subr.mxu0 0.0
        %5753 = vmatpush1.msra.mxu0 0.0
        %5754 = vmatprep.subr.mxu0 0.0
        %5755 = vmatpush1.msra.mxu0 0.0
        %5756 = vmatprep.subr.mxu0 0.0
        %5757 = vmatpush1.msra.mxu0 0.0
        %5758 = vmatprep.subr.mxu0 0.0
        %5759 = vmatpush1.msra.mxu0 0.0
        %5760 = vmatprep.subr.mxu0 0.0
        %5761 = vmatpush1.msra.mxu0 0.0
        %5762 = vmatprep.subr.mxu0 0.0
        %5763 = vmatpush1.msra.mxu0 0.0
        %5764 = vmatprep.subr.mxu0 0.0
        %5765 = vmatpush1.msra.mxu0 0.0
        %5766 = vmatprep.subr.mxu0 0.0
        %5767 = vmatpush1.msra.mxu0 0.0
        %5768 = vmatprep.subr.mxu0 0.0
        %5769 = vmatpush1.msra.mxu0 0.0
        %5770 = vmatprep.subr.mxu0 0.0
        %5771 = vmatpush1.msra.mxu0 0.0
        %5772 = vmatprep.subr.mxu0 0.0
        %5773 = vmatpush1.msra.mxu0 0.0
        %5774 = vmatprep.subr.mxu0 0.0
        %5775 = vmatpush1.msra.mxu0 0.0
        %5776 = vmatprep.subr.mxu0 0.0
        %5777 = vmatpush1.msra.mxu0 0.0
        %5778 = vmatprep.subr.mxu0 0.0
        %5779 = vmatpush1.msra.mxu0 0.0
        %5780 = vmatprep.subr.mxu0 0.0
        %5781 = vmatpush1.msra.mxu0 0.0
        %5782 = vmatprep.subr.mxu0 0.0
        %5783 = vmatpush1.msra.mxu0 0.0
        %5784 = vmatprep.subr.mxu0 0.0
        %5785 = vmatpush1.msra.mxu0 0.0
        %5786 = vmatprep.subr.mxu0 0.0
        %5787 = vmatpush1.msra.mxu0 0.0
        %5788 = vmatprep.subr.mxu0 0.0
        %5789 = vmatpush1.msra.mxu0 0.0
        %5790 = vmatprep.subr.mxu0 0.0
        %5791 = vmatpush1.msra.mxu0 0.0
        %5792 = vmatprep.subr.mxu0 0.0
        %5793 = vmatpush1.msra.mxu0 0.0
        %5794 = vmatprep.subr.mxu0 0.0
        %5795 = vmatpush1.msra.mxu0 0.0
        %5796 = vmatprep.subr.mxu0 0.0
        %5797 = vmatpush1.msra.mxu0 0.0
        %5798 = vmatprep.subr.mxu0 0.0
        %5799 = vmatpush1.msra.mxu0 0.0
        %5800 = vmatprep.subr.mxu0 0.0
        %5801 = vmatpush1.msra.mxu0 0.0
        %5802 = vmatprep.subr.mxu0 0.0
        %5803 = vmatpush1.msra.mxu0 0.0
        %5804 = vmatprep.subr.mxu0 0.0
        %5805 = vmatpush1.msra.mxu0 0.0
        %5806 = vmatprep.subr.mxu0 0.0
        %5807 = vmatpush1.msra.mxu0 0.0
        %5808 = vmatprep.mubr.f32.mxu0 0.0
        %5809 = vmatmul.mubr.f32.gmra.mrb[0].mxu0 %v5742
        %v5810 = vpop.f32.mrb[0].mxu0
        %v5811 = vadd.f32 0.0, %v5810
        %v5812 = vpop.f32.mrb[0].mxu0
        %5813 = vdwg.mxu0
        %5814 = vrot.lane.b32.xlu0 %v3186, 64
        %v5815 = vpop.permute.xlu0 %5814
        %5816 = vrot.lane.b32.xlu0 %v3358, 64
        %v5817 = vpop.permute.xlu0 %5816
        %v5818 = vsel %vm3536, %v5815, 0
        %v5820 = vsel %vm3536, %v5817, 0
        %5822 = vmatprep.subr.mxu0 0.0
        %5823 = vmatpush1.xpose.msra.mxu0 %v5820
        %5824 = vmatprep.subr.mxu0 0.0
        %5825 = vmatpush1.xpose.msra.mxu0 0.0
        %5826 = vmatprep.subr.mxu0 0.0
        %5827 = vmatpush1.xpose.msra.mxu0 0.0
        %5828 = vmatprep.subr.mxu0 0.0
        %5829 = vmatpush1.xpose.msra.mxu0 0.0
        %5830 = vmatprep.subr.mxu0 0.0
        %5831 = vmatpush1.xpose.msra.mxu0 0.0
        %5832 = vmatprep.subr.mxu0 0.0
        %5833 = vmatpush1.xpose.msra.mxu0 0.0
        %5834 = vmatprep.subr.mxu0 0.0
        %5835 = vmatpush1.xpose.msra.mxu0 0.0
        %5836 = vmatprep.subr.mxu0 0.0
        %5837 = vmatpush1.xpose.msra.mxu0 0.0
        %5838 = vmatprep.subr.mxu0 0.0
        %5839 = vmatpush1.xpose.msra.mxu0 0.0
        %5840 = vmatprep.subr.mxu0 0.0
        %5841 = vmatpush1.xpose.msra.mxu0 0.0
        %5842 = vmatprep.subr.mxu0 0.0
        %5843 = vmatpush1.xpose.msra.mxu0 0.0
        %5844 = vmatprep.subr.mxu0 0.0
        %5845 = vmatpush1.xpose.msra.mxu0 0.0
        %5846 = vmatprep.subr.mxu0 0.0
        %5847 = vmatpush1.xpose.msra.mxu0 0.0
        %5848 = vmatprep.subr.mxu0 0.0
        %5849 = vmatpush1.xpose.msra.mxu0 0.0
        %5850 = vmatprep.subr.mxu0 0.0
        %5851 = vmatpush1.xpose.msra.mxu0 0.0
        %5852 = vmatprep.subr.mxu0 0.0
        %5853 = vmatpush1.xpose.msra.mxu0 0.0
        %5854 = vmatprep.subr.mxu0 0.0
        %5855 = vmatpush1.xpose.msra.mxu0 0.0
        %5856 = vmatprep.subr.mxu0 0.0
        %5857 = vmatpush1.xpose.msra.mxu0 0.0
        %5858 = vmatprep.subr.mxu0 0.0
        %5859 = vmatpush1.xpose.msra.mxu0 0.0
        %5860 = vmatprep.subr.mxu0 0.0
        %5861 = vmatpush1.xpose.msra.mxu0 0.0
        %5862 = vmatprep.subr.mxu0 0.0
        %5863 = vmatpush1.xpose.msra.mxu0 0.0
        %5864 = vmatprep.subr.mxu0 0.0
        %5865 = vmatpush1.xpose.msra.mxu0 0.0
        %5866 = vmatprep.subr.mxu0 0.0
        %5867 = vmatpush1.xpose.msra.mxu0 0.0
        %5868 = vmatprep.subr.mxu0 0.0
        %5869 = vmatpush1.xpose.msra.mxu0 0.0
        %5870 = vmatprep.subr.mxu0 0.0
        %5871 = vmatpush1.xpose.msra.mxu0 0.0
        %5872 = vmatprep.subr.mxu0 0.0
        %5873 = vmatpush1.xpose.msra.mxu0 0.0
        %5874 = vmatprep.subr.mxu0 0.0
        %5875 = vmatpush1.xpose.msra.mxu0 0.0
        %5876 = vmatprep.subr.mxu0 0.0
        %5877 = vmatpush1.xpose.msra.mxu0 0.0
        %5878 = vmatprep.subr.mxu0 0.0
        %5879 = vmatpush1.xpose.msra.mxu0 0.0
        %5880 = vmatprep.subr.mxu0 0.0
        %5881 = vmatpush1.xpose.msra.mxu0 0.0
        %5882 = vmatprep.subr.mxu0 0.0
        %5883 = vmatpush1.xpose.msra.mxu0 0.0
        %5884 = vmatprep.subr.mxu0 0.0
        %5885 = vmatpush1.xpose.msra.mxu0 0.0
        %5886 = vmatprep.mubr.f32.mxu0 0.0
        %5887 = vmatmul.mubr.f32.gmra.mrb[0].mxu0 %v5818
        %v5888 = vpop.f32.mrb[0].mxu0
        %v5889 = vadd.f32 0.0, %v5888
        %v5890 = vpop.f32.mrb[0].mxu0
        %5891 = vdwg.mxu0
        %5892 = vrot.lane.b32.xlu0 %v3190, 64
        %v5893 = vpop.permute.xlu0 %5892
        %5894 = vrot.lane.b32.xlu0 %v3362, 64
        %v5895 = vpop.permute.xlu0 %5894
        %v5896 = vsel %vm3536, %v5893, 0
        %v5898 = vsel %vm3536, %v5895, 0
        %5900 = vmatprep.subr.mxu0 0.0
        %5901 = vmatpush1.xpose.msra.mxu0 %v5898
        %5902 = vmatprep.subr.mxu0 0.0
        %5903 = vmatpush1.xpose.msra.mxu0 0.0
        %5904 = vmatprep.subr.mxu0 0.0
        %5905 = vmatpush1.xpose.msra.mxu0 0.0
        %5906 = vmatprep.subr.mxu0 0.0
        %5907 = vmatpush1.xpose.msra.mxu0 0.0
        %5908 = vmatprep.subr.mxu0 0.0
        %5909 = vmatpush1.xpose.msra.mxu0 0.0
        %5910 = vmatprep.subr.mxu0 0.0
        %5911 = vmatpush1.xpose.msra.mxu0 0.0
        %5912 = vmatprep.subr.mxu0 0.0
        %5913 = vmatpush1.xpose.msra.mxu0 0.0
        %5914 = vmatprep.subr.mxu0 0.0
        %5915 = vmatpush1.xpose.msra.mxu0 0.0
        %5916 = vmatprep.subr.mxu0 0.0
        %5917 = vmatpush1.xpose.msra.mxu0 0.0
        %5918 = vmatprep.subr.mxu0 0.0
        %5919 = vmatpush1.xpose.msra.mxu0 0.0
        %5920 = vmatprep.subr.mxu0 0.0
        %5921 = vmatpush1.xpose.msra.mxu0 0.0
        %5922 = vmatprep.subr.mxu0 0.0
        %5923 = vmatpush1.xpose.msra.mxu0 0.0
        %5924 = vmatprep.subr.mxu0 0.0
        %5925 = vmatpush1.xpose.msra.mxu0 0.0
        %5926 = vmatprep.subr.mxu0 0.0
        %5927 = vmatpush1.xpose.msra.mxu0 0.0
        %5928 = vmatprep.subr.mxu0 0.0
        %5929 = vmatpush1.xpose.msra.mxu0 0.0
        %5930 = vmatprep.subr.mxu0 0.0
        %5931 = vmatpush1.xpose.msra.mxu0 0.0
        %5932 = vmatprep.subr.mxu0 0.0
        %5933 = vmatpush1.xpose.msra.mxu0 0.0
        %5934 = vmatprep.subr.mxu0 0.0
        %5935 = vmatpush1.xpose.msra.mxu0 0.0
        %5936 = vmatprep.subr.mxu0 0.0
        %5937 = vmatpush1.xpose.msra.mxu0 0.0
        %5938 = vmatprep.subr.mxu0 0.0
        %5939 = vmatpush1.xpose.msra.mxu0 0.0
        %5940 = vmatprep.subr.mxu0 0.0
        %5941 = vmatpush1.xpose.msra.mxu0 0.0
        %5942 = vmatprep.subr.mxu0 0.0
        %5943 = vmatpush1.xpose.msra.mxu0 0.0
        %5944 = vmatprep.subr.mxu0 0.0
        %5945 = vmatpush1.xpose.msra.mxu0 0.0
        %5946 = vmatprep.subr.mxu0 0.0
        %5947 = vmatpush1.xpose.msra.mxu0 0.0
        %5948 = vmatprep.subr.mxu0 0.0
        %5949 = vmatpush1.xpose.msra.mxu0 0.0
        %5950 = vmatprep.subr.mxu0 0.0
        %5951 = vmatpush1.xpose.msra.mxu0 0.0
        %5952 = vmatprep.subr.mxu0 0.0
        %5953 = vmatpush1.xpose.msra.mxu0 0.0
        %5954 = vmatprep.subr.mxu0 0.0
        %5955 = vmatpush1.xpose.msra.mxu0 0.0
        %5956 = vmatprep.subr.mxu0 0.0
        %5957 = vmatpush1.xpose.msra.mxu0 0.0
        %5958 = vmatprep.subr.mxu0 0.0
        %5959 = vmatpush1.xpose.msra.mxu0 0.0
        %5960 = vmatprep.subr.mxu0 0.0
        %5961 = vmatpush1.xpose.msra.mxu0 0.0
        %5962 = vmatprep.subr.mxu0 0.0
        %5963 = vmatpush1.xpose.msra.mxu0 0.0
        %5964 = vmatprep.mubr.f32.mxu0 0.0
        %5965 = vmatmul.mubr.f32.gmra.mrb[0].mxu0 %v5896
        %v5966 = vpop.f32.mrb[0].mxu0
        %v5967 = vadd.f32 0.0, %v5966
        %v5968 = vpop.f32.mrb[0].mxu0
        %5969 = vdwg.mxu0
        %v5970 = vsel %vm3689, %v5889, -inf
        %5971 = vmax.xlane.f32.xlu0 %v5970
        %v5972 = vpop.xlane.xlu0 %5971
        %v5973 = vsel %vm3689, %v5967, -inf
        %5974 = vmax.xlane.f32.xlu0 %v5973
        %v5975 = vpop.xlane.xlu0 %5974
        %v5976 = vsub.f32 %v5889, %v5972
        %v5977 = vsub.f32 %v5967, %v5975
        %v5978 = vmul.f32 %v5976, 1.442695
        %v5979 = vpow.pop %v5978
        %v5980 = vmul.f32 %v5977, 1.442695
        %v5981 = vpow.pop %v5980
        %v5982 = vsel %vm3689, %v5979, 0.0
        %5983 = vadd.xlane.f32.xlu0 %v5982
        %v5984 = vpop.xlane.xlu0 %5983
        %v5985 = vsel %vm3689, %v5981, 0.0
        %5986 = vadd.xlane.f32.xlu0 %v5985
        %v5987 = vpop.xlane.xlu0 %5986
        %v5988 = vrcp.pop %v5984
        %v5989 = vrcp.pop %v5987
        %v5990 = vmul.f32 %v5979, %v5988
        %v5991 = vmul.f32 %v5981, %v5989
        %5993 = vrot.lane.b32.xlu0 %v3530, 64
        %v5994 = vpop.permute.xlu0 %5993
        %v5997 = vsel %vm3689, %v5990, 0
        %5999 = vmatprep.subr.mxu0 0.0
        %6000 = vmatpush1.msra.mxu0 %v5994
        %6001 = vmatprep.subr.mxu0 0.0
        %6002 = vmatpush1.msra.mxu0 0.0
        %6003 = vmatprep.subr.mxu0 0.0
        %6004 = vmatpush1.msra.mxu0 0.0
        %6005 = vmatprep.subr.mxu0 0.0
        %6006 = vmatpush1.msra.mxu0 0.0
        %6007 = vmatprep.subr.mxu0 0.0
        %6008 = vmatpush1.msra.mxu0 0.0
        %6009 = vmatprep.subr.mxu0 0.0
        %6010 = vmatpush1.msra.mxu0 0.0
        %6011 = vmatprep.subr.mxu0 0.0
        %6012 = vmatpush1.msra.mxu0 0.0
        %6013 = vmatprep.subr.mxu0 0.0
        %6014 = vmatpush1.msra.mxu0 0.0
        %6015 = vmatprep.subr.mxu0 0.0
        %6016 = vmatpush1.msra.mxu0 0.0
        %6017 = vmatprep.subr.mxu0 0.0
        %6018 = vmatpush1.msra.mxu0 0.0
        %6019 = vmatprep.subr.mxu0 0.0
        %6020 = vmatpush1.msra.mxu0 0.0
        %6021 = vmatprep.subr.mxu0 0.0
        %6022 = vmatpush1.msra.mxu0 0.0
        %6023 = vmatprep.subr.mxu0 0.0
        %6024 = vmatpush1.msra.mxu0 0.0
        %6025 = vmatprep.subr.mxu0 0.0
        %6026 = vmatpush1.msra.mxu0 0.0
        %6027 = vmatprep.subr.mxu0 0.0
        %6028 = vmatpush1.msra.mxu0 0.0
        %6029 = vmatprep.subr.mxu0 0.0
        %6030 = vmatpush1.msra.mxu0 0.0
        %6031 = vmatprep.subr.mxu0 0.0
        %6032 = vmatpush1.msra.mxu0 0.0
        %6033 = vmatprep.subr.mxu0 0.0
        %6034 = vmatpush1.msra.mxu0 0.0
        %6035 = vmatprep.subr.mxu0 0.0
        %6036 = vmatpush1.msra.mxu0 0.0
        %6037 = vmatprep.subr.mxu0 0.0
        %6038 = vmatpush1.msra.mxu0 0.0
        %6039 = vmatprep.subr.mxu0 0.0
        %6040 = vmatpush1.msra.mxu0 0.0
        %6041 = vmatprep.subr.mxu0 0.0
        %6042 = vmatpush1.msra.mxu0 0.0
        %6043 = vmatprep.subr.mxu0 0.0
        %6044 = vmatpush1.msra.mxu0 0.0
        %6045 = vmatprep.subr.mxu0 0.0
        %6046 = vmatpush1.msra.mxu0 0.0
        %6047 = vmatprep.subr.mxu0 0.0
        %6048 = vmatpush1.msra.mxu0 0.0
        %6049 = vmatprep.subr.mxu0 0.0
        %6050 = vmatpush1.msra.mxu0 0.0
        %6051 = vmatprep.subr.mxu0 0.0
        %6052 = vmatpush1.msra.mxu0 0.0
        %6053 = vmatprep.subr.mxu0 0.0
        %6054 = vmatpush1.msra.mxu0 0.0
        %6055 = vmatprep.subr.mxu0 0.0
        %6056 = vmatpush1.msra.mxu0 0.0
        %6057 = vmatprep.subr.mxu0 0.0
        %6058 = vmatpush1.msra.mxu0 0.0
        %6059 = vmatprep.subr.mxu0 0.0
        %6060 = vmatpush1.msra.mxu0 0.0
        %6061 = vmatprep.subr.mxu0 0.0
        %6062 = vmatpush1.msra.mxu0 0.0
        %6063 = vmatprep.mubr.f32.mxu0 0.0
        %6064 = vmatmul.mubr.f32.gmra.mrb[0].mxu0 %v5997
        %v6065 = vpop.f32.mrb[0].mxu0
        %v6066 = vadd.f32 0.0, %v6065
        %v6067 = vpop.f32.mrb[0].mxu0
        %6068 = vdwg.mxu0
        %6070 = vrot.lane.b32.xlu0 %v3534, 64
        %v6071 = vpop.permute.xlu0 %6070
        %v6074 = vsel %vm3689, %v5991, 0
        %6076 = vmatprep.subr.mxu0 0.0
        %6077 = vmatpush1.msra.mxu0 %v6071
        %6078 = vmatprep.subr.mxu0 0.0
        %6079 = vmatpush1.msra.mxu0 0.0
        %6080 = vmatprep.subr.mxu0 0.0
        %6081 = vmatpush1.msra.mxu0 0.0
        %6082 = vmatprep.subr.mxu0 0.0
        %6083 = vmatpush1.msra.mxu0 0.0
        %6084 = vmatprep.subr.mxu0 0.0
        %6085 = vmatpush1.msra.mxu0 0.0
        %6086 = vmatprep.subr.mxu0 0.0
        %6087 = vmatpush1.msra.mxu0 0.0
        %6088 = vmatprep.subr.mxu0 0.0
        %6089 = vmatpush1.msra.mxu0 0.0
        %6090 = vmatprep.subr.mxu0 0.0
        %6091 = vmatpush1.msra.mxu0 0.0
        %6092 = vmatprep.subr.mxu0 0.0
        %6093 = vmatpush1.msra.mxu0 0.0
        %6094 = vmatprep.subr.mxu0 0.0
        %6095 = vmatpush1.msra.mxu0 0.0
        %6096 = vmatprep.subr.mxu0 0.0
        %6097 = vmatpush1.msra.mxu0 0.0
        %6098 = vmatprep.subr.mxu0 0.0
        %6099 = vmatpush1.msra.mxu0 0.0
        %6100 = vmatprep.subr.mxu0 0.0
        %6101 = vmatpush1.msra.mxu0 0.0
        %6102 = vmatprep.subr.mxu0 0.0
        %6103 = vmatpush1.msra.mxu0 0.0
        %6104 = vmatprep.subr.mxu0 0.0
        %6105 = vmatpush1.msra.mxu0 0.0
        %6106 = vmatprep.subr.mxu0 0.0
        %6107 = vmatpush1.msra.mxu0 0.0
        %6108 = vmatprep.subr.mxu0 0.0
        %6109 = vmatpush1.msra.mxu0 0.0
        %6110 = vmatprep.subr.mxu0 0.0
        %6111 = vmatpush1.msra.mxu0 0.0
        %6112 = vmatprep.subr.mxu0 0.0
        %6113 = vmatpush1.msra.mxu0 0.0
        %6114 = vmatprep.subr.mxu0 0.0
        %6115 = vmatpush1.msra.mxu0 0.0
        %6116 = vmatprep.subr.mxu0 0.0
        %6117 = vmatpush1.msra.mxu0 0.0
        %6118 = vmatprep.subr.mxu0 0.0
        %6119 = vmatpush1.msra.mxu0 0.0
        %6120 = vmatprep.subr.mxu0 0.0
        %6121 = vmatpush1.msra.mxu0 0.0
        %6122 = vmatprep.subr.mxu0 0.0
        %6123 = vmatpush1.msra.mxu0 0.0
        %6124 = vmatprep.subr.mxu0 0.0
        %6125 = vmatpush1.msra.mxu0 0.0
        %6126 = vmatprep.subr.mxu0 0.0
        %6127 = vmatpush1.msra.mxu0 0.0
        %6128 = vmatprep.subr.mxu0 0.0
        %6129 = vmatpush1.msra.mxu0 0.0
        %6130 = vmatprep.subr.mxu0 0.0
        %6131 = vmatpush1.msra.mxu0 0.0
        %6132 = vmatprep.subr.mxu0 0.0
        %6133 = vmatpush1.msra.mxu0 0.0
        %6134 = vmatprep.subr.mxu0 0.0
        %6135 = vmatpush1.msra.mxu0 0.0
        %6136 = vmatprep.subr.mxu0 0.0
        %6137 = vmatpush1.msra.mxu0 0.0
        %6138 = vmatprep.subr.mxu0 0.0
        %6139 = vmatpush1.msra.mxu0 0.0
        %6140 = vmatprep.mubr.f32.mxu0 0.0
        %6141 = vmatmul.mubr.f32.gmra.mrb[0].mxu0 %v6074
        %v6142 = vpop.f32.mrb[0].mxu0
        %v6143 = vadd.f32 0.0, %v6142
        %v6144 = vpop.f32.mrb[0].mxu0
        %6145 = vdwg.mxu0
        %6148 = vrot.lane.b32.xlu0 %v4110, 64
        %v6149 = vpop.permute.xlu0 %6148
        %6150 = vrot.lane.b32.xlu0 %v4187, 64
        %v6151 = vpop.permute.xlu0 %6150
        %6156 = vrot.lane.b32.xlu0 %v4762, 64
        %v6157 = vpop.permute.xlu0 %6156
        %6158 = vrot.lane.b32.xlu0 %v4839, 64
        %v6159 = vpop.permute.xlu0 %6158
        %6164 = vrot.lane.b32.xlu0 %v5414, 64
        %v6165 = vpop.permute.xlu0 %6164
        %6166 = vrot.lane.b32.xlu0 %v5491, 64
        %v6167 = vpop.permute.xlu0 %6166
        %6172 = vrot.lane.b32.xlu0 %v6066, 64
        %v6173 = vpop.permute.xlu0 %6172
        %6174 = vrot.lane.b32.xlu0 %v6143, 64
        %v6175 = vpop.permute.xlu0 %6174
        %v6178 = vsel %vm3536, %v3782, %v6149
        %v6179 = vsel %vm3536, %v3855, %v6151
        %v6180 = vsel %vm3536, %v4434, %v6157
        %v6181 = vsel %vm3536, %v4507, %v6159
        %v6182 = vsel %vm3536, %v5086, %v6165
        %v6183 = vsel %vm3536, %v5159, %v6167
        %v6184 = vsel %vm3536, %v5738, %v6173
        %v6185 = vsel %vm3536, %v5811, %v6175
        %v6186 = vpack.c.bf16 %v6179, %v6178
        %v6187 = vpack.c.bf16 %v6181, %v6180
        %v6188 = vpack.c.bf16 %v6183, %v6182
        %v6189 = vpack.c.bf16 %v6185, %v6184
        %v6190 = vld [vmem:[%s411] sm:$0xff]
        %v6191 = vld [vmem:[%s411 + $0x8] sm:$0xff]
        %v6192 = vld [vmem:[%s411 + $0x10] sm:$0xff]
        %v6193 = vld [vmem:[%s411 + $0x18] sm:$0xff]
        %v6194 = vld [vmem:[%s411 + $0x20] sm:$0xff]
        %v6195 = vld [vmem:[%s411 + $0x28] sm:$0xff]
        %v6196 = vld [vmem:[%s411 + $0x30] sm:$0xff]
        %v6197 = vld [vmem:[%s411 + $0x38] sm:$0xff]
        %v6198 = vld [vmem:[%s411 + $0x40] sm:$0xff]
        %v6199 = vld [vmem:[%s411 + $0x48] sm:$0xff]
        %v6200 = vld [vmem:[%s411 + $0x50] sm:$0xff]
        %v6201 = vld [vmem:[%s411 + $0x58] sm:$0xff]
        %v6202 = vld [vmem:[%s411 + $0x60] sm:$0xff]
        %v6203 = vld [vmem:[%s411 + $0x68] sm:$0xff]
        %v6204 = vld [vmem:[%s411 + $0x70] sm:$0xff]
        %v6205 = vld [vmem:[%s411 + $0x78] sm:$0xff]
        %v6206 = vld [vmem:[%s411 + $0x80] sm:$0xff]
        %v6207 = vld [vmem:[%s411 + $0x88] sm:$0xff]
        %v6208 = vld [vmem:[%s411 + $0x90] sm:$0xff]
        %v6209 = vld [vmem:[%s411 + $0x98] sm:$0xff]
        %v6210 = vld [vmem:[%s411 + $0xa0] sm:$0xff]
        %v6211 = vld [vmem:[%s411 + $0xa8] sm:$0xff]
        %v6212 = vld [vmem:[%s411 + $0xb0] sm:$0xff]
        %v6213 = vld [vmem:[%s411 + $0xb8] sm:$0xff]
        %v6214 = vld [vmem:[%s411 + $0xc0] sm:$0xff]
        %v6215 = vld [vmem:[%s411 + $0xc8] sm:$0xff]
        %v6216 = vld [vmem:[%s411 + $0xd0] sm:$0xff]
        %v6217 = vld [vmem:[%s411 + $0xd8] sm:$0xff]
        %v6218 = vld [vmem:[%s411 + $0xe0] sm:$0xff]
        %v6219 = vld [vmem:[%s411 + $0xe8] sm:$0xff]
        %v6220 = vld [vmem:[%s411 + $0xf0] sm:$0xff]
        %v6221 = vld [vmem:[%s411 + $0xf8] sm:$0xff]
        %v6222 = vld [vmem:[%s411 + $0x100] sm:$0xff]
        %v6223 = vld [vmem:[%s411 + $0x108] sm:$0xff]
        %v6224 = vld [vmem:[%s411 + $0x110] sm:$0xff]
        %v6225 = vld [vmem:[%s411 + $0x118] sm:$0xff]
        %v6226 = vld [vmem:[%s411 + $0x120] sm:$0xff]
        %v6227 = vld [vmem:[%s411 + $0x128] sm:$0xff]
        %v6228 = vld [vmem:[%s411 + $0x130] sm:$0xff]
        %v6229 = vld [vmem:[%s411 + $0x138] sm:$0xff]
        %v6230 = vld [vmem:[%s411 + $0x140] sm:$0xff]
        %v6231 = vld [vmem:[%s411 + $0x148] sm:$0xff]
        %v6232 = vld [vmem:[%s411 + $0x150] sm:$0xff]
        %v6233 = vld [vmem:[%s411 + $0x158] sm:$0xff]
        %v6234 = vld [vmem:[%s411 + $0x160] sm:$0xff]
        %v6235 = vld [vmem:[%s411 + $0x168] sm:$0xff]
        %v6236 = vld [vmem:[%s411 + $0x170] sm:$0xff]
        %v6237 = vld [vmem:[%s411 + $0x178] sm:$0xff]
        %v6238 = vld [vmem:[%s411 + $0x180] sm:$0xff]
        %v6239 = vld [vmem:[%s411 + $0x188] sm:$0xff]
        %v6240 = vld [vmem:[%s411 + $0x190] sm:$0xff]
        %v6241 = vld [vmem:[%s411 + $0x198] sm:$0xff]
        %v6242 = vld [vmem:[%s411 + $0x1a0] sm:$0xff]
        %v6243 = vld [vmem:[%s411 + $0x1a8] sm:$0xff]
        %v6244 = vld [vmem:[%s411 + $0x1b0] sm:$0xff]
        %v6245 = vld [vmem:[%s411 + $0x1b8] sm:$0xff]
        %v6246 = vld [vmem:[%s411 + $0x1c0] sm:$0xff]
        %v6247 = vld [vmem:[%s411 + $0x1c8] sm:$0xff]
        %v6248 = vld [vmem:[%s411 + $0x1d0] sm:$0xff]
        %v6249 = vld [vmem:[%s411 + $0x1d8] sm:$0xff]
        %v6250 = vld [vmem:[%s411 + $0x1e0] sm:$0xff]
        %v6251 = vld [vmem:[%s411 + $0x1e8] sm:$0xff]
        %v6252 = vld [vmem:[%s411 + $0x1f0] sm:$0xff]
        %v6253 = vld [vmem:[%s411 + $0x1f8] sm:$0xff]
        %v6254 = vld [vmem:[%s411 + $0x200] sm:$0xff]
        %v6255 = vld [vmem:[%s411 + $0x208] sm:$0xff]
        %v6256 = vld [vmem:[%s411 + $0x210] sm:$0xff]
        %v6257 = vld [vmem:[%s411 + $0x218] sm:$0xff]
        %v6258 = vld [vmem:[%s411 + $0x220] sm:$0xff]
        %v6259 = vld [vmem:[%s411 + $0x228] sm:$0xff]
        %v6260 = vld [vmem:[%s411 + $0x230] sm:$0xff]
        %v6261 = vld [vmem:[%s411 + $0x238] sm:$0xff]
        %v6262 = vld [vmem:[%s411 + $0x240] sm:$0xff]
        %v6263 = vld [vmem:[%s411 + $0x248] sm:$0xff]
        %v6264 = vld [vmem:[%s411 + $0x250] sm:$0xff]
        %v6265 = vld [vmem:[%s411 + $0x258] sm:$0xff]
        %v6266 = vld [vmem:[%s411 + $0x260] sm:$0xff]
        %v6267 = vld [vmem:[%s411 + $0x268] sm:$0xff]
        %v6268 = vld [vmem:[%s411 + $0x270] sm:$0xff]
        %v6269 = vld [vmem:[%s411 + $0x278] sm:$0xff]
        %v6270 = vld [vmem:[%s411 + $0x280] sm:$0xff]
        %v6271 = vld [vmem:[%s411 + $0x288] sm:$0xff]
        %v6272 = vld [vmem:[%s411 + $0x290] sm:$0xff]
        %v6273 = vld [vmem:[%s411 + $0x298] sm:$0xff]
        %v6274 = vld [vmem:[%s411 + $0x2a0] sm:$0xff]
        %v6275 = vld [vmem:[%s411 + $0x2a8] sm:$0xff]
        %v6276 = vld [vmem:[%s411 + $0x2b0] sm:$0xff]
        %v6277 = vld [vmem:[%s411 + $0x2b8] sm:$0xff]
        %v6278 = vld [vmem:[%s411 + $0x2c0] sm:$0xff]
        %v6279 = vld [vmem:[%s411 + $0x2c8] sm:$0xff]
        %v6280 = vld [vmem:[%s411 + $0x2d0] sm:$0xff]
        %v6281 = vld [vmem:[%s411 + $0x2d8] sm:$0xff]
        %v6282 = vld [vmem:[%s411 + $0x2e0] sm:$0xff]
        %v6283 = vld [vmem:[%s411 + $0x2e8] sm:$0xff]
        %v6284 = vld [vmem:[%s411 + $0x2f0] sm:$0xff]
        %v6285 = vld [vmem:[%s411 + $0x2f8] sm:$0xff]
        %v6286 = vld [vmem:[%s411 + $0x300] sm:$0xff]
        %v6287 = vld [vmem:[%s411 + $0x308] sm:$0xff]
        %v6288 = vld [vmem:[%s411 + $0x310] sm:$0xff]
        %v6289 = vld [vmem:[%s411 + $0x318] sm:$0xff]
        %v6290 = vld [vmem:[%s411 + $0x320] sm:$0xff]
        %v6291 = vld [vmem:[%s411 + $0x328] sm:$0xff]
        %v6292 = vld [vmem:[%s411 + $0x330] sm:$0xff]
        %v6293 = vld [vmem:[%s411 + $0x338] sm:$0xff]
        %v6294 = vld [vmem:[%s411 + $0x340] sm:$0xff]
        %v6295 = vld [vmem:[%s411 + $0x348] sm:$0xff]
        %v6296 = vld [vmem:[%s411 + $0x350] sm:$0xff]
        %v6297 = vld [vmem:[%s411 + $0x358] sm:$0xff]
        %v6298 = vld [vmem:[%s411 + $0x360] sm:$0xff]
        %v6299 = vld [vmem:[%s411 + $0x368] sm:$0xff]
        %v6300 = vld [vmem:[%s411 + $0x370] sm:$0xff]
        %v6301 = vld [vmem:[%s411 + $0x378] sm:$0xff]
        %v6302 = vld [vmem:[%s411 + $0x380] sm:$0xff]
        %v6303 = vld [vmem:[%s411 + $0x388] sm:$0xff]
        %v6304 = vld [vmem:[%s411 + $0x390] sm:$0xff]
        %v6305 = vld [vmem:[%s411 + $0x398] sm:$0xff]
        %v6306 = vld [vmem:[%s411 + $0x3a0] sm:$0xff]
        %v6307 = vld [vmem:[%s411 + $0x3a8] sm:$0xff]
        %v6308 = vld [vmem:[%s411 + $0x3b0] sm:$0xff]
        %v6309 = vld [vmem:[%s411 + $0x3b8] sm:$0xff]
        %v6310 = vld [vmem:[%s411 + $0x3c0] sm:$0xff]
        %v6311 = vld [vmem:[%s411 + $0x3c8] sm:$0xff]
        %v6312 = vld [vmem:[%s411 + $0x3d0] sm:$0xff]
        %v6313 = vld [vmem:[%s411 + $0x3d8] sm:$0xff]
        %v6314 = vld [vmem:[%s411 + $0x3e0] sm:$0xff]
        %v6315 = vld [vmem:[%s411 + $0x3e8] sm:$0xff]
        %v6316 = vld [vmem:[%s411 + $0x3f0] sm:$0xff]
        %v6317 = vld [vmem:[%s411 + $0x3f8] sm:$0xff]
        %v6319 = vlaneseq
        %v6320 = vshrl.u32 %v6319, 7
        %v6321 = vsub.s32 0, %v6320
        %v6322 = vrot.slane %v528, %v6321
        %v6323 = vlaneseq
        %v6324 = vshrl.u32 %v6323, 7
        %v6325 = vsub.s32 1, %v6324
        %v6326 = vrot.slane %v528, %v6325
        %v6327 = vlaneseq
        %v6328 = vshrl.u32 %v6327, 7
        %v6329 = vsub.s32 2, %v6328
        %v6330 = vrot.slane %v528, %v6329
        %v6331 = vlaneseq
        %v6332 = vshrl.u32 %v6331, 7
        %v6333 = vsub.s32 3, %v6332
        %v6334 = vrot.slane %v528, %v6333
        %v6467 = vunpack.c.l.b16 %v6190
        %v6468 = vunpack.c.h.b16 %v6190
        %v6469 = vunpack.c.l.b16 %v6191
        %v6470 = vunpack.c.h.b16 %v6191
        %v6471 = vunpack.c.l.b16 %v6192
        %v6472 = vunpack.c.h.b16 %v6192
        %v6473 = vunpack.c.l.b16 %v6193
        %v6474 = vunpack.c.h.b16 %v6193
        %v6475 = vunpack.c.l.b16 %v6194
        %v6476 = vunpack.c.h.b16 %v6194
        %v6477 = vunpack.c.l.b16 %v6195
        %v6478 = vunpack.c.h.b16 %v6195
        %v6479 = vunpack.c.l.b16 %v6196
        %v6480 = vunpack.c.h.b16 %v6196
        %v6481 = vunpack.c.l.b16 %v6197
        %v6482 = vunpack.c.h.b16 %v6197
        %v6483 = vunpack.c.l.b16 %v6198
        %v6484 = vunpack.c.h.b16 %v6198
        %v6485 = vunpack.c.l.b16 %v6199
        %v6486 = vunpack.c.h.b16 %v6199
        %v6487 = vunpack.c.l.b16 %v6200
        %v6488 = vunpack.c.h.b16 %v6200
        %v6489 = vunpack.c.l.b16 %v6201
        %v6490 = vunpack.c.h.b16 %v6201
        %v6491 = vunpack.c.l.b16 %v6202
        %v6492 = vunpack.c.h.b16 %v6202
        %v6493 = vunpack.c.l.b16 %v6203
        %v6494 = vunpack.c.h.b16 %v6203
        %v6495 = vunpack.c.l.b16 %v6204
        %v6496 = vunpack.c.h.b16 %v6204
        %v6497 = vunpack.c.l.b16 %v6205
        %v6498 = vunpack.c.h.b16 %v6205
        %v6499 = vunpack.c.l.b16 %v6206
        %v6500 = vunpack.c.h.b16 %v6206
        %v6501 = vunpack.c.l.b16 %v6207
        %v6502 = vunpack.c.h.b16 %v6207
        %v6503 = vunpack.c.l.b16 %v6208
        %v6504 = vunpack.c.h.b16 %v6208
        %v6505 = vunpack.c.l.b16 %v6209
        %v6506 = vunpack.c.h.b16 %v6209
        %v6507 = vunpack.c.l.b16 %v6210
        %v6508 = vunpack.c.h.b16 %v6210
        %v6509 = vunpack.c.l.b16 %v6211
        %v6510 = vunpack.c.h.b16 %v6211
        %v6511 = vunpack.c.l.b16 %v6212
        %v6512 = vunpack.c.h.b16 %v6212
        %v6513 = vunpack.c.l.b16 %v6213
        %v6514 = vunpack.c.h.b16 %v6213
        %v6515 = vunpack.c.l.b16 %v6214
        %v6516 = vunpack.c.h.b16 %v6214
        %v6517 = vunpack.c.l.b16 %v6215
        %v6518 = vunpack.c.h.b16 %v6215
        %v6519 = vunpack.c.l.b16 %v6216
        %v6520 = vunpack.c.h.b16 %v6216
        %v6521 = vunpack.c.l.b16 %v6217
        %v6522 = vunpack.c.h.b16 %v6217
        %v6523 = vunpack.c.l.b16 %v6218
        %v6524 = vunpack.c.h.b16 %v6218
        %v6525 = vunpack.c.l.b16 %v6219
        %v6526 = vunpack.c.h.b16 %v6219
        %v6527 = vunpack.c.l.b16 %v6220
        %v6528 = vunpack.c.h.b16 %v6220
        %v6529 = vunpack.c.l.b16 %v6221
        %v6530 = vunpack.c.h.b16 %v6221
        %v6531 = vunpack.c.l.b16 %v6222
        %v6532 = vunpack.c.h.b16 %v6222
        %v6533 = vunpack.c.l.b16 %v6223
        %v6534 = vunpack.c.h.b16 %v6223
        %v6535 = vunpack.c.l.b16 %v6224
        %v6536 = vunpack.c.h.b16 %v6224
        %v6537 = vunpack.c.l.b16 %v6225
        %v6538 = vunpack.c.h.b16 %v6225
        %v6539 = vunpack.c.l.b16 %v6226
        %v6540 = vunpack.c.h.b16 %v6226
        %v6541 = vunpack.c.l.b16 %v6227
        %v6542 = vunpack.c.h.b16 %v6227
        %v6543 = vunpack.c.l.b16 %v6228
        %v6544 = vunpack.c.h.b16 %v6228
        %v6545 = vunpack.c.l.b16 %v6229
        %v6546 = vunpack.c.h.b16 %v6229
        %v6547 = vunpack.c.l.b16 %v6230
        %v6548 = vunpack.c.h.b16 %v6230
        %v6549 = vunpack.c.l.b16 %v6231
        %v6550 = vunpack.c.h.b16 %v6231
        %v6551 = vunpack.c.l.b16 %v6232
        %v6552 = vunpack.c.h.b16 %v6232
        %v6553 = vunpack.c.l.b16 %v6233
        %v6554 = vunpack.c.h.b16 %v6233
        %v6555 = vunpack.c.l.b16 %v6234
        %v6556 = vunpack.c.h.b16 %v6234
        %v6557 = vunpack.c.l.b16 %v6235
        %v6558 = vunpack.c.h.b16 %v6235
        %v6559 = vunpack.c.l.b16 %v6236
        %v6560 = vunpack.c.h.b16 %v6236
        %v6561 = vunpack.c.l.b16 %v6237
        %v6562 = vunpack.c.h.b16 %v6237
        %v6563 = vunpack.c.l.b16 %v6238
        %v6564 = vunpack.c.h.b16 %v6238
        %v6565 = vunpack.c.l.b16 %v6239
        %v6566 = vunpack.c.h.b16 %v6239
        %v6567 = vunpack.c.l.b16 %v6240
        %v6568 = vunpack.c.h.b16 %v6240
        %v6569 = vunpack.c.l.b16 %v6241
        %v6570 = vunpack.c.h.b16 %v6241
        %v6571 = vunpack.c.l.b16 %v6242
        %v6572 = vunpack.c.h.b16 %v6242
        %v6573 = vunpack.c.l.b16 %v6243
        %v6574 = vunpack.c.h.b16 %v6243
        %v6575 = vunpack.c.l.b16 %v6244
        %v6576 = vunpack.c.h.b16 %v6244
        %v6577 = vunpack.c.l.b16 %v6245
        %v6578 = vunpack.c.h.b16 %v6245
        %v6579 = vunpack.c.l.b16 %v6246
        %v6580 = vunpack.c.h.b16 %v6246
        %v6581 = vunpack.c.l.b16 %v6247
        %v6582 = vunpack.c.h.b16 %v6247
        %v6583 = vunpack.c.l.b16 %v6248
        %v6584 = vunpack.c.h.b16 %v6248
        %v6585 = vunpack.c.l.b16 %v6249
        %v6586 = vunpack.c.h.b16 %v6249
        %v6587 = vunpack.c.l.b16 %v6250
        %v6588 = vunpack.c.h.b16 %v6250
        %v6589 = vunpack.c.l.b16 %v6251
        %v6590 = vunpack.c.h.b16 %v6251
        %v6591 = vunpack.c.l.b16 %v6252
        %v6592 = vunpack.c.h.b16 %v6252
        %v6593 = vunpack.c.l.b16 %v6253
        %v6594 = vunpack.c.h.b16 %v6253
        %v6595 = vunpack.c.l.b16 %v6254
        %v6596 = vunpack.c.h.b16 %v6254
        %v6597 = vunpack.c.l.b16 %v6255
        %v6598 = vunpack.c.h.b16 %v6255
        %v6599 = vunpack.c.l.b16 %v6256
        %v6600 = vunpack.c.h.b16 %v6256
        %v6601 = vunpack.c.l.b16 %v6257
        %v6602 = vunpack.c.h.b16 %v6257
        %v6603 = vunpack.c.l.b16 %v6258
        %v6604 = vunpack.c.h.b16 %v6258
        %v6605 = vunpack.c.l.b16 %v6259
        %v6606 = vunpack.c.h.b16 %v6259
        %v6607 = vunpack.c.l.b16 %v6260
        %v6608 = vunpack.c.h.b16 %v6260
        %v6609 = vunpack.c.l.b16 %v6261
        %v6610 = vunpack.c.h.b16 %v6261
        %v6611 = vunpack.c.l.b16 %v6262
        %v6612 = vunpack.c.h.b16 %v6262
        %v6613 = vunpack.c.l.b16 %v6263
        %v6614 = vunpack.c.h.b16 %v6263
        %v6615 = vunpack.c.l.b16 %v6264
        %v6616 = vunpack.c.h.b16 %v6264
        %v6617 = vunpack.c.l.b16 %v6265
        %v6618 = vunpack.c.h.b16 %v6265
        %v6619 = vunpack.c.l.b16 %v6266
        %v6620 = vunpack.c.h.b16 %v6266
        %v6621 = vunpack.c.l.b16 %v6267
        %v6622 = vunpack.c.h.b16 %v6267
        %v6623 = vunpack.c.l.b16 %v6268
        %v6624 = vunpack.c.h.b16 %v6268
        %v6625 = vunpack.c.l.b16 %v6269
        %v6626 = vunpack.c.h.b16 %v6269
        %v6627 = vunpack.c.l.b16 %v6270
        %v6628 = vunpack.c.h.b16 %v6270
        %v6629 = vunpack.c.l.b16 %v6271
        %v6630 = vunpack.c.h.b16 %v6271
        %v6631 = vunpack.c.l.b16 %v6272
        %v6632 = vunpack.c.h.b16 %v6272
        %v6633 = vunpack.c.l.b16 %v6273
        %v6634 = vunpack.c.h.b16 %v6273
        %v6635 = vunpack.c.l.b16 %v6274
        %v6636 = vunpack.c.h.b16 %v6274
        %v6637 = vunpack.c.l.b16 %v6275
        %v6638 = vunpack.c.h.b16 %v6275
        %v6639 = vunpack.c.l.b16 %v6276
        %v6640 = vunpack.c.h.b16 %v6276
        %v6641 = vunpack.c.l.b16 %v6277
        %v6642 = vunpack.c.h.b16 %v6277
        %v6643 = vunpack.c.l.b16 %v6278
        %v6644 = vunpack.c.h.b16 %v6278
        %v6645 = vunpack.c.l.b16 %v6279
        %v6646 = vunpack.c.h.b16 %v6279
        %v6647 = vunpack.c.l.b16 %v6280
        %v6648 = vunpack.c.h.b16 %v6280
        %v6649 = vunpack.c.l.b16 %v6281
        %v6650 = vunpack.c.h.b16 %v6281
        %v6651 = vunpack.c.l.b16 %v6282
        %v6652 = vunpack.c.h.b16 %v6282
        %v6653 = vunpack.c.l.b16 %v6283
        %v6654 = vunpack.c.h.b16 %v6283
        %v6655 = vunpack.c.l.b16 %v6284
        %v6656 = vunpack.c.h.b16 %v6284
        %v6657 = vunpack.c.l.b16 %v6285
        %v6658 = vunpack.c.h.b16 %v6285
        %v6659 = vunpack.c.l.b16 %v6286
        %v6660 = vunpack.c.h.b16 %v6286
        %v6661 = vunpack.c.l.b16 %v6287
        %v6662 = vunpack.c.h.b16 %v6287
        %v6663 = vunpack.c.l.b16 %v6288
        %v6664 = vunpack.c.h.b16 %v6288
        %v6665 = vunpack.c.l.b16 %v6289
        %v6666 = vunpack.c.h.b16 %v6289
        %v6667 = vunpack.c.l.b16 %v6290
        %v6668 = vunpack.c.h.b16 %v6290
        %v6669 = vunpack.c.l.b16 %v6291
        %v6670 = vunpack.c.h.b16 %v6291
        %v6671 = vunpack.c.l.b16 %v6292
        %v6672 = vunpack.c.h.b16 %v6292
        %v6673 = vunpack.c.l.b16 %v6293
        %v6674 = vunpack.c.h.b16 %v6293
        %v6675 = vunpack.c.l.b16 %v6294
        %v6676 = vunpack.c.h.b16 %v6294
        %v6677 = vunpack.c.l.b16 %v6295
        %v6678 = vunpack.c.h.b16 %v6295
        %v6679 = vunpack.c.l.b16 %v6296
        %v6680 = vunpack.c.h.b16 %v6296
        %v6681 = vunpack.c.l.b16 %v6297
        %v6682 = vunpack.c.h.b16 %v6297
        %v6683 = vunpack.c.l.b16 %v6298
        %v6684 = vunpack.c.h.b16 %v6298
        %v6685 = vunpack.c.l.b16 %v6299
        %v6686 = vunpack.c.h.b16 %v6299
        %v6687 = vunpack.c.l.b16 %v6300
        %v6688 = vunpack.c.h.b16 %v6300
        %v6689 = vunpack.c.l.b16 %v6301
        %v6690 = vunpack.c.h.b16 %v6301
        %v6691 = vunpack.c.l.b16 %v6302
        %v6692 = vunpack.c.h.b16 %v6302
        %v6693 = vunpack.c.l.b16 %v6303
        %v6694 = vunpack.c.h.b16 %v6303
        %v6695 = vunpack.c.l.b16 %v6304
        %v6696 = vunpack.c.h.b16 %v6304
        %v6697 = vunpack.c.l.b16 %v6305
        %v6698 = vunpack.c.h.b16 %v6305
        %v6699 = vunpack.c.l.b16 %v6306
        %v6700 = vunpack.c.h.b16 %v6306
        %v6701 = vunpack.c.l.b16 %v6307
        %v6702 = vunpack.c.h.b16 %v6307
        %v6703 = vunpack.c.l.b16 %v6308
        %v6704 = vunpack.c.h.b16 %v6308
        %v6705 = vunpack.c.l.b16 %v6309
        %v6706 = vunpack.c.h.b16 %v6309
        %v6707 = vunpack.c.l.b16 %v6310
        %v6708 = vunpack.c.h.b16 %v6310
        %v6709 = vunpack.c.l.b16 %v6311
        %v6710 = vunpack.c.h.b16 %v6311
        %v6711 = vunpack.c.l.b16 %v6312
        %v6712 = vunpack.c.h.b16 %v6312
        %v6713 = vunpack.c.l.b16 %v6313
        %v6714 = vunpack.c.h.b16 %v6313
        %v6715 = vunpack.c.l.b16 %v6314
        %v6716 = vunpack.c.h.b16 %v6314
        %v6717 = vunpack.c.l.b16 %v6315
        %v6718 = vunpack.c.h.b16 %v6315
        %v6719 = vunpack.c.l.b16 %v6316
        %v6720 = vunpack.c.h.b16 %v6316
        %v6721 = vunpack.c.l.b16 %v6317
        %v6722 = vunpack.c.h.b16 %v6317
        %v6723 = vpack.c.b16 %v6471, %v6467
        %v6724 = vpack.c.b16 %v6472, %v6468
        %v6725 = vpack.c.b16 %v6473, %v6469
        %v6726 = vpack.c.b16 %v6474, %v6470
        %v6727 = vpack.c.b16 %v6479, %v6475
        %v6728 = vpack.c.b16 %v6480, %v6476
        %v6729 = vpack.c.b16 %v6481, %v6477
        %v6730 = vpack.c.b16 %v6482, %v6478
        %v6731 = vpack.c.b16 %v6487, %v6483
        %v6732 = vpack.c.b16 %v6488, %v6484
        %v6733 = vpack.c.b16 %v6489, %v6485
        %v6734 = vpack.c.b16 %v6490, %v6486
        %v6735 = vpack.c.b16 %v6495, %v6491
        %v6736 = vpack.c.b16 %v6496, %v6492
        %v6737 = vpack.c.b16 %v6497, %v6493
        %v6738 = vpack.c.b16 %v6498, %v6494
        %v6739 = vpack.c.b16 %v6503, %v6499
        %v6740 = vpack.c.b16 %v6504, %v6500
        %v6741 = vpack.c.b16 %v6505, %v6501
        %v6742 = vpack.c.b16 %v6506, %v6502
        %v6743 = vpack.c.b16 %v6511, %v6507
        %v6744 = vpack.c.b16 %v6512, %v6508
        %v6745 = vpack.c.b16 %v6513, %v6509
        %v6746 = vpack.c.b16 %v6514, %v6510
        %v6747 = vpack.c.b16 %v6519, %v6515
        %v6748 = vpack.c.b16 %v6520, %v6516
        %v6749 = vpack.c.b16 %v6521, %v6517
        %v6750 = vpack.c.b16 %v6522, %v6518
        %v6751 = vpack.c.b16 %v6527, %v6523
        %v6752 = vpack.c.b16 %v6528, %v6524
        %v6753 = vpack.c.b16 %v6529, %v6525
        %v6754 = vpack.c.b16 %v6530, %v6526
        %v6755 = vpack.c.b16 %v6535, %v6531
        %v6756 = vpack.c.b16 %v6536, %v6532
        %v6757 = vpack.c.b16 %v6537, %v6533
        %v6758 = vpack.c.b16 %v6538, %v6534
        %v6759 = vpack.c.b16 %v6543, %v6539
        %v6760 = vpack.c.b16 %v6544, %v6540
        %v6761 = vpack.c.b16 %v6545, %v6541
        %v6762 = vpack.c.b16 %v6546, %v6542
        %v6763 = vpack.c.b16 %v6551, %v6547
        %v6764 = vpack.c.b16 %v6552, %v6548
        %v6765 = vpack.c.b16 %v6553, %v6549
        %v6766 = vpack.c.b16 %v6554, %v6550
        %v6767 = vpack.c.b16 %v6559, %v6555
        %v6768 = vpack.c.b16 %v6560, %v6556
        %v6769 = vpack.c.b16 %v6561, %v6557
        %v6770 = vpack.c.b16 %v6562, %v6558
        %v6771 = vpack.c.b16 %v6567, %v6563
        %v6772 = vpack.c.b16 %v6568, %v6564
        %v6773 = vpack.c.b16 %v6569, %v6565
        %v6774 = vpack.c.b16 %v6570, %v6566
        %v6775 = vpack.c.b16 %v6575, %v6571
        %v6776 = vpack.c.b16 %v6576, %v6572
        %v6777 = vpack.c.b16 %v6577, %v6573
        %v6778 = vpack.c.b16 %v6578, %v6574
        %v6779 = vpack.c.b16 %v6583, %v6579
        %v6780 = vpack.c.b16 %v6584, %v6580
        %v6781 = vpack.c.b16 %v6585, %v6581
        %v6782 = vpack.c.b16 %v6586, %v6582
        %v6783 = vpack.c.b16 %v6591, %v6587
        %v6784 = vpack.c.b16 %v6592, %v6588
        %v6785 = vpack.c.b16 %v6593, %v6589
        %v6786 = vpack.c.b16 %v6594, %v6590
        %v6787 = vpack.c.b16 %v6599, %v6595
        %v6788 = vpack.c.b16 %v6600, %v6596
        %v6789 = vpack.c.b16 %v6601, %v6597
        %v6790 = vpack.c.b16 %v6602, %v6598
        %v6791 = vpack.c.b16 %v6607, %v6603
        %v6792 = vpack.c.b16 %v6608, %v6604
        %v6793 = vpack.c.b16 %v6609, %v6605
        %v6794 = vpack.c.b16 %v6610, %v6606
        %v6795 = vpack.c.b16 %v6615, %v6611
        %v6796 = vpack.c.b16 %v6616, %v6612
        %v6797 = vpack.c.b16 %v6617, %v6613
        %v6798 = vpack.c.b16 %v6618, %v6614
        %v6799 = vpack.c.b16 %v6623, %v6619
        %v6800 = vpack.c.b16 %v6624, %v6620
        %v6801 = vpack.c.b16 %v6625, %v6621
        %v6802 = vpack.c.b16 %v6626, %v6622
        %v6803 = vpack.c.b16 %v6631, %v6627
        %v6804 = vpack.c.b16 %v6632, %v6628
        %v6805 = vpack.c.b16 %v6633, %v6629
        %v6806 = vpack.c.b16 %v6634, %v6630
        %v6807 = vpack.c.b16 %v6639, %v6635
        %v6808 = vpack.c.b16 %v6640, %v6636
        %v6809 = vpack.c.b16 %v6641, %v6637
        %v6810 = vpack.c.b16 %v6642, %v6638
        %v6811 = vpack.c.b16 %v6647, %v6643
        %v6812 = vpack.c.b16 %v6648, %v6644
        %v6813 = vpack.c.b16 %v6649, %v6645
        %v6814 = vpack.c.b16 %v6650, %v6646
        %v6815 = vpack.c.b16 %v6655, %v6651
        %v6816 = vpack.c.b16 %v6656, %v6652
        %v6817 = vpack.c.b16 %v6657, %v6653
        %v6818 = vpack.c.b16 %v6658, %v6654
        %v6819 = vpack.c.b16 %v6663, %v6659
        %v6820 = vpack.c.b16 %v6664, %v6660
        %v6821 = vpack.c.b16 %v6665, %v6661
        %v6822 = vpack.c.b16 %v6666, %v6662
        %v6823 = vpack.c.b16 %v6671, %v6667
        %v6824 = vpack.c.b16 %v6672, %v6668
        %v6825 = vpack.c.b16 %v6673, %v6669
        %v6826 = vpack.c.b16 %v6674, %v6670
        %v6827 = vpack.c.b16 %v6679, %v6675
        %v6828 = vpack.c.b16 %v6680, %v6676
        %v6829 = vpack.c.b16 %v6681, %v6677
        %v6830 = vpack.c.b16 %v6682, %v6678
        %v6831 = vpack.c.b16 %v6687, %v6683
        %v6832 = vpack.c.b16 %v6688, %v6684
        %v6833 = vpack.c.b16 %v6689, %v6685
        %v6834 = vpack.c.b16 %v6690, %v6686
        %v6835 = vpack.c.b16 %v6695, %v6691
        %v6836 = vpack.c.b16 %v6696, %v6692
        %v6837 = vpack.c.b16 %v6697, %v6693
        %v6838 = vpack.c.b16 %v6698, %v6694
        %v6839 = vpack.c.b16 %v6703, %v6699
        %v6840 = vpack.c.b16 %v6704, %v6700
        %v6841 = vpack.c.b16 %v6705, %v6701
        %v6842 = vpack.c.b16 %v6706, %v6702
        %v6843 = vpack.c.b16 %v6711, %v6707
        %v6844 = vpack.c.b16 %v6712, %v6708
        %v6845 = vpack.c.b16 %v6713, %v6709
        %v6846 = vpack.c.b16 %v6714, %v6710
        %v6847 = vpack.c.b16 %v6719, %v6715
        %v6848 = vpack.c.b16 %v6720, %v6716
        %v6849 = vpack.c.b16 %v6721, %v6717
        %v6850 = vpack.c.b16 %v6722, %v6718
        %6979 = vmatprep.subr.bf16.mxu0 %v6724
        %6980 = vmatpush1.bf16.msra.mxu0 %v6723
        %6981 = vmatprep.subr.bf16.mxu0 %v6728
        %6982 = vmatpush1.bf16.msra.mxu0 %v6727
        %6983 = vmatprep.subr.bf16.mxu0 %v6732
        %6984 = vmatpush1.bf16.msra.mxu0 %v6731
        %6985 = vmatprep.subr.bf16.mxu0 %v6736
        %6986 = vmatpush1.bf16.msra.mxu0 %v6735
        %6987 = vmatprep.subr.bf16.mxu0 %v6740
        %6988 = vmatpush1.bf16.msra.mxu0 %v6739
        %6989 = vmatprep.subr.bf16.mxu0 %v6744
        %6990 = vmatpush1.bf16.msra.mxu0 %v6743
        %6991 = vmatprep.subr.bf16.mxu0 %v6748
        %6992 = vmatpush1.bf16.msra.mxu0 %v6747
        %6993 = vmatprep.subr.bf16.mxu0 %v6752
        %6994 = vmatpush1.bf16.msra.mxu0 %v6751
        %6995 = vmatprep.subr.bf16.mxu0 %v6756
        %6996 = vmatpush1.bf16.msra.mxu0 %v6755
        %6997 = vmatprep.subr.bf16.mxu0 %v6760
        %6998 = vmatpush1.bf16.msra.mxu0 %v6759
        %6999 = vmatprep.subr.bf16.mxu0 %v6764
        %7000 = vmatpush1.bf16.msra.mxu0 %v6763
        %7001 = vmatprep.subr.bf16.mxu0 %v6768
        %7002 = vmatpush1.bf16.msra.mxu0 %v6767
        %7003 = vmatprep.subr.bf16.mxu0 %v6772
        %7004 = vmatpush1.bf16.msra.mxu0 %v6771
        %7005 = vmatprep.subr.bf16.mxu0 %v6776
        %7006 = vmatpush1.bf16.msra.mxu0 %v6775
        %7007 = vmatprep.subr.bf16.mxu0 %v6780
        %7008 = vmatpush1.bf16.msra.mxu0 %v6779
        %7009 = vmatprep.subr.bf16.mxu0 %v6784
        %7010 = vmatpush1.bf16.msra.mxu0 %v6783
        %7011 = vmatprep.mubr.bf16.mxu0 %v6187
        %7012 = vmatmul.mubr.bf16.gmra.mrb[0].mxu0 %v6186
        %v7013 = vpop.f32.mrb[0].mxu0
        %v7014 = vadd.f32 %v6322, %v7013
        %v7015 = vpop.f32.mrb[0].mxu0
        %v7016 = vadd.f32 %v6326, %v7015
        %v7017 = vpop.f32.mrb[0].mxu0
        %v7018 = vadd.f32 %v6322, %v7017
        %v7019 = vpop.f32.mrb[0].mxu0
        %v7020 = vadd.f32 %v6326, %v7019
        %7021 = vdwg.mxu0
        %7022 = vmatprep.subr.bf16.mxu0 %v6788
        %7023 = vmatpush1.bf16.msra.mxu0 %v6787
        %7024 = vmatprep.subr.bf16.mxu0 %v6792
        %7025 = vmatpush1.bf16.msra.mxu0 %v6791
        %7026 = vmatprep.subr.bf16.mxu0 %v6796
        %7027 = vmatpush1.bf16.msra.mxu0 %v6795
        %7028 = vmatprep.subr.bf16.mxu0 %v6800
        %7029 = vmatpush1.bf16.msra.mxu0 %v6799
        %7030 = vmatprep.subr.bf16.mxu0 %v6804
        %7031 = vmatpush1.bf16.msra.mxu0 %v6803
        %7032 = vmatprep.subr.bf16.mxu0 %v6808
        %7033 = vmatpush1.bf16.msra.mxu0 %v6807
        %7034 = vmatprep.subr.bf16.mxu0 %v6812
        %7035 = vmatpush1.bf16.msra.mxu0 %v6811
        %7036 = vmatprep.subr.bf16.mxu0 %v6816
        %7037 = vmatpush1.bf16.msra.mxu0 %v6815
        %7038 = vmatprep.subr.bf16.mxu0 %v6820
        %7039 = vmatpush1.bf16.msra.mxu0 %v6819
        %7040 = vmatprep.subr.bf16.mxu0 %v6824
        %7041 = vmatpush1.bf16.msra.mxu0 %v6823
        %7042 = vmatprep.subr.bf16.mxu0 %v6828
        %7043 = vmatpush1.bf16.msra.mxu0 %v6827
        %7044 = vmatprep.subr.bf16.mxu0 %v6832
        %7045 = vmatpush1.bf16.msra.mxu0 %v6831
        %7046 = vmatprep.subr.bf16.mxu0 %v6836
        %7047 = vmatpush1.bf16.msra.mxu0 %v6835
        %7048 = vmatprep.subr.bf16.mxu0 %v6840
        %7049 = vmatpush1.bf16.msra.mxu0 %v6839
        %7050 = vmatprep.subr.bf16.mxu0 %v6844
        %7051 = vmatpush1.bf16.msra.mxu0 %v6843
        %7052 = vmatprep.subr.bf16.mxu0 %v6848
        %7053 = vmatpush1.bf16.msra.mxu0 %v6847
        %7054 = vmatprep.mubr.bf16.mxu0 %v6189
        %7055 = vmatmul.mubr.bf16.gmra.mrb[0].mxu0 %v6188
        %v7056 = vpop.f32.mrb[0].mxu0
        %v7057 = vadd.f32 %v7014, %v7056
        %v7058 = vpop.f32.mrb[0].mxu0
        %v7059 = vadd.f32 %v7016, %v7058
        %v7060 = vpop.f32.mrb[0].mxu0
        %v7061 = vadd.f32 %v7018, %v7060
        %v7062 = vpop.f32.mrb[0].mxu0
        %v7063 = vadd.f32 %v7020, %v7062
        %7064 = vdwg.mxu0
        %7065 = vmatprep.subr.bf16.mxu0 %v6726
        %7066 = vmatpush1.bf16.msra.mxu0 %v6725
        %7067 = vmatprep.subr.bf16.mxu0 %v6730
        %7068 = vmatpush1.bf16.msra.mxu0 %v6729
        %7069 = vmatprep.subr.bf16.mxu0 %v6734
        %7070 = vmatpush1.bf16.msra.mxu0 %v6733
        %7071 = vmatprep.subr.bf16.mxu0 %v6738
        %7072 = vmatpush1.bf16.msra.mxu0 %v6737
        %7073 = vmatprep.subr.bf16.mxu0 %v6742
        %7074 = vmatpush1.bf16.msra.mxu0 %v6741
        %7075 = vmatprep.subr.bf16.mxu0 %v6746
        %7076 = vmatpush1.bf16.msra.mxu0 %v6745
        %7077 = vmatprep.subr.bf16.mxu0 %v6750
        %7078 = vmatpush1.bf16.msra.mxu0 %v6749
        %7079 = vmatprep.subr.bf16.mxu0 %v6754
        %7080 = vmatpush1.bf16.msra.mxu0 %v6753
        %7081 = vmatprep.subr.bf16.mxu0 %v6758
        %7082 = vmatpush1.bf16.msra.mxu0 %v6757
        %7083 = vmatprep.subr.bf16.mxu0 %v6762
        %7084 = vmatpush1.bf16.msra.mxu0 %v6761
        %7085 = vmatprep.subr.bf16.mxu0 %v6766
        %7086 = vmatpush1.bf16.msra.mxu0 %v6765
        %7087 = vmatprep.subr.bf16.mxu0 %v6770
        %7088 = vmatpush1.bf16.msra.mxu0 %v6769
        %7089 = vmatprep.subr.bf16.mxu0 %v6774
        %7090 = vmatpush1.bf16.msra.mxu0 %v6773
        %7091 = vmatprep.subr.bf16.mxu0 %v6778
        %7092 = vmatpush1.bf16.msra.mxu0 %v6777
        %7093 = vmatprep.subr.bf16.mxu0 %v6782
        %7094 = vmatpush1.bf16.msra.mxu0 %v6781
        %7095 = vmatprep.subr.bf16.mxu0 %v6786
        %7096 = vmatpush1.bf16.msra.mxu0 %v6785
        %7097 = vmatprep.mubr.bf16.mxu0 %v6187
        %7098 = vmatmul.mubr.bf16.gmra.mrb[0].mxu0 %v6186
        %v7099 = vpop.f32.mrb[0].mxu0
        %v7100 = vadd.f32 %v6330, %v7099
        %v7101 = vpop.f32.mrb[0].mxu0
        %v7102 = vadd.f32 %v6334, %v7101
        %v7103 = vpop.f32.mrb[0].mxu0
        %v7104 = vadd.f32 %v6330, %v7103
        %v7105 = vpop.f32.mrb[0].mxu0
        %v7106 = vadd.f32 %v6334, %v7105
        %7107 = vdwg.mxu0
        %7108 = vmatprep.subr.bf16.mxu0 %v6790
        %7109 = vmatpush1.bf16.msra.mxu0 %v6789
        %7110 = vmatprep.subr.bf16.mxu0 %v6794
        %7111 = vmatpush1.bf16.msra.mxu0 %v6793
        %7112 = vmatprep.subr.bf16.mxu0 %v6798
        %7113 = vmatpush1.bf16.msra.mxu0 %v6797
        %7114 = vmatprep.subr.bf16.mxu0 %v6802
        %7115 = vmatpush1.bf16.msra.mxu0 %v6801
        %7116 = vmatprep.subr.bf16.mxu0 %v6806
        %7117 = vmatpush1.bf16.msra.mxu0 %v6805
        %7118 = vmatprep.subr.bf16.mxu0 %v6810
        %7119 = vmatpush1.bf16.msra.mxu0 %v6809
        %7120 = vmatprep.subr.bf16.mxu0 %v6814
        %7121 = vmatpush1.bf16.msra.mxu0 %v6813
        %7122 = vmatprep.subr.bf16.mxu0 %v6818
        %7123 = vmatpush1.bf16.msra.mxu0 %v6817
        %7124 = vmatprep.subr.bf16.mxu0 %v6822
        %7125 = vmatpush1.bf16.msra.mxu0 %v6821
        %7126 = vmatprep.subr.bf16.mxu0 %v6826
        %7127 = vmatpush1.bf16.msra.mxu0 %v6825
        %7128 = vmatprep.subr.bf16.mxu0 %v6830
        %7129 = vmatpush1.bf16.msra.mxu0 %v6829
        %7130 = vmatprep.subr.bf16.mxu0 %v6834
        %7131 = vmatpush1.bf16.msra.mxu0 %v6833
        %7132 = vmatprep.subr.bf16.mxu0 %v6838
        %7133 = vmatpush1.bf16.msra.mxu0 %v6837
        %7134 = vmatprep.subr.bf16.mxu0 %v6842
        %7135 = vmatpush1.bf16.msra.mxu0 %v6841
        %7136 = vmatprep.subr.bf16.mxu0 %v6846
        %7137 = vmatpush1.bf16.msra.mxu0 %v6845
        %7138 = vmatprep.subr.bf16.mxu0 %v6850
        %7139 = vmatpush1.bf16.msra.mxu0 %v6849
        %7140 = vmatprep.mubr.bf16.mxu0 %v6189
        %7141 = vmatmul.mubr.bf16.gmra.mrb[0].mxu0 %v6188
        %v7142 = vpop.f32.mrb[0].mxu0
        %v7143 = vadd.f32 %v7100, %v7142
        %v7144 = vpop.f32.mrb[0].mxu0
        %v7145 = vadd.f32 %v7102, %v7144
        %v7146 = vpop.f32.mrb[0].mxu0
        %v7147 = vadd.f32 %v7104, %v7146
        %v7148 = vpop.f32.mrb[0].mxu0
        %v7149 = vadd.f32 %v7106, %v7148
        %7150 = vdwg.mxu0
        %v7151 = vadd.f32 %v510, %v7057
        %v7152 = vadd.f32 %v511, %v7059
        %v7153 = vadd.f32 %v512, %v7143
        %v7154 = vadd.f32 %v513, %v7145
        %v7155 = vadd.f32 %v514, %v7061
        %v7156 = vadd.f32 %v515, %v7063
        %v7157 = vadd.f32 %v516, %v7147
        %v7158 = vadd.f32 %v517, %v7149
        %v7159 = vadd.f32 %v7151, %v7152
        %v7160 = vadd.f32 %v7159, %v7153
        %v7161 = vadd.f32 %v7160, %v7154
        %7162 = vadd.xlane.f32.xlu0 %v7161
        %v7163 = vpop.xlane.xlu0 %7162
        %v7164 = vadd.f32 %v7155, %v7156
        %v7165 = vadd.f32 %v7164, %v7157
        %v7166 = vadd.f32 %v7165, %v7158
        %7167 = vadd.xlane.f32.xlu0 %v7166
        %v7168 = vpop.xlane.xlu0 %7167
        %v7169 = vmul.f32 %v7163, %v549
        %v7170 = vmul.f32 %v7168, %v549
        %v7171 = vsub.f32 %v7151, %v7169
        %v7172 = vsub.f32 %v7152, %v7169
        %v7173 = vsub.f32 %v7153, %v7169
        %v7174 = vsub.f32 %v7154, %v7169
        %v7175 = vsub.f32 %v7155, %v7170
        %v7176 = vsub.f32 %v7156, %v7170
        %v7177 = vsub.f32 %v7157, %v7170
        %v7178 = vsub.f32 %v7158, %v7170
        %v7179 = vmul.f32 %v7171, %v7171
        %v7180 = vmul.f32 %v7172, %v7172
        %v7181 = vmul.f32 %v7173, %v7173
        %v7182 = vmul.f32 %v7174, %v7174
        %v7183 = vmul.f32 %v7175, %v7175
        %v7184 = vmul.f32 %v7176, %v7176
        %v7185 = vmul.f32 %v7177, %v7177
        %v7186 = vmul.f32 %v7178, %v7178
        %v7187 = vadd.f32 %v7179, %v7180
        %v7188 = vadd.f32 %v7187, %v7181
        %v7189 = vadd.f32 %v7188, %v7182
        %7190 = vadd.xlane.f32.xlu0 %v7189
        %v7191 = vpop.xlane.xlu0 %7190
        %v7192 = vadd.f32 %v7183, %v7184
        %v7193 = vadd.f32 %v7192, %v7185
        %v7194 = vadd.f32 %v7193, %v7186
        %7195 = vadd.xlane.f32.xlu0 %v7194
        %v7196 = vpop.xlane.xlu0 %7195
        %v7197 = vmul.f32 %v7191, %v549
        %v7198 = vmul.f32 %v7196, %v549
        %v7199 = vadd.f32 %v7197, 1e-06
        %v7200 = vadd.f32 %v7198, 1e-06
        %v7201 = vrsqrt.pop %v7199
        %v7202 = vrsqrt.pop %v7200
        %v7203 = vmul.f32 %v7171, %v7201
        %v7204 = vmul.f32 %v7172, %v7201
        %v7205 = vmul.f32 %v7173, %v7201
        %v7206 = vmul.f32 %v7174, %v7201
        %v7207 = vmul.f32 %v7175, %v7202
        %v7208 = vmul.f32 %v7176, %v7202
        %v7209 = vmul.f32 %v7177, %v7202
        %v7210 = vmul.f32 %v7178, %v7202
        %v7212 = vlaneseq
        %v7213 = vshrl.u32 %v7212, 7
        %v7214 = vsub.s32 0, %v7213
        %v7215 = vrot.slane %v530, %v7214
        %v7216 = vlaneseq
        %v7217 = vshrl.u32 %v7216, 7
        %v7218 = vsub.s32 1, %v7217
        %v7219 = vrot.slane %v530, %v7218
        %v7220 = vlaneseq
        %v7221 = vshrl.u32 %v7220, 7
        %v7222 = vsub.s32 2, %v7221
        %v7223 = vrot.slane %v530, %v7222
        %v7224 = vlaneseq
        %v7225 = vshrl.u32 %v7224, 7
        %v7226 = vsub.s32 3, %v7225
        %v7227 = vrot.slane %v530, %v7226
        %v7232 = vmul.f32 %v7203, %v7215
        %v7233 = vmul.f32 %v7204, %v7219
        %v7234 = vmul.f32 %v7205, %v7223
        %v7235 = vmul.f32 %v7206, %v7227
        %v7236 = vmul.f32 %v7207, %v7215
        %v7237 = vmul.f32 %v7208, %v7219
        %v7238 = vmul.f32 %v7209, %v7223
        %v7239 = vmul.f32 %v7210, %v7227
        %v7241 = vlaneseq
        %v7242 = vshrl.u32 %v7241, 7
        %v7243 = vsub.s32 0, %v7242
        %v7244 = vrot.slane %v532, %v7243
        %v7245 = vlaneseq
        %v7246 = vshrl.u32 %v7245, 7
        %v7247 = vsub.s32 1, %v7246
        %v7248 = vrot.slane %v532, %v7247
        %v7249 = vlaneseq
        %v7250 = vshrl.u32 %v7249, 7
        %v7251 = vsub.s32 2, %v7250
        %v7252 = vrot.slane %v532, %v7251
        %v7253 = vlaneseq
        %v7254 = vshrl.u32 %v7253, 7
        %v7255 = vsub.s32 3, %v7254
        %v7256 = vrot.slane %v532, %v7255
        %v7261 = vadd.f32 %v7232, %v7244
        %v7262 = vadd.f32 %v7233, %v7248
        %v7263 = vadd.f32 %v7234, %v7252
        %v7264 = vadd.f32 %v7235, %v7256
        %v7265 = vadd.f32 %v7236, %v7244
        %v7266 = vadd.f32 %v7237, %v7248
        %v7267 = vadd.f32 %v7238, %v7252
        %v7268 = vadd.f32 %v7239, %v7256
        %v7269 = vpack.c.bf16 %v7265, %v7261
        %v7270 = vpack.c.bf16 %v7266, %v7262
        %v7271 = vpack.c.bf16 %v7267, %v7263
        %v7272 = vpack.c.bf16 %v7268, %v7264
        %v7273 = vld [vmem:[%s420] sm:$0xff]
        %v7274 = vld [vmem:[%s420 + $0x8] sm:$0xff]
        %v7275 = vld [vmem:[%s420 + $0x10] sm:$0xff]
        %v7276 = vld [vmem:[%s420 + $0x18] sm:$0xff]
        %v7277 = vld [vmem:[%s420 + $0x20] sm:$0xff]
        %v7278 = vld [vmem:[%s420 + $0x28] sm:$0xff]
        %v7279 = vld [vmem:[%s420 + $0x30] sm:$0xff]
        %v7280 = vld [vmem:[%s420 + $0x38] sm:$0xff]
        %v7281 = vld [vmem:[%s420 + $0x40] sm:$0xff]
        %v7282 = vld [vmem:[%s420 + $0x48] sm:$0xff]
        %v7283 = vld [vmem:[%s420 + $0x50] sm:$0xff]
        %v7284 = vld [vmem:[%s420 + $0x58] sm:$0xff]
        %v7285 = vld [vmem:[%s420 + $0x60] sm:$0xff]
        %v7286 = vld [vmem:[%s420 + $0x68] sm:$0xff]
        %v7287 = vld [vmem:[%s420 + $0x70] sm:$0xff]
        %v7288 = vld [vmem:[%s420 + $0x78] sm:$0xff]
        %v7289 = vld [vmem:[%s420 + $0x80] sm:$0xff]
        %v7290 = vld [vmem:[%s420 + $0x88] sm:$0xff]
        %v7291 = vld [vmem:[%s420 + $0x90] sm:$0xff]
        %v7292 = vld [vmem:[%s420 + $0x98] sm:$0xff]
        %v7293 = vld [vmem:[%s420 + $0xa0] sm:$0xff]
        %v7294 = vld [vmem:[%s420 + $0xa8] sm:$0xff]
        %v7295 = vld [vmem:[%s420 + $0xb0] sm:$0xff]
        %v7296 = vld [vmem:[%s420 + $0xb8] sm:$0xff]
        %v7297 = vld [vmem:[%s420 + $0xc0] sm:$0xff]
        %v7298 = vld [vmem:[%s420 + $0xc8] sm:$0xff]
        %v7299 = vld [vmem:[%s420 + $0xd0] sm:$0xff]
        %v7300 = vld [vmem:[%s420 + $0xd8] sm:$0xff]
        %v7301 = vld [vmem:[%s420 + $0xe0] sm:$0xff]
        %v7302 = vld [vmem:[%s420 + $0xe8] sm:$0xff]
        %v7303 = vld [vmem:[%s420 + $0xf0] sm:$0xff]
        %v7304 = vld [vmem:[%s420 + $0xf8] sm:$0xff]
        %v7305 = vld [vmem:[%s420 + $0x100] sm:$0xff]
        %v7306 = vld [vmem:[%s420 + $0x108] sm:$0xff]
        %v7307 = vld [vmem:[%s420 + $0x110] sm:$0xff]
        %v7308 = vld [vmem:[%s420 + $0x118] sm:$0xff]
        %v7309 = vld [vmem:[%s420 + $0x120] sm:$0xff]
        %v7310 = vld [vmem:[%s420 + $0x128] sm:$0xff]
        %v7311 = vld [vmem:[%s420 + $0x130] sm:$0xff]
        %v7312 = vld [vmem:[%s420 + $0x138] sm:$0xff]
        %v7313 = vld [vmem:[%s420 + $0x140] sm:$0xff]
        %v7314 = vld [vmem:[%s420 + $0x148] sm:$0xff]
        %v7315 = vld [vmem:[%s420 + $0x150] sm:$0xff]
        %v7316 = vld [vmem:[%s420 + $0x158] sm:$0xff]
        %v7317 = vld [vmem:[%s420 + $0x160] sm:$0xff]
        %v7318 = vld [vmem:[%s420 + $0x168] sm:$0xff]
        %v7319 = vld [vmem:[%s420 + $0x170] sm:$0xff]
        %v7320 = vld [vmem:[%s420 + $0x178] sm:$0xff]
        %v7321 = vld [vmem:[%s420 + $0x180] sm:$0xff]
        %v7322 = vld [vmem:[%s420 + $0x188] sm:$0xff]
        %v7323 = vld [vmem:[%s420 + $0x190] sm:$0xff]
        %v7324 = vld [vmem:[%s420 + $0x198] sm:$0xff]
        %v7325 = vld [vmem:[%s420 + $0x1a0] sm:$0xff]
        %v7326 = vld [vmem:[%s420 + $0x1a8] sm:$0xff]
        %v7327 = vld [vmem:[%s420 + $0x1b0] sm:$0xff]
        %v7328 = vld [vmem:[%s420 + $0x1b8] sm:$0xff]
        %v7329 = vld [vmem:[%s420 + $0x1c0] sm:$0xff]
        %v7330 = vld [vmem:[%s420 + $0x1c8] sm:$0xff]
        %v7331 = vld [vmem:[%s420 + $0x1d0] sm:$0xff]
        %v7332 = vld [vmem:[%s420 + $0x1d8] sm:$0xff]
        %v7333 = vld [vmem:[%s420 + $0x1e0] sm:$0xff]
        %v7334 = vld [vmem:[%s420 + $0x1e8] sm:$0xff]
        %v7335 = vld [vmem:[%s420 + $0x1f0] sm:$0xff]
        %v7336 = vld [vmem:[%s420 + $0x1f8] sm:$0xff]
        %v7337 = vld [vmem:[%s420 + $0x200] sm:$0xff]
        %v7338 = vld [vmem:[%s420 + $0x208] sm:$0xff]
        %v7339 = vld [vmem:[%s420 + $0x210] sm:$0xff]
        %v7340 = vld [vmem:[%s420 + $0x218] sm:$0xff]
        %v7341 = vld [vmem:[%s420 + $0x220] sm:$0xff]
        %v7342 = vld [vmem:[%s420 + $0x228] sm:$0xff]
        %v7343 = vld [vmem:[%s420 + $0x230] sm:$0xff]
        %v7344 = vld [vmem:[%s420 + $0x238] sm:$0xff]
        %v7345 = vld [vmem:[%s420 + $0x240] sm:$0xff]
        %v7346 = vld [vmem:[%s420 + $0x248] sm:$0xff]
        %v7347 = vld [vmem:[%s420 + $0x250] sm:$0xff]
        %v7348 = vld [vmem:[%s420 + $0x258] sm:$0xff]
        %v7349 = vld [vmem:[%s420 + $0x260] sm:$0xff]
        %v7350 = vld [vmem:[%s420 + $0x268] sm:$0xff]
        %v7351 = vld [vmem:[%s420 + $0x270] sm:$0xff]
        %v7352 = vld [vmem:[%s420 + $0x278] sm:$0xff]
        %v7353 = vld [vmem:[%s420 + $0x280] sm:$0xff]
        %v7354 = vld [vmem:[%s420 + $0x288] sm:$0xff]
        %v7355 = vld [vmem:[%s420 + $0x290] sm:$0xff]
        %v7356 = vld [vmem:[%s420 + $0x298] sm:$0xff]
        %v7357 = vld [vmem:[%s420 + $0x2a0] sm:$0xff]
        %v7358 = vld [vmem:[%s420 + $0x2a8] sm:$0xff]
        %v7359 = vld [vmem:[%s420 + $0x2b0] sm:$0xff]
        %v7360 = vld [vmem:[%s420 + $0x2b8] sm:$0xff]
        %v7361 = vld [vmem:[%s420 + $0x2c0] sm:$0xff]
        %v7362 = vld [vmem:[%s420 + $0x2c8] sm:$0xff]
        %v7363 = vld [vmem:[%s420 + $0x2d0] sm:$0xff]
        %v7364 = vld [vmem:[%s420 + $0x2d8] sm:$0xff]
        %v7365 = vld [vmem:[%s420 + $0x2e0] sm:$0xff]
        %v7366 = vld [vmem:[%s420 + $0x2e8] sm:$0xff]
        %v7367 = vld [vmem:[%s420 + $0x2f0] sm:$0xff]
        %v7368 = vld [vmem:[%s420 + $0x2f8] sm:$0xff]
        %v7369 = vld [vmem:[%s420 + $0x300] sm:$0xff]
        %v7370 = vld [vmem:[%s420 + $0x308] sm:$0xff]
        %v7371 = vld [vmem:[%s420 + $0x310] sm:$0xff]
        %v7372 = vld [vmem:[%s420 + $0x318] sm:$0xff]
        %v7373 = vld [vmem:[%s420 + $0x320] sm:$0xff]
        %v7374 = vld [vmem:[%s420 + $0x328] sm:$0xff]
        %v7375 = vld [vmem:[%s420 + $0x330] sm:$0xff]
        %v7376 = vld [vmem:[%s420 + $0x338] sm:$0xff]
        %v7377 = vld [vmem:[%s420 + $0x340] sm:$0xff]
        %v7378 = vld [vmem:[%s420 + $0x348] sm:$0xff]
        %v7379 = vld [vmem:[%s420 + $0x350] sm:$0xff]
        %v7380 = vld [vmem:[%s420 + $0x358] sm:$0xff]
        %v7381 = vld [vmem:[%s420 + $0x360] sm:$0xff]
        %v7382 = vld [vmem:[%s420 + $0x368] sm:$0xff]
        %v7383 = vld [vmem:[%s420 + $0x370] sm:$0xff]
        %v7384 = vld [vmem:[%s420 + $0x378] sm:$0xff]
        %v7385 = vld [vmem:[%s420 + $0x380] sm:$0xff]
        %v7386 = vld [vmem:[%s420 + $0x388] sm:$0xff]
        %v7387 = vld [vmem:[%s420 + $0x390] sm:$0xff]
        %v7388 = vld [vmem:[%s420 + $0x398] sm:$0xff]
        %v7389 = vld [vmem:[%s420 + $0x3a0] sm:$0xff]
        %v7390 = vld [vmem:[%s420 + $0x3a8] sm:$0xff]
        %v7391 = vld [vmem:[%s420 + $0x3b0] sm:$0xff]
        %v7392 = vld [vmem:[%s420 + $0x3b8] sm:$0xff]
        %v7393 = vld [vmem:[%s420 + $0x3c0] sm:$0xff]
        %v7394 = vld [vmem:[%s420 + $0x3c8] sm:$0xff]
        %v7395 = vld [vmem:[%s420 + $0x3d0] sm:$0xff]
        %v7396 = vld [vmem:[%s420 + $0x3d8] sm:$0xff]
        %v7397 = vld [vmem:[%s420 + $0x3e0] sm:$0xff]
        %v7398 = vld [vmem:[%s420 + $0x3e8] sm:$0xff]
        %v7399 = vld [vmem:[%s420 + $0x3f0] sm:$0xff]
        %v7400 = vld [vmem:[%s420 + $0x3f8] sm:$0xff]
        %v7401 = vld [vmem:[%s420 + $0x400] sm:$0xff]
        %v7402 = vld [vmem:[%s420 + $0x408] sm:$0xff]
        %v7403 = vld [vmem:[%s420 + $0x410] sm:$0xff]
        %v7404 = vld [vmem:[%s420 + $0x418] sm:$0xff]
        %v7405 = vld [vmem:[%s420 + $0x420] sm:$0xff]
        %v7406 = vld [vmem:[%s420 + $0x428] sm:$0xff]
        %v7407 = vld [vmem:[%s420 + $0x430] sm:$0xff]
        %v7408 = vld [vmem:[%s420 + $0x438] sm:$0xff]
        %v7409 = vld [vmem:[%s420 + $0x440] sm:$0xff]
        %v7410 = vld [vmem:[%s420 + $0x448] sm:$0xff]
        %v7411 = vld [vmem:[%s420 + $0x450] sm:$0xff]
        %v7412 = vld [vmem:[%s420 + $0x458] sm:$0xff]
        %v7413 = vld [vmem:[%s420 + $0x460] sm:$0xff]
        %v7414 = vld [vmem:[%s420 + $0x468] sm:$0xff]
        %v7415 = vld [vmem:[%s420 + $0x470] sm:$0xff]
        %v7416 = vld [vmem:[%s420 + $0x478] sm:$0xff]
        %v7417 = vld [vmem:[%s420 + $0x480] sm:$0xff]
        %v7418 = vld [vmem:[%s420 + $0x488] sm:$0xff]
        %v7419 = vld [vmem:[%s420 + $0x490] sm:$0xff]
        %v7420 = vld [vmem:[%s420 + $0x498] sm:$0xff]
        %v7421 = vld [vmem:[%s420 + $0x4a0] sm:$0xff]
        %v7422 = vld [vmem:[%s420 + $0x4a8] sm:$0xff]
        %v7423 = vld [vmem:[%s420 + $0x4b0] sm:$0xff]
        %v7424 = vld [vmem:[%s420 + $0x4b8] sm:$0xff]
        %v7425 = vld [vmem:[%s420 + $0x4c0] sm:$0xff]
        %v7426 = vld [vmem:[%s420 + $0x4c8] sm:$0xff]
        %v7427 = vld [vmem:[%s420 + $0x4d0] sm:$0xff]
        %v7428 = vld [vmem:[%s420 + $0x4d8] sm:$0xff]
        %v7429 = vld [vmem:[%s420 + $0x4e0] sm:$0xff]
        %v7430 = vld [vmem:[%s420 + $0x4e8] sm:$0xff]
        %v7431 = vld [vmem:[%s420 + $0x4f0] sm:$0xff]
        %v7432 = vld [vmem:[%s420 + $0x4f8] sm:$0xff]
        %v7433 = vld [vmem:[%s420 + $0x500] sm:$0xff]
        %v7434 = vld [vmem:[%s420 + $0x508] sm:$0xff]
        %v7435 = vld [vmem:[%s420 + $0x510] sm:$0xff]
        %v7436 = vld [vmem:[%s420 + $0x518] sm:$0xff]
        %v7437 = vld [vmem:[%s420 + $0x520] sm:$0xff]
        %v7438 = vld [vmem:[%s420 + $0x528] sm:$0xff]
        %v7439 = vld [vmem:[%s420 + $0x530] sm:$0xff]
        %v7440 = vld [vmem:[%s420 + $0x538] sm:$0xff]
        %v7441 = vld [vmem:[%s420 + $0x540] sm:$0xff]
        %v7442 = vld [vmem:[%s420 + $0x548] sm:$0xff]
        %v7443 = vld [vmem:[%s420 + $0x550] sm:$0xff]
        %v7444 = vld [vmem:[%s420 + $0x558] sm:$0xff]
        %v7445 = vld [vmem:[%s420 + $0x560] sm:$0xff]
        %v7446 = vld [vmem:[%s420 + $0x568] sm:$0xff]
        %v7447 = vld [vmem:[%s420 + $0x570] sm:$0xff]
        %v7448 = vld [vmem:[%s420 + $0x578] sm:$0xff]
        %v7449 = vld [vmem:[%s420 + $0x580] sm:$0xff]
        %v7450 = vld [vmem:[%s420 + $0x588] sm:$0xff]
        %v7451 = vld [vmem:[%s420 + $0x590] sm:$0xff]
        %v7452 = vld [vmem:[%s420 + $0x598] sm:$0xff]
        %v7453 = vld [vmem:[%s420 + $0x5a0] sm:$0xff]
        %v7454 = vld [vmem:[%s420 + $0x5a8] sm:$0xff]
        %v7455 = vld [vmem:[%s420 + $0x5b0] sm:$0xff]
        %v7456 = vld [vmem:[%s420 + $0x5b8] sm:$0xff]
        %v7457 = vld [vmem:[%s420 + $0x5c0] sm:$0xff]
        %v7458 = vld [vmem:[%s420 + $0x5c8] sm:$0xff]
        %v7459 = vld [vmem:[%s420 + $0x5d0] sm:$0xff]
        %v7460 = vld [vmem:[%s420 + $0x5d8] sm:$0xff]
        %v7461 = vld [vmem:[%s420 + $0x5e0] sm:$0xff]
        %v7462 = vld [vmem:[%s420 + $0x5e8] sm:$0xff]
        %v7463 = vld [vmem:[%s420 + $0x5f0] sm:$0xff]
        %v7464 = vld [vmem:[%s420 + $0x5f8] sm:$0xff]
        %v7465 = vld [vmem:[%s420 + $0x600] sm:$0xff]
        %v7466 = vld [vmem:[%s420 + $0x608] sm:$0xff]
        %v7467 = vld [vmem:[%s420 + $0x610] sm:$0xff]
        %v7468 = vld [vmem:[%s420 + $0x618] sm:$0xff]
        %v7469 = vld [vmem:[%s420 + $0x620] sm:$0xff]
        %v7470 = vld [vmem:[%s420 + $0x628] sm:$0xff]
        %v7471 = vld [vmem:[%s420 + $0x630] sm:$0xff]
        %v7472 = vld [vmem:[%s420 + $0x638] sm:$0xff]
        %v7473 = vld [vmem:[%s420 + $0x640] sm:$0xff]
        %v7474 = vld [vmem:[%s420 + $0x648] sm:$0xff]
        %v7475 = vld [vmem:[%s420 + $0x650] sm:$0xff]
        %v7476 = vld [vmem:[%s420 + $0x658] sm:$0xff]
        %v7477 = vld [vmem:[%s420 + $0x660] sm:$0xff]
        %v7478 = vld [vmem:[%s420 + $0x668] sm:$0xff]
        %v7479 = vld [vmem:[%s420 + $0x670] sm:$0xff]
        %v7480 = vld [vmem:[%s420 + $0x678] sm:$0xff]
        %v7481 = vld [vmem:[%s420 + $0x680] sm:$0xff]
        %v7482 = vld [vmem:[%s420 + $0x688] sm:$0xff]
        %v7483 = vld [vmem:[%s420 + $0x690] sm:$0xff]
        %v7484 = vld [vmem:[%s420 + $0x698] sm:$0xff]
        %v7485 = vld [vmem:[%s420 + $0x6a0] sm:$0xff]
        %v7486 = vld [vmem:[%s420 + $0x6a8] sm:$0xff]
        %v7487 = vld [vmem:[%s420 + $0x6b0] sm:$0xff]
        %v7488 = vld [vmem:[%s420 + $0x6b8] sm:$0xff]
        %v7489 = vld [vmem:[%s420 + $0x6c0] sm:$0xff]
        %v7490 = vld [vmem:[%s420 + $0x6c8] sm:$0xff]
        %v7491 = vld [vmem:[%s420 + $0x6d0] sm:$0xff]
        %v7492 = vld [vmem:[%s420 + $0x6d8] sm:$0xff]
        %v7493 = vld [vmem:[%s420 + $0x6e0] sm:$0xff]
        %v7494 = vld [vmem:[%s420 + $0x6e8] sm:$0xff]
        %v7495 = vld [vmem:[%s420 + $0x6f0] sm:$0xff]
        %v7496 = vld [vmem:[%s420 + $0x6f8] sm:$0xff]
        %v7497 = vld [vmem:[%s420 + $0x700] sm:$0xff]
        %v7498 = vld [vmem:[%s420 + $0x708] sm:$0xff]
        %v7499 = vld [vmem:[%s420 + $0x710] sm:$0xff]
        %v7500 = vld [vmem:[%s420 + $0x718] sm:$0xff]
        %v7501 = vld [vmem:[%s420 + $0x720] sm:$0xff]
        %v7502 = vld [vmem:[%s420 + $0x728] sm:$0xff]
        %v7503 = vld [vmem:[%s420 + $0x730] sm:$0xff]
        %v7504 = vld [vmem:[%s420 + $0x738] sm:$0xff]
        %v7505 = vld [vmem:[%s420 + $0x740] sm:$0xff]
        %v7506 = vld [vmem:[%s420 + $0x748] sm:$0xff]
        %v7507 = vld [vmem:[%s420 + $0x750] sm:$0xff]
        %v7508 = vld [vmem:[%s420 + $0x758] sm:$0xff]
        %v7509 = vld [vmem:[%s420 + $0x760] sm:$0xff]
        %v7510 = vld [vmem:[%s420 + $0x768] sm:$0xff]
        %v7511 = vld [vmem:[%s420 + $0x770] sm:$0xff]
        %v7512 = vld [vmem:[%s420 + $0x778] sm:$0xff]
        %v7513 = vld [vmem:[%s420 + $0x780] sm:$0xff]
        %v7514 = vld [vmem:[%s420 + $0x788] sm:$0xff]
        %v7515 = vld [vmem:[%s420 + $0x790] sm:$0xff]
        %v7516 = vld [vmem:[%s420 + $0x798] sm:$0xff]
        %v7517 = vld [vmem:[%s420 + $0x7a0] sm:$0xff]
        %v7518 = vld [vmem:[%s420 + $0x7a8] sm:$0xff]
        %v7519 = vld [vmem:[%s420 + $0x7b0] sm:$0xff]
        %v7520 = vld [vmem:[%s420 + $0x7b8] sm:$0xff]
        %v7521 = vld [vmem:[%s420 + $0x7c0] sm:$0xff]
        %v7522 = vld [vmem:[%s420 + $0x7c8] sm:$0xff]
        %v7523 = vld [vmem:[%s420 + $0x7d0] sm:$0xff]
        %v7524 = vld [vmem:[%s420 + $0x7d8] sm:$0xff]
        %v7525 = vld [vmem:[%s420 + $0x7e0] sm:$0xff]
        %v7526 = vld [vmem:[%s420 + $0x7e8] sm:$0xff]
        %v7527 = vld [vmem:[%s420 + $0x7f0] sm:$0xff]
        %v7528 = vld [vmem:[%s420 + $0x7f8] sm:$0xff]
        %v7530 = vlaneseq
        %v7531 = vshrl.u32 %v7530, 7
        %v7532 = vsub.s32 0, %v7531
        %v7533 = vrot.slane %v538, %v7532
        %v7534 = vlaneseq
        %v7535 = vshrl.u32 %v7534, 7
        %v7536 = vsub.s32 1, %v7535
        %v7537 = vrot.slane %v538, %v7536
        %v7538 = vlaneseq
        %v7539 = vshrl.u32 %v7538, 7
        %v7540 = vsub.s32 2, %v7539
        %v7541 = vrot.slane %v538, %v7540
        %v7542 = vlaneseq
        %v7543 = vshrl.u32 %v7542, 7
        %v7544 = vsub.s32 3, %v7543
        %v7545 = vrot.slane %v538, %v7544
        %v7546 = vlaneseq
        %v7547 = vshrl.u32 %v7546, 7
        %v7548 = vsub.s32 4, %v7547
        %v7549 = vrot.slane %v538, %v7548
        %v7550 = vlaneseq
        %v7551 = vshrl.u32 %v7550, 7
        %v7552 = vsub.s32 5, %v7551
        %v7553 = vrot.slane %v538, %v7552
        %v7554 = vlaneseq
        %v7555 = vshrl.u32 %v7554, 7
        %v7556 = vsub.s32 6, %v7555
        %v7557 = vrot.slane %v538, %v7556
        %v7558 = vlaneseq
        %v7559 = vshrl.u32 %v7558, 7
        %v7560 = vsub.s32 7, %v7559
        %v7561 = vrot.slane %v538, %v7560
        %v7826 = vunpack.c.l.b16 %v7273
        %v7827 = vunpack.c.h.b16 %v7273
        %v7828 = vunpack.c.l.b16 %v7274
        %v7829 = vunpack.c.h.b16 %v7274
        %v7830 = vunpack.c.l.b16 %v7275
        %v7831 = vunpack.c.h.b16 %v7275
        %v7832 = vunpack.c.l.b16 %v7276
        %v7833 = vunpack.c.h.b16 %v7276
        %v7834 = vunpack.c.l.b16 %v7277
        %v7835 = vunpack.c.h.b16 %v7277
        %v7836 = vunpack.c.l.b16 %v7278
        %v7837 = vunpack.c.h.b16 %v7278
        %v7838 = vunpack.c.l.b16 %v7279
        %v7839 = vunpack.c.h.b16 %v7279
        %v7840 = vunpack.c.l.b16 %v7280
        %v7841 = vunpack.c.h.b16 %v7280
        %v7842 = vunpack.c.l.b16 %v7281
        %v7843 = vunpack.c.h.b16 %v7281
        %v7844 = vunpack.c.l.b16 %v7282
        %v7845 = vunpack.c.h.b16 %v7282
        %v7846 = vunpack.c.l.b16 %v7283
        %v7847 = vunpack.c.h.b16 %v7283
        %v7848 = vunpack.c.l.b16 %v7284
        %v7849 = vunpack.c.h.b16 %v7284
        %v7850 = vunpack.c.l.b16 %v7285
        %v7851 = vunpack.c.h.b16 %v7285
        %v7852 = vunpack.c.l.b16 %v7286
        %v7853 = vunpack.c.h.b16 %v7286
        %v7854 = vunpack.c.l.b16 %v7287
        %v7855 = vunpack.c.h.b16 %v7287
        %v7856 = vunpack.c.l.b16 %v7288
        %v7857 = vunpack.c.h.b16 %v7288
        %v7858 = vunpack.c.l.b16 %v7289
        %v7859 = vunpack.c.h.b16 %v7289
        %v7860 = vunpack.c.l.b16 %v7290
        %v7861 = vunpack.c.h.b16 %v7290
        %v7862 = vunpack.c.l.b16 %v7291
        %v7863 = vunpack.c.h.b16 %v7291
        %v7864 = vunpack.c.l.b16 %v7292
        %v7865 = vunpack.c.h.b16 %v7292
        %v7866 = vunpack.c.l.b16 %v7293
        %v7867 = vunpack.c.h.b16 %v7293
        %v7868 = vunpack.c.l.b16 %v7294
        %v7869 = vunpack.c.h.b16 %v7294
        %v7870 = vunpack.c.l.b16 %v7295
        %v7871 = vunpack.c.h.b16 %v7295
        %v7872 = vunpack.c.l.b16 %v7296
        %v7873 = vunpack.c.h.b16 %v7296
        %v7874 = vunpack.c.l.b16 %v7297
        %v7875 = vunpack.c.h.b16 %v7297
        %v7876 = vunpack.c.l.b16 %v7298
        %v7877 = vunpack.c.h.b16 %v7298
        %v7878 = vunpack.c.l.b16 %v7299
        %v7879 = vunpack.c.h.b16 %v7299
        %v7880 = vunpack.c.l.b16 %v7300
        %v7881 = vunpack.c.h.b16 %v7300
        %v7882 = vunpack.c.l.b16 %v7301
        %v7883 = vunpack.c.h.b16 %v7301
        %v7884 = vunpack.c.l.b16 %v7302
        %v7885 = vunpack.c.h.b16 %v7302
        %v7886 = vunpack.c.l.b16 %v7303
        %v7887 = vunpack.c.h.b16 %v7303
        %v7888 = vunpack.c.l.b16 %v7304
        %v7889 = vunpack.c.h.b16 %v7304
        %v7890 = vunpack.c.l.b16 %v7305
        %v7891 = vunpack.c.h.b16 %v7305
        %v7892 = vunpack.c.l.b16 %v7306
        %v7893 = vunpack.c.h.b16 %v7306
        %v7894 = vunpack.c.l.b16 %v7307
        %v7895 = vunpack.c.h.b16 %v7307
        %v7896 = vunpack.c.l.b16 %v7308
        %v7897 = vunpack.c.h.b16 %v7308
        %v7898 = vunpack.c.l.b16 %v7309
        %v7899 = vunpack.c.h.b16 %v7309
        %v7900 = vunpack.c.l.b16 %v7310
        %v7901 = vunpack.c.h.b16 %v7310
        %v7902 = vunpack.c.l.b16 %v7311
        %v7903 = vunpack.c.h.b16 %v7311
        %v7904 = vunpack.c.l.b16 %v7312
        %v7905 = vunpack.c.h.b16 %v7312
        %v7906 = vunpack.c.l.b16 %v7313
        %v7907 = vunpack.c.h.b16 %v7313
        %v7908 = vunpack.c.l.b16 %v7314
        %v7909 = vunpack.c.h.b16 %v7314
        %v7910 = vunpack.c.l.b16 %v7315
        %v7911 = vunpack.c.h.b16 %v7315
        %v7912 = vunpack.c.l.b16 %v7316
        %v7913 = vunpack.c.h.b16 %v7316
        %v7914 = vunpack.c.l.b16 %v7317
        %v7915 = vunpack.c.h.b16 %v7317
        %v7916 = vunpack.c.l.b16 %v7318
        %v7917 = vunpack.c.h.b16 %v7318
        %v7918 = vunpack.c.l.b16 %v7319
        %v7919 = vunpack.c.h.b16 %v7319
        %v7920 = vunpack.c.l.b16 %v7320
        %v7921 = vunpack.c.h.b16 %v7320
        %v7922 = vunpack.c.l.b16 %v7321
        %v7923 = vunpack.c.h.b16 %v7321
        %v7924 = vunpack.c.l.b16 %v7322
        %v7925 = vunpack.c.h.b16 %v7322
        %v7926 = vunpack.c.l.b16 %v7323
        %v7927 = vunpack.c.h.b16 %v7323
        %v7928 = vunpack.c.l.b16 %v7324
        %v7929 = vunpack.c.h.b16 %v7324
        %v7930 = vunpack.c.l.b16 %v7325
        %v7931 = vunpack.c.h.b16 %v7325
        %v7932 = vunpack.c.l.b16 %v7326
        %v7933 = vunpack.c.h.b16 %v7326
        %v7934 = vunpack.c.l.b16 %v7327
        %v7935 = vunpack.c.h.b16 %v7327
        %v7936 = vunpack.c.l.b16 %v7328
        %v7937 = vunpack.c.h.b16 %v7328
        %v7938 = vunpack.c.l.b16 %v7329
        %v7939 = vunpack.c.h.b16 %v7329
        %v7940 = vunpack.c.l.b16 %v7330
        %v7941 = vunpack.c.h.b16 %v7330
        %v7942 = vunpack.c.l.b16 %v7331
        %v7943 = vunpack.c.h.b16 %v7331
        %v7944 = vunpack.c.l.b16 %v7332
        %v7945 = vunpack.c.h.b16 %v7332
        %v7946 = vunpack.c.l.b16 %v7333
        %v7947 = vunpack.c.h.b16 %v7333
        %v7948 = vunpack.c.l.b16 %v7334
        %v7949 = vunpack.c.h.b16 %v7334
        %v7950 = vunpack.c.l.b16 %v7335
        %v7951 = vunpack.c.h.b16 %v7335
        %v7952 = vunpack.c.l.b16 %v7336
        %v7953 = vunpack.c.h.b16 %v7336
        %v7954 = vunpack.c.l.b16 %v7337
        %v7955 = vunpack.c.h.b16 %v7337
        %v7956 = vunpack.c.l.b16 %v7338
        %v7957 = vunpack.c.h.b16 %v7338
        %v7958 = vunpack.c.l.b16 %v7339
        %v7959 = vunpack.c.h.b16 %v7339
        %v7960 = vunpack.c.l.b16 %v7340
        %v7961 = vunpack.c.h.b16 %v7340
        %v7962 = vunpack.c.l.b16 %v7341
        %v7963 = vunpack.c.h.b16 %v7341
        %v7964 = vunpack.c.l.b16 %v7342
        %v7965 = vunpack.c.h.b16 %v7342
        %v7966 = vunpack.c.l.b16 %v7343
        %v7967 = vunpack.c.h.b16 %v7343
        %v7968 = vunpack.c.l.b16 %v7344
        %v7969 = vunpack.c.h.b16 %v7344
        %v7970 = vunpack.c.l.b16 %v7345
        %v7971 = vunpack.c.h.b16 %v7345
        %v7972 = vunpack.c.l.b16 %v7346
        %v7973 = vunpack.c.h.b16 %v7346
        %v7974 = vunpack.c.l.b16 %v7347
        %v7975 = vunpack.c.h.b16 %v7347
        %v7976 = vunpack.c.l.b16 %v7348
        %v7977 = vunpack.c.h.b16 %v7348
        %v7978 = vunpack.c.l.b16 %v7349
        %v7979 = vunpack.c.h.b16 %v7349
        %v7980 = vunpack.c.l.b16 %v7350
        %v7981 = vunpack.c.h.b16 %v7350
        %v7982 = vunpack.c.l.b16 %v7351
        %v7983 = vunpack.c.h.b16 %v7351
        %v7984 = vunpack.c.l.b16 %v7352
        %v7985 = vunpack.c.h.b16 %v7352
        %v7986 = vunpack.c.l.b16 %v7353
        %v7987 = vunpack.c.h.b16 %v7353
        %v7988 = vunpack.c.l.b16 %v7354
        %v7989 = vunpack.c.h.b16 %v7354
        %v7990 = vunpack.c.l.b16 %v7355
        %v7991 = vunpack.c.h.b16 %v7355
        %v7992 = vunpack.c.l.b16 %v7356
        %v7993 = vunpack.c.h.b16 %v7356
        %v7994 = vunpack.c.l.b16 %v7357
        %v7995 = vunpack.c.h.b16 %v7357
        %v7996 = vunpack.c.l.b16 %v7358
        %v7997 = vunpack.c.h.b16 %v7358
        %v7998 = vunpack.c.l.b16 %v7359
        %v7999 = vunpack.c.h.b16 %v7359
        %v8000 = vunpack.c.l.b16 %v7360
        %v8001 = vunpack.c.h.b16 %v7360
        %v8002 = vunpack.c.l.b16 %v7361
        %v8003 = vunpack.c.h.b16 %v7361
        %v8004 = vunpack.c.l.b16 %v7362
        %v8005 = vunpack.c.h.b16 %v7362
        %v8006 = vunpack.c.l.b16 %v7363
        %v8007 = vunpack.c.h.b16 %v7363
        %v8008 = vunpack.c.l.b16 %v7364
        %v8009 = vunpack.c.h.b16 %v7364
        %v8010 = vunpack.c.l.b16 %v7365
        %v8011 = vunpack.c.h.b16 %v7365
        %v8012 = vunpack.c.l.b16 %v7366
        %v8013 = vunpack.c.h.b16 %v7366
        %v8014 = vunpack.c.l.b16 %v7367
        %v8015 = vunpack.c.h.b16 %v7367
        %v8016 = vunpack.c.l.b16 %v7368
        %v8017 = vunpack.c.h.b16 %v7368
        %v8018 = vunpack.c.l.b16 %v7369
        %v8019 = vunpack.c.h.b16 %v7369
        %v8020 = vunpack.c.l.b16 %v7370
        %v8021 = vunpack.c.h.b16 %v7370
        %v8022 = vunpack.c.l.b16 %v7371
        %v8023 = vunpack.c.h.b16 %v7371
        %v8024 = vunpack.c.l.b16 %v7372
        %v8025 = vunpack.c.h.b16 %v7372
        %v8026 = vunpack.c.l.b16 %v7373
        %v8027 = vunpack.c.h.b16 %v7373
        %v8028 = vunpack.c.l.b16 %v7374
        %v8029 = vunpack.c.h.b16 %v7374
        %v8030 = vunpack.c.l.b16 %v7375
        %v8031 = vunpack.c.h.b16 %v7375
        %v8032 = vunpack.c.l.b16 %v7376
        %v8033 = vunpack.c.h.b16 %v7376
        %v8034 = vunpack.c.l.b16 %v7377
        %v8035 = vunpack.c.h.b16 %v7377
        %v8036 = vunpack.c.l.b16 %v7378
        %v8037 = vunpack.c.h.b16 %v7378
        %v8038 = vunpack.c.l.b16 %v7379
        %v8039 = vunpack.c.h.b16 %v7379
        %v8040 = vunpack.c.l.b16 %v7380
        %v8041 = vunpack.c.h.b16 %v7380
        %v8042 = vunpack.c.l.b16 %v7381
        %v8043 = vunpack.c.h.b16 %v7381
        %v8044 = vunpack.c.l.b16 %v7382
        %v8045 = vunpack.c.h.b16 %v7382
        %v8046 = vunpack.c.l.b16 %v7383
        %v8047 = vunpack.c.h.b16 %v7383
        %v8048 = vunpack.c.l.b16 %v7384
        %v8049 = vunpack.c.h.b16 %v7384
        %v8050 = vunpack.c.l.b16 %v7385
        %v8051 = vunpack.c.h.b16 %v7385
        %v8052 = vunpack.c.l.b16 %v7386
        %v8053 = vunpack.c.h.b16 %v7386
        %v8054 = vunpack.c.l.b16 %v7387
        %v8055 = vunpack.c.h.b16 %v7387
        %v8056 = vunpack.c.l.b16 %v7388
        %v8057 = vunpack.c.h.b16 %v7388
        %v8058 = vunpack.c.l.b16 %v7389
        %v8059 = vunpack.c.h.b16 %v7389
        %v8060 = vunpack.c.l.b16 %v7390
        %v8061 = vunpack.c.h.b16 %v7390
        %v8062 = vunpack.c.l.b16 %v7391
        %v8063 = vunpack.c.h.b16 %v7391
        %v8064 = vunpack.c.l.b16 %v7392
        %v8065 = vunpack.c.h.b16 %v7392
        %v8066 = vunpack.c.l.b16 %v7393
        %v8067 = vunpack.c.h.b16 %v7393
        %v8068 = vunpack.c.l.b16 %v7394
        %v8069 = vunpack.c.h.b16 %v7394
        %v8070 = vunpack.c.l.b16 %v7395
        %v8071 = vunpack.c.h.b16 %v7395
        %v8072 = vunpack.c.l.b16 %v7396
        %v8073 = vunpack.c.h.b16 %v7396
        %v8074 = vunpack.c.l.b16 %v7397
        %v8075 = vunpack.c.h.b16 %v7397
        %v8076 = vunpack.c.l.b16 %v7398
        %v8077 = vunpack.c.h.b16 %v7398
        %v8078 = vunpack.c.l.b16 %v7399
        %v8079 = vunpack.c.h.b16 %v7399
        %v8080 = vunpack.c.l.b16 %v7400
        %v8081 = vunpack.c.h.b16 %v7400
        %v8082 = vunpack.c.l.b16 %v7401
        %v8083 = vunpack.c.h.b16 %v7401
        %v8084 = vunpack.c.l.b16 %v7402
        %v8085 = vunpack.c.h.b16 %v7402
        %v8086 = vunpack.c.l.b16 %v7403
        %v8087 = vunpack.c.h.b16 %v7403
        %v8088 = vunpack.c.l.b16 %v7404
        %v8089 = vunpack.c.h.b16 %v7404
        %v8090 = vunpack.c.l.b16 %v7405
        %v8091 = vunpack.c.h.b16 %v7405
        %v8092 = vunpack.c.l.b16 %v7406
        %v8093 = vunpack.c.h.b16 %v7406
        %v8094 = vunpack.c.l.b16 %v7407
        %v8095 = vunpack.c.h.b16 %v7407
        %v8096 = vunpack.c.l.b16 %v7408
        %v8097 = vunpack.c.h.b16 %v7408
        %v8098 = vunpack.c.l.b16 %v7409
        %v8099 = vunpack.c.h.b16 %v7409
        %v8100 = vunpack.c.l.b16 %v7410
        %v8101 = vunpack.c.h.b16 %v7410
        %v8102 = vunpack.c.l.b16 %v7411
        %v8103 = vunpack.c.h.b16 %v7411
        %v8104 = vunpack.c.l.b16 %v7412
        %v8105 = vunpack.c.h.b16 %v7412
        %v8106 = vunpack.c.l.b16 %v7413
        %v8107 = vunpack.c.h.b16 %v7413
        %v8108 = vunpack.c.l.b16 %v7414
        %v8109 = vunpack.c.h.b16 %v7414
        %v8110 = vunpack.c.l.b16 %v7415
        %v8111 = vunpack.c.h.b16 %v7415
        %v8112 = vunpack.c.l.b16 %v7416
        %v8113 = vunpack.c.h.b16 %v7416
        %v8114 = vunpack.c.l.b16 %v7417
        %v8115 = vunpack.c.h.b16 %v7417
        %v8116 = vunpack.c.l.b16 %v7418
        %v8117 = vunpack.c.h.b16 %v7418
        %v8118 = vunpack.c.l.b16 %v7419
        %v8119 = vunpack.c.h.b16 %v7419
        %v8120 = vunpack.c.l.b16 %v7420
        %v8121 = vunpack.c.h.b16 %v7420
        %v8122 = vunpack.c.l.b16 %v7421
        %v8123 = vunpack.c.h.b16 %v7421
        %v8124 = vunpack.c.l.b16 %v7422
        %v8125 = vunpack.c.h.b16 %v7422
        %v8126 = vunpack.c.l.b16 %v7423
        %v8127 = vunpack.c.h.b16 %v7423
        %v8128 = vunpack.c.l.b16 %v7424
        %v8129 = vunpack.c.h.b16 %v7424
        %v8130 = vunpack.c.l.b16 %v7425
        %v8131 = vunpack.c.h.b16 %v7425
        %v8132 = vunpack.c.l.b16 %v7426
        %v8133 = vunpack.c.h.b16 %v7426
        %v8134 = vunpack.c.l.b16 %v7427
        %v8135 = vunpack.c.h.b16 %v7427
        %v8136 = vunpack.c.l.b16 %v7428
        %v8137 = vunpack.c.h.b16 %v7428
        %v8138 = vunpack.c.l.b16 %v7429
        %v8139 = vunpack.c.h.b16 %v7429
        %v8140 = vunpack.c.l.b16 %v7430
        %v8141 = vunpack.c.h.b16 %v7430
        %v8142 = vunpack.c.l.b16 %v7431
        %v8143 = vunpack.c.h.b16 %v7431
        %v8144 = vunpack.c.l.b16 %v7432
        %v8145 = vunpack.c.h.b16 %v7432
        %v8146 = vunpack.c.l.b16 %v7433
        %v8147 = vunpack.c.h.b16 %v7433
        %v8148 = vunpack.c.l.b16 %v7434
        %v8149 = vunpack.c.h.b16 %v7434
        %v8150 = vunpack.c.l.b16 %v7435
        %v8151 = vunpack.c.h.b16 %v7435
        %v8152 = vunpack.c.l.b16 %v7436
        %v8153 = vunpack.c.h.b16 %v7436
        %v8154 = vunpack.c.l.b16 %v7437
        %v8155 = vunpack.c.h.b16 %v7437
        %v8156 = vunpack.c.l.b16 %v7438
        %v8157 = vunpack.c.h.b16 %v7438
        %v8158 = vunpack.c.l.b16 %v7439
        %v8159 = vunpack.c.h.b16 %v7439
        %v8160 = vunpack.c.l.b16 %v7440
        %v8161 = vunpack.c.h.b16 %v7440
        %v8162 = vunpack.c.l.b16 %v7441
        %v8163 = vunpack.c.h.b16 %v7441
        %v8164 = vunpack.c.l.b16 %v7442
        %v8165 = vunpack.c.h.b16 %v7442
        %v8166 = vunpack.c.l.b16 %v7443
        %v8167 = vunpack.c.h.b16 %v7443
        %v8168 = vunpack.c.l.b16 %v7444
        %v8169 = vunpack.c.h.b16 %v7444
        %v8170 = vunpack.c.l.b16 %v7445
        %v8171 = vunpack.c.h.b16 %v7445
        %v8172 = vunpack.c.l.b16 %v7446
        %v8173 = vunpack.c.h.b16 %v7446
        %v8174 = vunpack.c.l.b16 %v7447
        %v8175 = vunpack.c.h.b16 %v7447
        %v8176 = vunpack.c.l.b16 %v7448
        %v8177 = vunpack.c.h.b16 %v7448
        %v8178 = vunpack.c.l.b16 %v7449
        %v8179 = vunpack.c.h.b16 %v7449
        %v8180 = vunpack.c.l.b16 %v7450
        %v8181 = vunpack.c.h.b16 %v7450
        %v8182 = vunpack.c.l.b16 %v7451
        %v8183 = vunpack.c.h.b16 %v7451
        %v8184 = vunpack.c.l.b16 %v7452
        %v8185 = vunpack.c.h.b16 %v7452
        %v8186 = vunpack.c.l.b16 %v7453
        %v8187 = vunpack.c.h.b16 %v7453
        %v8188 = vunpack.c.l.b16 %v7454
        %v8189 = vunpack.c.h.b16 %v7454
        %v8190 = vunpack.c.l.b16 %v7455
        %v8191 = vunpack.c.h.b16 %v7455
        %v8192 = vunpack.c.l.b16 %v7456
        %v8193 = vunpack.c.h.b16 %v7456
        %v8194 = vunpack.c.l.b16 %v7457
        %v8195 = vunpack.c.h.b16 %v7457
        %v8196 = vunpack.c.l.b16 %v7458
        %v8197 = vunpack.c.h.b16 %v7458
        %v8198 = vunpack.c.l.b16 %v7459
        %v8199 = vunpack.c.h.b16 %v7459
        %v8200 = vunpack.c.l.b16 %v7460
        %v8201 = vunpack.c.h.b16 %v7460
        %v8202 = vunpack.c.l.b16 %v7461
        %v8203 = vunpack.c.h.b16 %v7461
        %v8204 = vunpack.c.l.b16 %v7462
        %v8205 = vunpack.c.h.b16 %v7462
        %v8206 = vunpack.c.l.b16 %v7463
        %v8207 = vunpack.c.h.b16 %v7463
        %v8208 = vunpack.c.l.b16 %v7464
        %v8209 = vunpack.c.h.b16 %v7464
        %v8210 = vunpack.c.l.b16 %v7465
        %v8211 = vunpack.c.h.b16 %v7465
        %v8212 = vunpack.c.l.b16 %v7466
        %v8213 = vunpack.c.h.b16 %v7466
        %v8214 = vunpack.c.l.b16 %v7467
        %v8215 = vunpack.c.h.b16 %v7467
        %v8216 = vunpack.c.l.b16 %v7468
        %v8217 = vunpack.c.h.b16 %v7468
        %v8218 = vunpack.c.l.b16 %v7469
        %v8219 = vunpack.c.h.b16 %v7469
        %v8220 = vunpack.c.l.b16 %v7470
        %v8221 = vunpack.c.h.b16 %v7470
        %v8222 = vunpack.c.l.b16 %v7471
        %v8223 = vunpack.c.h.b16 %v7471
        %v8224 = vunpack.c.l.b16 %v7472
        %v8225 = vunpack.c.h.b16 %v7472
        %v8226 = vunpack.c.l.b16 %v7473
        %v8227 = vunpack.c.h.b16 %v7473
        %v8228 = vunpack.c.l.b16 %v7474
        %v8229 = vunpack.c.h.b16 %v7474
        %v8230 = vunpack.c.l.b16 %v7475
        %v8231 = vunpack.c.h.b16 %v7475
        %v8232 = vunpack.c.l.b16 %v7476
        %v8233 = vunpack.c.h.b16 %v7476
        %v8234 = vunpack.c.l.b16 %v7477
        %v8235 = vunpack.c.h.b16 %v7477
        %v8236 = vunpack.c.l.b16 %v7478
        %v8237 = vunpack.c.h.b16 %v7478
        %v8238 = vunpack.c.l.b16 %v7479
        %v8239 = vunpack.c.h.b16 %v7479
        %v8240 = vunpack.c.l.b16 %v7480
        %v8241 = vunpack.c.h.b16 %v7480
        %v8242 = vunpack.c.l.b16 %v7481
        %v8243 = vunpack.c.h.b16 %v7481
        %v8244 = vunpack.c.l.b16 %v7482
        %v8245 = vunpack.c.h.b16 %v7482
        %v8246 = vunpack.c.l.b16 %v7483
        %v8247 = vunpack.c.h.b16 %v7483
        %v8248 = vunpack.c.l.b16 %v7484
        %v8249 = vunpack.c.h.b16 %v7484
        %v8250 = vunpack.c.l.b16 %v7485
        %v8251 = vunpack.c.h.b16 %v7485
        %v8252 = vunpack.c.l.b16 %v7486
        %v8253 = vunpack.c.h.b16 %v7486
        %v8254 = vunpack.c.l.b16 %v7487
        %v8255 = vunpack.c.h.b16 %v7487
        %v8256 = vunpack.c.l.b16 %v7488
        %v8257 = vunpack.c.h.b16 %v7488
        %v8258 = vunpack.c.l.b16 %v7489
        %v8259 = vunpack.c.h.b16 %v7489
        %v8260 = vunpack.c.l.b16 %v7490
        %v8261 = vunpack.c.h.b16 %v7490
        %v8262 = vunpack.c.l.b16 %v7491
        %v8263 = vunpack.c.h.b16 %v7491
        %v8264 = vunpack.c.l.b16 %v7492
        %v8265 = vunpack.c.h.b16 %v7492
        %v8266 = vunpack.c.l.b16 %v7493
        %v8267 = vunpack.c.h.b16 %v7493
        %v8268 = vunpack.c.l.b16 %v7494
        %v8269 = vunpack.c.h.b16 %v7494
        %v8270 = vunpack.c.l.b16 %v7495
        %v8271 = vunpack.c.h.b16 %v7495
        %v8272 = vunpack.c.l.b16 %v7496
        %v8273 = vunpack.c.h.b16 %v7496
        %v8274 = vunpack.c.l.b16 %v7497
        %v8275 = vunpack.c.h.b16 %v7497
        %v8276 = vunpack.c.l.b16 %v7498
        %v8277 = vunpack.c.h.b16 %v7498
        %v8278 = vunpack.c.l.b16 %v7499
        %v8279 = vunpack.c.h.b16 %v7499
        %v8280 = vunpack.c.l.b16 %v7500
        %v8281 = vunpack.c.h.b16 %v7500
        %v8282 = vunpack.c.l.b16 %v7501
        %v8283 = vunpack.c.h.b16 %v7501
        %v8284 = vunpack.c.l.b16 %v7502
        %v8285 = vunpack.c.h.b16 %v7502
        %v8286 = vunpack.c.l.b16 %v7503
        %v8287 = vunpack.c.h.b16 %v7503
        %v8288 = vunpack.c.l.b16 %v7504
        %v8289 = vunpack.c.h.b16 %v7504
        %v8290 = vunpack.c.l.b16 %v7505
        %v8291 = vunpack.c.h.b16 %v7505
        %v8292 = vunpack.c.l.b16 %v7506
        %v8293 = vunpack.c.h.b16 %v7506
        %v8294 = vunpack.c.l.b16 %v7507
        %v8295 = vunpack.c.h.b16 %v7507
        %v8296 = vunpack.c.l.b16 %v7508
        %v8297 = vunpack.c.h.b16 %v7508
        %v8298 = vunpack.c.l.b16 %v7509
        %v8299 = vunpack.c.h.b16 %v7509
        %v8300 = vunpack.c.l.b16 %v7510
        %v8301 = vunpack.c.h.b16 %v7510
        %v8302 = vunpack.c.l.b16 %v7511
        %v8303 = vunpack.c.h.b16 %v7511
        %v8304 = vunpack.c.l.b16 %v7512
        %v8305 = vunpack.c.h.b16 %v7512
        %v8306 = vunpack.c.l.b16 %v7513
        %v8307 = vunpack.c.h.b16 %v7513
        %v8308 = vunpack.c.l.b16 %v7514
        %v8309 = vunpack.c.h.b16 %v7514
        %v8310 = vunpack.c.l.b16 %v7515
        %v8311 = vunpack.c.h.b16 %v7515
        %v8312 = vunpack.c.l.b16 %v7516
        %v8313 = vunpack.c.h.b16 %v7516
        %v8314 = vunpack.c.l.b16 %v7517
        %v8315 = vunpack.c.h.b16 %v7517
        %v8316 = vunpack.c.l.b16 %v7518
        %v8317 = vunpack.c.h.b16 %v7518
        %v8318 = vunpack.c.l.b16 %v7519
        %v8319 = vunpack.c.h.b16 %v7519
        %v8320 = vunpack.c.l.b16 %v7520
        %v8321 = vunpack.c.h.b16 %v7520
        %v8322 = vunpack.c.l.b16 %v7521
        %v8323 = vunpack.c.h.b16 %v7521
        %v8324 = vunpack.c.l.b16 %v7522
        %v8325 = vunpack.c.h.b16 %v7522
        %v8326 = vunpack.c.l.b16 %v7523
        %v8327 = vunpack.c.h.b16 %v7523
        %v8328 = vunpack.c.l.b16 %v7524
        %v8329 = vunpack.c.h.b16 %v7524
        %v8330 = vunpack.c.l.b16 %v7525
        %v8331 = vunpack.c.h.b16 %v7525
        %v8332 = vunpack.c.l.b16 %v7526
        %v8333 = vunpack.c.h.b16 %v7526
        %v8334 = vunpack.c.l.b16 %v7527
        %v8335 = vunpack.c.h.b16 %v7527
        %v8336 = vunpack.c.l.b16 %v7528
        %v8337 = vunpack.c.h.b16 %v7528
        %v8338 = vpack.c.b16 %v7834, %v7826
        %v8339 = vpack.c.b16 %v7835, %v7827
        %v8340 = vpack.c.b16 %v7836, %v7828
        %v8341 = vpack.c.b16 %v7837, %v7829
        %v8342 = vpack.c.b16 %v7838, %v7830
        %v8343 = vpack.c.b16 %v7839, %v7831
        %v8344 = vpack.c.b16 %v7840, %v7832
        %v8345 = vpack.c.b16 %v7841, %v7833
        %v8346 = vpack.c.b16 %v7850, %v7842
        %v8347 = vpack.c.b16 %v7851, %v7843
        %v8348 = vpack.c.b16 %v7852, %v7844
        %v8349 = vpack.c.b16 %v7853, %v7845
        %v8350 = vpack.c.b16 %v7854, %v7846
        %v8351 = vpack.c.b16 %v7855, %v7847
        %v8352 = vpack.c.b16 %v7856, %v7848
        %v8353 = vpack.c.b16 %v7857, %v7849
        %v8354 = vpack.c.b16 %v7866, %v7858
        %v8355 = vpack.c.b16 %v7867, %v7859
        %v8356 = vpack.c.b16 %v7868, %v7860
        %v8357 = vpack.c.b16 %v7869, %v7861
        %v8358 = vpack.c.b16 %v7870, %v7862
        %v8359 = vpack.c.b16 %v7871, %v7863
        %v8360 = vpack.c.b16 %v7872, %v7864
        %v8361 = vpack.c.b16 %v7873, %v7865
        %v8362 = vpack.c.b16 %v7882, %v7874
        %v8363 = vpack.c.b16 %v7883, %v7875
        %v8364 = vpack.c.b16 %v7884, %v7876
        %v8365 = vpack.c.b16 %v7885, %v7877
        %v8366 = vpack.c.b16 %v7886, %v7878
        %v8367 = vpack.c.b16 %v7887, %v7879
        %v8368 = vpack.c.b16 %v7888, %v7880
        %v8369 = vpack.c.b16 %v7889, %v7881
        %v8370 = vpack.c.b16 %v7898, %v7890
        %v8371 = vpack.c.b16 %v7899, %v7891
        %v8372 = vpack.c.b16 %v7900, %v7892
        %v8373 = vpack.c.b16 %v7901, %v7893
        %v8374 = vpack.c.b16 %v7902, %v7894
        %v8375 = vpack.c.b16 %v7903, %v7895
        %v8376 = vpack.c.b16 %v7904, %v7896
        %v8377 = vpack.c.b16 %v7905, %v7897
        %v8378 = vpack.c.b16 %v7914, %v7906
        %v8379 = vpack.c.b16 %v7915, %v7907
        %v8380 = vpack.c.b16 %v7916, %v7908
        %v8381 = vpack.c.b16 %v7917, %v7909
        %v8382 = vpack.c.b16 %v7918, %v7910
        %v8383 = vpack.c.b16 %v7919, %v7911
        %v8384 = vpack.c.b16 %v7920, %v7912
        %v8385 = vpack.c.b16 %v7921, %v7913
        %v8386 = vpack.c.b16 %v7930, %v7922
        %v8387 = vpack.c.b16 %v7931, %v7923
        %v8388 = vpack.c.b16 %v7932, %v7924
        %v8389 = vpack.c.b16 %v7933, %v7925
        %v8390 = vpack.c.b16 %v7934, %v7926
        %v8391 = vpack.c.b16 %v7935, %v7927
        %v8392 = vpack.c.b16 %v7936, %v7928
        %v8393 = vpack.c.b16 %v7937, %v7929
        %v8394 = vpack.c.b16 %v7946, %v7938
        %v8395 = vpack.c.b16 %v7947, %v7939
        %v8396 = vpack.c.b16 %v7948, %v7940
        %v8397 = vpack.c.b16 %v7949, %v7941
        %v8398 = vpack.c.b16 %v7950, %v7942
        %v8399 = vpack.c.b16 %v7951, %v7943
        %v8400 = vpack.c.b16 %v7952, %v7944
        %v8401 = vpack.c.b16 %v7953, %v7945
        %v8402 = vpack.c.b16 %v7962, %v7954
        %v8403 = vpack.c.b16 %v7963, %v7955
        %v8404 = vpack.c.b16 %v7964, %v7956
        %v8405 = vpack.c.b16 %v7965, %v7957
        %v8406 = vpack.c.b16 %v7966, %v7958
        %v8407 = vpack.c.b16 %v7967, %v7959
        %v8408 = vpack.c.b16 %v7968, %v7960
        %v8409 = vpack.c.b16 %v7969, %v7961
        %v8410 = vpack.c.b16 %v7978, %v7970
        %v8411 = vpack.c.b16 %v7979, %v7971
        %v8412 = vpack.c.b16 %v7980, %v7972
        %v8413 = vpack.c.b16 %v7981, %v7973
        %v8414 = vpack.c.b16 %v7982, %v7974
        %v8415 = vpack.c.b16 %v7983, %v7975
        %v8416 = vpack.c.b16 %v7984, %v7976
        %v8417 = vpack.c.b16 %v7985, %v7977
        %v8418 = vpack.c.b16 %v7994, %v7986
        %v8419 = vpack.c.b16 %v7995, %v7987
        %v8420 = vpack.c.b16 %v7996, %v7988
        %v8421 = vpack.c.b16 %v7997, %v7989
        %v8422 = vpack.c.b16 %v7998, %v7990
        %v8423 = vpack.c.b16 %v7999, %v7991
        %v8424 = vpack.c.b16 %v8000, %v7992
        %v8425 = vpack.c.b16 %v8001, %v7993
        %v8426 = vpack.c.b16 %v8010, %v8002
        %v8427 = vpack.c.b16 %v8011, %v8003
        %v8428 = vpack.c.b16 %v8012, %v8004
        %v8429 = vpack.c.b16 %v8013, %v8005
        %v8430 = vpack.c.b16 %v8014, %v8006
        %v8431 = vpack.c.b16 %v8015, %v8007
        %v8432 = vpack.c.b16 %v8016, %v8008
        %v8433 = vpack.c.b16 %v8017, %v8009
        %v8434 = vpack.c.b16 %v8026, %v8018
        %v8435 = vpack.c.b16 %v8027, %v8019
        %v8436 = vpack.c.b16 %v8028, %v8020
        %v8437 = vpack.c.b16 %v8029, %v8021
        %v8438 = vpack.c.b16 %v8030, %v8022
        %v8439 = vpack.c.b16 %v8031, %v8023
        %v8440 = vpack.c.b16 %v8032, %v8024
        %v8441 = vpack.c.b16 %v8033, %v8025
        %v8442 = vpack.c.b16 %v8042, %v8034
        %v8443 = vpack.c.b16 %v8043, %v8035
        %v8444 = vpack.c.b16 %v8044, %v8036
        %v8445 = vpack.c.b16 %v8045, %v8037
        %v8446 = vpack.c.b16 %v8046, %v8038
        %v8447 = vpack.c.b16 %v8047, %v8039
        %v8448 = vpack.c.b16 %v8048, %v8040
        %v8449 = vpack.c.b16 %v8049, %v8041
        %v8450 = vpack.c.b16 %v8058, %v8050
        %v8451 = vpack.c.b16 %v8059, %v8051
        %v8452 = vpack.c.b16 %v8060, %v8052
        %v8453 = vpack.c.b16 %v8061, %v8053
        %v8454 = vpack.c.b16 %v8062, %v8054
        %v8455 = vpack.c.b16 %v8063, %v8055
        %v8456 = vpack.c.b16 %v8064, %v8056
        %v8457 = vpack.c.b16 %v8065, %v8057
        %v8458 = vpack.c.b16 %v8074, %v8066
        %v8459 = vpack.c.b16 %v8075, %v8067
        %v8460 = vpack.c.b16 %v8076, %v8068
        %v8461 = vpack.c.b16 %v8077, %v8069
        %v8462 = vpack.c.b16 %v8078, %v8070
        %v8463 = vpack.c.b16 %v8079, %v8071
        %v8464 = vpack.c.b16 %v8080, %v8072
        %v8465 = vpack.c.b16 %v8081, %v8073
        %v8466 = vpack.c.b16 %v8090, %v8082
        %v8467 = vpack.c.b16 %v8091, %v8083
        %v8468 = vpack.c.b16 %v8092, %v8084
        %v8469 = vpack.c.b16 %v8093, %v8085
        %v8470 = vpack.c.b16 %v8094, %v8086
        %v8471 = vpack.c.b16 %v8095, %v8087
        %v8472 = vpack.c.b16 %v8096, %v8088
        %v8473 = vpack.c.b16 %v8097, %v8089
        %v8474 = vpack.c.b16 %v8106, %v8098
        %v8475 = vpack.c.b16 %v8107, %v8099
        %v8476 = vpack.c.b16 %v8108, %v8100
        %v8477 = vpack.c.b16 %v8109, %v8101
        %v8478 = vpack.c.b16 %v8110, %v8102
        %v8479 = vpack.c.b16 %v8111, %v8103
        %v8480 = vpack.c.b16 %v8112, %v8104
        %v8481 = vpack.c.b16 %v8113, %v8105
        %v8482 = vpack.c.b16 %v8122, %v8114
        %v8483 = vpack.c.b16 %v8123, %v8115
        %v8484 = vpack.c.b16 %v8124, %v8116
        %v8485 = vpack.c.b16 %v8125, %v8117
        %v8486 = vpack.c.b16 %v8126, %v8118
        %v8487 = vpack.c.b16 %v8127, %v8119
        %v8488 = vpack.c.b16 %v8128, %v8120
        %v8489 = vpack.c.b16 %v8129, %v8121
        %v8490 = vpack.c.b16 %v8138, %v8130
        %v8491 = vpack.c.b16 %v8139, %v8131
        %v8492 = vpack.c.b16 %v8140, %v8132
        %v8493 = vpack.c.b16 %v8141, %v8133
        %v8494 = vpack.c.b16 %v8142, %v8134
        %v8495 = vpack.c.b16 %v8143, %v8135
        %v8496 = vpack.c.b16 %v8144, %v8136
        %v8497 = vpack.c.b16 %v8145, %v8137
        %v8498 = vpack.c.b16 %v8154, %v8146
        %v8499 = vpack.c.b16 %v8155, %v8147
        %v8500 = vpack.c.b16 %v8156, %v8148
        %v8501 = vpack.c.b16 %v8157, %v8149
        %v8502 = vpack.c.b16 %v8158, %v8150
        %v8503 = vpack.c.b16 %v8159, %v8151
        %v8504 = vpack.c.b16 %v8160, %v8152
        %v8505 = vpack.c.b16 %v8161, %v8153
        %v8506 = vpack.c.b16 %v8170, %v8162
        %v8507 = vpack.c.b16 %v8171, %v8163
        %v8508 = vpack.c.b16 %v8172, %v8164
        %v8509 = vpack.c.b16 %v8173, %v8165
        %v8510 = vpack.c.b16 %v8174, %v8166
        %v8511 = vpack.c.b16 %v8175, %v8167
        %v8512 = vpack.c.b16 %v8176, %v8168
        %v8513 = vpack.c.b16 %v8177, %v8169
        %v8514 = vpack.c.b16 %v8186, %v8178
        %v8515 = vpack.c.b16 %v8187, %v8179
        %v8516 = vpack.c.b16 %v8188, %v8180
        %v8517 = vpack.c.b16 %v8189, %v8181
        %v8518 = vpack.c.b16 %v8190, %v8182
        %v8519 = vpack.c.b16 %v8191, %v8183
        %v8520 = vpack.c.b16 %v8192, %v8184
        %v8521 = vpack.c.b16 %v8193, %v8185
        %v8522 = vpack.c.b16 %v8202, %v8194
        %v8523 = vpack.c.b16 %v8203, %v8195
        %v8524 = vpack.c.b16 %v8204, %v8196
        %v8525 = vpack.c.b16 %v8205, %v8197
        %v8526 = vpack.c.b16 %v8206, %v8198
        %v8527 = vpack.c.b16 %v8207, %v8199
        %v8528 = vpack.c.b16 %v8208, %v8200
        %v8529 = vpack.c.b16 %v8209, %v8201
        %v8530 = vpack.c.b16 %v8218, %v8210
        %v8531 = vpack.c.b16 %v8219, %v8211
        %v8532 = vpack.c.b16 %v8220, %v8212
        %v8533 = vpack.c.b16 %v8221, %v8213
        %v8534 = vpack.c.b16 %v8222, %v8214
        %v8535 = vpack.c.b16 %v8223, %v8215
        %v8536 = vpack.c.b16 %v8224, %v8216
        %v8537 = vpack.c.b16 %v8225, %v8217
        %v8538 = vpack.c.b16 %v8234, %v8226
        %v8539 = vpack.c.b16 %v8235, %v8227
        %v8540 = vpack.c.b16 %v8236, %v8228
        %v8541 = vpack.c.b16 %v8237, %v8229
        %v8542 = vpack.c.b16 %v8238, %v8230
        %v8543 = vpack.c.b16 %v8239, %v8231
        %v8544 = vpack.c.b16 %v8240, %v8232
        %v8545 = vpack.c.b16 %v8241, %v8233
        %v8546 = vpack.c.b16 %v8250, %v8242
        %v8547 = vpack.c.b16 %v8251, %v8243
        %v8548 = vpack.c.b16 %v8252, %v8244
        %v8549 = vpack.c.b16 %v8253, %v8245
        %v8550 = vpack.c.b16 %v8254, %v8246
        %v8551 = vpack.c.b16 %v8255, %v8247
        %v8552 = vpack.c.b16 %v8256, %v8248
        %v8553 = vpack.c.b16 %v8257, %v8249
        %v8554 = vpack.c.b16 %v8266, %v8258
        %v8555 = vpack.c.b16 %v8267, %v8259
        %v8556 = vpack.c.b16 %v8268, %v8260
        %v8557 = vpack.c.b16 %v8269, %v8261
        %v8558 = vpack.c.b16 %v8270, %v8262
        %v8559 = vpack.c.b16 %v8271, %v8263
        %v8560 = vpack.c.b16 %v8272, %v8264
        %v8561 = vpack.c.b16 %v8273, %v8265
        %v8562 = vpack.c.b16 %v8282, %v8274
        %v8563 = vpack.c.b16 %v8283, %v8275
        %v8564 = vpack.c.b16 %v8284, %v8276
        %v8565 = vpack.c.b16 %v8285, %v8277
        %v8566 = vpack.c.b16 %v8286, %v8278
        %v8567 = vpack.c.b16 %v8287, %v8279
        %v8568 = vpack.c.b16 %v8288, %v8280
        %v8569 = vpack.c.b16 %v8289, %v8281
        %v8570 = vpack.c.b16 %v8298, %v8290
        %v8571 = vpack.c.b16 %v8299, %v8291
        %v8572 = vpack.c.b16 %v8300, %v8292
        %v8573 = vpack.c.b16 %v8301, %v8293
        %v8574 = vpack.c.b16 %v8302, %v8294
        %v8575 = vpack.c.b16 %v8303, %v8295
        %v8576 = vpack.c.b16 %v8304, %v8296
        %v8577 = vpack.c.b16 %v8305, %v8297
        %v8578 = vpack.c.b16 %v8314, %v8306
        %v8579 = vpack.c.b16 %v8315, %v8307
        %v8580 = vpack.c.b16 %v8316, %v8308
        %v8581 = vpack.c.b16 %v8317, %v8309
        %v8582 = vpack.c.b16 %v8318, %v8310
        %v8583 = vpack.c.b16 %v8319, %v8311
        %v8584 = vpack.c.b16 %v8320, %v8312
        %v8585 = vpack.c.b16 %v8321, %v8313
        %v8586 = vpack.c.b16 %v8330, %v8322
        %v8587 = vpack.c.b16 %v8331, %v8323
        %v8588 = vpack.c.b16 %v8332, %v8324
        %v8589 = vpack.c.b16 %v8333, %v8325
        %v8590 = vpack.c.b16 %v8334, %v8326
        %v8591 = vpack.c.b16 %v8335, %v8327
        %v8592 = vpack.c.b16 %v8336, %v8328
        %v8593 = vpack.c.b16 %v8337, %v8329
        %8850 = vmatprep.subr.bf16.mxu0 %v8339
        %8851 = vmatpush1.bf16.msra.mxu0 %v8338
        %8852 = vmatprep.subr.bf16.mxu0 %v8347
        %8853 = vmatpush1.bf16.msra.mxu0 %v8346
        %8854 = vmatprep.subr.bf16.mxu0 %v8355
        %8855 = vmatpush1.bf16.msra.mxu0 %v8354
        %8856 = vmatprep.subr.bf16.mxu0 %v8363
        %8857 = vmatpush1.bf16.msra.mxu0 %v8362
        %8858 = vmatprep.subr.bf16.mxu0 %v8371
        %8859 = vmatpush1.bf16.msra.mxu0 %v8370
        %8860 = vmatprep.subr.bf16.mxu0 %v8379
        %8861 = vmatpush1.bf16.msra.mxu0 %v8378
        %8862 = vmatprep.subr.bf16.mxu0 %v8387
        %8863 = vmatpush1.bf16.msra.mxu0 %v8386
        %8864 = vmatprep.subr.bf16.mxu0 %v8395
        %8865 = vmatpush1.bf16.msra.mxu0 %v8394
        %8866 = vmatprep.subr.bf16.mxu0 %v8403
        %8867 = vmatpush1.bf16.msra.mxu0 %v8402
        %8868 = vmatprep.subr.bf16.mxu0 %v8411
        %8869 = vmatpush1.bf16.msra.mxu0 %v8410
        %8870 = vmatprep.subr.bf16.mxu0 %v8419
        %8871 = vmatpush1.bf16.msra.mxu0 %v8418
        %8872 = vmatprep.subr.bf16.mxu0 %v8427
        %8873 = vmatpush1.bf16.msra.mxu0 %v8426
        %8874 = vmatprep.subr.bf16.mxu0 %v8435
        %8875 = vmatpush1.bf16.msra.mxu0 %v8434
        %8876 = vmatprep.subr.bf16.mxu0 %v8443
        %8877 = vmatpush1.bf16.msra.mxu0 %v8442
        %8878 = vmatprep.subr.bf16.mxu0 %v8451
        %8879 = vmatpush1.bf16.msra.mxu0 %v8450
        %8880 = vmatprep.subr.bf16.mxu0 %v8459
        %8881 = vmatpush1.bf16.msra.mxu0 %v8458
        %8882 = vmatprep.mubr.bf16.mxu0 %v7270
        %8883 = vmatmul.mubr.bf16.gmra.mrb[0].mxu0 %v7269
        %v8884 = vpop.f32.mrb[0].mxu0
        %v8885 = vadd.f32 %v7533, %v8884
        %v8886 = vpop.f32.mrb[0].mxu0
        %v8887 = vadd.f32 %v7537, %v8886
        %v8888 = vpop.f32.mrb[0].mxu0
        %v8889 = vadd.f32 %v7533, %v8888
        %v8890 = vpop.f32.mrb[0].mxu0
        %v8891 = vadd.f32 %v7537, %v8890
        %8892 = vdwg.mxu0
        %8893 = vmatprep.subr.bf16.mxu0 %v8467
        %8894 = vmatpush1.bf16.msra.mxu0 %v8466
        %8895 = vmatprep.subr.bf16.mxu0 %v8475
        %8896 = vmatpush1.bf16.msra.mxu0 %v8474
        %8897 = vmatprep.subr.bf16.mxu0 %v8483
        %8898 = vmatpush1.bf16.msra.mxu0 %v8482
        %8899 = vmatprep.subr.bf16.mxu0 %v8491
        %8900 = vmatpush1.bf16.msra.mxu0 %v8490
        %8901 = vmatprep.subr.bf16.mxu0 %v8499
        %8902 = vmatpush1.bf16.msra.mxu0 %v8498
        %8903 = vmatprep.subr.bf16.mxu0 %v8507
        %8904 = vmatpush1.bf16.msra.mxu0 %v8506
        %8905 = vmatprep.subr.bf16.mxu0 %v8515
        %8906 = vmatpush1.bf16.msra.mxu0 %v8514
        %8907 = vmatprep.subr.bf16.mxu0 %v8523
        %8908 = vmatpush1.bf16.msra.mxu0 %v8522
        %8909 = vmatprep.subr.bf16.mxu0 %v8531
        %8910 = vmatpush1.bf16.msra.mxu0 %v8530
        %8911 = vmatprep.subr.bf16.mxu0 %v8539
        %8912 = vmatpush1.bf16.msra.mxu0 %v8538
        %8913 = vmatprep.subr.bf16.mxu0 %v8547
        %8914 = vmatpush1.bf16.msra.mxu0 %v8546
        %8915 = vmatprep.subr.bf16.mxu0 %v8555
        %8916 = vmatpush1.bf16.msra.mxu0 %v8554
        %8917 = vmatprep.subr.bf16.mxu0 %v8563
        %8918 = vmatpush1.bf16.msra.mxu0 %v8562
        %8919 = vmatprep.subr.bf16.mxu0 %v8571
        %8920 = vmatpush1.bf16.msra.mxu0 %v8570
        %8921 = vmatprep.subr.bf16.mxu0 %v8579
        %8922 = vmatpush1.bf16.msra.mxu0 %v8578
        %8923 = vmatprep.subr.bf16.mxu0 %v8587
        %8924 = vmatpush1.bf16.msra.mxu0 %v8586
        %8925 = vmatprep.mubr.bf16.mxu0 %v7272
        %8926 = vmatmul.mubr.bf16.gmra.mrb[0].mxu0 %v7271
        %v8927 = vpop.f32.mrb[0].mxu0
        %v8928 = vadd.f32 %v8885, %v8927
        %v8929 = vpop.f32.mrb[0].mxu0
        %v8930 = vadd.f32 %v8887, %v8929
        %v8931 = vpop.f32.mrb[0].mxu0
        %v8932 = vadd.f32 %v8889, %v8931
        %v8933 = vpop.f32.mrb[0].mxu0
        %v8934 = vadd.f32 %v8891, %v8933
        %8935 = vdwg.mxu0
        %8936 = vmatprep.subr.bf16.mxu0 %v8341
        %8937 = vmatpush1.bf16.msra.mxu0 %v8340
        %8938 = vmatprep.subr.bf16.mxu0 %v8349
        %8939 = vmatpush1.bf16.msra.mxu0 %v8348
        %8940 = vmatprep.subr.bf16.mxu0 %v8357
        %8941 = vmatpush1.bf16.msra.mxu0 %v8356
        %8942 = vmatprep.subr.bf16.mxu0 %v8365
        %8943 = vmatpush1.bf16.msra.mxu0 %v8364
        %8944 = vmatprep.subr.bf16.mxu0 %v8373
        %8945 = vmatpush1.bf16.msra.mxu0 %v8372
        %8946 = vmatprep.subr.bf16.mxu0 %v8381
        %8947 = vmatpush1.bf16.msra.mxu0 %v8380
        %8948 = vmatprep.subr.bf16.mxu0 %v8389
        %8949 = vmatpush1.bf16.msra.mxu0 %v8388
        %8950 = vmatprep.subr.bf16.mxu0 %v8397
        %8951 = vmatpush1.bf16.msra.mxu0 %v8396
        %8952 = vmatprep.subr.bf16.mxu0 %v8405
        %8953 = vmatpush1.bf16.msra.mxu0 %v8404
        %8954 = vmatprep.subr.bf16.mxu0 %v8413
        %8955 = vmatpush1.bf16.msra.mxu0 %v8412
        %8956 = vmatprep.subr.bf16.mxu0 %v8421
        %8957 = vmatpush1.bf16.msra.mxu0 %v8420
        %8958 = vmatprep.subr.bf16.mxu0 %v8429
        %8959 = vmatpush1.bf16.msra.mxu0 %v8428
        %8960 = vmatprep.subr.bf16.mxu0 %v8437
        %8961 = vmatpush1.bf16.msra.mxu0 %v8436
        %8962 = vmatprep.subr.bf16.mxu0 %v8445
        %8963 = vmatpush1.bf16.msra.mxu0 %v8444
        %8964 = vmatprep.subr.bf16.mxu0 %v8453
        %8965 = vmatpush1.bf16.msra.mxu0 %v8452
        %8966 = vmatprep.subr.bf16.mxu0 %v8461
        %8967 = vmatpush1.bf16.msra.mxu0 %v8460
        %8968 = vmatprep.mubr.bf16.mxu0 %v7270
        %8969 = vmatmul.mubr.bf16.gmra.mrb[0].mxu0 %v7269
        %v8970 = vpop.f32.mrb[0].mxu0
        %v8971 = vadd.f32 %v7541, %v8970
        %v8972 = vpop.f32.mrb[0].mxu0
        %v8973 = vadd.f32 %v7545, %v8972
        %v8974 = vpop.f32.mrb[0].mxu0
        %v8975 = vadd.f32 %v7541, %v8974
        %v8976 = vpop.f32.mrb[0].mxu0
        %v8977 = vadd.f32 %v7545, %v8976
        %8978 = vdwg.mxu0
        %8979 = vmatprep.subr.bf16.mxu0 %v8469
        %8980 = vmatpush1.bf16.msra.mxu0 %v8468
        %8981 = vmatprep.subr.bf16.mxu0 %v8477
        %8982 = vmatpush1.bf16.msra.mxu0 %v8476
        %8983 = vmatprep.subr.bf16.mxu0 %v8485
        %8984 = vmatpush1.bf16.msra.mxu0 %v8484
        %8985 = vmatprep.subr.bf16.mxu0 %v8493
        %8986 = vmatpush1.bf16.msra.mxu0 %v8492
        %8987 = vmatprep.subr.bf16.mxu0 %v8501
        %8988 = vmatpush1.bf16.msra.mxu0 %v8500
        %8989 = vmatprep.subr.bf16.mxu0 %v8509
        %8990 = vmatpush1.bf16.msra.mxu0 %v8508
        %8991 = vmatprep.subr.bf16.mxu0 %v8517
        %8992 = vmatpush1.bf16.msra.mxu0 %v8516
        %8993 = vmatprep.subr.bf16.mxu0 %v8525
        %8994 = vmatpush1.bf16.msra.mxu0 %v8524
        %8995 = vmatprep.subr.bf16.mxu0 %v8533
        %8996 = vmatpush1.bf16.msra.mxu0 %v8532
        %8997 = vmatprep.subr.bf16.mxu0 %v8541
        %8998 = vmatpush1.bf16.msra.mxu0 %v8540
        %8999 = vmatprep.subr.bf16.mxu0 %v8549
        %9000 = vmatpush1.bf16.msra.mxu0 %v8548
        %9001 = vmatprep.subr.bf16.mxu0 %v8557
        %9002 = vmatpush1.bf16.msra.mxu0 %v8556
        %9003 = vmatprep.subr.bf16.mxu0 %v8565
        %9004 = vmatpush1.bf16.msra.mxu0 %v8564
        %9005 = vmatprep.subr.bf16.mxu0 %v8573
        %9006 = vmatpush1.bf16.msra.mxu0 %v8572
        %9007 = vmatprep.subr.bf16.mxu0 %v8581
        %9008 = vmatpush1.bf16.msra.mxu0 %v8580
        %9009 = vmatprep.subr.bf16.mxu0 %v8589
        %9010 = vmatpush1.bf16.msra.mxu0 %v8588
        %9011 = vmatprep.mubr.bf16.mxu0 %v7272
        %9012 = vmatmul.mubr.bf16.gmra.mrb[0].mxu0 %v7271
        %v9013 = vpop.f32.mrb[0].mxu0
        %v9014 = vadd.f32 %v8971, %v9013
        %v9015 = vpop.f32.mrb[0].mxu0
        %v9016 = vadd.f32 %v8973, %v9015
        %v9017 = vpop.f32.mrb[0].mxu0
        %v9018 = vadd.f32 %v8975, %v9017
        %v9019 = vpop.f32.mrb[0].mxu0
        %v9020 = vadd.f32 %v8977, %v9019
        %9021 = vdwg.mxu0
        %9022 = vmatprep.subr.bf16.mxu0 %v8343
        %9023 = vmatpush1.bf16.msra.mxu0 %v8342
        %9024 = vmatprep.subr.bf16.mxu0 %v8351
        %9025 = vmatpush1.bf16.msra.mxu0 %v8350
        %9026 = vmatprep.subr.bf16.mxu0 %v8359
        %9027 = vmatpush1.bf16.msra.mxu0 %v8358
        %9028 = vmatprep.subr.bf16.mxu0 %v8367
        %9029 = vmatpush1.bf16.msra.mxu0 %v8366
        %9030 = vmatprep.subr.bf16.mxu0 %v8375
        %9031 = vmatpush1.bf16.msra.mxu0 %v8374
        %9032 = vmatprep.subr.bf16.mxu0 %v8383
        %9033 = vmatpush1.bf16.msra.mxu0 %v8382
        %9034 = vmatprep.subr.bf16.mxu0 %v8391
        %9035 = vmatpush1.bf16.msra.mxu0 %v8390
        %9036 = vmatprep.subr.bf16.mxu0 %v8399
        %9037 = vmatpush1.bf16.msra.mxu0 %v8398
        %9038 = vmatprep.subr.bf16.mxu0 %v8407
        %9039 = vmatpush1.bf16.msra.mxu0 %v8406
        %9040 = vmatprep.subr.bf16.mxu0 %v8415
        %9041 = vmatpush1.bf16.msra.mxu0 %v8414
        %9042 = vmatprep.subr.bf16.mxu0 %v8423
        %9043 = vmatpush1.bf16.msra.mxu0 %v8422
        %9044 = vmatprep.subr.bf16.mxu0 %v8431
        %9045 = vmatpush1.bf16.msra.mxu0 %v8430
        %9046 = vmatprep.subr.bf16.mxu0 %v8439
        %9047 = vmatpush1.bf16.msra.mxu0 %v8438
        %9048 = vmatprep.subr.bf16.mxu0 %v8447
        %9049 = vmatpush1.bf16.msra.mxu0 %v8446
        %9050 = vmatprep.subr.bf16.mxu0 %v8455
        %9051 = vmatpush1.bf16.msra.mxu0 %v8454
        %9052 = vmatprep.subr.bf16.mxu0 %v8463
        %9053 = vmatpush1.bf16.msra.mxu0 %v8462
        %9054 = vmatprep.mubr.bf16.mxu0 %v7270
        %9055 = vmatmul.mubr.bf16.gmra.mrb[0].mxu0 %v7269
        %v9056 = vpop.f32.mrb[0].mxu0
        %v9057 = vadd.f32 %v7549, %v9056
        %v9058 = vpop.f32.mrb[0].mxu0
        %v9059 = vadd.f32 %v7553, %v9058
        %v9060 = vpop.f32.mrb[0].mxu0
        %v9061 = vadd.f32 %v7549, %v9060
        %v9062 = vpop.f32.mrb[0].mxu0
        %v9063 = vadd.f32 %v7553, %v9062
        %9064 = vdwg.mxu0
        %9065 = vmatprep.subr.bf16.mxu0 %v8471
        %9066 = vmatpush1.bf16.msra.mxu0 %v8470
        %9067 = vmatprep.subr.bf16.mxu0 %v8479
        %9068 = vmatpush1.bf16.msra.mxu0 %v8478
        %9069 = vmatprep.subr.bf16.mxu0 %v8487
        %9070 = vmatpush1.bf16.msra.mxu0 %v8486
        %9071 = vmatprep.subr.bf16.mxu0 %v8495
        %9072 = vmatpush1.bf16.msra.mxu0 %v8494
        %9073 = vmatprep.subr.bf16.mxu0 %v8503
        %9074 = vmatpush1.bf16.msra.mxu0 %v8502
        %9075 = vmatprep.subr.bf16.mxu0 %v8511
        %9076 = vmatpush1.bf16.msra.mxu0 %v8510
        %9077 = vmatprep.subr.bf16.mxu0 %v8519
        %9078 = vmatpush1.bf16.msra.mxu0 %v8518
        %9079 = vmatprep.subr.bf16.mxu0 %v8527
        %9080 = vmatpush1.bf16.msra.mxu0 %v8526
        %9081 = vmatprep.subr.bf16.mxu0 %v8535
        %9082 = vmatpush1.bf16.msra.mxu0 %v8534
        %9083 = vmatprep.subr.bf16.mxu0 %v8543
        %9084 = vmatpush1.bf16.msra.mxu0 %v8542
        %9085 = vmatprep.subr.bf16.mxu0 %v8551
        %9086 = vmatpush1.bf16.msra.mxu0 %v8550
        %9087 = vmatprep.subr.bf16.mxu0 %v8559
        %9088 = vmatpush1.bf16.msra.mxu0 %v8558
        %9089 = vmatprep.subr.bf16.mxu0 %v8567
        %9090 = vmatpush1.bf16.msra.mxu0 %v8566
        %9091 = vmatprep.subr.bf16.mxu0 %v8575
        %9092 = vmatpush1.bf16.msra.mxu0 %v8574
        %9093 = vmatprep.subr.bf16.mxu0 %v8583
        %9094 = vmatpush1.bf16.msra.mxu0 %v8582
        %9095 = vmatprep.subr.bf16.mxu0 %v8591
        %9096 = vmatpush1.bf16.msra.mxu0 %v8590
        %9097 = vmatprep.mubr.bf16.mxu0 %v7272
        %9098 = vmatmul.mubr.bf16.gmra.mrb[0].mxu0 %v7271
        %v9099 = vpop.f32.mrb[0].mxu0
        %v9100 = vadd.f32 %v9057, %v9099
        %v9101 = vpop.f32.mrb[0].mxu0
        %v9102 = vadd.f32 %v9059, %v9101
        %v9103 = vpop.f32.mrb[0].mxu0
        %v9104 = vadd.f32 %v9061, %v9103
        %v9105 = vpop.f32.mrb[0].mxu0
        %v9106 = vadd.f32 %v9063, %v9105
        %9107 = vdwg.mxu0
        %9108 = vmatprep.subr.bf16.mxu0 %v8345
        %9109 = vmatpush1.bf16.msra.mxu0 %v8344
        %9110 = vmatprep.subr.bf16.mxu0 %v8353
        %9111 = vmatpush1.bf16.msra.mxu0 %v8352
        %9112 = vmatprep.subr.bf16.mxu0 %v8361
        %9113 = vmatpush1.bf16.msra.mxu0 %v8360
        %9114 = vmatprep.subr.bf16.mxu0 %v8369
        %9115 = vmatpush1.bf16.msra.mxu0 %v8368
        %9116 = vmatprep.subr.bf16.mxu0 %v8377
        %9117 = vmatpush1.bf16.msra.mxu0 %v8376
        %9118 = vmatprep.subr.bf16.mxu0 %v8385
        %9119 = vmatpush1.bf16.msra.mxu0 %v8384
        %9120 = vmatprep.subr.bf16.mxu0 %v8393
        %9121 = vmatpush1.bf16.msra.mxu0 %v8392
        %9122 = vmatprep.subr.bf16.mxu0 %v8401
        %9123 = vmatpush1.bf16.msra.mxu0 %v8400
        %9124 = vmatprep.subr.bf16.mxu0 %v8409
        %9125 = vmatpush1.bf16.msra.mxu0 %v8408
        %9126 = vmatprep.subr.bf16.mxu0 %v8417
        %9127 = vmatpush1.bf16.msra.mxu0 %v8416
        %9128 = vmatprep.subr.bf16.mxu0 %v8425
        %9129 = vmatpush1.bf16.msra.mxu0 %v8424
        %9130 = vmatprep.subr.bf16.mxu0 %v8433
        %9131 = vmatpush1.bf16.msra.mxu0 %v8432
        %9132 = vmatprep.subr.bf16.mxu0 %v8441
        %9133 = vmatpush1.bf16.msra.mxu0 %v8440
        %9134 = vmatprep.subr.bf16.mxu0 %v8449
        %9135 = vmatpush1.bf16.msra.mxu0 %v8448
        %9136 = vmatprep.subr.bf16.mxu0 %v8457
        %9137 = vmatpush1.bf16.msra.mxu0 %v8456
        %9138 = vmatprep.subr.bf16.mxu0 %v8465
        %9139 = vmatpush1.bf16.msra.mxu0 %v8464
        %9140 = vmatprep.mubr.bf16.mxu0 %v7270
        %9141 = vmatmul.mubr.bf16.gmra.mrb[0].mxu0 %v7269
        %v9142 = vpop.f32.mrb[0].mxu0
        %v9143 = vadd.f32 %v7557, %v9142
        %v9144 = vpop.f32.mrb[0].mxu0
        %v9145 = vadd.f32 %v7561, %v9144
        %v9146 = vpop.f32.mrb[0].mxu0
        %v9147 = vadd.f32 %v7557, %v9146
        %v9148 = vpop.f32.mrb[0].mxu0
        %v9149 = vadd.f32 %v7561, %v9148
        %9150 = vdwg.mxu0
        %9151 = vmatprep.subr.bf16.mxu0 %v8473
        %9152 = vmatpush1.bf16.msra.mxu0 %v8472
        %9153 = vmatprep.subr.bf16.mxu0 %v8481
        %9154 = vmatpush1.bf16.msra.mxu0 %v8480
        %9155 = vmatprep.subr.bf16.mxu0 %v8489
        %9156 = vmatpush1.bf16.msra.mxu0 %v8488
        %9157 = vmatprep.subr.bf16.mxu0 %v8497
        %9158 = vmatpush1.bf16.msra.mxu0 %v8496
        %9159 = vmatprep.subr.bf16.mxu0 %v8505
        %9160 = vmatpush1.bf16.msra.mxu0 %v8504
        %9161 = vmatprep.subr.bf16.mxu0 %v8513
        %9162 = vmatpush1.bf16.msra.mxu0 %v8512
        %9163 = vmatprep.subr.bf16.mxu0 %v8521
        %9164 = vmatpush1.bf16.msra.mxu0 %v8520
        %9165 = vmatprep.subr.bf16.mxu0 %v8529
        %9166 = vmatpush1.bf16.msra.mxu0 %v8528
        %9167 = vmatprep.subr.bf16.mxu0 %v8537
        %9168 = vmatpush1.bf16.msra.mxu0 %v8536
        %9169 = vmatprep.subr.bf16.mxu0 %v8545
        %9170 = vmatpush1.bf16.msra.mxu0 %v8544
        %9171 = vmatprep.subr.bf16.mxu0 %v8553
        %9172 = vmatpush1.bf16.msra.mxu0 %v8552
        %9173 = vmatprep.subr.bf16.mxu0 %v8561
        %9174 = vmatpush1.bf16.msra.mxu0 %v8560
        %9175 = vmatprep.subr.bf16.mxu0 %v8569
        %9176 = vmatpush1.bf16.msra.mxu0 %v8568
        %9177 = vmatprep.subr.bf16.mxu0 %v8577
        %9178 = vmatpush1.bf16.msra.mxu0 %v8576
        %9179 = vmatprep.subr.bf16.mxu0 %v8585
        %9180 = vmatpush1.bf16.msra.mxu0 %v8584
        %9181 = vmatprep.subr.bf16.mxu0 %v8593
        %9182 = vmatpush1.bf16.msra.mxu0 %v8592
        %9183 = vmatprep.mubr.bf16.mxu0 %v7272
        %9184 = vmatmul.mubr.bf16.gmra.mrb[0].mxu0 %v7271
        %v9185 = vpop.f32.mrb[0].mxu0
        %v9186 = vadd.f32 %v9143, %v9185
        %v9187 = vpop.f32.mrb[0].mxu0
        %v9188 = vadd.f32 %v9145, %v9187
        %v9189 = vpop.f32.mrb[0].mxu0
        %v9190 = vadd.f32 %v9147, %v9189
        %v9191 = vpop.f32.mrb[0].mxu0
        %v9192 = vadd.f32 %v9149, %v9191
        %9193 = vdwg.mxu0
        %v9194 = vmul.f32 %v8928, %v8928
        %v9195 = vmul.f32 %v8930, %v8930
        %v9196 = vmul.f32 %v9014, %v9014
        %v9197 = vmul.f32 %v9016, %v9016
        %v9198 = vmul.f32 %v9100, %v9100
        %v9199 = vmul.f32 %v9102, %v9102
        %v9200 = vmul.f32 %v9186, %v9186
        %v9201 = vmul.f32 %v9188, %v9188
        %v9202 = vmul.f32 %v8932, %v8932
        %v9203 = vmul.f32 %v8934, %v8934
        %v9204 = vmul.f32 %v9018, %v9018
        %v9205 = vmul.f32 %v9020, %v9020
        %v9206 = vmul.f32 %v9104, %v9104
        %v9207 = vmul.f32 %v9106, %v9106
        %v9208 = vmul.f32 %v9190, %v9190
        %v9209 = vmul.f32 %v9192, %v9192
        %v9210 = vmul.f32 %v8928, %v9194
        %v9211 = vmul.f32 %v8930, %v9195
        %v9212 = vmul.f32 %v9014, %v9196
        %v9213 = vmul.f32 %v9016, %v9197
        %v9214 = vmul.f32 %v9100, %v9198
        %v9215 = vmul.f32 %v9102, %v9199
        %v9216 = vmul.f32 %v9186, %v9200
        %v9217 = vmul.f32 %v9188, %v9201
        %v9218 = vmul.f32 %v8932, %v9202
        %v9219 = vmul.f32 %v8934, %v9203
        %v9220 = vmul.f32 %v9018, %v9204
        %v9221 = vmul.f32 %v9020, %v9205
        %v9222 = vmul.f32 %v9104, %v9206
        %v9223 = vmul.f32 %v9106, %v9207
        %v9224 = vmul.f32 %v9190, %v9208
        %v9225 = vmul.f32 %v9192, %v9209
        %v9226 = vmul.f32 %v9210, 0.044715
        %v9227 = vmul.f32 %v9211, 0.044715
        %v9228 = vmul.f32 %v9212, 0.044715
        %v9229 = vmul.f32 %v9213, 0.044715
        %v9230 = vmul.f32 %v9214, 0.044715
        %v9231 = vmul.f32 %v9215, 0.044715
        %v9232 = vmul.f32 %v9216, 0.044715
        %v9233 = vmul.f32 %v9217, 0.044715
        %v9234 = vmul.f32 %v9218, 0.044715
        %v9235 = vmul.f32 %v9219, 0.044715
        %v9236 = vmul.f32 %v9220, 0.044715
        %v9237 = vmul.f32 %v9221, 0.044715
        %v9238 = vmul.f32 %v9222, 0.044715
        %v9239 = vmul.f32 %v9223, 0.044715
        %v9240 = vmul.f32 %v9224, 0.044715
        %v9241 = vmul.f32 %v9225, 0.044715
        %v9242 = vadd.f32 %v8928, %v9226
        %v9243 = vadd.f32 %v8930, %v9227
        %v9244 = vadd.f32 %v9014, %v9228
        %v9245 = vadd.f32 %v9016, %v9229
        %v9246 = vadd.f32 %v9100, %v9230
        %v9247 = vadd.f32 %v9102, %v9231
        %v9248 = vadd.f32 %v9186, %v9232
        %v9249 = vadd.f32 %v9188, %v9233
        %v9250 = vadd.f32 %v8932, %v9234
        %v9251 = vadd.f32 %v8934, %v9235
        %v9252 = vadd.f32 %v9018, %v9236
        %v9253 = vadd.f32 %v9020, %v9237
        %v9254 = vadd.f32 %v9104, %v9238
        %v9255 = vadd.f32 %v9106, %v9239
        %v9256 = vadd.f32 %v9190, %v9240
        %v9257 = vadd.f32 %v9192, %v9241
        %v9258 = vmul.f32 %v9242, 0.7978846
        %v9259 = vmul.f32 %v9243, 0.7978846
        %v9260 = vmul.f32 %v9244, 0.7978846
        %v9261 = vmul.f32 %v9245, 0.7978846
        %v9262 = vmul.f32 %v9246, 0.7978846
        %v9263 = vmul.f32 %v9247, 0.7978846
        %v9264 = vmul.f32 %v9248, 0.7978846
        %v9265 = vmul.f32 %v9249, 0.7978846
        %v9266 = vmul.f32 %v9250, 0.7978846
        %v9267 = vmul.f32 %v9251, 0.7978846
        %v9268 = vmul.f32 %v9252, 0.7978846
        %v9269 = vmul.f32 %v9253, 0.7978846
        %v9270 = vmul.f32 %v9254, 0.7978846
        %v9271 = vmul.f32 %v9255, 0.7978846
        %v9272 = vmul.f32 %v9256, 0.7978846
        %v9273 = vmul.f32 %v9257, 0.7978846
        %v9274 = vtanh.pop %v9258
        %v9275 = vtanh.pop %v9259
        %v9276 = vtanh.pop %v9260
        %v9277 = vtanh.pop %v9261
        %v9278 = vtanh.pop %v9262
        %v9279 = vtanh.pop %v9263
        %v9280 = vtanh.pop %v9264
        %v9281 = vtanh.pop %v9265
        %v9282 = vtanh.pop %v9266
        %v9283 = vtanh.pop %v9267
        %v9284 = vtanh.pop %v9268
        %v9285 = vtanh.pop %v9269
        %v9286 = vtanh.pop %v9270
        %v9287 = vtanh.pop %v9271
        %v9288 = vtanh.pop %v9272
        %v9289 = vtanh.pop %v9273
        %v9290 = vadd.f32 %v9274, 1.0
        %v9291 = vadd.f32 %v9275, 1.0
        %v9292 = vadd.f32 %v9276, 1.0
        %v9293 = vadd.f32 %v9277, 1.0
        %v9294 = vadd.f32 %v9278, 1.0
        %v9295 = vadd.f32 %v9279, 1.0
        %v9296 = vadd.f32 %v9280, 1.0
        %v9297 = vadd.f32 %v9281, 1.0
        %v9298 = vadd.f32 %v9282, 1.0
        %v9299 = vadd.f32 %v9283, 1.0
        %v9300 = vadd.f32 %v9284, 1.0
        %v9301 = vadd.f32 %v9285, 1.0
        %v9302 = vadd.f32 %v9286, 1.0
        %v9303 = vadd.f32 %v9287, 1.0
        %v9304 = vadd.f32 %v9288, 1.0
        %v9305 = vadd.f32 %v9289, 1.0
        %v9306 = vmul.f32 %v9290, 0.5
        %v9307 = vmul.f32 %v9291, 0.5
        %v9308 = vmul.f32 %v9292, 0.5
        %v9309 = vmul.f32 %v9293, 0.5
        %v9310 = vmul.f32 %v9294, 0.5
        %v9311 = vmul.f32 %v9295, 0.5
        %v9312 = vmul.f32 %v9296, 0.5
        %v9313 = vmul.f32 %v9297, 0.5
        %v9314 = vmul.f32 %v9298, 0.5
        %v9315 = vmul.f32 %v9299, 0.5
        %v9316 = vmul.f32 %v9300, 0.5
        %v9317 = vmul.f32 %v9301, 0.5
        %v9318 = vmul.f32 %v9302, 0.5
        %v9319 = vmul.f32 %v9303, 0.5
        %v9320 = vmul.f32 %v9304, 0.5
        %v9321 = vmul.f32 %v9305, 0.5
        %v9322 = vmul.f32 %v8928, %v9306
        %v9323 = vmul.f32 %v8930, %v9307
        %v9324 = vmul.f32 %v9014, %v9308
        %v9325 = vmul.f32 %v9016, %v9309
        %v9326 = vmul.f32 %v9100, %v9310
        %v9327 = vmul.f32 %v9102, %v9311
        %v9328 = vmul.f32 %v9186, %v9312
        %v9329 = vmul.f32 %v9188, %v9313
        %v9330 = vmul.f32 %v8932, %v9314
        %v9331 = vmul.f32 %v8934, %v9315
        %v9332 = vmul.f32 %v9018, %v9316
        %v9333 = vmul.f32 %v9020, %v9317
        %v9334 = vmul.f32 %v9104, %v9318
        %v9335 = vmul.f32 %v9106, %v9319
        %v9336 = vmul.f32 %v9190, %v9320
        %v9337 = vmul.f32 %v9192, %v9321
        %v9338 = vpack.c.bf16 %v9330, %v9322
        %v9339 = vpack.c.bf16 %v9331, %v9323
        %v9340 = vpack.c.bf16 %v9332, %v9324
        %v9341 = vpack.c.bf16 %v9333, %v9325
        %v9342 = vpack.c.bf16 %v9334, %v9326
        %v9343 = vpack.c.bf16 %v9335, %v9327
        %v9344 = vpack.c.bf16 %v9336, %v9328
        %v9345 = vpack.c.bf16 %v9337, %v9329
        %v9346 = vld [vmem:[%s429] sm:$0xff]
        %v9347 = vld [vmem:[%s429 + $0x8] sm:$0xff]
        %v9348 = vld [vmem:[%s429 + $0x10] sm:$0xff]
        %v9349 = vld [vmem:[%s429 + $0x18] sm:$0xff]
        %v9350 = vld [vmem:[%s429 + $0x20] sm:$0xff]
        %v9351 = vld [vmem:[%s429 + $0x28] sm:$0xff]
        %v9352 = vld [vmem:[%s429 + $0x30] sm:$0xff]
        %v9353 = vld [vmem:[%s429 + $0x38] sm:$0xff]
        %v9354 = vld [vmem:[%s429 + $0x40] sm:$0xff]
        %v9355 = vld [vmem:[%s429 + $0x48] sm:$0xff]
        %v9356 = vld [vmem:[%s429 + $0x50] sm:$0xff]
        %v9357 = vld [vmem:[%s429 + $0x58] sm:$0xff]
        %v9358 = vld [vmem:[%s429 + $0x60] sm:$0xff]
        %v9359 = vld [vmem:[%s429 + $0x68] sm:$0xff]
        %v9360 = vld [vmem:[%s429 + $0x70] sm:$0xff]
        %v9361 = vld [vmem:[%s429 + $0x78] sm:$0xff]
        %v9362 = vld [vmem:[%s429 + $0x80] sm:$0xff]
        %v9363 = vld [vmem:[%s429 + $0x88] sm:$0xff]
        %v9364 = vld [vmem:[%s429 + $0x90] sm:$0xff]
        %v9365 = vld [vmem:[%s429 + $0x98] sm:$0xff]
        %v9366 = vld [vmem:[%s429 + $0xa0] sm:$0xff]
        %v9367 = vld [vmem:[%s429 + $0xa8] sm:$0xff]
        %v9368 = vld [vmem:[%s429 + $0xb0] sm:$0xff]
        %v9369 = vld [vmem:[%s429 + $0xb8] sm:$0xff]
        %v9370 = vld [vmem:[%s429 + $0xc0] sm:$0xff]
        %v9371 = vld [vmem:[%s429 + $0xc8] sm:$0xff]
        %v9372 = vld [vmem:[%s429 + $0xd0] sm:$0xff]
        %v9373 = vld [vmem:[%s429 + $0xd8] sm:$0xff]
        %v9374 = vld [vmem:[%s429 + $0xe0] sm:$0xff]
        %v9375 = vld [vmem:[%s429 + $0xe8] sm:$0xff]
        %v9376 = vld [vmem:[%s429 + $0xf0] sm:$0xff]
        %v9377 = vld [vmem:[%s429 + $0xf8] sm:$0xff]
        %v9378 = vld [vmem:[%s429 + $0x100] sm:$0xff]
        %v9379 = vld [vmem:[%s429 + $0x108] sm:$0xff]
        %v9380 = vld [vmem:[%s429 + $0x110] sm:$0xff]
        %v9381 = vld [vmem:[%s429 + $0x118] sm:$0xff]
        %v9382 = vld [vmem:[%s429 + $0x120] sm:$0xff]
        %v9383 = vld [vmem:[%s429 + $0x128] sm:$0xff]
        %v9384 = vld [vmem:[%s429 + $0x130] sm:$0xff]
        %v9385 = vld [vmem:[%s429 + $0x138] sm:$0xff]
        %v9386 = vld [vmem:[%s429 + $0x140] sm:$0xff]
        %v9387 = vld [vmem:[%s429 + $0x148] sm:$0xff]
        %v9388 = vld [vmem:[%s429 + $0x150] sm:$0xff]
        %v9389 = vld [vmem:[%s429 + $0x158] sm:$0xff]
        %v9390 = vld [vmem:[%s429 + $0x160] sm:$0xff]
        %v9391 = vld [vmem:[%s429 + $0x168] sm:$0xff]
        %v9392 = vld [vmem:[%s429 + $0x170] sm:$0xff]
        %v9393 = vld [vmem:[%s429 + $0x178] sm:$0xff]
        %v9394 = vld [vmem:[%s429 + $0x180] sm:$0xff]
        %v9395 = vld [vmem:[%s429 + $0x188] sm:$0xff]
        %v9396 = vld [vmem:[%s429 + $0x190] sm:$0xff]
        %v9397 = vld [vmem:[%s429 + $0x198] sm:$0xff]
        %v9398 = vld [vmem:[%s429 + $0x1a0] sm:$0xff]
        %v9399 = vld [vmem:[%s429 + $0x1a8] sm:$0xff]
        %v9400 = vld [vmem:[%s429 + $0x1b0] sm:$0xff]
        %v9401 = vld [vmem:[%s429 + $0x1b8] sm:$0xff]
        %v9402 = vld [vmem:[%s429 + $0x1c0] sm:$0xff]
        %v9403 = vld [vmem:[%s429 + $0x1c8] sm:$0xff]
        %v9404 = vld [vmem:[%s429 + $0x1d0] sm:$0xff]
        %v9405 = vld [vmem:[%s429 + $0x1d8] sm:$0xff]
        %v9406 = vld [vmem:[%s429 + $0x1e0] sm:$0xff]
        %v9407 = vld [vmem:[%s429 + $0x1e8] sm:$0xff]
        %v9408 = vld [vmem:[%s429 + $0x1f0] sm:$0xff]
        %v9409 = vld [vmem:[%s429 + $0x1f8] sm:$0xff]
        %v9410 = vld [vmem:[%s429 + $0x200] sm:$0xff]
        %v9411 = vld [vmem:[%s429 + $0x208] sm:$0xff]
        %v9412 = vld [vmem:[%s429 + $0x210] sm:$0xff]
        %v9413 = vld [vmem:[%s429 + $0x218] sm:$0xff]
        %v9414 = vld [vmem:[%s429 + $0x220] sm:$0xff]
        %v9415 = vld [vmem:[%s429 + $0x228] sm:$0xff]
        %v9416 = vld [vmem:[%s429 + $0x230] sm:$0xff]
        %v9417 = vld [vmem:[%s429 + $0x238] sm:$0xff]
        %v9418 = vld [vmem:[%s429 + $0x240] sm:$0xff]
        %v9419 = vld [vmem:[%s429 + $0x248] sm:$0xff]
        %v9420 = vld [vmem:[%s429 + $0x250] sm:$0xff]
        %v9421 = vld [vmem:[%s429 + $0x258] sm:$0xff]
        %v9422 = vld [vmem:[%s429 + $0x260] sm:$0xff]
        %v9423 = vld [vmem:[%s429 + $0x268] sm:$0xff]
        %v9424 = vld [vmem:[%s429 + $0x270] sm:$0xff]
        %v9425 = vld [vmem:[%s429 + $0x278] sm:$0xff]
        %v9426 = vld [vmem:[%s429 + $0x280] sm:$0xff]
        %v9427 = vld [vmem:[%s429 + $0x288] sm:$0xff]
        %v9428 = vld [vmem:[%s429 + $0x290] sm:$0xff]
        %v9429 = vld [vmem:[%s429 + $0x298] sm:$0xff]
        %v9430 = vld [vmem:[%s429 + $0x2a0] sm:$0xff]
        %v9431 = vld [vmem:[%s429 + $0x2a8] sm:$0xff]
        %v9432 = vld [vmem:[%s429 + $0x2b0] sm:$0xff]
        %v9433 = vld [vmem:[%s429 + $0x2b8] sm:$0xff]
        %v9434 = vld [vmem:[%s429 + $0x2c0] sm:$0xff]
        %v9435 = vld [vmem:[%s429 + $0x2c8] sm:$0xff]
        %v9436 = vld [vmem:[%s429 + $0x2d0] sm:$0xff]
        %v9437 = vld [vmem:[%s429 + $0x2d8] sm:$0xff]
        %v9438 = vld [vmem:[%s429 + $0x2e0] sm:$0xff]
        %v9439 = vld [vmem:[%s429 + $0x2e8] sm:$0xff]
        %v9440 = vld [vmem:[%s429 + $0x2f0] sm:$0xff]
        %v9441 = vld [vmem:[%s429 + $0x2f8] sm:$0xff]
        %v9442 = vld [vmem:[%s429 + $0x300] sm:$0xff]
        %v9443 = vld [vmem:[%s429 + $0x308] sm:$0xff]
        %v9444 = vld [vmem:[%s429 + $0x310] sm:$0xff]
        %v9445 = vld [vmem:[%s429 + $0x318] sm:$0xff]
        %v9446 = vld [vmem:[%s429 + $0x320] sm:$0xff]
        %v9447 = vld [vmem:[%s429 + $0x328] sm:$0xff]
        %v9448 = vld [vmem:[%s429 + $0x330] sm:$0xff]
        %v9449 = vld [vmem:[%s429 + $0x338] sm:$0xff]
        %v9450 = vld [vmem:[%s429 + $0x340] sm:$0xff]
        %v9451 = vld [vmem:[%s429 + $0x348] sm:$0xff]
        %v9452 = vld [vmem:[%s429 + $0x350] sm:$0xff]
        %v9453 = vld [vmem:[%s429 + $0x358] sm:$0xff]
        %v9454 = vld [vmem:[%s429 + $0x360] sm:$0xff]
        %v9455 = vld [vmem:[%s429 + $0x368] sm:$0xff]
        %v9456 = vld [vmem:[%s429 + $0x370] sm:$0xff]
        %v9457 = vld [vmem:[%s429 + $0x378] sm:$0xff]
        %v9458 = vld [vmem:[%s429 + $0x380] sm:$0xff]
        %v9459 = vld [vmem:[%s429 + $0x388] sm:$0xff]
        %v9460 = vld [vmem:[%s429 + $0x390] sm:$0xff]
        %v9461 = vld [vmem:[%s429 + $0x398] sm:$0xff]
        %v9462 = vld [vmem:[%s429 + $0x3a0] sm:$0xff]
        %v9463 = vld [vmem:[%s429 + $0x3a8] sm:$0xff]
        %v9464 = vld [vmem:[%s429 + $0x3b0] sm:$0xff]
        %v9465 = vld [vmem:[%s429 + $0x3b8] sm:$0xff]
        %v9466 = vld [vmem:[%s429 + $0x3c0] sm:$0xff]
        %v9467 = vld [vmem:[%s429 + $0x3c8] sm:$0xff]
        %v9468 = vld [vmem:[%s429 + $0x3d0] sm:$0xff]
        %v9469 = vld [vmem:[%s429 + $0x3d8] sm:$0xff]
        %v9470 = vld [vmem:[%s429 + $0x3e0] sm:$0xff]
        %v9471 = vld [vmem:[%s429 + $0x3e8] sm:$0xff]
        %v9472 = vld [vmem:[%s429 + $0x3f0] sm:$0xff]
        %v9473 = vld [vmem:[%s429 + $0x3f8] sm:$0xff]
        %v9474 = vld [vmem:[%s429 + $0x400] sm:$0xff]
        %v9475 = vld [vmem:[%s429 + $0x408] sm:$0xff]
        %v9476 = vld [vmem:[%s429 + $0x410] sm:$0xff]
        %v9477 = vld [vmem:[%s429 + $0x418] sm:$0xff]
        %v9478 = vld [vmem:[%s429 + $0x420] sm:$0xff]
        %v9479 = vld [vmem:[%s429 + $0x428] sm:$0xff]
        %v9480 = vld [vmem:[%s429 + $0x430] sm:$0xff]
        %v9481 = vld [vmem:[%s429 + $0x438] sm:$0xff]
        %v9482 = vld [vmem:[%s429 + $0x440] sm:$0xff]
        %v9483 = vld [vmem:[%s429 + $0x448] sm:$0xff]
        %v9484 = vld [vmem:[%s429 + $0x450] sm:$0xff]
        %v9485 = vld [vmem:[%s429 + $0x458] sm:$0xff]
        %v9486 = vld [vmem:[%s429 + $0x460] sm:$0xff]
        %v9487 = vld [vmem:[%s429 + $0x468] sm:$0xff]
        %v9488 = vld [vmem:[%s429 + $0x470] sm:$0xff]
        %v9489 = vld [vmem:[%s429 + $0x478] sm:$0xff]
        %v9490 = vld [vmem:[%s429 + $0x480] sm:$0xff]
        %v9491 = vld [vmem:[%s429 + $0x488] sm:$0xff]
        %v9492 = vld [vmem:[%s429 + $0x490] sm:$0xff]
        %v9493 = vld [vmem:[%s429 + $0x498] sm:$0xff]
        %v9494 = vld [vmem:[%s429 + $0x4a0] sm:$0xff]
        %v9495 = vld [vmem:[%s429 + $0x4a8] sm:$0xff]
        %v9496 = vld [vmem:[%s429 + $0x4b0] sm:$0xff]
        %v9497 = vld [vmem:[%s429 + $0x4b8] sm:$0xff]
        %v9498 = vld [vmem:[%s429 + $0x4c0] sm:$0xff]
        %v9499 = vld [vmem:[%s429 + $0x4c8] sm:$0xff]
        %v9500 = vld [vmem:[%s429 + $0x4d0] sm:$0xff]
        %v9501 = vld [vmem:[%s429 + $0x4d8] sm:$0xff]
        %v9502 = vld [vmem:[%s429 + $0x4e0] sm:$0xff]
        %v9503 = vld [vmem:[%s429 + $0x4e8] sm:$0xff]
        %v9504 = vld [vmem:[%s429 + $0x4f0] sm:$0xff]
        %v9505 = vld [vmem:[%s429 + $0x4f8] sm:$0xff]
        %v9506 = vld [vmem:[%s429 + $0x500] sm:$0xff]
        %v9507 = vld [vmem:[%s429 + $0x508] sm:$0xff]
        %v9508 = vld [vmem:[%s429 + $0x510] sm:$0xff]
        %v9509 = vld [vmem:[%s429 + $0x518] sm:$0xff]
        %v9510 = vld [vmem:[%s429 + $0x520] sm:$0xff]
        %v9511 = vld [vmem:[%s429 + $0x528] sm:$0xff]
        %v9512 = vld [vmem:[%s429 + $0x530] sm:$0xff]
        %v9513 = vld [vmem:[%s429 + $0x538] sm:$0xff]
        %v9514 = vld [vmem:[%s429 + $0x540] sm:$0xff]
        %v9515 = vld [vmem:[%s429 + $0x548] sm:$0xff]
        %v9516 = vld [vmem:[%s429 + $0x550] sm:$0xff]
        %v9517 = vld [vmem:[%s429 + $0x558] sm:$0xff]
        %v9518 = vld [vmem:[%s429 + $0x560] sm:$0xff]
        %v9519 = vld [vmem:[%s429 + $0x568] sm:$0xff]
        %v9520 = vld [vmem:[%s429 + $0x570] sm:$0xff]
        %v9521 = vld [vmem:[%s429 + $0x578] sm:$0xff]
        %v9522 = vld [vmem:[%s429 + $0x580] sm:$0xff]
        %v9523 = vld [vmem:[%s429 + $0x588] sm:$0xff]
        %v9524 = vld [vmem:[%s429 + $0x590] sm:$0xff]
        %v9525 = vld [vmem:[%s429 + $0x598] sm:$0xff]
        %v9526 = vld [vmem:[%s429 + $0x5a0] sm:$0xff]
        %v9527 = vld [vmem:[%s429 + $0x5a8] sm:$0xff]
        %v9528 = vld [vmem:[%s429 + $0x5b0] sm:$0xff]
        %v9529 = vld [vmem:[%s429 + $0x5b8] sm:$0xff]
        %v9530 = vld [vmem:[%s429 + $0x5c0] sm:$0xff]
        %v9531 = vld [vmem:[%s429 + $0x5c8] sm:$0xff]
        %v9532 = vld [vmem:[%s429 + $0x5d0] sm:$0xff]
        %v9533 = vld [vmem:[%s429 + $0x5d8] sm:$0xff]
        %v9534 = vld [vmem:[%s429 + $0x5e0] sm:$0xff]
        %v9535 = vld [vmem:[%s429 + $0x5e8] sm:$0xff]
        %v9536 = vld [vmem:[%s429 + $0x5f0] sm:$0xff]
        %v9537 = vld [vmem:[%s429 + $0x5f8] sm:$0xff]
        %v9538 = vld [vmem:[%s429 + $0x600] sm:$0xff]
        %v9539 = vld [vmem:[%s429 + $0x608] sm:$0xff]
        %v9540 = vld [vmem:[%s429 + $0x610] sm:$0xff]
        %v9541 = vld [vmem:[%s429 + $0x618] sm:$0xff]
        %v9542 = vld [vmem:[%s429 + $0x620] sm:$0xff]
        %v9543 = vld [vmem:[%s429 + $0x628] sm:$0xff]
        %v9544 = vld [vmem:[%s429 + $0x630] sm:$0xff]
        %v9545 = vld [vmem:[%s429 + $0x638] sm:$0xff]
        %v9546 = vld [vmem:[%s429 + $0x640] sm:$0xff]
        %v9547 = vld [vmem:[%s429 + $0x648] sm:$0xff]
        %v9548 = vld [vmem:[%s429 + $0x650] sm:$0xff]
        %v9549 = vld [vmem:[%s429 + $0x658] sm:$0xff]
        %v9550 = vld [vmem:[%s429 + $0x660] sm:$0xff]
        %v9551 = vld [vmem:[%s429 + $0x668] sm:$0xff]
        %v9552 = vld [vmem:[%s429 + $0x670] sm:$0xff]
        %v9553 = vld [vmem:[%s429 + $0x678] sm:$0xff]
        %v9554 = vld [vmem:[%s429 + $0x680] sm:$0xff]
        %v9555 = vld [vmem:[%s429 + $0x688] sm:$0xff]
        %v9556 = vld [vmem:[%s429 + $0x690] sm:$0xff]
        %v9557 = vld [vmem:[%s429 + $0x698] sm:$0xff]
        %v9558 = vld [vmem:[%s429 + $0x6a0] sm:$0xff]
        %v9559 = vld [vmem:[%s429 + $0x6a8] sm:$0xff]
        %v9560 = vld [vmem:[%s429 + $0x6b0] sm:$0xff]
        %v9561 = vld [vmem:[%s429 + $0x6b8] sm:$0xff]
        %v9562 = vld [vmem:[%s429 + $0x6c0] sm:$0xff]
        %v9563 = vld [vmem:[%s429 + $0x6c8] sm:$0xff]
        %v9564 = vld [vmem:[%s429 + $0x6d0] sm:$0xff]
        %v9565 = vld [vmem:[%s429 + $0x6d8] sm:$0xff]
        %v9566 = vld [vmem:[%s429 + $0x6e0] sm:$0xff]
        %v9567 = vld [vmem:[%s429 + $0x6e8] sm:$0xff]
        %v9568 = vld [vmem:[%s429 + $0x6f0] sm:$0xff]
        %v9569 = vld [vmem:[%s429 + $0x6f8] sm:$0xff]
        %v9570 = vld [vmem:[%s429 + $0x700] sm:$0xff]
        %v9571 = vld [vmem:[%s429 + $0x708] sm:$0xff]
        %v9572 = vld [vmem:[%s429 + $0x710] sm:$0xff]
        %v9573 = vld [vmem:[%s429 + $0x718] sm:$0xff]
        %v9574 = vld [vmem:[%s429 + $0x720] sm:$0xff]
        %v9575 = vld [vmem:[%s429 + $0x728] sm:$0xff]
        %v9576 = vld [vmem:[%s429 + $0x730] sm:$0xff]
        %v9577 = vld [vmem:[%s429 + $0x738] sm:$0xff]
        %v9578 = vld [vmem:[%s429 + $0x740] sm:$0xff]
        %v9579 = vld [vmem:[%s429 + $0x748] sm:$0xff]
        %v9580 = vld [vmem:[%s429 + $0x750] sm:$0xff]
        %v9581 = vld [vmem:[%s429 + $0x758] sm:$0xff]
        %v9582 = vld [vmem:[%s429 + $0x760] sm:$0xff]
        %v9583 = vld [vmem:[%s429 + $0x768] sm:$0xff]
        %v9584 = vld [vmem:[%s429 + $0x770] sm:$0xff]
        %v9585 = vld [vmem:[%s429 + $0x778] sm:$0xff]
        %v9586 = vld [vmem:[%s429 + $0x780] sm:$0xff]
        %v9587 = vld [vmem:[%s429 + $0x788] sm:$0xff]
        %v9588 = vld [vmem:[%s429 + $0x790] sm:$0xff]
        %v9589 = vld [vmem:[%s429 + $0x798] sm:$0xff]
        %v9590 = vld [vmem:[%s429 + $0x7a0] sm:$0xff]
        %v9591 = vld [vmem:[%s429 + $0x7a8] sm:$0xff]
        %v9592 = vld [vmem:[%s429 + $0x7b0] sm:$0xff]
        %v9593 = vld [vmem:[%s429 + $0x7b8] sm:$0xff]
        %v9594 = vld [vmem:[%s429 + $0x7c0] sm:$0xff]
        %v9595 = vld [vmem:[%s429 + $0x7c8] sm:$0xff]
        %v9596 = vld [vmem:[%s429 + $0x7d0] sm:$0xff]
        %v9597 = vld [vmem:[%s429 + $0x7d8] sm:$0xff]
        %v9598 = vld [vmem:[%s429 + $0x7e0] sm:$0xff]
        %v9599 = vld [vmem:[%s429 + $0x7e8] sm:$0xff]
        %v9600 = vld [vmem:[%s429 + $0x7f0] sm:$0xff]
        %v9601 = vld [vmem:[%s429 + $0x7f8] sm:$0xff]
        %v9603 = vlaneseq
        %v9604 = vshrl.u32 %v9603, 7
        %v9605 = vsub.s32 0, %v9604
        %v9606 = vrot.slane %v534, %v9605
        %v9607 = vlaneseq
        %v9608 = vshrl.u32 %v9607, 7
        %v9609 = vsub.s32 1, %v9608
        %v9610 = vrot.slane %v534, %v9609
        %v9611 = vlaneseq
        %v9612 = vshrl.u32 %v9611, 7
        %v9613 = vsub.s32 2, %v9612
        %v9614 = vrot.slane %v534, %v9613
        %v9615 = vlaneseq
        %v9616 = vshrl.u32 %v9615, 7
        %v9617 = vsub.s32 3, %v9616
        %v9618 = vrot.slane %v534, %v9617
        %v9879 = vunpack.c.l.b16 %v9346
        %v9880 = vunpack.c.h.b16 %v9346
        %v9881 = vunpack.c.l.b16 %v9347
        %v9882 = vunpack.c.h.b16 %v9347
        %v9883 = vunpack.c.l.b16 %v9348
        %v9884 = vunpack.c.h.b16 %v9348
        %v9885 = vunpack.c.l.b16 %v9349
        %v9886 = vunpack.c.h.b16 %v9349
        %v9887 = vunpack.c.l.b16 %v9350
        %v9888 = vunpack.c.h.b16 %v9350
        %v9889 = vunpack.c.l.b16 %v9351
        %v9890 = vunpack.c.h.b16 %v9351
        %v9891 = vunpack.c.l.b16 %v9352
        %v9892 = vunpack.c.h.b16 %v9352
        %v9893 = vunpack.c.l.b16 %v9353
        %v9894 = vunpack.c.h.b16 %v9353
        %v9895 = vunpack.c.l.b16 %v9354
        %v9896 = vunpack.c.h.b16 %v9354
        %v9897 = vunpack.c.l.b16 %v9355
        %v9898 = vunpack.c.h.b16 %v9355
        %v9899 = vunpack.c.l.b16 %v9356
        %v9900 = vunpack.c.h.b16 %v9356
        %v9901 = vunpack.c.l.b16 %v9357
        %v9902 = vunpack.c.h.b16 %v9357
        %v9903 = vunpack.c.l.b16 %v9358
        %v9904 = vunpack.c.h.b16 %v9358
        %v9905 = vunpack.c.l.b16 %v9359
        %v9906 = vunpack.c.h.b16 %v9359
        %v9907 = vunpack.c.l.b16 %v9360
        %v9908 = vunpack.c.h.b16 %v9360
        %v9909 = vunpack.c.l.b16 %v9361
        %v9910 = vunpack.c.h.b16 %v9361
        %v9911 = vunpack.c.l.b16 %v9362
        %v9912 = vunpack.c.h.b16 %v9362
        %v9913 = vunpack.c.l.b16 %v9363
        %v9914 = vunpack.c.h.b16 %v9363
        %v9915 = vunpack.c.l.b16 %v9364
        %v9916 = vunpack.c.h.b16 %v9364
        %v9917 = vunpack.c.l.b16 %v9365
        %v9918 = vunpack.c.h.b16 %v9365
        %v9919 = vunpack.c.l.b16 %v9366
        %v9920 = vunpack.c.h.b16 %v9366
        %v9921 = vunpack.c.l.b16 %v9367
        %v9922 = vunpack.c.h.b16 %v9367
        %v9923 = vunpack.c.l.b16 %v9368
        %v9924 = vunpack.c.h.b16 %v9368
        %v9925 = vunpack.c.l.b16 %v9369
        %v9926 = vunpack.c.h.b16 %v9369
        %v9927 = vunpack.c.l.b16 %v9370
        %v9928 = vunpack.c.h.b16 %v9370
        %v9929 = vunpack.c.l.b16 %v9371
        %v9930 = vunpack.c.h.b16 %v9371
        %v9931 = vunpack.c.l.b16 %v9372
        %v9932 = vunpack.c.h.b16 %v9372
        %v9933 = vunpack.c.l.b16 %v9373
        %v9934 = vunpack.c.h.b16 %v9373
        %v9935 = vunpack.c.l.b16 %v9374
        %v9936 = vunpack.c.h.b16 %v9374
        %v9937 = vunpack.c.l.b16 %v9375
        %v9938 = vunpack.c.h.b16 %v9375
        %v9939 = vunpack.c.l.b16 %v9376
        %v9940 = vunpack.c.h.b16 %v9376
        %v9941 = vunpack.c.l.b16 %v9377
        %v9942 = vunpack.c.h.b16 %v9377
        %v9943 = vunpack.c.l.b16 %v9378
        %v9944 = vunpack.c.h.b16 %v9378
        %v9945 = vunpack.c.l.b16 %v9379
        %v9946 = vunpack.c.h.b16 %v9379
        %v9947 = vunpack.c.l.b16 %v9380
        %v9948 = vunpack.c.h.b16 %v9380
        %v9949 = vunpack.c.l.b16 %v9381
        %v9950 = vunpack.c.h.b16 %v9381
        %v9951 = vunpack.c.l.b16 %v9382
        %v9952 = vunpack.c.h.b16 %v9382
        %v9953 = vunpack.c.l.b16 %v9383
        %v9954 = vunpack.c.h.b16 %v9383
        %v9955 = vunpack.c.l.b16 %v9384
        %v9956 = vunpack.c.h.b16 %v9384
        %v9957 = vunpack.c.l.b16 %v9385
        %v9958 = vunpack.c.h.b16 %v9385
        %v9959 = vunpack.c.l.b16 %v9386
        %v9960 = vunpack.c.h.b16 %v9386
        %v9961 = vunpack.c.l.b16 %v9387
        %v9962 = vunpack.c.h.b16 %v9387
        %v9963 = vunpack.c.l.b16 %v9388
        %v9964 = vunpack.c.h.b16 %v9388
        %v9965 = vunpack.c.l.b16 %v9389
        %v9966 = vunpack.c.h.b16 %v9389
        %v9967 = vunpack.c.l.b16 %v9390
        %v9968 = vunpack.c.h.b16 %v9390
        %v9969 = vunpack.c.l.b16 %v9391
        %v9970 = vunpack.c.h.b16 %v9391
        %v9971 = vunpack.c.l.b16 %v9392
        %v9972 = vunpack.c.h.b16 %v9392
        %v9973 = vunpack.c.l.b16 %v9393
        %v9974 = vunpack.c.h.b16 %v9393
        %v9975 = vunpack.c.l.b16 %v9394
        %v9976 = vunpack.c.h.b16 %v9394
        %v9977 = vunpack.c.l.b16 %v9395
        %v9978 = vunpack.c.h.b16 %v9395
        %v9979 = vunpack.c.l.b16 %v9396
        %v9980 = vunpack.c.h.b16 %v9396
        %v9981 = vunpack.c.l.b16 %v9397
        %v9982 = vunpack.c.h.b16 %v9397
        %v9983 = vunpack.c.l.b16 %v9398
        %v9984 = vunpack.c.h.b16 %v9398
        %v9985 = vunpack.c.l.b16 %v9399
        %v9986 = vunpack.c.h.b16 %v9399
        %v9987 = vunpack.c.l.b16 %v9400
        %v9988 = vunpack.c.h.b16 %v9400
        %v9989 = vunpack.c.l.b16 %v9401
        %v9990 = vunpack.c.h.b16 %v9401
        %v9991 = vunpack.c.l.b16 %v9402
        %v9992 = vunpack.c.h.b16 %v9402
        %v9993 = vunpack.c.l.b16 %v9403
        %v9994 = vunpack.c.h.b16 %v9403
        %v9995 = vunpack.c.l.b16 %v9404
        %v9996 = vunpack.c.h.b16 %v9404
        %v9997 = vunpack.c.l.b16 %v9405
        %v9998 = vunpack.c.h.b16 %v9405
        %v9999 = vunpack.c.l.b16 %v9406
        %v10000 = vunpack.c.h.b16 %v9406
        %v10001 = vunpack.c.l.b16 %v9407
        %v10002 = vunpack.c.h.b16 %v9407
        %v10003 = vunpack.c.l.b16 %v9408
        %v10004 = vunpack.c.h.b16 %v9408
        %v10005 = vunpack.c.l.b16 %v9409
        %v10006 = vunpack.c.h.b16 %v9409
        %v10007 = vunpack.c.l.b16 %v9410
        %v10008 = vunpack.c.h.b16 %v9410
        %v10009 = vunpack.c.l.b16 %v9411
        %v10010 = vunpack.c.h.b16 %v9411
        %v10011 = vunpack.c.l.b16 %v9412
        %v10012 = vunpack.c.h.b16 %v9412
        %v10013 = vunpack.c.l.b16 %v9413
        %v10014 = vunpack.c.h.b16 %v9413
        %v10015 = vunpack.c.l.b16 %v9414
        %v10016 = vunpack.c.h.b16 %v9414
        %v10017 = vunpack.c.l.b16 %v9415
        %v10018 = vunpack.c.h.b16 %v9415
        %v10019 = vunpack.c.l.b16 %v9416
        %v10020 = vunpack.c.h.b16 %v9416
        %v10021 = vunpack.c.l.b16 %v9417
        %v10022 = vunpack.c.h.b16 %v9417
        %v10023 = vunpack.c.l.b16 %v9418
        %v10024 = vunpack.c.h.b16 %v9418
        %v10025 = vunpack.c.l.b16 %v9419
        %v10026 = vunpack.c.h.b16 %v9419
        %v10027 = vunpack.c.l.b16 %v9420
        %v10028 = vunpack.c.h.b16 %v9420
        %v10029 = vunpack.c.l.b16 %v9421
        %v10030 = vunpack.c.h.b16 %v9421
        %v10031 = vunpack.c.l.b16 %v9422
        %v10032 = vunpack.c.h.b16 %v9422
        %v10033 = vunpack.c.l.b16 %v9423
        %v10034 = vunpack.c.h.b16 %v9423
        %v10035 = vunpack.c.l.b16 %v9424
        %v10036 = vunpack.c.h.b16 %v9424
        %v10037 = vunpack.c.l.b16 %v9425
        %v10038 = vunpack.c.h.b16 %v9425
        %v10039 = vunpack.c.l.b16 %v9426
        %v10040 = vunpack.c.h.b16 %v9426
        %v10041 = vunpack.c.l.b16 %v9427
        %v10042 = vunpack.c.h.b16 %v9427
        %v10043 = vunpack.c.l.b16 %v9428
        %v10044 = vunpack.c.h.b16 %v9428
        %v10045 = vunpack.c.l.b16 %v9429
        %v10046 = vunpack.c.h.b16 %v9429
        %v10047 = vunpack.c.l.b16 %v9430
        %v10048 = vunpack.c.h.b16 %v9430
        %v10049 = vunpack.c.l.b16 %v9431
        %v10050 = vunpack.c.h.b16 %v9431
        %v10051 = vunpack.c.l.b16 %v9432
        %v10052 = vunpack.c.h.b16 %v9432
        %v10053 = vunpack.c.l.b16 %v9433
        %v10054 = vunpack.c.h.b16 %v9433
        %v10055 = vunpack.c.l.b16 %v9434
        %v10056 = vunpack.c.h.b16 %v9434
        %v10057 = vunpack.c.l.b16 %v9435
        %v10058 = vunpack.c.h.b16 %v9435
        %v10059 = vunpack.c.l.b16 %v9436
        %v10060 = vunpack.c.h.b16 %v9436
        %v10061 = vunpack.c.l.b16 %v9437
        %v10062 = vunpack.c.h.b16 %v9437
        %v10063 = vunpack.c.l.b16 %v9438
        %v10064 = vunpack.c.h.b16 %v9438
        %v10065 = vunpack.c.l.b16 %v9439
        %v10066 = vunpack.c.h.b16 %v9439
        %v10067 = vunpack.c.l.b16 %v9440
        %v10068 = vunpack.c.h.b16 %v9440
        %v10069 = vunpack.c.l.b16 %v9441
        %v10070 = vunpack.c.h.b16 %v9441
        %v10071 = vunpack.c.l.b16 %v9442
        %v10072 = vunpack.c.h.b16 %v9442
        %v10073 = vunpack.c.l.b16 %v9443
        %v10074 = vunpack.c.h.b16 %v9443
        %v10075 = vunpack.c.l.b16 %v9444
        %v10076 = vunpack.c.h.b16 %v9444
        %v10077 = vunpack.c.l.b16 %v9445
        %v10078 = vunpack.c.h.b16 %v9445
        %v10079 = vunpack.c.l.b16 %v9446
        %v10080 = vunpack.c.h.b16 %v9446
        %v10081 = vunpack.c.l.b16 %v9447
        %v10082 = vunpack.c.h.b16 %v9447
        %v10083 = vunpack.c.l.b16 %v9448
        %v10084 = vunpack.c.h.b16 %v9448
        %v10085 = vunpack.c.l.b16 %v9449
        %v10086 = vunpack.c.h.b16 %v9449
        %v10087 = vunpack.c.l.b16 %v9450
        %v10088 = vunpack.c.h.b16 %v9450
        %v10089 = vunpack.c.l.b16 %v9451
        %v10090 = vunpack.c.h.b16 %v9451
        %v10091 = vunpack.c.l.b16 %v9452
        %v10092 = vunpack.c.h.b16 %v9452
        %v10093 = vunpack.c.l.b16 %v9453
        %v10094 = vunpack.c.h.b16 %v9453
        %v10095 = vunpack.c.l.b16 %v9454
        %v10096 = vunpack.c.h.b16 %v9454
        %v10097 = vunpack.c.l.b16 %v9455
        %v10098 = vunpack.c.h.b16 %v9455
        %v10099 = vunpack.c.l.b16 %v9456
        %v10100 = vunpack.c.h.b16 %v9456
        %v10101 = vunpack.c.l.b16 %v9457
        %v10102 = vunpack.c.h.b16 %v9457
        %v10103 = vunpack.c.l.b16 %v9458
        %v10104 = vunpack.c.h.b16 %v9458
        %v10105 = vunpack.c.l.b16 %v9459
        %v10106 = vunpack.c.h.b16 %v9459
        %v10107 = vunpack.c.l.b16 %v9460
        %v10108 = vunpack.c.h.b16 %v9460
        %v10109 = vunpack.c.l.b16 %v9461
        %v10110 = vunpack.c.h.b16 %v9461
        %v10111 = vunpack.c.l.b16 %v9462
        %v10112 = vunpack.c.h.b16 %v9462
        %v10113 = vunpack.c.l.b16 %v9463
        %v10114 = vunpack.c.h.b16 %v9463
        %v10115 = vunpack.c.l.b16 %v9464
        %v10116 = vunpack.c.h.b16 %v9464
        %v10117 = vunpack.c.l.b16 %v9465
        %v10118 = vunpack.c.h.b16 %v9465
        %v10119 = vunpack.c.l.b16 %v9466
        %v10120 = vunpack.c.h.b16 %v9466
        %v10121 = vunpack.c.l.b16 %v9467
        %v10122 = vunpack.c.h.b16 %v9467
        %v10123 = vunpack.c.l.b16 %v9468
        %v10124 = vunpack.c.h.b16 %v9468
        %v10125 = vunpack.c.l.b16 %v9469
        %v10126 = vunpack.c.h.b16 %v9469
        %v10127 = vunpack.c.l.b16 %v9470
        %v10128 = vunpack.c.h.b16 %v9470
        %v10129 = vunpack.c.l.b16 %v9471
        %v10130 = vunpack.c.h.b16 %v9471
        %v10131 = vunpack.c.l.b16 %v9472
        %v10132 = vunpack.c.h.b16 %v9472
        %v10133 = vunpack.c.l.b16 %v9473
        %v10134 = vunpack.c.h.b16 %v9473
        %v10135 = vunpack.c.l.b16 %v9474
        %v10136 = vunpack.c.h.b16 %v9474
        %v10137 = vunpack.c.l.b16 %v9475
        %v10138 = vunpack.c.h.b16 %v9475
        %v10139 = vunpack.c.l.b16 %v9476
        %v10140 = vunpack.c.h.b16 %v9476
        %v10141 = vunpack.c.l.b16 %v9477
        %v10142 = vunpack.c.h.b16 %v9477
        %v10143 = vunpack.c.l.b16 %v9478
        %v10144 = vunpack.c.h.b16 %v9478
        %v10145 = vunpack.c.l.b16 %v9479
        %v10146 = vunpack.c.h.b16 %v9479
        %v10147 = vunpack.c.l.b16 %v9480
        %v10148 = vunpack.c.h.b16 %v9480
        %v10149 = vunpack.c.l.b16 %v9481
        %v10150 = vunpack.c.h.b16 %v9481
        %v10151 = vunpack.c.l.b16 %v9482
        %v10152 = vunpack.c.h.b16 %v9482
        %v10153 = vunpack.c.l.b16 %v9483
        %v10154 = vunpack.c.h.b16 %v9483
        %v10155 = vunpack.c.l.b16 %v9484
        %v10156 = vunpack.c.h.b16 %v9484
        %v10157 = vunpack.c.l.b16 %v9485
        %v10158 = vunpack.c.h.b16 %v9485
        %v10159 = vunpack.c.l.b16 %v9486
        %v10160 = vunpack.c.h.b16 %v9486
        %v10161 = vunpack.c.l.b16 %v9487
        %v10162 = vunpack.c.h.b16 %v9487
        %v10163 = vunpack.c.l.b16 %v9488
        %v10164 = vunpack.c.h.b16 %v9488
        %v10165 = vunpack.c.l.b16 %v9489
        %v10166 = vunpack.c.h.b16 %v9489
        %v10167 = vunpack.c.l.b16 %v9490
        %v10168 = vunpack.c.h.b16 %v9490
        %v10169 = vunpack.c.l.b16 %v9491
        %v10170 = vunpack.c.h.b16 %v9491
        %v10171 = vunpack.c.l.b16 %v9492
        %v10172 = vunpack.c.h.b16 %v9492
        %v10173 = vunpack.c.l.b16 %v9493
        %v10174 = vunpack.c.h.b16 %v9493
        %v10175 = vunpack.c.l.b16 %v9494
        %v10176 = vunpack.c.h.b16 %v9494
        %v10177 = vunpack.c.l.b16 %v9495
        %v10178 = vunpack.c.h.b16 %v9495
        %v10179 = vunpack.c.l.b16 %v9496
        %v10180 = vunpack.c.h.b16 %v9496
        %v10181 = vunpack.c.l.b16 %v9497
        %v10182 = vunpack.c.h.b16 %v9497
        %v10183 = vunpack.c.l.b16 %v9498
        %v10184 = vunpack.c.h.b16 %v9498
        %v10185 = vunpack.c.l.b16 %v9499
        %v10186 = vunpack.c.h.b16 %v9499
        %v10187 = vunpack.c.l.b16 %v9500
        %v10188 = vunpack.c.h.b16 %v9500
        %v10189 = vunpack.c.l.b16 %v9501
        %v10190 = vunpack.c.h.b16 %v9501
        %v10191 = vunpack.c.l.b16 %v9502
        %v10192 = vunpack.c.h.b16 %v9502
        %v10193 = vunpack.c.l.b16 %v9503
        %v10194 = vunpack.c.h.b16 %v9503
        %v10195 = vunpack.c.l.b16 %v9504
        %v10196 = vunpack.c.h.b16 %v9504
        %v10197 = vunpack.c.l.b16 %v9505
        %v10198 = vunpack.c.h.b16 %v9505
        %v10199 = vunpack.c.l.b16 %v9506
        %v10200 = vunpack.c.h.b16 %v9506
        %v10201 = vunpack.c.l.b16 %v9507
        %v10202 = vunpack.c.h.b16 %v9507
        %v10203 = vunpack.c.l.b16 %v9508
        %v10204 = vunpack.c.h.b16 %v9508
        %v10205 = vunpack.c.l.b16 %v9509
        %v10206 = vunpack.c.h.b16 %v9509
        %v10207 = vunpack.c.l.b16 %v9510
        %v10208 = vunpack.c.h.b16 %v9510
        %v10209 = vunpack.c.l.b16 %v9511
        %v10210 = vunpack.c.h.b16 %v9511
        %v10211 = vunpack.c.l.b16 %v9512
        %v10212 = vunpack.c.h.b16 %v9512
        %v10213 = vunpack.c.l.b16 %v9513
        %v10214 = vunpack.c.h.b16 %v9513
        %v10215 = vunpack.c.l.b16 %v9514
        %v10216 = vunpack.c.h.b16 %v9514
        %v10217 = vunpack.c.l.b16 %v9515
        %v10218 = vunpack.c.h.b16 %v9515
        %v10219 = vunpack.c.l.b16 %v9516
        %v10220 = vunpack.c.h.b16 %v9516
        %v10221 = vunpack.c.l.b16 %v9517
        %v10222 = vunpack.c.h.b16 %v9517
        %v10223 = vunpack.c.l.b16 %v9518
        %v10224 = vunpack.c.h.b16 %v9518
        %v10225 = vunpack.c.l.b16 %v9519
        %v10226 = vunpack.c.h.b16 %v9519
        %v10227 = vunpack.c.l.b16 %v9520
        %v10228 = vunpack.c.h.b16 %v9520
        %v10229 = vunpack.c.l.b16 %v9521
        %v10230 = vunpack.c.h.b16 %v9521
        %v10231 = vunpack.c.l.b16 %v9522
        %v10232 = vunpack.c.h.b16 %v9522
        %v10233 = vunpack.c.l.b16 %v9523
        %v10234 = vunpack.c.h.b16 %v9523
        %v10235 = vunpack.c.l.b16 %v9524
        %v10236 = vunpack.c.h.b16 %v9524
        %v10237 = vunpack.c.l.b16 %v9525
        %v10238 = vunpack.c.h.b16 %v9525
        %v10239 = vunpack.c.l.b16 %v9526
        %v10240 = vunpack.c.h.b16 %v9526
        %v10241 = vunpack.c.l.b16 %v9527
        %v10242 = vunpack.c.h.b16 %v9527
        %v10243 = vunpack.c.l.b16 %v9528
        %v10244 = vunpack.c.h.b16 %v9528
        %v10245 = vunpack.c.l.b16 %v9529
        %v10246 = vunpack.c.h.b16 %v9529
        %v10247 = vunpack.c.l.b16 %v9530
        %v10248 = vunpack.c.h.b16 %v9530
        %v10249 = vunpack.c.l.b16 %v9531
        %v10250 = vunpack.c.h.b16 %v9531
        %v10251 = vunpack.c.l.b16 %v9532
        %v10252 = vunpack.c.h.b16 %v9532
        %v10253 = vunpack.c.l.b16 %v9533
        %v10254 = vunpack.c.h.b16 %v9533
        %v10255 = vunpack.c.l.b16 %v9534
        %v10256 = vunpack.c.h.b16 %v9534
        %v10257 = vunpack.c.l.b16 %v9535
        %v10258 = vunpack.c.h.b16 %v9535
        %v10259 = vunpack.c.l.b16 %v9536
        %v10260 = vunpack.c.h.b16 %v9536
        %v10261 = vunpack.c.l.b16 %v9537
        %v10262 = vunpack.c.h.b16 %v9537
        %v10263 = vunpack.c.l.b16 %v9538
        %v10264 = vunpack.c.h.b16 %v9538
        %v10265 = vunpack.c.l.b16 %v9539
        %v10266 = vunpack.c.h.b16 %v9539
        %v10267 = vunpack.c.l.b16 %v9540
        %v10268 = vunpack.c.h.b16 %v9540
        %v10269 = vunpack.c.l.b16 %v9541
        %v10270 = vunpack.c.h.b16 %v9541
        %v10271 = vunpack.c.l.b16 %v9542
        %v10272 = vunpack.c.h.b16 %v9542
        %v10273 = vunpack.c.l.b16 %v9543
        %v10274 = vunpack.c.h.b16 %v9543
        %v10275 = vunpack.c.l.b16 %v9544
        %v10276 = vunpack.c.h.b16 %v9544
        %v10277 = vunpack.c.l.b16 %v9545
        %v10278 = vunpack.c.h.b16 %v9545
        %v10279 = vunpack.c.l.b16 %v9546
        %v10280 = vunpack.c.h.b16 %v9546
        %v10281 = vunpack.c.l.b16 %v9547
        %v10282 = vunpack.c.h.b16 %v9547
        %v10283 = vunpack.c.l.b16 %v9548
        %v10284 = vunpack.c.h.b16 %v9548
        %v10285 = vunpack.c.l.b16 %v9549
        %v10286 = vunpack.c.h.b16 %v9549
        %v10287 = vunpack.c.l.b16 %v9550
        %v10288 = vunpack.c.h.b16 %v9550
        %v10289 = vunpack.c.l.b16 %v9551
        %v10290 = vunpack.c.h.b16 %v9551
        %v10291 = vunpack.c.l.b16 %v9552
        %v10292 = vunpack.c.h.b16 %v9552
        %v10293 = vunpack.c.l.b16 %v9553
        %v10294 = vunpack.c.h.b16 %v9553
        %v10295 = vunpack.c.l.b16 %v9554
        %v10296 = vunpack.c.h.b16 %v9554
        %v10297 = vunpack.c.l.b16 %v9555
        %v10298 = vunpack.c.h.b16 %v9555
        %v10299 = vunpack.c.l.b16 %v9556
        %v10300 = vunpack.c.h.b16 %v9556
        %v10301 = vunpack.c.l.b16 %v9557
        %v10302 = vunpack.c.h.b16 %v9557
        %v10303 = vunpack.c.l.b16 %v9558
        %v10304 = vunpack.c.h.b16 %v9558
        %v10305 = vunpack.c.l.b16 %v9559
        %v10306 = vunpack.c.h.b16 %v9559
        %v10307 = vunpack.c.l.b16 %v9560
        %v10308 = vunpack.c.h.b16 %v9560
        %v10309 = vunpack.c.l.b16 %v9561
        %v10310 = vunpack.c.h.b16 %v9561
        %v10311 = vunpack.c.l.b16 %v9562
        %v10312 = vunpack.c.h.b16 %v9562
        %v10313 = vunpack.c.l.b16 %v9563
        %v10314 = vunpack.c.h.b16 %v9563
        %v10315 = vunpack.c.l.b16 %v9564
        %v10316 = vunpack.c.h.b16 %v9564
        %v10317 = vunpack.c.l.b16 %v9565
        %v10318 = vunpack.c.h.b16 %v9565
        %v10319 = vunpack.c.l.b16 %v9566
        %v10320 = vunpack.c.h.b16 %v9566
        %v10321 = vunpack.c.l.b16 %v9567
        %v10322 = vunpack.c.h.b16 %v9567
        %v10323 = vunpack.c.l.b16 %v9568
        %v10324 = vunpack.c.h.b16 %v9568
        %v10325 = vunpack.c.l.b16 %v9569
        %v10326 = vunpack.c.h.b16 %v9569
        %v10327 = vunpack.c.l.b16 %v9570
        %v10328 = vunpack.c.h.b16 %v9570
        %v10329 = vunpack.c.l.b16 %v9571
        %v10330 = vunpack.c.h.b16 %v9571
        %v10331 = vunpack.c.l.b16 %v9572
        %v10332 = vunpack.c.h.b16 %v9572
        %v10333 = vunpack.c.l.b16 %v9573
        %v10334 = vunpack.c.h.b16 %v9573
        %v10335 = vunpack.c.l.b16 %v9574
        %v10336 = vunpack.c.h.b16 %v9574
        %v10337 = vunpack.c.l.b16 %v9575
        %v10338 = vunpack.c.h.b16 %v9575
        %v10339 = vunpack.c.l.b16 %v9576
        %v10340 = vunpack.c.h.b16 %v9576
        %v10341 = vunpack.c.l.b16 %v9577
        %v10342 = vunpack.c.h.b16 %v9577
        %v10343 = vunpack.c.l.b16 %v9578
        %v10344 = vunpack.c.h.b16 %v9578
        %v10345 = vunpack.c.l.b16 %v9579
        %v10346 = vunpack.c.h.b16 %v9579
        %v10347 = vunpack.c.l.b16 %v9580
        %v10348 = vunpack.c.h.b16 %v9580
        %v10349 = vunpack.c.l.b16 %v9581
        %v10350 = vunpack.c.h.b16 %v9581
        %v10351 = vunpack.c.l.b16 %v9582
        %v10352 = vunpack.c.h.b16 %v9582
        %v10353 = vunpack.c.l.b16 %v9583
        %v10354 = vunpack.c.h.b16 %v9583
        %v10355 = vunpack.c.l.b16 %v9584
        %v10356 = vunpack.c.h.b16 %v9584
        %v10357 = vunpack.c.l.b16 %v9585
        %v10358 = vunpack.c.h.b16 %v9585
        %v10359 = vunpack.c.l.b16 %v9586
        %v10360 = vunpack.c.h.b16 %v9586
        %v10361 = vunpack.c.l.b16 %v9587
        %v10362 = vunpack.c.h.b16 %v9587
        %v10363 = vunpack.c.l.b16 %v9588
        %v10364 = vunpack.c.h.b16 %v9588
        %v10365 = vunpack.c.l.b16 %v9589
        %v10366 = vunpack.c.h.b16 %v9589
        %v10367 = vunpack.c.l.b16 %v9590
        %v10368 = vunpack.c.h.b16 %v9590
        %v10369 = vunpack.c.l.b16 %v9591
        %v10370 = vunpack.c.h.b16 %v9591
        %v10371 = vunpack.c.l.b16 %v9592
        %v10372 = vunpack.c.h.b16 %v9592
        %v10373 = vunpack.c.l.b16 %v9593
        %v10374 = vunpack.c.h.b16 %v9593
        %v10375 = vunpack.c.l.b16 %v9594
        %v10376 = vunpack.c.h.b16 %v9594
        %v10377 = vunpack.c.l.b16 %v9595
        %v10378 = vunpack.c.h.b16 %v9595
        %v10379 = vunpack.c.l.b16 %v9596
        %v10380 = vunpack.c.h.b16 %v9596
        %v10381 = vunpack.c.l.b16 %v9597
        %v10382 = vunpack.c.h.b16 %v9597
        %v10383 = vunpack.c.l.b16 %v9598
        %v10384 = vunpack.c.h.b16 %v9598
        %v10385 = vunpack.c.l.b16 %v9599
        %v10386 = vunpack.c.h.b16 %v9599
        %v10387 = vunpack.c.l.b16 %v9600
        %v10388 = vunpack.c.h.b16 %v9600
        %v10389 = vunpack.c.l.b16 %v9601
        %v10390 = vunpack.c.h.b16 %v9601
        %v10391 = vpack.c.b16 %v9883, %v9879
        %v10392 = vpack.c.b16 %v9884, %v9880
        %v10393 = vpack.c.b16 %v9885, %v9881
        %v10394 = vpack.c.b16 %v9886, %v9882
        %v10395 = vpack.c.b16 %v9891, %v9887
        %v10396 = vpack.c.b16 %v9892, %v9888
        %v10397 = vpack.c.b16 %v9893, %v9889
        %v10398 = vpack.c.b16 %v9894, %v9890
        %v10399 = vpack.c.b16 %v9899, %v9895
        %v10400 = vpack.c.b16 %v9900, %v9896
        %v10401 = vpack.c.b16 %v9901, %v9897
        %v10402 = vpack.c.b16 %v9902, %v9898
        %v10403 = vpack.c.b16 %v9907, %v9903
        %v10404 = vpack.c.b16 %v9908, %v9904
        %v10405 = vpack.c.b16 %v9909, %v9905
        %v10406 = vpack.c.b16 %v9910, %v9906
        %v10407 = vpack.c.b16 %v9915, %v9911
        %v10408 = vpack.c.b16 %v9916, %v9912
        %v10409 = vpack.c.b16 %v9917, %v9913
        %v10410 = vpack.c.b16 %v9918, %v9914
        %v10411 = vpack.c.b16 %v9923, %v9919
        %v10412 = vpack.c.b16 %v9924, %v9920
        %v10413 = vpack.c.b16 %v9925, %v9921
        %v10414 = vpack.c.b16 %v9926, %v9922
        %v10415 = vpack.c.b16 %v9931, %v9927
        %v10416 = vpack.c.b16 %v9932, %v9928
        %v10417 = vpack.c.b16 %v9933, %v9929
        %v10418 = vpack.c.b16 %v9934, %v9930
        %v10419 = vpack.c.b16 %v9939, %v9935
        %v10420 = vpack.c.b16 %v9940, %v9936
        %v10421 = vpack.c.b16 %v9941, %v9937
        %v10422 = vpack.c.b16 %v9942, %v9938
        %v10423 = vpack.c.b16 %v9947, %v9943
        %v10424 = vpack.c.b16 %v9948, %v9944
        %v10425 = vpack.c.b16 %v9949, %v9945
        %v10426 = vpack.c.b16 %v9950, %v9946
        %v10427 = vpack.c.b16 %v9955, %v9951
        %v10428 = vpack.c.b16 %v9956, %v9952
        %v10429 = vpack.c.b16 %v9957, %v9953
        %v10430 = vpack.c.b16 %v9958, %v9954
        %v10431 = vpack.c.b16 %v9963, %v9959
        %v10432 = vpack.c.b16 %v9964, %v9960
        %v10433 = vpack.c.b16 %v9965, %v9961
        %v10434 = vpack.c.b16 %v9966, %v9962
        %v10435 = vpack.c.b16 %v9971, %v9967
        %v10436 = vpack.c.b16 %v9972, %v9968
        %v10437 = vpack.c.b16 %v9973, %v9969
        %v10438 = vpack.c.b16 %v9974, %v9970
        %v10439 = vpack.c.b16 %v9979, %v9975
        %v10440 = vpack.c.b16 %v9980, %v9976
        %v10441 = vpack.c.b16 %v9981, %v9977
        %v10442 = vpack.c.b16 %v9982, %v9978
        %v10443 = vpack.c.b16 %v9987, %v9983
        %v10444 = vpack.c.b16 %v9988, %v9984
        %v10445 = vpack.c.b16 %v9989, %v9985
        %v10446 = vpack.c.b16 %v9990, %v9986
        %v10447 = vpack.c.b16 %v9995, %v9991
        %v10448 = vpack.c.b16 %v9996, %v9992
        %v10449 = vpack.c.b16 %v9997, %v9993
        %v10450 = vpack.c.b16 %v9998, %v9994
        %v10451 = vpack.c.b16 %v10003, %v9999
        %v10452 = vpack.c.b16 %v10004, %v10000
        %v10453 = vpack.c.b16 %v10005, %v10001
        %v10454 = vpack.c.b16 %v10006, %v10002
        %v10455 = vpack.c.b16 %v10011, %v10007
        %v10456 = vpack.c.b16 %v10012, %v10008
        %v10457 = vpack.c.b16 %v10013, %v10009
        %v10458 = vpack.c.b16 %v10014, %v10010
        %v10459 = vpack.c.b16 %v10019, %v10015
        %v10460 = vpack.c.b16 %v10020, %v10016
        %v10461 = vpack.c.b16 %v10021, %v10017
        %v10462 = vpack.c.b16 %v10022, %v10018
        %v10463 = vpack.c.b16 %v10027, %v10023
        %v10464 = vpack.c.b16 %v10028, %v10024
        %v10465 = vpack.c.b16 %v10029, %v10025
        %v10466 = vpack.c.b16 %v10030, %v10026
        %v10467 = vpack.c.b16 %v10035, %v10031
        %v10468 = vpack.c.b16 %v10036, %v10032
        %v10469 = vpack.c.b16 %v10037, %v10033
        %v10470 = vpack.c.b16 %v10038, %v10034
        %v10471 = vpack.c.b16 %v10043, %v10039
        %v10472 = vpack.c.b16 %v10044, %v10040
        %v10473 = vpack.c.b16 %v10045, %v10041
        %v10474 = vpack.c.b16 %v10046, %v10042
        %v10475 = vpack.c.b16 %v10051, %v10047
        %v10476 = vpack.c.b16 %v10052, %v10048
        %v10477 = vpack.c.b16 %v10053, %v10049
        %v10478 = vpack.c.b16 %v10054, %v10050
        %v10479 = vpack.c.b16 %v10059, %v10055
        %v10480 = vpack.c.b16 %v10060, %v10056
        %v10481 = vpack.c.b16 %v10061, %v10057
        %v10482 = vpack.c.b16 %v10062, %v10058
        %v10483 = vpack.c.b16 %v10067, %v10063
        %v10484 = vpack.c.b16 %v10068, %v10064
        %v10485 = vpack.c.b16 %v10069, %v10065
        %v10486 = vpack.c.b16 %v10070, %v10066
        %v10487 = vpack.c.b16 %v10075, %v10071
        %v10488 = vpack.c.b16 %v10076, %v10072
        %v10489 = vpack.c.b16 %v10077, %v10073
        %v10490 = vpack.c.b16 %v10078, %v10074
        %v10491 = vpack.c.b16 %v10083, %v10079
        %v10492 = vpack.c.b16 %v10084, %v10080
        %v10493 = vpack.c.b16 %v10085, %v10081
        %v10494 = vpack.c.b16 %v10086, %v10082
        %v10495 = vpack.c.b16 %v10091, %v10087
        %v10496 = vpack.c.b16 %v10092, %v10088
        %v10497 = vpack.c.b16 %v10093, %v10089
        %v10498 = vpack.c.b16 %v10094, %v10090
        %v10499 = vpack.c.b16 %v10099, %v10095
        %v10500 = vpack.c.b16 %v10100, %v10096
        %v10501 = vpack.c.b16 %v10101, %v10097
        %v10502 = vpack.c.b16 %v10102, %v10098
        %v10503 = vpack.c.b16 %v10107, %v10103
        %v10504 = vpack.c.b16 %v10108, %v10104
        %v10505 = vpack.c.b16 %v10109, %v10105
        %v10506 = vpack.c.b16 %v10110, %v10106
        %v10507 = vpack.c.b16 %v10115, %v10111
        %v10508 = vpack.c.b16 %v10116, %v10112
        %v10509 = vpack.c.b16 %v10117, %v10113
        %v10510 = vpack.c.b16 %v10118, %v10114
        %v10511 = vpack.c.b16 %v10123, %v10119
        %v10512 = vpack.c.b16 %v10124, %v10120
        %v10513 = vpack.c.b16 %v10125, %v10121
        %v10514 = vpack.c.b16 %v10126, %v10122
        %v10515 = vpack.c.b16 %v10131, %v10127
        %v10516 = vpack.c.b16 %v10132, %v10128
        %v10517 = vpack.c.b16 %v10133, %v10129
        %v10518 = vpack.c.b16 %v10134, %v10130
        %v10519 = vpack.c.b16 %v10139, %v10135
        %v10520 = vpack.c.b16 %v10140, %v10136
        %v10521 = vpack.c.b16 %v10141, %v10137
        %v10522 = vpack.c.b16 %v10142, %v10138
        %v10523 = vpack.c.b16 %v10147, %v10143
        %v10524 = vpack.c.b16 %v10148, %v10144
        %v10525 = vpack.c.b16 %v10149, %v10145
        %v10526 = vpack.c.b16 %v10150, %v10146
        %v10527 = vpack.c.b16 %v10155, %v10151
        %v10528 = vpack.c.b16 %v10156, %v10152
        %v10529 = vpack.c.b16 %v10157, %v10153
        %v10530 = vpack.c.b16 %v10158, %v10154
        %v10531 = vpack.c.b16 %v10163, %v10159
        %v10532 = vpack.c.b16 %v10164, %v10160
        %v10533 = vpack.c.b16 %v10165, %v10161
        %v10534 = vpack.c.b16 %v10166, %v10162
        %v10535 = vpack.c.b16 %v10171, %v10167
        %v10536 = vpack.c.b16 %v10172, %v10168
        %v10537 = vpack.c.b16 %v10173, %v10169
        %v10538 = vpack.c.b16 %v10174, %v10170
        %v10539 = vpack.c.b16 %v10179, %v10175
        %v10540 = vpack.c.b16 %v10180, %v10176
        %v10541 = vpack.c.b16 %v10181, %v10177
        %v10542 = vpack.c.b16 %v10182, %v10178
        %v10543 = vpack.c.b16 %v10187, %v10183
        %v10544 = vpack.c.b16 %v10188, %v10184
        %v10545 = vpack.c.b16 %v10189, %v10185
        %v10546 = vpack.c.b16 %v10190, %v10186
        %v10547 = vpack.c.b16 %v10195, %v10191
        %v10548 = vpack.c.b16 %v10196, %v10192
        %v10549 = vpack.c.b16 %v10197, %v10193
        %v10550 = vpack.c.b16 %v10198, %v10194
        %v10551 = vpack.c.b16 %v10203, %v10199
        %v10552 = vpack.c.b16 %v10204, %v10200
        %v10553 = vpack.c.b16 %v10205, %v10201
        %v10554 = vpack.c.b16 %v10206, %v10202
        %v10555 = vpack.c.b16 %v10211, %v10207
        %v10556 = vpack.c.b16 %v10212, %v10208
        %v10557 = vpack.c.b16 %v10213, %v10209
        %v10558 = vpack.c.b16 %v10214, %v10210
        %v10559 = vpack.c.b16 %v10219, %v10215
        %v10560 = vpack.c.b16 %v10220, %v10216
        %v10561 = vpack.c.b16 %v10221, %v10217
        %v10562 = vpack.c.b16 %v10222, %v10218
        %v10563 = vpack.c.b16 %v10227, %v10223
        %v10564 = vpack.c.b16 %v10228, %v10224
        %v10565 = vpack.c.b16 %v10229, %v10225
        %v10566 = vpack.c.b16 %v10230, %v10226
        %v10567 = vpack.c.b16 %v10235, %v10231
        %v10568 = vpack.c.b16 %v10236, %v10232
        %v10569 = vpack.c.b16 %v10237, %v10233
        %v10570 = vpack.c.b16 %v10238, %v10234
        %v10571 = vpack.c.b16 %v10243, %v10239
        %v10572 = vpack.c.b16 %v10244, %v10240
        %v10573 = vpack.c.b16 %v10245, %v10241
        %v10574 = vpack.c.b16 %v10246, %v10242
        %v10575 = vpack.c.b16 %v10251, %v10247
        %v10576 = vpack.c.b16 %v10252, %v10248
        %v10577 = vpack.c.b16 %v10253, %v10249
        %v10578 = vpack.c.b16 %v10254, %v10250
        %v10579 = vpack.c.b16 %v10259, %v10255
        %v10580 = vpack.c.b16 %v10260, %v10256
        %v10581 = vpack.c.b16 %v10261, %v10257
        %v10582 = vpack.c.b16 %v10262, %v10258
        %v10583 = vpack.c.b16 %v10267, %v10263
        %v10584 = vpack.c.b16 %v10268, %v10264
        %v10585 = vpack.c.b16 %v10269, %v10265
        %v10586 = vpack.c.b16 %v10270, %v10266
        %v10587 = vpack.c.b16 %v10275, %v10271
        %v10588 = vpack.c.b16 %v10276, %v10272
        %v10589 = vpack.c.b16 %v10277, %v10273
        %v10590 = vpack.c.b16 %v10278, %v10274
        %v10591 = vpack.c.b16 %v10283, %v10279
        %v10592 = vpack.c.b16 %v10284, %v10280
        %v10593 = vpack.c.b16 %v10285, %v10281
        %v10594 = vpack.c.b16 %v10286, %v10282
        %v10595 = vpack.c.b16 %v10291, %v10287
        %v10596 = vpack.c.b16 %v10292, %v10288
        %v10597 = vpack.c.b16 %v10293, %v10289
        %v10598 = vpack.c.b16 %v10294, %v10290
        %v10599 = vpack.c.b16 %v10299, %v10295
        %v10600 = vpack.c.b16 %v10300, %v10296
        %v10601 = vpack.c.b16 %v10301, %v10297
        %v10602 = vpack.c.b16 %v10302, %v10298
        %v10603 = vpack.c.b16 %v10307, %v10303
        %v10604 = vpack.c.b16 %v10308, %v10304
        %v10605 = vpack.c.b16 %v10309, %v10305
        %v10606 = vpack.c.b16 %v10310, %v10306
        %v10607 = vpack.c.b16 %v10315, %v10311
        %v10608 = vpack.c.b16 %v10316, %v10312
        %v10609 = vpack.c.b16 %v10317, %v10313
        %v10610 = vpack.c.b16 %v10318, %v10314
        %v10611 = vpack.c.b16 %v10323, %v10319
        %v10612 = vpack.c.b16 %v10324, %v10320
        %v10613 = vpack.c.b16 %v10325, %v10321
        %v10614 = vpack.c.b16 %v10326, %v10322
        %v10615 = vpack.c.b16 %v10331, %v10327
        %v10616 = vpack.c.b16 %v10332, %v10328
        %v10617 = vpack.c.b16 %v10333, %v10329
        %v10618 = vpack.c.b16 %v10334, %v10330
        %v10619 = vpack.c.b16 %v10339, %v10335
        %v10620 = vpack.c.b16 %v10340, %v10336
        %v10621 = vpack.c.b16 %v10341, %v10337
        %v10622 = vpack.c.b16 %v10342, %v10338
        %v10623 = vpack.c.b16 %v10347, %v10343
        %v10624 = vpack.c.b16 %v10348, %v10344
        %v10625 = vpack.c.b16 %v10349, %v10345
        %v10626 = vpack.c.b16 %v10350, %v10346
        %v10627 = vpack.c.b16 %v10355, %v10351
        %v10628 = vpack.c.b16 %v10356, %v10352
        %v10629 = vpack.c.b16 %v10357, %v10353
        %v10630 = vpack.c.b16 %v10358, %v10354
        %v10631 = vpack.c.b16 %v10363, %v10359
        %v10632 = vpack.c.b16 %v10364, %v10360
        %v10633 = vpack.c.b16 %v10365, %v10361
        %v10634 = vpack.c.b16 %v10366, %v10362
        %v10635 = vpack.c.b16 %v10371, %v10367
        %v10636 = vpack.c.b16 %v10372, %v10368
        %v10637 = vpack.c.b16 %v10373, %v10369
        %v10638 = vpack.c.b16 %v10374, %v10370
        %v10639 = vpack.c.b16 %v10379, %v10375
        %v10640 = vpack.c.b16 %v10380, %v10376
        %v10641 = vpack.c.b16 %v10381, %v10377
        %v10642 = vpack.c.b16 %v10382, %v10378
        %v10643 = vpack.c.b16 %v10387, %v10383
        %v10644 = vpack.c.b16 %v10388, %v10384
        %v10645 = vpack.c.b16 %v10389, %v10385
        %v10646 = vpack.c.b16 %v10390, %v10386
        %10903 = vmatprep.subr.bf16.mxu0 %v10392
        %10904 = vmatpush1.bf16.msra.mxu0 %v10391
        %10905 = vmatprep.subr.bf16.mxu0 %v10396
        %10906 = vmatpush1.bf16.msra.mxu0 %v10395
        %10907 = vmatprep.subr.bf16.mxu0 %v10400
        %10908 = vmatpush1.bf16.msra.mxu0 %v10399
        %10909 = vmatprep.subr.bf16.mxu0 %v10404
        %10910 = vmatpush1.bf16.msra.mxu0 %v10403
        %10911 = vmatprep.subr.bf16.mxu0 %v10408
        %10912 = vmatpush1.bf16.msra.mxu0 %v10407
        %10913 = vmatprep.subr.bf16.mxu0 %v10412
        %10914 = vmatpush1.bf16.msra.mxu0 %v10411
        %10915 = vmatprep.subr.bf16.mxu0 %v10416
        %10916 = vmatpush1.bf16.msra.mxu0 %v10415
        %10917 = vmatprep.subr.bf16.mxu0 %v10420
        %10918 = vmatpush1.bf16.msra.mxu0 %v10419
        %10919 = vmatprep.subr.bf16.mxu0 %v10424
        %10920 = vmatpush1.bf16.msra.mxu0 %v10423
        %10921 = vmatprep.subr.bf16.mxu0 %v10428
        %10922 = vmatpush1.bf16.msra.mxu0 %v10427
        %10923 = vmatprep.subr.bf16.mxu0 %v10432
        %10924 = vmatpush1.bf16.msra.mxu0 %v10431
        %10925 = vmatprep.subr.bf16.mxu0 %v10436
        %10926 = vmatpush1.bf16.msra.mxu0 %v10435
        %10927 = vmatprep.subr.bf16.mxu0 %v10440
        %10928 = vmatpush1.bf16.msra.mxu0 %v10439
        %10929 = vmatprep.subr.bf16.mxu0 %v10444
        %10930 = vmatpush1.bf16.msra.mxu0 %v10443
        %10931 = vmatprep.subr.bf16.mxu0 %v10448
        %10932 = vmatpush1.bf16.msra.mxu0 %v10447
        %10933 = vmatprep.subr.bf16.mxu0 %v10452
        %10934 = vmatpush1.bf16.msra.mxu0 %v10451
        %10935 = vmatprep.mubr.bf16.mxu0 %v9339
        %10936 = vmatmul.mubr.bf16.gmra.mrb[0].mxu0 %v9338
        %v10937 = vpop.f32.mrb[0].mxu0
        %v10938 = vadd.f32 %v9606, %v10937
        %v10939 = vpop.f32.mrb[0].mxu0
        %v10940 = vadd.f32 %v9610, %v10939
        %v10941 = vpop.f32.mrb[0].mxu0
        %v10942 = vadd.f32 %v9606, %v10941
        %v10943 = vpop.f32.mrb[0].mxu0
        %v10944 = vadd.f32 %v9610, %v10943
        %10945 = vdwg.mxu0
        %10946 = vmatprep.subr.bf16.mxu0 %v10456
        %10947 = vmatpush1.bf16.msra.mxu0 %v10455
        %10948 = vmatprep.subr.bf16.mxu0 %v10460
        %10949 = vmatpush1.bf16.msra.mxu0 %v10459
        %10950 = vmatprep.subr.bf16.mxu0 %v10464
        %10951 = vmatpush1.bf16.msra.mxu0 %v10463
        %10952 = vmatprep.subr.bf16.mxu0 %v10468
        %10953 = vmatpush1.bf16.msra.mxu0 %v10467
        %10954 = vmatprep.subr.bf16.mxu0 %v10472
        %10955 = vmatpush1.bf16.msra.mxu0 %v10471
        %10956 = vmatprep.subr.bf16.mxu0 %v10476
        %10957 = vmatpush1.bf16.msra.mxu0 %v10475
        %10958 = vmatprep.subr.bf16.mxu0 %v10480
        %10959 = vmatpush1.bf16.msra.mxu0 %v10479
        %10960 = vmatprep.subr.bf16.mxu0 %v10484
        %10961 = vmatpush1.bf16.msra.mxu0 %v10483
        %10962 = vmatprep.subr.bf16.mxu0 %v10488
        %10963 = vmatpush1.bf16.msra.mxu0 %v10487
        %10964 = vmatprep.subr.bf16.mxu0 %v10492
        %10965 = vmatpush1.bf16.msra.mxu0 %v10491
        %10966 = vmatprep.subr.bf16.mxu0 %v10496
        %10967 = vmatpush1.bf16.msra.mxu0 %v10495
        %10968 = vmatprep.subr.bf16.mxu0 %v10500
        %10969 = vmatpush1.bf16.msra.mxu0 %v10499
        %10970 = vmatprep.subr.bf16.mxu0 %v10504
        %10971 = vmatpush1.bf16.msra.mxu0 %v10503
        %10972 = vmatprep.subr.bf16.mxu0 %v10508
        %10973 = vmatpush1.bf16.msra.mxu0 %v10507
        %10974 = vmatprep.subr.bf16.mxu0 %v10512
        %10975 = vmatpush1.bf16.msra.mxu0 %v10511
        %10976 = vmatprep.subr.bf16.mxu0 %v10516
        %10977 = vmatpush1.bf16.msra.mxu0 %v10515
        %10978 = vmatprep.mubr.bf16.mxu0 %v9341
        %10979 = vmatmul.mubr.bf16.gmra.mrb[0].mxu0 %v9340
        %v10980 = vpop.f32.mrb[0].mxu0
        %v10981 = vadd.f32 %v10938, %v10980
        %v10982 = vpop.f32.mrb[0].mxu0
        %v10983 = vadd.f32 %v10940, %v10982
        %v10984 = vpop.f32.mrb[0].mxu0
        %v10985 = vadd.f32 %v10942, %v10984
        %v10986 = vpop.f32.mrb[0].mxu0
        %v10987 = vadd.f32 %v10944, %v10986
        %10988 = vdwg.mxu0
        %10989 = vmatprep.subr.bf16.mxu0 %v10520
        %10990 = vmatpush1.bf16.msra.mxu0 %v10519
        %10991 = vmatprep.subr.bf16.mxu0 %v10524
        %10992 = vmatpush1.bf16.msra.mxu0 %v10523
        %10993 = vmatprep.subr.bf16.mxu0 %v10528
        %10994 = vmatpush1.bf16.msra.mxu0 %v10527
        %10995 = vmatprep.subr.bf16.mxu0 %v10532
        %10996 = vmatpush1.bf16.msra.mxu0 %v10531
        %10997 = vmatprep.subr.bf16.mxu0 %v10536
        %10998 = vmatpush1.bf16.msra.mxu0 %v10535
        %10999 = vmatprep.subr.bf16.mxu0 %v10540
        %11000 = vmatpush1.bf16.msra.mxu0 %v10539
        %11001 = vmatprep.subr.bf16.mxu0 %v10544
        %11002 = vmatpush1.bf16.msra.mxu0 %v10543
        %11003 = vmatprep.subr.bf16.mxu0 %v10548
        %11004 = vmatpush1.bf16.msra.mxu0 %v10547
        %11005 = vmatprep.subr.bf16.mxu0 %v10552
        %11006 = vmatpush1.bf16.msra.mxu0 %v10551
        %11007 = vmatprep.subr.bf16.mxu0 %v10556
        %11008 = vmatpush1.bf16.msra.mxu0 %v10555
        %11009 = vmatprep.subr.bf16.mxu0 %v10560
        %11010 = vmatpush1.bf16.msra.mxu0 %v10559
        %11011 = vmatprep.subr.bf16.mxu0 %v10564
        %11012 = vmatpush1.bf16.msra.mxu0 %v10563
        %11013 = vmatprep.subr.bf16.mxu0 %v10568
        %11014 = vmatpush1.bf16.msra.mxu0 %v10567
        %11015 = vmatprep.subr.bf16.mxu0 %v10572
        %11016 = vmatpush1.bf16.msra.mxu0 %v10571
        %11017 = vmatprep.subr.bf16.mxu0 %v10576
        %11018 = vmatpush1.bf16.msra.mxu0 %v10575
        %11019 = vmatprep.subr.bf16.mxu0 %v10580
        %11020 = vmatpush1.bf16.msra.mxu0 %v10579
        %11021 = vmatprep.mubr.bf16.mxu0 %v9343
        %11022 = vmatmul.mubr.bf16.gmra.mrb[0].mxu0 %v9342
        %v11023 = vpop.f32.mrb[0].mxu0
        %v11024 = vadd.f32 %v10981, %v11023
        %v11025 = vpop.f32.mrb[0].mxu0
        %v11026 = vadd.f32 %v10983, %v11025
        %v11027 = vpop.f32.mrb[0].mxu0
        %v11028 = vadd.f32 %v10985, %v11027
        %v11029 = vpop.f32.mrb[0].mxu0
        %v11030 = vadd.f32 %v10987, %v11029
        %11031 = vdwg.mxu0
        %11032 = vmatprep.subr.bf16.mxu0 %v10584
        %11033 = vmatpush1.bf16.msra.mxu0 %v10583
        %11034 = vmatprep.subr.bf16.mxu0 %v10588
        %11035 = vmatpush1.bf16.msra.mxu0 %v10587
        %11036 = vmatprep.subr.bf16.mxu0 %v10592
        %11037 = vmatpush1.bf16.msra.mxu0 %v10591
        %11038 = vmatprep.subr.bf16.mxu0 %v10596
        %11039 = vmatpush1.bf16.msra.mxu0 %v10595
        %11040 = vmatprep.subr.bf16.mxu0 %v10600
        %11041 = vmatpush1.bf16.msra.mxu0 %v10599
        %11042 = vmatprep.subr.bf16.mxu0 %v10604
        %11043 = vmatpush1.bf16.msra.mxu0 %v10603
        %11044 = vmatprep.subr.bf16.mxu0 %v10608
        %11045 = vmatpush1.bf16.msra.mxu0 %v10607
        %11046 = vmatprep.subr.bf16.mxu0 %v10612
        %11047 = vmatpush1.bf16.msra.mxu0 %v10611
        %11048 = vmatprep.subr.bf16.mxu0 %v10616
        %11049 = vmatpush1.bf16.msra.mxu0 %v10615
        %11050 = vmatprep.subr.bf16.mxu0 %v10620
        %11051 = vmatpush1.bf16.msra.mxu0 %v10619
        %11052 = vmatprep.subr.bf16.mxu0 %v10624
        %11053 = vmatpush1.bf16.msra.mxu0 %v10623
        %11054 = vmatprep.subr.bf16.mxu0 %v10628
        %11055 = vmatpush1.bf16.msra.mxu0 %v10627
        %11056 = vmatprep.subr.bf16.mxu0 %v10632
        %11057 = vmatpush1.bf16.msra.mxu0 %v10631
        %11058 = vmatprep.subr.bf16.mxu0 %v10636
        %11059 = vmatpush1.bf16.msra.mxu0 %v10635
        %11060 = vmatprep.subr.bf16.mxu0 %v10640
        %11061 = vmatpush1.bf16.msra.mxu0 %v10639
        %11062 = vmatprep.subr.bf16.mxu0 %v10644
        %11063 = vmatpush1.bf16.msra.mxu0 %v10643
        %11064 = vmatprep.mubr.bf16.mxu0 %v9345
        %11065 = vmatmul.mubr.bf16.gmra.mrb[0].mxu0 %v9344
        %v11066 = vpop.f32.mrb[0].mxu0
        %v11067 = vadd.f32 %v11024, %v11066
        %v11068 = vpop.f32.mrb[0].mxu0
        %v11069 = vadd.f32 %v11026, %v11068
        %v11070 = vpop.f32.mrb[0].mxu0
        %v11071 = vadd.f32 %v11028, %v11070
        %v11072 = vpop.f32.mrb[0].mxu0
        %v11073 = vadd.f32 %v11030, %v11072
        %11074 = vdwg.mxu0
        %11075 = vmatprep.subr.bf16.mxu0 %v10394
        %11076 = vmatpush1.bf16.msra.mxu0 %v10393
        %11077 = vmatprep.subr.bf16.mxu0 %v10398
        %11078 = vmatpush1.bf16.msra.mxu0 %v10397
        %11079 = vmatprep.subr.bf16.mxu0 %v10402
        %11080 = vmatpush1.bf16.msra.mxu0 %v10401
        %11081 = vmatprep.subr.bf16.mxu0 %v10406
        %11082 = vmatpush1.bf16.msra.mxu0 %v10405
        %11083 = vmatprep.subr.bf16.mxu0 %v10410
        %11084 = vmatpush1.bf16.msra.mxu0 %v10409
        %11085 = vmatprep.subr.bf16.mxu0 %v10414
        %11086 = vmatpush1.bf16.msra.mxu0 %v10413
        %11087 = vmatprep.subr.bf16.mxu0 %v10418
        %11088 = vmatpush1.bf16.msra.mxu0 %v10417
        %11089 = vmatprep.subr.bf16.mxu0 %v10422
        %11090 = vmatpush1.bf16.msra.mxu0 %v10421
        %11091 = vmatprep.subr.bf16.mxu0 %v10426
        %11092 = vmatpush1.bf16.msra.mxu0 %v10425
        %11093 = vmatprep.subr.bf16.mxu0 %v10430
        %11094 = vmatpush1.bf16.msra.mxu0 %v10429
        %11095 = vmatprep.subr.bf16.mxu0 %v10434
        %11096 = vmatpush1.bf16.msra.mxu0 %v10433
        %11097 = vmatprep.subr.bf16.mxu0 %v10438
        %11098 = vmatpush1.bf16.msra.mxu0 %v10437
        %11099 = vmatprep.subr.bf16.mxu0 %v10442
        %11100 = vmatpush1.bf16.msra.mxu0 %v10441
        %11101 = vmatprep.subr.bf16.mxu0 %v10446
        %11102 = vmatpush1.bf16.msra.mxu0 %v10445
        %11103 = vmatprep.subr.bf16.mxu0 %v10450
        %11104 = vmatpush1.bf16.msra.mxu0 %v10449
        %11105 = vmatprep.subr.bf16.mxu0 %v10454
        %11106 = vmatpush1.bf16.msra.mxu0 %v10453
        %11107 = vmatprep.mubr.bf16.mxu0 %v9339
        %11108 = vmatmul.mubr.bf16.gmra.mrb[0].mxu0 %v9338
        %v11109 = vpop.f32.mrb[0].mxu0
        %v11110 = vadd.f32 %v9614, %v11109
        %v11111 = vpop.f32.mrb[0].mxu0
        %v11112 = vadd.f32 %v9618, %v11111
        %v11113 = vpop.f32.mrb[0].mxu0
        %v11114 = vadd.f32 %v9614, %v11113
        %v11115 = vpop.f32.mrb[0].mxu0
        %v11116 = vadd.f32 %v9618, %v11115
        %11117 = vdwg.mxu0
        %11118 = vmatprep.subr.bf16.mxu0 %v10458
        %11119 = vmatpush1.bf16.msra.mxu0 %v10457
        %11120 = vmatprep.subr.bf16.mxu0 %v10462
        %11121 = vmatpush1.bf16.msra.mxu0 %v10461
        %11122 = vmatprep.subr.bf16.mxu0 %v10466
        %11123 = vmatpush1.bf16.msra.mxu0 %v10465
        %11124 = vmatprep.subr.bf16.mxu0 %v10470
        %11125 = vmatpush1.bf16.msra.mxu0 %v10469
        %11126 = vmatprep.subr.bf16.mxu0 %v10474
        %11127 = vmatpush1.bf16.msra.mxu0 %v10473
        %11128 = vmatprep.subr.bf16.mxu0 %v10478
        %11129 = vmatpush1.bf16.msra.mxu0 %v10477
        %11130 = vmatprep.subr.bf16.mxu0 %v10482
        %11131 = vmatpush1.bf16.msra.mxu0 %v10481
        %11132 = vmatprep.subr.bf16.mxu0 %v10486
        %11133 = vmatpush1.bf16.msra.mxu0 %v10485
        %11134 = vmatprep.subr.bf16.mxu0 %v10490
        %11135 = vmatpush1.bf16.msra.mxu0 %v10489
        %11136 = vmatprep.subr.bf16.mxu0 %v10494
        %11137 = vmatpush1.bf16.msra.mxu0 %v10493
        %11138 = vmatprep.subr.bf16.mxu0 %v10498
        %11139 = vmatpush1.bf16.msra.mxu0 %v10497
        %11140 = vmatprep.subr.bf16.mxu0 %v10502
        %11141 = vmatpush1.bf16.msra.mxu0 %v10501
        %11142 = vmatprep.subr.bf16.mxu0 %v10506
        %11143 = vmatpush1.bf16.msra.mxu0 %v10505
        %11144 = vmatprep.subr.bf16.mxu0 %v10510
        %11145 = vmatpush1.bf16.msra.mxu0 %v10509
        %11146 = vmatprep.subr.bf16.mxu0 %v10514
        %11147 = vmatpush1.bf16.msra.mxu0 %v10513
        %11148 = vmatprep.subr.bf16.mxu0 %v10518
        %11149 = vmatpush1.bf16.msra.mxu0 %v10517
        %11150 = vmatprep.mubr.bf16.mxu0 %v9341
        %11151 = vmatmul.mubr.bf16.gmra.mrb[0].mxu0 %v9340
        %v11152 = vpop.f32.mrb[0].mxu0
        %v11153 = vadd.f32 %v11110, %v11152
        %v11154 = vpop.f32.mrb[0].mxu0
        %v11155 = vadd.f32 %v11112, %v11154
        %v11156 = vpop.f32.mrb[0].mxu0
        %v11157 = vadd.f32 %v11114, %v11156
        %v11158 = vpop.f32.mrb[0].mxu0
        %v11159 = vadd.f32 %v11116, %v11158
        %11160 = vdwg.mxu0
        %11161 = vmatprep.subr.bf16.mxu0 %v10522
        %11162 = vmatpush1.bf16.msra.mxu0 %v10521
        %11163 = vmatprep.subr.bf16.mxu0 %v10526
        %11164 = vmatpush1.bf16.msra.mxu0 %v10525
        %11165 = vmatprep.subr.bf16.mxu0 %v10530
        %11166 = vmatpush1.bf16.msra.mxu0 %v10529
        %11167 = vmatprep.subr.bf16.mxu0 %v10534
        %11168 = vmatpush1.bf16.msra.mxu0 %v10533
        %11169 = vmatprep.subr.bf16.mxu0 %v10538
        %11170 = vmatpush1.bf16.msra.mxu0 %v10537
        %11171 = vmatprep.subr.bf16.mxu0 %v10542
        %11172 = vmatpush1.bf16.msra.mxu0 %v10541
        %11173 = vmatprep.subr.bf16.mxu0 %v10546
        %11174 = vmatpush1.bf16.msra.mxu0 %v10545
        %11175 = vmatprep.subr.bf16.mxu0 %v10550
        %11176 = vmatpush1.bf16.msra.mxu0 %v10549
        %11177 = vmatprep.subr.bf16.mxu0 %v10554
        %11178 = vmatpush1.bf16.msra.mxu0 %v10553
        %11179 = vmatprep.subr.bf16.mxu0 %v10558
        %11180 = vmatpush1.bf16.msra.mxu0 %v10557
        %11181 = vmatprep.subr.bf16.mxu0 %v10562
        %11182 = vmatpush1.bf16.msra.mxu0 %v10561
        %11183 = vmatprep.subr.bf16.mxu0 %v10566
        %11184 = vmatpush1.bf16.msra.mxu0 %v10565
        %11185 = vmatprep.subr.bf16.mxu0 %v10570
        %11186 = vmatpush1.bf16.msra.mxu0 %v10569
        %11187 = vmatprep.subr.bf16.mxu0 %v10574
        %11188 = vmatpush1.bf16.msra.mxu0 %v10573
        %11189 = vmatprep.subr.bf16.mxu0 %v10578
        %11190 = vmatpush1.bf16.msra.mxu0 %v10577
        %11191 = vmatprep.subr.bf16.mxu0 %v10582
        %11192 = vmatpush1.bf16.msra.mxu0 %v10581
        %11193 = vmatprep.mubr.bf16.mxu0 %v9343
        %11194 = vmatmul.mubr.bf16.gmra.mrb[0].mxu0 %v9342
        %v11195 = vpop.f32.mrb[0].mxu0
        %v11196 = vadd.f32 %v11153, %v11195
        %v11197 = vpop.f32.mrb[0].mxu0
        %v11198 = vadd.f32 %v11155, %v11197
        %v11199 = vpop.f32.mrb[0].mxu0
        %v11200 = vadd.f32 %v11157, %v11199
        %v11201 = vpop.f32.mrb[0].mxu0
        %v11202 = vadd.f32 %v11159, %v11201
        %11203 = vdwg.mxu0
        %11204 = vmatprep.subr.bf16.mxu0 %v10586
        %11205 = vmatpush1.bf16.msra.mxu0 %v10585
        %11206 = vmatprep.subr.bf16.mxu0 %v10590
        %11207 = vmatpush1.bf16.msra.mxu0 %v10589
        %11208 = vmatprep.subr.bf16.mxu0 %v10594
        %11209 = vmatpush1.bf16.msra.mxu0 %v10593
        %11210 = vmatprep.subr.bf16.mxu0 %v10598
        %11211 = vmatpush1.bf16.msra.mxu0 %v10597
        %11212 = vmatprep.subr.bf16.mxu0 %v10602
        %11213 = vmatpush1.bf16.msra.mxu0 %v10601
        %11214 = vmatprep.subr.bf16.mxu0 %v10606
        %11215 = vmatpush1.bf16.msra.mxu0 %v10605
        %11216 = vmatprep.subr.bf16.mxu0 %v10610
        %11217 = vmatpush1.bf16.msra.mxu0 %v10609
        %11218 = vmatprep.subr.bf16.mxu0 %v10614
        %11219 = vmatpush1.bf16.msra.mxu0 %v10613
        %11220 = vmatprep.subr.bf16.mxu0 %v10618
        %11221 = vmatpush1.bf16.msra.mxu0 %v10617
        %11222 = vmatprep.subr.bf16.mxu0 %v10622
        %11223 = vmatpush1.bf16.msra.mxu0 %v10621
        %11224 = vmatprep.subr.bf16.mxu0 %v10626
        %11225 = vmatpush1.bf16.msra.mxu0 %v10625
        %11226 = vmatprep.subr.bf16.mxu0 %v10630
        %11227 = vmatpush1.bf16.msra.mxu0 %v10629
        %11228 = vmatprep.subr.bf16.mxu0 %v10634
        %11229 = vmatpush1.bf16.msra.mxu0 %v10633
        %11230 = vmatprep.subr.bf16.mxu0 %v10638
        %11231 = vmatpush1.bf16.msra.mxu0 %v10637
        %11232 = vmatprep.subr.bf16.mxu0 %v10642
        %11233 = vmatpush1.bf16.msra.mxu0 %v10641
        %11234 = vmatprep.subr.bf16.mxu0 %v10646
        %11235 = vmatpush1.bf16.msra.mxu0 %v10645
        %11236 = vmatprep.mubr.bf16.mxu0 %v9345
        %11237 = vmatmul.mubr.bf16.gmra.mrb[0].mxu0 %v9344
        %v11238 = vpop.f32.mrb[0].mxu0
        %v11239 = vadd.f32 %v11196, %v11238
        %v11240 = vpop.f32.mrb[0].mxu0
        %v11241 = vadd.f32 %v11198, %v11240
        %v11242 = vpop.f32.mrb[0].mxu0
        %v11243 = vadd.f32 %v11200, %v11242
        %v11244 = vpop.f32.mrb[0].mxu0
        %v11245 = vadd.f32 %v11202, %v11244
        %11246 = vdwg.mxu0
        %v11247 = vadd.f32 %v7151, %v11067
        %v11248 = vadd.f32 %v7152, %v11069
        %v11249 = vadd.f32 %v7153, %v11239
        %v11250 = vadd.f32 %v7154, %v11241
        %v11251 = vadd.f32 %v7155, %v11071
        %v11252 = vadd.f32 %v7156, %v11073
        %v11253 = vadd.f32 %v7157, %v11243
        %v11254 = vadd.f32 %v7158, %v11245
        %11255 = vst [vmem:[#allocation14] sm:$0xff] %v11247
        %11256 = vst [vmem:[#allocation14 + $0x8] sm:$0xff] %v11248
        %11257 = vst [vmem:[#allocation14 + $0x10] sm:$0xff] %v11249
        %11258 = vst [vmem:[#allocation14 + $0x18] sm:$0xff] %v11250
        %11259 = vst [vmem:[#allocation14 + $0x20] sm:$0xff] %v11251
        %11260 = vst [vmem:[#allocation14 + $0x28] sm:$0xff] %v11252
        %11261 = vst [vmem:[#allocation14 + $0x30] sm:$0xff] %v11253
        %11262 = vst [vmem:[#allocation14 + $0x38] sm:$0xff] %v11254
        %p11263 = scmp.eq.s32.totalorder %s32, 1
        // Predicated region
        $region81: #{tpu_custom_call.1} parent=47 // pred_check
          %p11264 = pneg %p11263
        $region82: #{tpu_custom_call.1} parent=47 // pred_check_branch
          %11266 = sbr.rel (%p11264) target = $region84
        $region83: #{tpu_custom_call.1} parent=47 // pred_region
          %v11267 = vld [vmem:[#allocation13] ss:$8 sm:$0xf]
          %s11268 = scalar_lea.vmem [#allocation13], 1
          %v11269 = vld [vmem:[%s11268] ss:$8 sm:$0xf]
          %v11270 = vadd.f32 %v11247, %v11248
          %v11271 = vadd.f32 %v11270, %v11249
          %v11272 = vadd.f32 %v11271, %v11250
          %11273 = vadd.xlane.f32.xlu0 %v11272
          %v11274 = vpop.xlane.xlu0 %11273
          %v11275 = vadd.f32 %v11251, %v11252
          %v11276 = vadd.f32 %v11275, %v11253
          %v11277 = vadd.f32 %v11276, %v11254
          %11278 = vadd.xlane.f32.xlu0 %v11277
          %v11279 = vpop.xlane.xlu0 %11278
          %v11280 = vmul.f32 %v11274, %v549
          %v11281 = vmul.f32 %v11279, %v549
          %v11282 = vsub.f32 %v11247, %v11280
          %v11283 = vsub.f32 %v11248, %v11280
          %v11284 = vsub.f32 %v11249, %v11280
          %v11285 = vsub.f32 %v11250, %v11280
          %v11286 = vsub.f32 %v11251, %v11281
          %v11287 = vsub.f32 %v11252, %v11281
          %v11288 = vsub.f32 %v11253, %v11281
          %v11289 = vsub.f32 %v11254, %v11281
          %v11290 = vmul.f32 %v11282, %v11282
          %v11291 = vmul.f32 %v11283, %v11283
          %v11292 = vmul.f32 %v11284, %v11284
          %v11293 = vmul.f32 %v11285, %v11285
          %v11294 = vmul.f32 %v11286, %v11286
          %v11295 = vmul.f32 %v11287, %v11287
          %v11296 = vmul.f32 %v11288, %v11288
          %v11297 = vmul.f32 %v11289, %v11289
          %v11298 = vadd.f32 %v11290, %v11291
          %v11299 = vadd.f32 %v11298, %v11292
          %v11300 = vadd.f32 %v11299, %v11293
          %11301 = vadd.xlane.f32.xlu0 %v11300
          %v11302 = vpop.xlane.xlu0 %11301
          %v11303 = vadd.f32 %v11294, %v11295
          %v11304 = vadd.f32 %v11303, %v11296
          %v11305 = vadd.f32 %v11304, %v11297
          %11306 = vadd.xlane.f32.xlu0 %v11305
          %v11307 = vpop.xlane.xlu0 %11306
          %v11308 = vmul.f32 %v11302, %v549
          %v11309 = vmul.f32 %v11307, %v549
          %v11310 = vadd.f32 %v11308, 1e-06
          %v11311 = vadd.f32 %v11309, 1e-06
          %v11312 = vrsqrt.pop %v11310
          %v11313 = vrsqrt.pop %v11311
          %v11314 = vmul.f32 %v11282, %v11312
          %v11315 = vmul.f32 %v11283, %v11312
          %v11316 = vmul.f32 %v11284, %v11312
          %v11317 = vmul.f32 %v11285, %v11312
          %v11318 = vmul.f32 %v11286, %v11313
          %v11319 = vmul.f32 %v11287, %v11313
          %v11320 = vmul.f32 %v11288, %v11313
          %v11321 = vmul.f32 %v11289, %v11313
          %v11323 = vlaneseq
          %v11324 = vshrl.u32 %v11323, 7
          %v11325 = vsub.s32 0, %v11324
          %v11326 = vrot.slane %v11267, %v11325
          %v11327 = vlaneseq
          %v11328 = vshrl.u32 %v11327, 7
          %v11329 = vsub.s32 1, %v11328
          %v11330 = vrot.slane %v11267, %v11329
          %v11331 = vlaneseq
          %v11332 = vshrl.u32 %v11331, 7
          %v11333 = vsub.s32 2, %v11332
          %v11334 = vrot.slane %v11267, %v11333
          %v11335 = vlaneseq
          %v11336 = vshrl.u32 %v11335, 7
          %v11337 = vsub.s32 3, %v11336
          %v11338 = vrot.slane %v11267, %v11337
          %v11343 = vmul.f32 %v11314, %v11326
          %v11344 = vmul.f32 %v11315, %v11330
          %v11345 = vmul.f32 %v11316, %v11334
          %v11346 = vmul.f32 %v11317, %v11338
          %v11347 = vmul.f32 %v11318, %v11326
          %v11348 = vmul.f32 %v11319, %v11330
          %v11349 = vmul.f32 %v11320, %v11334
          %v11350 = vmul.f32 %v11321, %v11338
          %v11352 = vlaneseq
          %v11353 = vshrl.u32 %v11352, 7
          %v11354 = vsub.s32 0, %v11353
          %v11355 = vrot.slane %v11269, %v11354
          %v11356 = vlaneseq
          %v11357 = vshrl.u32 %v11356, 7
          %v11358 = vsub.s32 1, %v11357
          %v11359 = vrot.slane %v11269, %v11358
          %v11360 = vlaneseq
          %v11361 = vshrl.u32 %v11360, 7
          %v11362 = vsub.s32 2, %v11361
          %v11363 = vrot.slane %v11269, %v11362
          %v11364 = vlaneseq
          %v11365 = vshrl.u32 %v11364, 7
          %v11366 = vsub.s32 3, %v11365
          %v11367 = vrot.slane %v11269, %v11366
          %v11372 = vadd.f32 %v11343, %v11355
          %v11373 = vadd.f32 %v11344, %v11359
          %v11374 = vadd.f32 %v11345, %v11363
          %v11375 = vadd.f32 %v11346, %v11367
          %v11376 = vadd.f32 %v11347, %v11355
          %v11377 = vadd.f32 %v11348, %v11359
          %v11378 = vadd.f32 %v11349, %v11363
          %v11379 = vadd.f32 %v11350, %v11367
          %11380 = vst [vmem:[#allocation15] sm:$0xff] %v11372
          %11381 = vst [vmem:[#allocation15 + $0x8] sm:$0xff] %v11373
          %11382 = vst [vmem:[#allocation15 + $0x10] sm:$0xff] %v11374
          %11383 = vst [vmem:[#allocation15 + $0x18] sm:$0xff] %v11375
          %11384 = vst [vmem:[#allocation15 + $0x20] sm:$0xff] %v11376
          %11385 = vst [vmem:[#allocation15 + $0x28] sm:$0xff] %v11377
          %11386 = vst [vmem:[#allocation15 + $0x30] sm:$0xff] %v11378
          %11387 = vst [vmem:[#allocation15 + $0x38] sm:$0xff] %v11379
        $region84: #{tpu_custom_call.1} parent=47 // pred_fallthru
          _
        // Predicated region
        $region85: #{tpu_custom_call.1} parent=47 // pred_check
          %p11388 = pneg %p217
        $region86: #{tpu_custom_call.1} parent=47 // pred_check_branch
          %11390 = sbr.rel (%p11388) target = $region88
        $region87: #{tpu_custom_call.1} parent=47 // pred_region
          %s11392 = ssub.s32 1024, 1024
          %11393 = vsyncadd [#allocation4], %s11392
          %s11394 = sshll.u32 [#allocation14], 4
          %s11395 = int_to_ptr.vmem [resolvable:$true] %s11394
          %11400 = dma.vmem_to_hbm [thread:$0]  %s11395, 1024, %s7, [#allocation4], 512, 512, 32
        $region88: #{tpu_custom_call.1} parent=47 // pred_fallthru
          _
        // Predicated region
        $region89: #{tpu_custom_call.1} parent=47 // pred_check
          %p11401 = pneg %p238
        $region90: #{tpu_custom_call.1} parent=47 // pred_check_branch
          %11403 = sbr.rel (%p11401) target = $region92
        $region91: #{tpu_custom_call.1} parent=47 // pred_region
          %s11405 = ssub.s32 1024, 1024
          %11406 = vsyncadd [#allocation16], %s11405
          %s11407 = sshll.u32 [#allocation15], 4
          %s11408 = int_to_ptr.vmem [resolvable:$true] %s11407
          %11413 = dma.vmem_to_hbm [thread:$0]  %s11408, 1024, %s8, [#allocation16], 512, 512, 32
        $region92: #{tpu_custom_call.1} parent=47 // pred_fallthru
          _
        // Predicated region
        $region93: #{tpu_custom_call.1} parent=47 // pred_check
          %p11414 = pneg %p217
        $region94: #{tpu_custom_call.1} parent=47 // pred_check_branch
          %11416 = sbr.rel (%p11414) target = $region96
        $region95: #{tpu_custom_call.1} parent=47 // pred_region
          %11417 = dma.done [#allocation4], 1024
        $region96: #{tpu_custom_call.1} parent=47 // pred_fallthru
          _
        // Predicated region
        $region97: #{tpu_custom_call.1} parent=47 // pred_check
          %p11418 = pneg %p238
        $region98: #{tpu_custom_call.1} parent=47 // pred_check_branch
          %11420 = sbr.rel (%p11418) target = $region100
        $region99: #{tpu_custom_call.1} parent=47 // pred_region
          %11421 = dma.done [#allocation16], 1024
        $region100: #{tpu_custom_call.1} parent=47 // pred_fallthru
          _
      $region48: #{tpu_custom_call.1} parent=5 // pred_fallthru
        _
      %p11422 = scmp.le.s32.totalorder 2, %s27
      // Predicated region
      $region101: #{tpu_custom_call.1} parent=5 // pred_check
        %p11423 = pneg %p11422
      $region102: #{tpu_custom_call.1} parent=5 // pred_check_branch
        %11425 = sbr.rel (%p11423) target = $region104
      $region103: #{tpu_custom_call.1} parent=5 // pred_region
        %s11426 = ssub.s32 %s27, 2
      $region104: #{tpu_custom_call.1} parent=5 // pred_fallthru
        _
    $region6: #{tpu_custom_call.1} parent=1 // loop_footer
      %s31 = sadd.s32 1, %s27
    $region7: #{tpu_custom_call.1} parent=1 // loop_footer_branch
      %26 = sbr.rel target = $region3
    $region8: #{tpu_custom_call.1} parent=1 // loop_exit
      _
    %11427 = vsyncpa [#allocation3], 1
    %s11428 = scalar_lea.sflag [#allocation3], 1
    %11429 = vsyncpa %s11428, 1
    %11430 = vsyncpa [#allocation6], 1
    %s11431 = scalar_lea.sflag [#allocation6], 1
    %11432 = vsyncpa %s11431, 1
    %11433 = vsyncpa [#allocation9], 1
    %s11434 = scalar_lea.sflag [#allocation9], 1
    %11435 = vsyncpa %s11434, 1
    %11436 = vsyncpa [#allocation12], 1
    %s11437 = scalar_lea.sflag [#allocation12], 1
    %11438 = vsyncpa %s11437, 1
    %11439 = vsyncpa [#allocation4], 1
    %s11440 = scalar_lea.sflag [#allocation4], 1
    %11441 = vsyncpa %s11440, 1
    %11442 = vsyncpa [#allocation16], 1

</llo_original>
